<compile_context>
chip_gen: v7x
topology: tpu7x:2x2x1
jax: 0.10.0
libtpu: 0.0.40
codegen_flags: <defaults>
</compile_context>

<pallas_src>
import math
from functools import partial

import jax
import jax.numpy as jnp
import numpy as np
from jax.experimental import pallas as pl
from jax.experimental.pallas import tpu as pltpu


KH = KW = 7
PAD = 3

_COMPILER_PARAMS = pltpu.CompilerParams(
    dimension_semantics=("parallel",),
    # above the 32 MiB scoped default, below v7x's 64 MiB physical VMEM
    vmem_limit_bytes=48 * 1024 * 1024)


# ----------------------------------------------------------------------------
# In-kernel conv block: Conv2d(7x7, stride, pad=3) + folded BN (+ folded
# fusion scale) + ReLU + 2x2/2 max-pool for Bt batch elements, one MXU matmul.
# ----------------------------------------------------------------------------
def _conv_block(x_ref, w_ref, b_ref, *, stride, Hb, Hp, Wp, Bt):
    """x_ref: (Bt, Rb, KW*Cin) bf16, rows = (row_phase, col_quadrant, hb, wp).
    w_ref: (KH*KW*Cin, Cout) bf16  (BN scale & fusion coefficient folded).
    b_ref: (1, Cout) f32           (conv bias + BN shift, scaled).
    Returns (Bt*Hp*Wp, Cout) f32 = relu(maxpool2x2(conv) + bias), rows=(b,hp,wp).
    """
    T = 2 * stride
    G = Hp * Wp
    w = w_ref[...]

    # Deduplicated bf16 tap slices: key = (batch-in-block, row offset, col quad).
    cache = {}

    def tap(ib, oh, dx):
        key = (ib, oh, dx)
        if key not in cache:
            r_h, q_h = oh % T, oh // T
            row0 = ((r_h * 2 + dx) * Hb + q_h) * Wp
            cache[key] = x_ref[ib, row0:row0 + G, :]           # (G, KW*Cin) bf16
        return cache[key]

    # Patch matrix rows ordered (quadrant, batch, hp, wp); per quadrant only
    # KH lane-concats of width KW*Cin (not KH*KW concats of width Cin).
    pieces = []
    for dy in range(2):
        for dx in range(2):
            for ib in range(Bt):
                taps = [tap(ib, stride * dy + ky, dx) for ky in range(KH)]
                pieces.append(jnp.concatenate(taps, axis=-1))  # (G, K) bf16
    p = jnp.concatenate(pieces, axis=0)                        # (4*Bt*G, K) bf16

    # Single MXU matmul with f32 accumulation.
    y = jnp.dot(p, w, preferred_element_type=jnp.float32)      # (4*Bt*G, Cout)

    # 2x2 max-pool = max over the 4 quadrant row-groups; +bias / ReLU once.
    GB = Bt * G
    m = jnp.maximum(jnp.maximum(y[:GB], y[GB:2 * GB]),
                    jnp.maximum(y[2 * GB:3 * GB], y[3 * GB:]))
    return jnp.maximum(m + b_ref[...], 0.0)                    # (Bt*G, Cout) f32


def _stem1_kernel(x1_ref, x2_ref, w1_ref, b1_ref, w2_ref, b2_ref,
                  o_fused_ref, o_diff_ref, *, stride, Hb, Hp, Wp, Bt, belta):
    """Fused stem11 + stem12 + (apha*x_path0 + belta*x_diff)."""
    geom = dict(stride=stride, Hb=Hb, Hp=Hp, Wp=Wp, Bt=Bt)
    y1 = _conv_block(x1_ref, w1_ref, b1_ref, **geom)   # apha folded into w1/b1
    y2 = _conv_block(x2_ref, w2_ref, b2_ref, **geom)   # raw stem12 -> x_diff
    fused = y1 + belta * y2
    G = Hp * Wp
    for ib in range(Bt):
        o_diff_ref[ib] = y2[ib * G:(ib + 1) * G].astype(o_diff_ref.dtype)
        o_fused_ref[ib] = fused[ib * G:(ib + 1) * G].astype(o_fused_ref.dtype)


def _stem2_kernel(x1_ref, x2_ref, w1_ref, b1_ref, w2_ref, b2_ref, o_ref, *,
                  stride, Hb, Hp, Wp, Bt):
    """Fused stem21 + stem22 + final apha/belta add (scales folded into w/b)."""
    geom = dict(stride=stride, Hb=Hb, Hp=Hp, Wp=Wp, Bt=Bt)
    y1 = _conv_block(x1_ref, w1_ref, b1_ref, **geom)
    y2 = _conv_block(x2_ref, w2_ref, b2_ref, **geom)
    out = y1 + y2
    G = Hp * Wp
    for ib in range(Bt):
        o_ref[ib] = out[ib * G:(ib + 1) * G].astype(o_ref.dtype)


# ----------------------------------------------------------------------------
# Wrapper-side layout prep (pure data movement, left to XLA, bf16)
# ----------------------------------------------------------------------------
def _prep_input(x_nhwc, stride):
    """Zero-pad, column-direction im2col (lanes = (kx, ci)) and row-phase
    decomposition.  Returns xg (B, Rb, KW*Cin) bf16 with row index
    ((row_phase*2 + col_quadrant)*Hb + hb)*Wp + wp, and the geometry dict."""
    B, H, W, Cin = x_nhwc.shape
    s = stride
    T = 2 * s
    Ho = (H + 2 * PAD - KH) // s + 1
    Wo = (W + 2 * PAD - KW) // s + 1
    Hp, Wp = Ho // 2, Wo // 2
    assert Hp >= 1 and Wp >= 1
    Hb = Hp + (s + KH - 1) // T
    rows_pad = T * Hb
    cols_need = T * (Wp - 1) + s + KW
    # sanity: every tap read stays inside the padded/truncated extents
    assert (s + KH - 1) // T + Hp <= Hb
    assert T * (Hp - 1) + s + KH - 1 < rows_pad
    assert T * (Wp - 1) + s + KW - 1 < cols_need

    pad_b = max(rows_pad - (H + PAD), 0)
    pad_r = max(cols_need - (W + PAD), 0)
    xp = jnp.pad(x_nhwc, ((0, 0), (PAD, pad_b), (PAD, pad_r), (0, 0)))
    xp = xp[:, :rows_pad, :cols_need, :].astype(jnp.bfloat16)

    # column-direction im2col: for each column quadrant dx and kx, take every
    # T-th column -> lanes become (kx, ci) of width KW*Cin
    per_dx = []
    for dx in range(2):
        per_kx = []
        for kx in range(KW):
            c0 = s * dx + kx
            per_kx.append(xp[:, :, c0:c0 + T * (Wp - 1) + 1:T, :])  # (B,R,Wp,Cin)
        per_dx.append(jnp.stack(per_kx, axis=3))                    # (B,R,Wp,KW,Cin)
    xg = jnp.stack(per_dx, axis=2)                                  # (B,R,2,Wp,KW,Cin)

    # row-phase decomposition; flatten rows to (row_phase, dx, hb, wp)
    xg = xg.reshape(B, Hb, T, 2, Wp, KW * Cin)
    xg = xg.transpose(0, 2, 3, 1, 4, 5).reshape(B, T * 2 * Hb * Wp, KW * Cin)
    return xg, dict(stride=s, Hb=Hb, Hp=Hp, Wp=Wp)


def _fold_params(p, out_scale):
    """Fold BN (inference form), conv bias and the fusion coefficient into one
    bf16 weight matrix (K, Cout) and one f32 bias (1, Cout)."""
    Cout, Cin, kh, kw = p["w"].shape
    eps = 1e-5
    scale = p["gamma"] * jax.lax.rsqrt(p["var"] + eps)               # (Cout,)
    bias = (p["beta"] + (p["b"] - p["mean"]) * scale) * out_scale
    w = jnp.transpose(p["w"], (2, 3, 1, 0)).reshape(kh * kw * Cin, Cout)
    w = (w * (scale * out_scale)[None, :]).astype(jnp.bfloat16)
    return w, bias.reshape(1, Cout).astype(jnp.float32)


def _per_batch_vmem_bytes(Rb, widths, G, Ks, Cout):
    inp = 2 * sum(Rb * w * 2 for w in widths)        # double-buffered bf16 inputs
    patch = sum(4 * G * k * 2 for k in Ks)           # bf16 patch matrices
    taps = sum(20 * G * w * 2 for w in widths)       # cached tap slices (approx)
    acc = sum(4 * G * Cout * 4 for _ in Ks) + 4 * G * Cout * 4
    return inp + patch + taps + acc


def _pick_bt(B, per_batch_bytes, budget=12 * 1024 * 1024):
    """Largest batch block that divides B, fits the VMEM budget and keeps the
    grid even and >= 2 (so both v7x TensorCores get work)."""
    cap = max(1, budget // max(per_batch_bytes, 1))
    best = 1
    for bt in range(1, B + 1):
        if B % bt == 0 and bt <= cap:
            g = B // bt
            if g >= 2 and g % 2 == 0:
                best = bt
    return best


# ----------------------------------------------------------------------------
# Fused stage wrappers
# ----------------------------------------------------------------------------
def _stem1_pair(x_rgb_nhwc, x_diff_nhwc, p11, p12, apha, belta):
    """Fused stem11 + stem12 + fusion-1.  Returns (x_p1_in, x_diff) as
    (B, Hp, Wp, dim//2) bf16."""
    B = x_rgb_nhwc.shape[0]
    xg1, geom = _prep_input(x_rgb_nhwc, stride=2)
    xg2, geom2 = _prep_input(x_diff_nhwc, stride=2)
    assert geom == geom2 and xg1.shape[1] == xg2.shape[1]
    w1, b1 = _fold_params(p11, apha)      # stem11, alpha folded (alpha >= 0)
    w2, b2 = _fold_params(p12, 1.0)       # stem12 raw -> x_diff
    Cout = w1.shape[1]
    Hp, Wp = geom["Hp"], geom["Wp"]
    G = Hp * Wp
    Rb, wd1 = xg1.shape[1], xg1.shape[2]
    wd2 = xg2.shape[2]
    Bt = _pick_bt(B, _per_batch_vmem_bytes(Rb, (wd1, wd2), G,
                                           (w1.shape[0], w2.shape[0]), Cout))
    kernel = partial(_stem1_kernel, Bt=Bt, belta=float(belta), **geom)
    o_fused, o_diff = pl.pallas_call(
        kernel,
        grid=(B // Bt,),
        in_specs=[
            pl.BlockSpec((Bt, Rb, wd1), lambda i: (i, 0, 0)),
            pl.BlockSpec((Bt, Rb, wd2), lambda i: (i, 0, 0)),
            pl.BlockSpec(w1.shape, lambda i: (0, 0)),
            pl.BlockSpec(b1.shape, lambda i: (0, 0)),
            pl.BlockSpec(w2.shape, lambda i: (0, 0)),
            pl.BlockSpec(b2.shape, lambda i: (0, 0)),
        ],
        out_specs=(
            pl.BlockSpec((Bt, G, Cout), lambda i: (i, 0, 0)),
            pl.BlockSpec((Bt, G, Cout), lambda i: (i, 0, 0)),
        ),
        out_shape=(
            jax.ShapeDtypeStruct((B, G, Cout), jnp.bfloat16),
            jax.ShapeDtypeStruct((B, G, Cout), jnp.bfloat16),
        ),
        compiler_params=_COMPILER_PARAMS,
    )(xg1, xg2, w1, b1, w2, b2)
    return (o_fused.reshape(B, Hp, Wp, Cout), o_diff.reshape(B, Hp, Wp, Cout))


def _stem2_pair(x_p1_nhwc, x_diff_nhwc, p21, p22, apha, belta):
    """Fused stem21 + stem22 + final apha/belta add.  Returns (B, Hp, Wp, dim)."""
    B = x_p1_nhwc.shape[0]
    xg1, geom = _prep_input(x_p1_nhwc, stride=1)
    xg2, geom2 = _prep_input(x_diff_nhwc, stride=1)
    assert geom == geom2 and xg1.shape[1] == xg2.shape[1]
    w1, b1 = _fold_params(p21, apha)
    w2, b2 = _fold_params(p22, belta)
    Cout = w1.shape[1]
    Hp, Wp = geom["Hp"], geom["Wp"]
    G = Hp * Wp
    Rb, wd1 = xg1.shape[1], xg1.shape[2]
    wd2 = xg2.shape[2]
    Bt = _pick_bt(B, _per_batch_vmem_bytes(Rb, (wd1, wd2), G,
                                           (w1.shape[0], w2.shape[0]), Cout))
    kernel = partial(_stem2_kernel, Bt=Bt, **geom)
    out = pl.pallas_call(
        kernel,
        grid=(B // Bt,),
        in_specs=[
            pl.BlockSpec((Bt, Rb, wd1), lambda i: (i, 0, 0)),
            pl.BlockSpec((Bt, Rb, wd2), lambda i: (i, 0, 0)),
            pl.BlockSpec(w1.shape, lambda i: (0, 0)),
            pl.BlockSpec(b1.shape, lambda i: (0, 0)),
            pl.BlockSpec(w2.shape, lambda i: (0, 0)),
            pl.BlockSpec(b2.shape, lambda i: (0, 0)),
        ],
        out_specs=pl.BlockSpec((Bt, G, Cout), lambda i: (i, 0, 0)),
        out_shape=jax.ShapeDtypeStruct((B, G, Cout), jnp.float32),
        compiler_params=_COMPILER_PARAMS,
    )(xg1, xg2, w1, b1, w2, b2)
    return out.reshape(B, Hp, Wp, Cout)


# ----------------------------------------------------------------------------
# Full CAFusion_Stem forward
# ----------------------------------------------------------------------------
def cafusion_stem_forward(x, params, apha=0.5, belta=0.5):
    """x: (N, D, C, H, W) float32.  Returns (N*D, dim, H//8, W//8) NCHW f32."""
    # alpha/beta are folded into the conv weights; exact only for coefficients
    # >= 0 (positive scaling commutes with ReLU / max-pool).
    assert apha >= 0.0 and belta >= 0.0, "fusion coefficients must be >= 0"
    if x.ndim == 5 and x.shape[2] >= x.shape[3]:   # (N,D,H,W,C) -> (N,D,C,H,W)
        x = jnp.transpose(x, (0, 1, 4, 2, 3))
    N, D, C, H, W = x.shape

    # temporal shift + frame-difference construction (cheap glue, left to XLA)
    x1 = jnp.concatenate([x[:, :1], x[:, :1], x[:, :D - 2]], axis=1)
    x2 = jnp.concatenate([x[:, :1], x[:, :D - 1]], axis=1)
    x3 = x
    x4 = jnp.concatenate([x[:, 1:], x[:, D - 1:]], axis=1)
    x5 = jnp.concatenate([x[:, 2:], x[:, D - 1:], x[:, D - 1:]], axis=1)
    diff_cat = jnp.concatenate([x2 - x1, x3 - x2, x4 - x3, x5 - x4], axis=2)
    diff_cat = diff_cat.reshape(N * D, 4 * C, H, W)
    x3r = x3.reshape(N * D, C, H, W)

    # NCHW -> NHWC layout glue for the kernels
    diff_nhwc = jnp.transpose(diff_cat, (0, 2, 3, 1))
    x3_nhwc = jnp.transpose(x3r, (0, 2, 3, 1))

    # fused stem11 + stem12 (+ fusion 1): emits stem21's input and x_diff
    x_p1_in, x_diff = _stem1_pair(x3_nhwc, diff_nhwc,
                                  params["stem11"], params["stem12"],
                                  apha, belta)
    # fused stem21 + stem22 + final alpha/beta add
    out_nhwc = _stem2_pair(x_p1_in, x_diff,
                           params["stem21"], params["stem22"], apha, belta)

    # back to NCHW to match the PyTorch module output
    return jnp.transpose(out_nhwc, (0, 3, 1, 2))


# ----------------------------------------------------------------------------
# Pure-JAX f32 reference (mirrors the PyTorch forward, BN in inference form)
# ----------------------------------------------------------------------------
def _ref_stem(x_nchw, p, stride):
    y = jax.lax.conv_general_dilated(
        x_nchw, p["w"], (stride, stride), [(3, 3), (3, 3)],
        dimension_numbers=("NCHW", "OIHW", "NCHW"))
    y = y + p["b"][None, :, None, None]
    eps = 1e-5
    y = (p["gamma"][None, :, None, None]
         * (y - p["mean"][None, :, None, None])
         / jnp.sqrt(p["var"][None, :, None, None] + eps)
         + p["beta"][None, :, None, None])
    y = jnp.maximum(y, 0.0)
    y = jax.lax.reduce_window(y, -jnp.inf, jax.lax.max,
                              (1, 1, 2, 2), (1, 1, 2, 2), "VALID")
    return y


def reference_forward(x, params, apha=0.5, belta=0.5):
    N, D, C, H, W = x.shape
    x1 = jnp.concatenate([x[:, :1], x[:, :1], x[:, :D - 2]], axis=1)
    x2 = jnp.concatenate([x[:, :1], x[:, :D - 1]], axis=1)
    x3 = x
    x4 = jnp.concatenate([x[:, 1:], x[:, D - 1:]], axis=1)
    x5 = jnp.concatenate([x[:, 2:], x[:, D - 1:], x[:, D - 1:]], axis=1)
    diff_cat = jnp.concatenate([x2 - x1, x3 - x2, x4 - x3, x5 - x4], axis=2)
    diff_cat = diff_cat.reshape(N * D, 4 * C, H, W)
    x3r = x3.reshape(N * D, C, H, W)
    x_diff = _ref_stem(diff_cat, params["stem12"], 2)
    x_path0 = _ref_stem(x3r, params["stem11"], 2)
    x_path1 = _ref_stem(apha * x_path0 + belta * x_diff, params["stem21"], 1)
    x_path2 = _ref_stem(x_diff, params["stem22"], 1)
    return apha * x_path1 + belta * x_path2


# ----------------------------------------------------------------------------
# Deterministic synthetic parameters (BN uses running-stats inference form)
# ----------------------------------------------------------------------------
def init_conv_bn(key, cout, cin, k=7):
    k1, k2, k3, k4, k5, k6 = jax.random.split(key, 6)
    fan_in = cin * k * k
    return dict(
        w=jax.random.normal(k1, (cout, cin, k, k), jnp.float32) / math.sqrt(fan_in),
        b=0.1 * jax.random.normal(k2, (cout,), jnp.float32),
        gamma=1.0 + 0.1 * jax.random.normal(k3, (cout,), jnp.float32),
        beta=0.1 * jax.random.normal(k4, (cout,), jnp.float32),
        mean=0.1 * jax.random.normal(k5, (cout,), jnp.float32),
        var=0.5 + 0.1 * jnp.abs(jax.random.normal(k6, (cout,), jnp.float32)),
    )


if __name__ == "__main__":
    key = jax.random.PRNGKey(0)
    kx, k11, k12, k21, k22 = jax.random.split(key, 5)
    dim = 24
    params = {
        "stem11": init_conv_bn(k11, dim // 2, 3),
        "stem12": init_conv_bn(k12, dim // 2, 12),
        "stem21": init_conv_bn(k21, dim, dim // 2),
        "stem22": init_conv_bn(k22, dim, dim // 2),
    }

    # small shapes consistent with the module: (N, D, C, H, W)
    x = jax.random.normal(kx, (2, 4, 3, 16, 16), jnp.float32)

    fwd = jax.jit(cafusion_stem_forward)
    out = jax.block_until_ready(fwd(x, params))
    assert out.shape == (8, dim, 2, 2), out.shape

    ref = reference_forward(x, params, apha=0.5, belta=0.5)
    # bf16 inputs/weights with f32 accumulation through two stacked conv
    # blocks -> loosened tolerance vs the all-f32 reference.
    np.testing.assert_allclose(np.asarray(out), np.asarray(ref),
                               rtol=5e-2, atol=5e-2)

    print("KERNEL_OK")
</pallas_src>

<mosaic_0001>
module attributes {stable_mosaic.version = 11 : i64} {
  func.func @_stem1_kernel(%arg0: i32, %arg1: memref<4x192x21xbf16, #tpu.memory_space<vmem>>, %arg2: memref<4x192x84xbf16, #tpu.memory_space<vmem>>, %arg3: memref<147x12xbf16, #tpu.memory_space<vmem>>, %arg4: memref<1x12xf32, #tpu.memory_space<vmem>>, %arg5: memref<588x12xbf16, #tpu.memory_space<vmem>>, %arg6: memref<1x12xf32, #tpu.memory_space<vmem>>, %arg7: memref<4x16x12xbf16, #tpu.memory_space<vmem>>, %arg8: memref<4x16x12xbf16, #tpu.memory_space<vmem>>) attributes {dimension_semantics = [#tpu.dimension_semantics<parallel>], iteration_bounds = array<i64: 2>, scalar_prefetch = 0 : i64, scratch_operands = 0 : i64, tpu.core_type = #tpu.core_type<tc>, window_params = [{transform_indices = @transform_0, window_bounds = array<i64: 4, 192, 21>}, {transform_indices = @transform_1, window_bounds = array<i64: 4, 192, 84>}, {pipeline_mode = #tpu.pipeline_mode<synchronous>, transform_indices = @transform_2, window_bounds = array<i64: 147, 12>}, {pipeline_mode = #tpu.pipeline_mode<synchronous>, transform_indices = @transform_3, window_bounds = array<i64: 1, 12>}, {pipeline_mode = #tpu.pipeline_mode<synchronous>, transform_indices = @transform_4, window_bounds = array<i64: 588, 12>}, {pipeline_mode = #tpu.pipeline_mode<synchronous>, transform_indices = @transform_5, window_bounds = array<i64: 1, 12>}, {transform_indices = @transform_6, window_bounds = array<i64: 4, 16, 12>}, {transform_indices = @transform_7, window_bounds = array<i64: 4, 16, 12>}]} {
    %c0 = arith.constant 0 : index
    %c0_0 = arith.constant 0 : index
    %0 = vector.load %arg3[%c0, %c0_0] : memref<147x12xbf16, #tpu.memory_space<vmem>>, vector<147x12xbf16>
    %c0_1 = arith.constant 0 : index
    %c0_2 = arith.constant 0 : index
    %c0_3 = arith.constant 0 : index
    %1 = vector.load %arg1[%c0_1, %c0_2, %c0_3] : memref<4x192x21xbf16, #tpu.memory_space<vmem>>, vector<1x16x21xbf16>
    %2 = vector.shape_cast %1 : vector<1x16x21xbf16> to vector<16x21xbf16>
    %c0_4 = arith.constant 0 : index
    %c48 = arith.constant 48 : index
    %c0_5 = arith.constant 0 : index
    %3 = vector.load %arg1[%c0_4, %c48, %c0_5] : memref<4x192x21xbf16, #tpu.memory_space<vmem>>, vector<1x16x21xbf16>
    %4 = vector.shape_cast %3 : vector<1x16x21xbf16> to vector<16x21xbf16>
    %c0_6 = arith.constant 0 : index
    %c96 = arith.constant 96 : index
    %c0_7 = arith.constant 0 : index
    %5 = vector.load %arg1[%c0_6, %c96, %c0_7] : memref<4x192x21xbf16, #tpu.memory_space<vmem>>, vector<1x16x21xbf16>
    %6 = vector.shape_cast %5 : vector<1x16x21xbf16> to vector<16x21xbf16>
    %c0_8 = arith.constant 0 : index
    %c144 = arith.constant 144 : index
    %c0_9 = arith.constant 0 : index
    %7 = vector.load %arg1[%c0_8, %c144, %c0_9] : memref<4x192x21xbf16, #tpu.memory_space<vmem>>, vector<1x16x21xbf16>
    %8 = vector.shape_cast %7 : vector<1x16x21xbf16> to vector<16x21xbf16>
    %c0_10 = arith.constant 0 : index
    %c4 = arith.constant 4 : index
    %c0_11 = arith.constant 0 : index
    %9 = vector.load %arg1[%c0_10, %c4, %c0_11] : memref<4x192x21xbf16, #tpu.memory_space<vmem>>, vector<1x16x21xbf16>
    %10 = vector.shape_cast %9 : vector<1x16x21xbf16> to vector<16x21xbf16>
    %c0_12 = arith.constant 0 : index
    %c52 = arith.constant 52 : index
    %c0_13 = arith.constant 0 : index
    %11 = vector.load %arg1[%c0_12, %c52, %c0_13] : memref<4x192x21xbf16, #tpu.memory_space<vmem>>, vector<1x16x21xbf16>
    %12 = vector.shape_cast %11 : vector<1x16x21xbf16> to vector<16x21xbf16>
    %c0_14 = arith.constant 0 : index
    %c100 = arith.constant 100 : index
    %c0_15 = arith.constant 0 : index
    %13 = vector.load %arg1[%c0_14, %c100, %c0_15] : memref<4x192x21xbf16, #tpu.memory_space<vmem>>, vector<1x16x21xbf16>
    %14 = vector.shape_cast %13 : vector<1x16x21xbf16> to vector<16x21xbf16>
    %15 = tpu.concatenate %2, %4, %6, %8, %10, %12, %14 in 1 : vector<16x21xbf16>, vector<16x21xbf16>, vector<16x21xbf16>, vector<16x21xbf16>, vector<16x21xbf16>, vector<16x21xbf16>, vector<16x21xbf16> -> vector<16x147xbf16>
    %c1 = arith.constant 1 : index
    %c0_16 = arith.constant 0 : index
    %c0_17 = arith.constant 0 : index
    %16 = vector.load %arg1[%c1, %c0_16, %c0_17] : memref<4x192x21xbf16, #tpu.memory_space<vmem>>, vector<1x16x21xbf16>
    %17 = vector.shape_cast %16 : vector<1x16x21xbf16> to vector<16x21xbf16>
    %c1_18 = arith.constant 1 : index
    %c48_19 = arith.constant 48 : index
    %c0_20 = arith.constant 0 : index
    %18 = vector.load %arg1[%c1_18, %c48_19, %c0_20] : memref<4x192x21xbf16, #tpu.memory_space<vmem>>, vector<1x16x21xbf16>
    %19 = vector.shape_cast %18 : vector<1x16x21xbf16> to vector<16x21xbf16>
    %c1_21 = arith.constant 1 : index
    %c96_22 = arith.constant 96 : index
    %c0_23 = arith.constant 0 : index
    %20 = vector.load %arg1[%c1_21, %c96_22, %c0_23] : memref<4x192x21xbf16, #tpu.memory_space<vmem>>, vector<1x16x21xbf16>
    %21 = vector.shape_cast %20 : vector<1x16x21xbf16> to vector<16x21xbf16>
    %c1_24 = arith.constant 1 : index
    %c144_25 = arith.constant 144 : index
    %c0_26 = arith.constant 0 : index
    %22 = vector.load %arg1[%c1_24, %c144_25, %c0_26] : memref<4x192x21xbf16, #tpu.memory_space<vmem>>, vector<1x16x21xbf16>
    %23 = vector.shape_cast %22 : vector<1x16x21xbf16> to vector<16x21xbf16>
    %c1_27 = arith.constant 1 : index
    %c4_28 = arith.constant 4 : index
    %c0_29 = arith.constant 0 : index
    %24 = vector.load %arg1[%c1_27, %c4_28, %c0_29] : memref<4x192x21xbf16, #tpu.memory_space<vmem>>, vector<1x16x21xbf16>
    %25 = vector.shape_cast %24 : vector<1x16x21xbf16> to vector<16x21xbf16>
    %c1_30 = arith.constant 1 : index
    %c52_31 = arith.constant 52 : index
    %c0_32 = arith.constant 0 : index
    %26 = vector.load %arg1[%c1_30, %c52_31, %c0_32] : memref<4x192x21xbf16, #tpu.memory_space<vmem>>, vector<1x16x21xbf16>
    %27 = vector.shape_cast %26 : vector<1x16x21xbf16> to vector<16x21xbf16>
    %c1_33 = arith.constant 1 : index
    %c100_34 = arith.constant 100 : index
    %c0_35 = arith.constant 0 : index
    %28 = vector.load %arg1[%c1_33, %c100_34, %c0_35] : memref<4x192x21xbf16, #tpu.memory_space<vmem>>, vector<1x16x21xbf16>
    %29 = vector.shape_cast %28 : vector<1x16x21xbf16> to vector<16x21xbf16>
    %30 = tpu.concatenate %17, %19, %21, %23, %25, %27, %29 in 1 : vector<16x21xbf16>, vector<16x21xbf16>, vector<16x21xbf16>, vector<16x21xbf16>, vector<16x21xbf16>, vector<16x21xbf16>, vector<16x21xbf16> -> vector<16x147xbf16>
    %c2 = arith.constant 2 : index
    %c0_36 = arith.constant 0 : index
    %c0_37 = arith.constant 0 : index
    %31 = vector.load %arg1[%c2, %c0_36, %c0_37] : memref<4x192x21xbf16, #tpu.memory_space<vmem>>, vector<1x16x21xbf16>
    %32 = vector.shape_cast %31 : vector<1x16x21xbf16> to vector<16x21xbf16>
    %c2_38 = arith.constant 2 : index
    %c48_39 = arith.constant 48 : index
    %c0_40 = arith.constant 0 : index
    %33 = vector.load %arg1[%c2_38, %c48_39, %c0_40] : memref<4x192x21xbf16, #tpu.memory_space<vmem>>, vector<1x16x21xbf16>
    %34 = vector.shape_cast %33 : vector<1x16x21xbf16> to vector<16x21xbf16>
    %c2_41 = arith.constant 2 : index
    %c96_42 = arith.constant 96 : index
    %c0_43 = arith.constant 0 : index
    %35 = vector.load %arg1[%c2_41, %c96_42, %c0_43] : memref<4x192x21xbf16, #tpu.memory_space<vmem>>, vector<1x16x21xbf16>
    %36 = vector.shape_cast %35 : vector<1x16x21xbf16> to vector<16x21xbf16>
    %c2_44 = arith.constant 2 : index
    %c144_45 = arith.constant 144 : index
    %c0_46 = arith.constant 0 : index
    %37 = vector.load %arg1[%c2_44, %c144_45, %c0_46] : memref<4x192x21xbf16, #tpu.memory_space<vmem>>, vector<1x16x21xbf16>
    %38 = vector.shape_cast %37 : vector<1x16x21xbf16> to vector<16x21xbf16>
    %c2_47 = arith.constant 2 : index
    %c4_48 = arith.constant 4 : index
    %c0_49 = arith.constant 0 : index
    %39 = vector.load %arg1[%c2_47, %c4_48, %c0_49] : memref<4x192x21xbf16, #tpu.memory_space<vmem>>, vector<1x16x21xbf16>
    %40 = vector.shape_cast %39 : vector<1x16x21xbf16> to vector<16x21xbf16>
    %c2_50 = arith.constant 2 : index
    %c52_51 = arith.constant 52 : index
    %c0_52 = arith.constant 0 : index
    %41 = vector.load %arg1[%c2_50, %c52_51, %c0_52] : memref<4x192x21xbf16, #tpu.memory_space<vmem>>, vector<1x16x21xbf16>
    %42 = vector.shape_cast %41 : vector<1x16x21xbf16> to vector<16x21xbf16>
    %c2_53 = arith.constant 2 : index
    %c100_54 = arith.constant 100 : index
    %c0_55 = arith.constant 0 : index
    %43 = vector.load %arg1[%c2_53, %c100_54, %c0_55] : memref<4x192x21xbf16, #tpu.memory_space<vmem>>, vector<1x16x21xbf16>
    %44 = vector.shape_cast %43 : vector<1x16x21xbf16> to vector<16x21xbf16>
    %45 = tpu.concatenate %32, %34, %36, %38, %40, %42, %44 in 1 : vector<16x21xbf16>, vector<16x21xbf16>, vector<16x21xbf16>, vector<16x21xbf16>, vector<16x21xbf16>, vector<16x21xbf16>, vector<16x21xbf16> -> vector<16x147xbf16>
    %c3 = arith.constant 3 : index
    %c0_56 = arith.constant 0 : index
    %c0_57 = arith.constant 0 : index
    %46 = vector.load %arg1[%c3, %c0_56, %c0_57] : memref<4x192x21xbf16, #tpu.memory_space<vmem>>, vector<1x16x21xbf16>
    %47 = vector.shape_cast %46 : vector<1x16x21xbf16> to vector<16x21xbf16>
    %c3_58 = arith.constant 3 : index
    %c48_59 = arith.constant 48 : index
    %c0_60 = arith.constant 0 : index
    %48 = vector.load %arg1[%c3_58, %c48_59, %c0_60] : memref<4x192x21xbf16, #tpu.memory_space<vmem>>, vector<1x16x21xbf16>
    %49 = vector.shape_cast %48 : vector<1x16x21xbf16> to vector<16x21xbf16>
    %c3_61 = arith.constant 3 : index
    %c96_62 = arith.constant 96 : index
    %c0_63 = arith.constant 0 : index
    %50 = vector.load %arg1[%c3_61, %c96_62, %c0_63] : memref<4x192x21xbf16, #tpu.memory_space<vmem>>, vector<1x16x21xbf16>
    %51 = vector.shape_cast %50 : vector<1x16x21xbf16> to vector<16x21xbf16>
    %c3_64 = arith.constant 3 : index
    %c144_65 = arith.constant 144 : index
    %c0_66 = arith.constant 0 : index
    %52 = vector.load %arg1[%c3_64, %c144_65, %c0_66] : memref<4x192x21xbf16, #tpu.memory_space<vmem>>, vector<1x16x21xbf16>
    %53 = vector.shape_cast %52 : vector<1x16x21xbf16> to vector<16x21xbf16>
    %c3_67 = arith.constant 3 : index
    %c4_68 = arith.constant 4 : index
    %c0_69 = arith.constant 0 : index
    %54 = vector.load %arg1[%c3_67, %c4_68, %c0_69] : memref<4x192x21xbf16, #tpu.memory_space<vmem>>, vector<1x16x21xbf16>
    %55 = vector.shape_cast %54 : vector<1x16x21xbf16> to vector<16x21xbf16>
    %c3_70 = arith.constant 3 : index
    %c52_71 = arith.constant 52 : index
    %c0_72 = arith.constant 0 : index
    %56 = vector.load %arg1[%c3_70, %c52_71, %c0_72] : memref<4x192x21xbf16, #tpu.memory_space<vmem>>, vector<1x16x21xbf16>
    %57 = vector.shape_cast %56 : vector<1x16x21xbf16> to vector<16x21xbf16>
    %c3_73 = arith.constant 3 : index
    %c100_74 = arith.constant 100 : index
    %c0_75 = arith.constant 0 : index
    %58 = vector.load %arg1[%c3_73, %c100_74, %c0_75] : memref<4x192x21xbf16, #tpu.memory_space<vmem>>, vector<1x16x21xbf16>
    %59 = vector.shape_cast %58 : vector<1x16x21xbf16> to vector<16x21xbf16>
    %60 = tpu.concatenate %47, %49, %51, %53, %55, %57, %59 in 1 : vector<16x21xbf16>, vector<16x21xbf16>, vector<16x21xbf16>, vector<16x21xbf16>, vector<16x21xbf16>, vector<16x21xbf16>, vector<16x21xbf16> -> vector<16x147xbf16>
    %c0_76 = arith.constant 0 : index
    %c24 = arith.constant 24 : index
    %c0_77 = arith.constant 0 : index
    %61 = vector.load %arg1[%c0_76, %c24, %c0_77] : memref<4x192x21xbf16, #tpu.memory_space<vmem>>, vector<1x16x21xbf16>
    %62 = vector.shape_cast %61 : vector<1x16x21xbf16> to vector<16x21xbf16>
    %c0_78 = arith.constant 0 : index
    %c72 = arith.constant 72 : index
    %c0_79 = arith.constant 0 : index
    %63 = vector.load %arg1[%c0_78, %c72, %c0_79] : memref<4x192x21xbf16, #tpu.memory_space<vmem>>, vector<1x16x21xbf16>
    %64 = vector.shape_cast %63 : vector<1x16x21xbf16> to vector<16x21xbf16>
    %c0_80 = arith.constant 0 : index
    %c120 = arith.constant 120 : index
    %c0_81 = arith.constant 0 : index
    %65 = vector.load %arg1[%c0_80, %c120, %c0_81] : memref<4x192x21xbf16, #tpu.memory_space<vmem>>, vector<1x16x21xbf16>
    %66 = vector.shape_cast %65 : vector<1x16x21xbf16> to vector<16x21xbf16>
    %c0_82 = arith.constant 0 : index
    %c168 = arith.constant 168 : index
    %c0_83 = arith.constant 0 : index
    %67 = vector.load %arg1[%c0_82, %c168, %c0_83] : memref<4x192x21xbf16, #tpu.memory_space<vmem>>, vector<1x16x21xbf16>
    %68 = vector.shape_cast %67 : vector<1x16x21xbf16> to vector<16x21xbf16>
    %c0_84 = arith.constant 0 : index
    %c28 = arith.constant 28 : index
    %c0_85 = arith.constant 0 : index
    %69 = vector.load %arg1[%c0_84, %c28, %c0_85] : memref<4x192x21xbf16, #tpu.memory_space<vmem>>, vector<1x16x21xbf16>
    %70 = vector.shape_cast %69 : vector<1x16x21xbf16> to vector<16x21xbf16>
    %c0_86 = arith.constant 0 : index
    %c76 = arith.constant 76 : index
    %c0_87 = arith.constant 0 : index
    %71 = vector.load %arg1[%c0_86, %c76, %c0_87] : memref<4x192x21xbf16, #tpu.memory_space<vmem>>, vector<1x16x21xbf16>
    %72 = vector.shape_cast %71 : vector<1x16x21xbf16> to vector<16x21xbf16>
    %c0_88 = arith.constant 0 : index
    %c124 = arith.constant 124 : index
    %c0_89 = arith.constant 0 : index
    %73 = vector.load %arg1[%c0_88, %c124, %c0_89] : memref<4x192x21xbf16, #tpu.memory_space<vmem>>, vector<1x16x21xbf16>
    %74 = vector.shape_cast %73 : vector<1x16x21xbf16> to vector<16x21xbf16>
    %75 = tpu.concatenate %62, %64, %66, %68, %70, %72, %74 in 1 : vector<16x21xbf16>, vector<16x21xbf16>, vector<16x21xbf16>, vector<16x21xbf16>, vector<16x21xbf16>, vector<16x21xbf16>, vector<16x21xbf16> -> vector<16x147xbf16>
    %c1_90 = arith.constant 1 : index
    %c24_91 = arith.constant 24 : index
    %c0_92 = arith.constant 0 : index
    %76 = vector.load %arg1[%c1_90, %c24_91, %c0_92] : memref<4x192x21xbf16, #tpu.memory_space<vmem>>, vector<1x16x21xbf16>
    %77 = vector.shape_cast %76 : vector<1x16x21xbf16> to vector<16x21xbf16>
    %c1_93 = arith.constant 1 : index
    %c72_94 = arith.constant 72 : index
    %c0_95 = arith.constant 0 : index
    %78 = vector.load %arg1[%c1_93, %c72_94, %c0_95] : memref<4x192x21xbf16, #tpu.memory_space<vmem>>, vector<1x16x21xbf16>
    %79 = vector.shape_cast %78 : vector<1x16x21xbf16> to vector<16x21xbf16>
    %c1_96 = arith.constant 1 : index
    %c120_97 = arith.constant 120 : index
    %c0_98 = arith.constant 0 : index
    %80 = vector.load %arg1[%c1_96, %c120_97, %c0_98] : memref<4x192x21xbf16, #tpu.memory_space<vmem>>, vector<1x16x21xbf16>
    %81 = vector.shape_cast %80 : vector<1x16x21xbf16> to vector<16x21xbf16>
    %c1_99 = arith.constant 1 : index
    %c168_100 = arith.constant 168 : index
    %c0_101 = arith.constant 0 : index
    %82 = vector.load %arg1[%c1_99, %c168_100, %c0_101] : memref<4x192x21xbf16, #tpu.memory_space<vmem>>, vector<1x16x21xbf16>
    %83 = vector.shape_cast %82 : vector<1x16x21xbf16> to vector<16x21xbf16>
    %c1_102 = arith.constant 1 : index
    %c28_103 = arith.constant 28 : index
    %c0_104 = arith.constant 0 : index
    %84 = vector.load %arg1[%c1_102, %c28_103, %c0_104] : memref<4x192x21xbf16, #tpu.memory_space<vmem>>, vector<1x16x21xbf16>
    %85 = vector.shape_cast %84 : vector<1x16x21xbf16> to vector<16x21xbf16>
    %c1_105 = arith.constant 1 : index
    %c76_106 = arith.constant 76 : index
    %c0_107 = arith.constant 0 : index
    %86 = vector.load %arg1[%c1_105, %c76_106, %c0_107] : memref<4x192x21xbf16, #tpu.memory_space<vmem>>, vector<1x16x21xbf16>
    %87 = vector.shape_cast %86 : vector<1x16x21xbf16> to vector<16x21xbf16>
    %c1_108 = arith.constant 1 : index
    %c124_109 = arith.constant 124 : index
    %c0_110 = arith.constant 0 : index
    %88 = vector.load %arg1[%c1_108, %c124_109, %c0_110] : memref<4x192x21xbf16, #tpu.memory_space<vmem>>, vector<1x16x21xbf16>
    %89 = vector.shape_cast %88 : vector<1x16x21xbf16> to vector<16x21xbf16>
    %90 = tpu.concatenate %77, %79, %81, %83, %85, %87, %89 in 1 : vector<16x21xbf16>, vector<16x21xbf16>, vector<16x21xbf16>, vector<16x21xbf16>, vector<16x21xbf16>, vector<16x21xbf16>, vector<16x21xbf16> -> vector<16x147xbf16>
    %c2_111 = arith.constant 2 : index
    %c24_112 = arith.constant 24 : index
    %c0_113 = arith.constant 0 : index
    %91 = vector.load %arg1[%c2_111, %c24_112, %c0_113] : memref<4x192x21xbf16, #tpu.memory_space<vmem>>, vector<1x16x21xbf16>
    %92 = vector.shape_cast %91 : vector<1x16x21xbf16> to vector<16x21xbf16>
    %c2_114 = arith.constant 2 : index
    %c72_115 = arith.constant 72 : index
    %c0_116 = arith.constant 0 : index
    %93 = vector.load %arg1[%c2_114, %c72_115, %c0_116] : memref<4x192x21xbf16, #tpu.memory_space<vmem>>, vector<1x16x21xbf16>
    %94 = vector.shape_cast %93 : vector<1x16x21xbf16> to vector<16x21xbf16>
    %c2_117 = arith.constant 2 : index
    %c120_118 = arith.constant 120 : index
    %c0_119 = arith.constant 0 : index
    %95 = vector.load %arg1[%c2_117, %c120_118, %c0_119] : memref<4x192x21xbf16, #tpu.memory_space<vmem>>, vector<1x16x21xbf16>
    %96 = vector.shape_cast %95 : vector<1x16x21xbf16> to vector<16x21xbf16>
    %c2_120 = arith.constant 2 : index
    %c168_121 = arith.constant 168 : index
    %c0_122 = arith.constant 0 : index
    %97 = vector.load %arg1[%c2_120, %c168_121, %c0_122] : memref<4x192x21xbf16, #tpu.memory_space<vmem>>, vector<1x16x21xbf16>
    %98 = vector.shape_cast %97 : vector<1x16x21xbf16> to vector<16x21xbf16>
    %c2_123 = arith.constant 2 : index
    %c28_124 = arith.constant 28 : index
    %c0_125 = arith.constant 0 : index
    %99 = vector.load %arg1[%c2_123, %c28_124, %c0_125] : memref<4x192x21xbf16, #tpu.memory_space<vmem>>, vector<1x16x21xbf16>
    %100 = vector.shape_cast %99 : vector<1x16x21xbf16> to vector<16x21xbf16>
    %c2_126 = arith.constant 2 : index
    %c76_127 = arith.constant 76 : index
    %c0_128 = arith.constant 0 : index
    %101 = vector.load %arg1[%c2_126, %c76_127, %c0_128] : memref<4x192x21xbf16, #tpu.memory_space<vmem>>, vector<1x16x21xbf16>
    %102 = vector.shape_cast %101 : vector<1x16x21xbf16> to vector<16x21xbf16>
    %c2_129 = arith.constant 2 : index
    %c124_130 = arith.constant 124 : index
    %c0_131 = arith.constant 0 : index
    %103 = vector.load %arg1[%c2_129, %c124_130, %c0_131] : memref<4x192x21xbf16, #tpu.memory_space<vmem>>, vector<1x16x21xbf16>
    %104 = vector.shape_cast %103 : vector<1x16x21xbf16> to vector<16x21xbf16>
    %105 = tpu.concatenate %92, %94, %96, %98, %100, %102, %104 in 1 : vector<16x21xbf16>, vector<16x21xbf16>, vector<16x21xbf16>, vector<16x21xbf16>, vector<16x21xbf16>, vector<16x21xbf16>, vector<16x21xbf16> -> vector<16x147xbf16>
    %c3_132 = arith.constant 3 : index
    %c24_133 = arith.constant 24 : index
    %c0_134 = arith.constant 0 : index
    %106 = vector.load %arg1[%c3_132, %c24_133, %c0_134] : memref<4x192x21xbf16, #tpu.memory_space<vmem>>, vector<1x16x21xbf16>
    %107 = vector.shape_cast %106 : vector<1x16x21xbf16> to vector<16x21xbf16>
    %c3_135 = arith.constant 3 : index
    %c72_136 = arith.constant 72 : index
    %c0_137 = arith.constant 0 : index
    %108 = vector.load %arg1[%c3_135, %c72_136, %c0_137] : memref<4x192x21xbf16, #tpu.memory_space<vmem>>, vector<1x16x21xbf16>
    %109 = vector.shape_cast %108 : vector<1x16x21xbf16> to vector<16x21xbf16>
    %c3_138 = arith.constant 3 : index
    %c120_139 = arith.constant 120 : index
    %c0_140 = arith.constant 0 : index
    %110 = vector.load %arg1[%c3_138, %c120_139, %c0_140] : memref<4x192x21xbf16, #tpu.memory_space<vmem>>, vector<1x16x21xbf16>
    %111 = vector.shape_cast %110 : vector<1x16x21xbf16> to vector<16x21xbf16>
    %c3_141 = arith.constant 3 : index
    %c168_142 = arith.constant 168 : index
    %c0_143 = arith.constant 0 : index
    %112 = vector.load %arg1[%c3_141, %c168_142, %c0_143] : memref<4x192x21xbf16, #tpu.memory_space<vmem>>, vector<1x16x21xbf16>
    %113 = vector.shape_cast %112 : vector<1x16x21xbf16> to vector<16x21xbf16>
    %c3_144 = arith.constant 3 : index
    %c28_145 = arith.constant 28 : index
    %c0_146 = arith.constant 0 : index
    %114 = vector.load %arg1[%c3_144, %c28_145, %c0_146] : memref<4x192x21xbf16, #tpu.memory_space<vmem>>, vector<1x16x21xbf16>
    %115 = vector.shape_cast %114 : vector<1x16x21xbf16> to vector<16x21xbf16>
    %c3_147 = arith.constant 3 : index
    %c76_148 = arith.constant 76 : index
    %c0_149 = arith.constant 0 : index
    %116 = vector.load %arg1[%c3_147, %c76_148, %c0_149] : memref<4x192x21xbf16, #tpu.memory_space<vmem>>, vector<1x16x21xbf16>
    %117 = vector.shape_cast %116 : vector<1x16x21xbf16> to vector<16x21xbf16>
    %c3_150 = arith.constant 3 : index
    %c124_151 = arith.constant 124 : index
    %c0_152 = arith.constant 0 : index
    %118 = vector.load %arg1[%c3_150, %c124_151, %c0_152] : memref<4x192x21xbf16, #tpu.memory_space<vmem>>, vector<1x16x21xbf16>
    %119 = vector.shape_cast %118 : vector<1x16x21xbf16> to vector<16x21xbf16>
    %120 = tpu.concatenate %107, %109, %111, %113, %115, %117, %119 in 1 : vector<16x21xbf16>, vector<16x21xbf16>, vector<16x21xbf16>, vector<16x21xbf16>, vector<16x21xbf16>, vector<16x21xbf16>, vector<16x21xbf16> -> vector<16x147xbf16>
    %c0_153 = arith.constant 0 : index
    %c148 = arith.constant 148 : index
    %c0_154 = arith.constant 0 : index
    %121 = vector.load %arg1[%c0_153, %c148, %c0_154] : memref<4x192x21xbf16, #tpu.memory_space<vmem>>, vector<1x16x21xbf16>
    %122 = vector.shape_cast %121 : vector<1x16x21xbf16> to vector<16x21xbf16>
    %c0_155 = arith.constant 0 : index
    %c8 = arith.constant 8 : index
    %c0_156 = arith.constant 0 : index
    %123 = vector.load %arg1[%c0_155, %c8, %c0_156] : memref<4x192x21xbf16, #tpu.memory_space<vmem>>, vector<1x16x21xbf16>
    %124 = vector.shape_cast %123 : vector<1x16x21xbf16> to vector<16x21xbf16>
    %125 = tpu.concatenate %6, %8, %10, %12, %14, %122, %124 in 1 : vector<16x21xbf16>, vector<16x21xbf16>, vector<16x21xbf16>, vector<16x21xbf16>, vector<16x21xbf16>, vector<16x21xbf16>, vector<16x21xbf16> -> vector<16x147xbf16>
    %c1_157 = arith.constant 1 : index
    %c148_158 = arith.constant 148 : index
    %c0_159 = arith.constant 0 : index
    %126 = vector.load %arg1[%c1_157, %c148_158, %c0_159] : memref<4x192x21xbf16, #tpu.memory_space<vmem>>, vector<1x16x21xbf16>
    %127 = vector.shape_cast %126 : vector<1x16x21xbf16> to vector<16x21xbf16>
    %c1_160 = arith.constant 1 : index
    %c8_161 = arith.constant 8 : index
    %c0_162 = arith.constant 0 : index
    %128 = vector.load %arg1[%c1_160, %c8_161, %c0_162] : memref<4x192x21xbf16, #tpu.memory_space<vmem>>, vector<1x16x21xbf16>
    %129 = vector.shape_cast %128 : vector<1x16x21xbf16> to vector<16x21xbf16>
    %130 = tpu.concatenate %21, %23, %25, %27, %29, %127, %129 in 1 : vector<16x21xbf16>, vector<16x21xbf16>, vector<16x21xbf16>, vector<16x21xbf16>, vector<16x21xbf16>, vector<16x21xbf16>, vector<16x21xbf16> -> vector<16x147xbf16>
    %c2_163 = arith.constant 2 : index
    %c148_164 = arith.constant 148 : index
    %c0_165 = arith.constant 0 : index
    %131 = vector.load %arg1[%c2_163, %c148_164, %c0_165] : memref<4x192x21xbf16, #tpu.memory_space<vmem>>, vector<1x16x21xbf16>
    %132 = vector.shape_cast %131 : vector<1x16x21xbf16> to vector<16x21xbf16>
    %c2_166 = arith.constant 2 : index
    %c8_167 = arith.constant 8 : index
    %c0_168 = arith.constant 0 : index
    %133 = vector.load %arg1[%c2_166, %c8_167, %c0_168] : memref<4x192x21xbf16, #tpu.memory_space<vmem>>, vector<1x16x21xbf16>
    %134 = vector.shape_cast %133 : vector<1x16x21xbf16> to vector<16x21xbf16>
    %135 = tpu.concatenate %36, %38, %40, %42, %44, %132, %134 in 1 : vector<16x21xbf16>, vector<16x21xbf16>, vector<16x21xbf16>, vector<16x21xbf16>, vector<16x21xbf16>, vector<16x21xbf16>, vector<16x21xbf16> -> vector<16x147xbf16>
    %c3_169 = arith.constant 3 : index
    %c148_170 = arith.constant 148 : index
    %c0_171 = arith.constant 0 : index
    %136 = vector.load %arg1[%c3_169, %c148_170, %c0_171] : memref<4x192x21xbf16, #tpu.memory_space<vmem>>, vector<1x16x21xbf16>
    %137 = vector.shape_cast %136 : vector<1x16x21xbf16> to vector<16x21xbf16>
    %c3_172 = arith.constant 3 : index
    %c8_173 = arith.constant 8 : index
    %c0_174 = arith.constant 0 : index
    %138 = vector.load %arg1[%c3_172, %c8_173, %c0_174] : memref<4x192x21xbf16, #tpu.memory_space<vmem>>, vector<1x16x21xbf16>
    %139 = vector.shape_cast %138 : vector<1x16x21xbf16> to vector<16x21xbf16>
    %140 = tpu.concatenate %51, %53, %55, %57, %59, %137, %139 in 1 : vector<16x21xbf16>, vector<16x21xbf16>, vector<16x21xbf16>, vector<16x21xbf16>, vector<16x21xbf16>, vector<16x21xbf16>, vector<16x21xbf16> -> vector<16x147xbf16>
    %c0_175 = arith.constant 0 : index
    %c172 = arith.constant 172 : index
    %c0_176 = arith.constant 0 : index
    %141 = vector.load %arg1[%c0_175, %c172, %c0_176] : memref<4x192x21xbf16, #tpu.memory_space<vmem>>, vector<1x16x21xbf16>
    %142 = vector.shape_cast %141 : vector<1x16x21xbf16> to vector<16x21xbf16>
    %c0_177 = arith.constant 0 : index
    %c32 = arith.constant 32 : index
    %c0_178 = arith.constant 0 : index
    %143 = vector.load %arg1[%c0_177, %c32, %c0_178] : memref<4x192x21xbf16, #tpu.memory_space<vmem>>, vector<1x16x21xbf16>
    %144 = vector.shape_cast %143 : vector<1x16x21xbf16> to vector<16x21xbf16>
    %145 = tpu.concatenate %66, %68, %70, %72, %74, %142, %144 in 1 : vector<16x21xbf16>, vector<16x21xbf16>, vector<16x21xbf16>, vector<16x21xbf16>, vector<16x21xbf16>, vector<16x21xbf16>, vector<16x21xbf16> -> vector<16x147xbf16>
    %c1_179 = arith.constant 1 : index
    %c172_180 = arith.constant 172 : index
    %c0_181 = arith.constant 0 : index
    %146 = vector.load %arg1[%c1_179, %c172_180, %c0_181] : memref<4x192x21xbf16, #tpu.memory_space<vmem>>, vector<1x16x21xbf16>
    %147 = vector.shape_cast %146 : vector<1x16x21xbf16> to vector<16x21xbf16>
    %c1_182 = arith.constant 1 : index
    %c32_183 = arith.constant 32 : index
    %c0_184 = arith.constant 0 : index
    %148 = vector.load %arg1[%c1_182, %c32_183, %c0_184] : memref<4x192x21xbf16, #tpu.memory_space<vmem>>, vector<1x16x21xbf16>
    %149 = vector.shape_cast %148 : vector<1x16x21xbf16> to vector<16x21xbf16>
    %150 = tpu.concatenate %81, %83, %85, %87, %89, %147, %149 in 1 : vector<16x21xbf16>, vector<16x21xbf16>, vector<16x21xbf16>, vector<16x21xbf16>, vector<16x21xbf16>, vector<16x21xbf16>, vector<16x21xbf16> -> vector<16x147xbf16>
    %c2_185 = arith.constant 2 : index
    %c172_186 = arith.constant 172 : index
    %c0_187 = arith.constant 0 : index
    %151 = vector.load %arg1[%c2_185, %c172_186, %c0_187] : memref<4x192x21xbf16, #tpu.memory_space<vmem>>, vector<1x16x21xbf16>
    %152 = vector.shape_cast %151 : vector<1x16x21xbf16> to vector<16x21xbf16>
    %c2_188 = arith.constant 2 : index
    %c32_189 = arith.constant 32 : index
    %c0_190 = arith.constant 0 : index
    %153 = vector.load %arg1[%c2_188, %c32_189, %c0_190] : memref<4x192x21xbf16, #tpu.memory_space<vmem>>, vector<1x16x21xbf16>
    %154 = vector.shape_cast %153 : vector<1x16x21xbf16> to vector<16x21xbf16>
    %155 = tpu.concatenate %96, %98, %100, %102, %104, %152, %154 in 1 : vector<16x21xbf16>, vector<16x21xbf16>, vector<16x21xbf16>, vector<16x21xbf16>, vector<16x21xbf16>, vector<16x21xbf16>, vector<16x21xbf16> -> vector<16x147xbf16>
    %c3_191 = arith.constant 3 : index
    %c172_192 = arith.constant 172 : index
    %c0_193 = arith.constant 0 : index
    %156 = vector.load %arg1[%c3_191, %c172_192, %c0_193] : memref<4x192x21xbf16, #tpu.memory_space<vmem>>, vector<1x16x21xbf16>
    %157 = vector.shape_cast %156 : vector<1x16x21xbf16> to vector<16x21xbf16>
    %c3_194 = arith.constant 3 : index
    %c32_195 = arith.constant 32 : index
    %c0_196 = arith.constant 0 : index
    %158 = vector.load %arg1[%c3_194, %c32_195, %c0_196] : memref<4x192x21xbf16, #tpu.memory_space<vmem>>, vector<1x16x21xbf16>
    %159 = vector.shape_cast %158 : vector<1x16x21xbf16> to vector<16x21xbf16>
    %160 = tpu.concatenate %111, %113, %115, %117, %119, %157, %159 in 1 : vector<16x21xbf16>, vector<16x21xbf16>, vector<16x21xbf16>, vector<16x21xbf16>, vector<16x21xbf16>, vector<16x21xbf16>, vector<16x21xbf16> -> vector<16x147xbf16>
    %161 = tpu.concatenate %15, %30, %45, %60, %75, %90, %105, %120, %125, %130, %135, %140, %145, %150, %155, %160 in 0 : vector<16x147xbf16>, vector<16x147xbf16>, vector<16x147xbf16>, vector<16x147xbf16>, vector<16x147xbf16>, vector<16x147xbf16>, vector<16x147xbf16>, vector<16x147xbf16>, vector<16x147xbf16>, vector<16x147xbf16>, vector<16x147xbf16>, vector<16x147xbf16>, vector<16x147xbf16>, vector<16x147xbf16>, vector<16x147xbf16>, vector<16x147xbf16> -> vector<256x147xbf16>
    %cst = arith.constant dense<0.000000e+00> : vector<256x12xf32>
    %162 = tpu.matmul %161, %0, %cst {dimension_numbers = #tpu.dot_dimension_numbers<[1], [0], [0], [1], [0, 0, 1, 1], [], []>} : vector<256x147xbf16>, vector<147x12xbf16>, vector<256x12xf32> -> vector<256x12xf32>
    %163 = vector.extract_strided_slice %162 {offsets = [0, 0], sizes = [64, 12], strides = [1, 1]} : vector<256x12xf32> to vector<64x12xf32>
    %164 = vector.extract_strided_slice %162 {offsets = [64, 0], sizes = [64, 12], strides = [1, 1]} : vector<256x12xf32> to vector<64x12xf32>
    %165 = arith.maximumf %163, %164 : vector<64x12xf32>
    %166 = vector.extract_strided_slice %162 {offsets = [128, 0], sizes = [64, 12], strides = [1, 1]} : vector<256x12xf32> to vector<64x12xf32>
    %167 = vector.extract_strided_slice %162 {offsets = [192, 0], sizes = [64, 12], strides = [1, 1]} : vector<256x12xf32> to vector<64x12xf32>
    %168 = arith.maximumf %166, %167 : vector<64x12xf32>
    %169 = arith.maximumf %165, %168 : vector<64x12xf32>
    %c0_197 = arith.constant 0 : index
    %c0_198 = arith.constant 0 : index
    %170 = vector.load %arg4[%c0_197, %c0_198] : memref<1x12xf32, #tpu.memory_space<vmem>>, vector<1x12xf32>
    %171 = vector.broadcast %170 : vector<1x12xf32> to vector<64x12xf32>
    %172 = arith.addf %169, %171 : vector<64x12xf32>
    %cst_199 = arith.constant 0.000000e+00 : f32
    %173 = vector.broadcast %cst_199 : f32 to vector<64x12xf32>
    %174 = arith.maximumf %172, %173 : vector<64x12xf32>
    %c0_200 = arith.constant 0 : index
    %c0_201 = arith.constant 0 : index
    %175 = vector.load %arg5[%c0_200, %c0_201] : memref<588x12xbf16, #tpu.memory_space<vmem>>, vector<588x12xbf16>
    %c0_202 = arith.constant 0 : index
    %c0_203 = arith.constant 0 : index
    %c0_204 = arith.constant 0 : index
    %176 = vector.load %arg2[%c0_202, %c0_203, %c0_204] : memref<4x192x84xbf16, #tpu.memory_space<vmem>>, vector<1x16x84xbf16>
    %177 = vector.shape_cast %176 : vector<1x16x84xbf16> to vector<16x84xbf16>
    %c0_205 = arith.constant 0 : index
    %c48_206 = arith.constant 48 : index
    %c0_207 = arith.constant 0 : index
    %178 = vector.load %arg2[%c0_205, %c48_206, %c0_207] : memref<4x192x84xbf16, #tpu.memory_space<vmem>>, vector<1x16x84xbf16>
    %179 = vector.shape_cast %178 : vector<1x16x84xbf16> to vector<16x84xbf16>
    %c0_208 = arith.constant 0 : index
    %c96_209 = arith.constant 96 : index
    %c0_210 = arith.constant 0 : index
    %180 = vector.load %arg2[%c0_208, %c96_209, %c0_210] : memref<4x192x84xbf16, #tpu.memory_space<vmem>>, vector<1x16x84xbf16>
    %181 = vector.shape_cast %180 : vector<1x16x84xbf16> to vector<16x84xbf16>
    %c0_211 = arith.constant 0 : index
    %c144_212 = arith.constant 144 : index
    %c0_213 = arith.constant 0 : index
    %182 = vector.load %arg2[%c0_211, %c144_212, %c0_213] : memref<4x192x84xbf16, #tpu.memory_space<vmem>>, vector<1x16x84xbf16>
    %183 = vector.shape_cast %182 : vector<1x16x84xbf16> to vector<16x84xbf16>
    %c0_214 = arith.constant 0 : index
    %c4_215 = arith.constant 4 : index
    %c0_216 = arith.constant 0 : index
    %184 = vector.load %arg2[%c0_214, %c4_215, %c0_216] : memref<4x192x84xbf16, #tpu.memory_space<vmem>>, vector<1x16x84xbf16>
    %185 = vector.shape_cast %184 : vector<1x16x84xbf16> to vector<16x84xbf16>
    %c0_217 = arith.constant 0 : index
    %c52_218 = arith.constant 52 : index
    %c0_219 = arith.constant 0 : index
    %186 = vector.load %arg2[%c0_217, %c52_218, %c0_219] : memref<4x192x84xbf16, #tpu.memory_space<vmem>>, vector<1x16x84xbf16>
    %187 = vector.shape_cast %186 : vector<1x16x84xbf16> to vector<16x84xbf16>
    %c0_220 = arith.constant 0 : index
    %c100_221 = arith.constant 100 : index
    %c0_222 = arith.constant 0 : index
    %188 = vector.load %arg2[%c0_220, %c100_221, %c0_222] : memref<4x192x84xbf16, #tpu.memory_space<vmem>>, vector<1x16x84xbf16>
    %189 = vector.shape_cast %188 : vector<1x16x84xbf16> to vector<16x84xbf16>
    %190 = tpu.concatenate %177, %179, %181, %183, %185, %187, %189 in 1 : vector<16x84xbf16>, vector<16x84xbf16>, vector<16x84xbf16>, vector<16x84xbf16>, vector<16x84xbf16>, vector<16x84xbf16>, vector<16x84xbf16> -> vector<16x588xbf16>
    %c1_223 = arith.constant 1 : index
    %c0_224 = arith.constant 0 : index
    %c0_225 = arith.constant 0 : index
    %191 = vector.load %arg2[%c1_223, %c0_224, %c0_225] : memref<4x192x84xbf16, #tpu.memory_space<vmem>>, vector<1x16x84xbf16>
    %192 = vector.shape_cast %191 : vector<1x16x84xbf16> to vector<16x84xbf16>
    %c1_226 = arith.constant 1 : index
    %c48_227 = arith.constant 48 : index
    %c0_228 = arith.constant 0 : index
    %193 = vector.load %arg2[%c1_226, %c48_227, %c0_228] : memref<4x192x84xbf16, #tpu.memory_space<vmem>>, vector<1x16x84xbf16>
    %194 = vector.shape_cast %193 : vector<1x16x84xbf16> to vector<16x84xbf16>
    %c1_229 = arith.constant 1 : index
    %c96_230 = arith.constant 96 : index
    %c0_231 = arith.constant 0 : index
    %195 = vector.load %arg2[%c1_229, %c96_230, %c0_231] : memref<4x192x84xbf16, #tpu.memory_space<vmem>>, vector<1x16x84xbf16>
    %196 = vector.shape_cast %195 : vector<1x16x84xbf16> to vector<16x84xbf16>
    %c1_232 = arith.constant 1 : index
    %c144_233 = arith.constant 144 : index
    %c0_234 = arith.constant 0 : index
    %197 = vector.load %arg2[%c1_232, %c144_233, %c0_234] : memref<4x192x84xbf16, #tpu.memory_space<vmem>>, vector<1x16x84xbf16>
    %198 = vector.shape_cast %197 : vector<1x16x84xbf16> to vector<16x84xbf16>
    %c1_235 = arith.constant 1 : index
    %c4_236 = arith.constant 4 : index
    %c0_237 = arith.constant 0 : index
    %199 = vector.load %arg2[%c1_235, %c4_236, %c0_237] : memref<4x192x84xbf16, #tpu.memory_space<vmem>>, vector<1x16x84xbf16>
    %200 = vector.shape_cast %199 : vector<1x16x84xbf16> to vector<16x84xbf16>
    %c1_238 = arith.constant 1 : index
    %c52_239 = arith.constant 52 : index
    %c0_240 = arith.constant 0 : index
    %201 = vector.load %arg2[%c1_238, %c52_239, %c0_240] : memref<4x192x84xbf16, #tpu.memory_space<vmem>>, vector<1x16x84xbf16>
    %202 = vector.shape_cast %201 : vector<1x16x84xbf16> to vector<16x84xbf16>
    %c1_241 = arith.constant 1 : index
    %c100_242 = arith.constant 100 : index
    %c0_243 = arith.constant 0 : index
    %203 = vector.load %arg2[%c1_241, %c100_242, %c0_243] : memref<4x192x84xbf16, #tpu.memory_space<vmem>>, vector<1x16x84xbf16>
    %204 = vector.shape_cast %203 : vector<1x16x84xbf16> to vector<16x84xbf16>
    %205 = tpu.concatenate %192, %194, %196, %198, %200, %202, %204 in 1 : vector<16x84xbf16>, vector<16x84xbf16>, vector<16x84xbf16>, vector<16x84xbf16>, vector<16x84xbf16>, vector<16x84xbf16>, vector<16x84xbf16> -> vector<16x588xbf16>
    %c2_244 = arith.constant 2 : index
    %c0_245 = arith.constant 0 : index
    %c0_246 = arith.constant 0 : index
    %206 = vector.load %arg2[%c2_244, %c0_245, %c0_246] : memref<4x192x84xbf16, #tpu.memory_space<vmem>>, vector<1x16x84xbf16>
    %207 = vector.shape_cast %206 : vector<1x16x84xbf16> to vector<16x84xbf16>
    %c2_247 = arith.constant 2 : index
    %c48_248 = arith.constant 48 : index
    %c0_249 = arith.constant 0 : index
    %208 = vector.load %arg2[%c2_247, %c48_248, %c0_249] : memref<4x192x84xbf16, #tpu.memory_space<vmem>>, vector<1x16x84xbf16>
    %209 = vector.shape_cast %208 : vector<1x16x84xbf16> to vector<16x84xbf16>
    %c2_250 = arith.constant 2 : index
    %c96_251 = arith.constant 96 : index
    %c0_252 = arith.constant 0 : index
    %210 = vector.load %arg2[%c2_250, %c96_251, %c0_252] : memref<4x192x84xbf16, #tpu.memory_space<vmem>>, vector<1x16x84xbf16>
    %211 = vector.shape_cast %210 : vector<1x16x84xbf16> to vector<16x84xbf16>
    %c2_253 = arith.constant 2 : index
    %c144_254 = arith.constant 144 : index
    %c0_255 = arith.constant 0 : index
    %212 = vector.load %arg2[%c2_253, %c144_254, %c0_255] : memref<4x192x84xbf16, #tpu.memory_space<vmem>>, vector<1x16x84xbf16>
    %213 = vector.shape_cast %212 : vector<1x16x84xbf16> to vector<16x84xbf16>
    %c2_256 = arith.constant 2 : index
    %c4_257 = arith.constant 4 : index
    %c0_258 = arith.constant 0 : index
    %214 = vector.load %arg2[%c2_256, %c4_257, %c0_258] : memref<4x192x84xbf16, #tpu.memory_space<vmem>>, vector<1x16x84xbf16>
    %215 = vector.shape_cast %214 : vector<1x16x84xbf16> to vector<16x84xbf16>
    %c2_259 = arith.constant 2 : index
    %c52_260 = arith.constant 52 : index
    %c0_261 = arith.constant 0 : index
    %216 = vector.load %arg2[%c2_259, %c52_260, %c0_261] : memref<4x192x84xbf16, #tpu.memory_space<vmem>>, vector<1x16x84xbf16>
    %217 = vector.shape_cast %216 : vector<1x16x84xbf16> to vector<16x84xbf16>
    %c2_262 = arith.constant 2 : index
    %c100_263 = arith.constant 100 : index
    %c0_264 = arith.constant 0 : index
    %218 = vector.load %arg2[%c2_262, %c100_263, %c0_264] : memref<4x192x84xbf16, #tpu.memory_space<vmem>>, vector<1x16x84xbf16>
    %219 = vector.shape_cast %218 : vector<1x16x84xbf16> to vector<16x84xbf16>
    %220 = tpu.concatenate %207, %209, %211, %213, %215, %217, %219 in 1 : vector<16x84xbf16>, vector<16x84xbf16>, vector<16x84xbf16>, vector<16x84xbf16>, vector<16x84xbf16>, vector<16x84xbf16>, vector<16x84xbf16> -> vector<16x588xbf16>
    %c3_265 = arith.constant 3 : index
    %c0_266 = arith.constant 0 : index
    %c0_267 = arith.constant 0 : index
    %221 = vector.load %arg2[%c3_265, %c0_266, %c0_267] : memref<4x192x84xbf16, #tpu.memory_space<vmem>>, vector<1x16x84xbf16>
    %222 = vector.shape_cast %221 : vector<1x16x84xbf16> to vector<16x84xbf16>
    %c3_268 = arith.constant 3 : index
    %c48_269 = arith.constant 48 : index
    %c0_270 = arith.constant 0 : index
    %223 = vector.load %arg2[%c3_268, %c48_269, %c0_270] : memref<4x192x84xbf16, #tpu.memory_space<vmem>>, vector<1x16x84xbf16>
    %224 = vector.shape_cast %223 : vector<1x16x84xbf16> to vector<16x84xbf16>
    %c3_271 = arith.constant 3 : index
    %c96_272 = arith.constant 96 : index
    %c0_273 = arith.constant 0 : index
    %225 = vector.load %arg2[%c3_271, %c96_272, %c0_273] : memref<4x192x84xbf16, #tpu.memory_space<vmem>>, vector<1x16x84xbf16>
    %226 = vector.shape_cast %225 : vector<1x16x84xbf16> to vector<16x84xbf16>
    %c3_274 = arith.constant 3 : index
    %c144_275 = arith.constant 144 : index
    %c0_276 = arith.constant 0 : index
    %227 = vector.load %arg2[%c3_274, %c144_275, %c0_276] : memref<4x192x84xbf16, #tpu.memory_space<vmem>>, vector<1x16x84xbf16>
    %228 = vector.shape_cast %227 : vector<1x16x84xbf16> to vector<16x84xbf16>
    %c3_277 = arith.constant 3 : index
    %c4_278 = arith.constant 4 : index
    %c0_279 = arith.constant 0 : index
    %229 = vector.load %arg2[%c3_277, %c4_278, %c0_279] : memref<4x192x84xbf16, #tpu.memory_space<vmem>>, vector<1x16x84xbf16>
    %230 = vector.shape_cast %229 : vector<1x16x84xbf16> to vector<16x84xbf16>
    %c3_280 = arith.constant 3 : index
    %c52_281 = arith.constant 52 : index
    %c0_282 = arith.constant 0 : index
    %231 = vector.load %arg2[%c3_280, %c52_281, %c0_282] : memref<4x192x84xbf16, #tpu.memory_space<vmem>>, vector<1x16x84xbf16>
    %232 = vector.shape_cast %231 : vector<1x16x84xbf16> to vector<16x84xbf16>
    %c3_283 = arith.constant 3 : index
    %c100_284 = arith.constant 100 : index
    %c0_285 = arith.constant 0 : index
    %233 = vector.load %arg2[%c3_283, %c100_284, %c0_285] : memref<4x192x84xbf16, #tpu.memory_space<vmem>>, vector<1x16x84xbf16>
    %234 = vector.shape_cast %233 : vector<1x16x84xbf16> to vector<16x84xbf16>
    %235 = tpu.concatenate %222, %224, %226, %228, %230, %232, %234 in 1 : vector<16x84xbf16>, vector<16x84xbf16>, vector<16x84xbf16>, vector<16x84xbf16>, vector<16x84xbf16>, vector<16x84xbf16>, vector<16x84xbf16> -> vector<16x588xbf16>
    %c0_286 = arith.constant 0 : index
    %c24_287 = arith.constant 24 : index
    %c0_288 = arith.constant 0 : index
    %236 = vector.load %arg2[%c0_286, %c24_287, %c0_288] : memref<4x192x84xbf16, #tpu.memory_space<vmem>>, vector<1x16x84xbf16>
    %237 = vector.shape_cast %236 : vector<1x16x84xbf16> to vector<16x84xbf16>
    %c0_289 = arith.constant 0 : index
    %c72_290 = arith.constant 72 : index
    %c0_291 = arith.constant 0 : index
    %238 = vector.load %arg2[%c0_289, %c72_290, %c0_291] : memref<4x192x84xbf16, #tpu.memory_space<vmem>>, vector<1x16x84xbf16>
    %239 = vector.shape_cast %238 : vector<1x16x84xbf16> to vector<16x84xbf16>
    %c0_292 = arith.constant 0 : index
    %c120_293 = arith.constant 120 : index
    %c0_294 = arith.constant 0 : index
    %240 = vector.load %arg2[%c0_292, %c120_293, %c0_294] : memref<4x192x84xbf16, #tpu.memory_space<vmem>>, vector<1x16x84xbf16>
    %241 = vector.shape_cast %240 : vector<1x16x84xbf16> to vector<16x84xbf16>
    %c0_295 = arith.constant 0 : index
    %c168_296 = arith.constant 168 : index
    %c0_297 = arith.constant 0 : index
    %242 = vector.load %arg2[%c0_295, %c168_296, %c0_297] : memref<4x192x84xbf16, #tpu.memory_space<vmem>>, vector<1x16x84xbf16>
    %243 = vector.shape_cast %242 : vector<1x16x84xbf16> to vector<16x84xbf16>
    %c0_298 = arith.constant 0 : index
    %c28_299 = arith.constant 28 : index
    %c0_300 = arith.constant 0 : index
    %244 = vector.load %arg2[%c0_298, %c28_299, %c0_300] : memref<4x192x84xbf16, #tpu.memory_space<vmem>>, vector<1x16x84xbf16>
    %245 = vector.shape_cast %244 : vector<1x16x84xbf16> to vector<16x84xbf16>
    %c0_301 = arith.constant 0 : index
    %c76_302 = arith.constant 76 : index
    %c0_303 = arith.constant 0 : index
    %246 = vector.load %arg2[%c0_301, %c76_302, %c0_303] : memref<4x192x84xbf16, #tpu.memory_space<vmem>>, vector<1x16x84xbf16>
    %247 = vector.shape_cast %246 : vector<1x16x84xbf16> to vector<16x84xbf16>
    %c0_304 = arith.constant 0 : index
    %c124_305 = arith.constant 124 : index
    %c0_306 = arith.constant 0 : index
    %248 = vector.load %arg2[%c0_304, %c124_305, %c0_306] : memref<4x192x84xbf16, #tpu.memory_space<vmem>>, vector<1x16x84xbf16>
    %249 = vector.shape_cast %248 : vector<1x16x84xbf16> to vector<16x84xbf16>
    %250 = tpu.concatenate %237, %239, %241, %243, %245, %247, %249 in 1 : vector<16x84xbf16>, vector<16x84xbf16>, vector<16x84xbf16>, vector<16x84xbf16>, vector<16x84xbf16>, vector<16x84xbf16>, vector<16x84xbf16> -> vector<16x588xbf16>
    %c1_307 = arith.constant 1 : index
    %c24_308 = arith.constant 24 : index
    %c0_309 = arith.constant 0 : index
    %251 = vector.load %arg2[%c1_307, %c24_308, %c0_309] : memref<4x192x84xbf16, #tpu.memory_space<vmem>>, vector<1x16x84xbf16>
    %252 = vector.shape_cast %251 : vector<1x16x84xbf16> to vector<16x84xbf16>
    %c1_310 = arith.constant 1 : index
    %c72_311 = arith.constant 72 : index
    %c0_312 = arith.constant 0 : index
    %253 = vector.load %arg2[%c1_310, %c72_311, %c0_312] : memref<4x192x84xbf16, #tpu.memory_space<vmem>>, vector<1x16x84xbf16>
    %254 = vector.shape_cast %253 : vector<1x16x84xbf16> to vector<16x84xbf16>
    %c1_313 = arith.constant 1 : index
    %c120_314 = arith.constant 120 : index
    %c0_315 = arith.constant 0 : index
    %255 = vector.load %arg2[%c1_313, %c120_314, %c0_315] : memref<4x192x84xbf16, #tpu.memory_space<vmem>>, vector<1x16x84xbf16>
    %256 = vector.shape_cast %255 : vector<1x16x84xbf16> to vector<16x84xbf16>
    %c1_316 = arith.constant 1 : index
    %c168_317 = arith.constant 168 : index
    %c0_318 = arith.constant 0 : index
    %257 = vector.load %arg2[%c1_316, %c168_317, %c0_318] : memref<4x192x84xbf16, #tpu.memory_space<vmem>>, vector<1x16x84xbf16>
    %258 = vector.shape_cast %257 : vector<1x16x84xbf16> to vector<16x84xbf16>
    %c1_319 = arith.constant 1 : index
    %c28_320 = arith.constant 28 : index
    %c0_321 = arith.constant 0 : index
    %259 = vector.load %arg2[%c1_319, %c28_320, %c0_321] : memref<4x192x84xbf16, #tpu.memory_space<vmem>>, vector<1x16x84xbf16>
    %260 = vector.shape_cast %259 : vector<1x16x84xbf16> to vector<16x84xbf16>
    %c1_322 = arith.constant 1 : index
    %c76_323 = arith.constant 76 : index
    %c0_324 = arith.constant 0 : index
    %261 = vector.load %arg2[%c1_322, %c76_323, %c0_324] : memref<4x192x84xbf16, #tpu.memory_space<vmem>>, vector<1x16x84xbf16>
    %262 = vector.shape_cast %261 : vector<1x16x84xbf16> to vector<16x84xbf16>
    %c1_325 = arith.constant 1 : index
    %c124_326 = arith.constant 124 : index
    %c0_327 = arith.constant 0 : index
    %263 = vector.load %arg2[%c1_325, %c124_326, %c0_327] : memref<4x192x84xbf16, #tpu.memory_space<vmem>>, vector<1x16x84xbf16>
    %264 = vector.shape_cast %263 : vector<1x16x84xbf16> to vector<16x84xbf16>
    %265 = tpu.concatenate %252, %254, %256, %258, %260, %262, %264 in 1 : vector<16x84xbf16>, vector<16x84xbf16>, vector<16x84xbf16>, vector<16x84xbf16>, vector<16x84xbf16>, vector<16x84xbf16>, vector<16x84xbf16> -> vector<16x588xbf16>
    %c2_328 = arith.constant 2 : index
    %c24_329 = arith.constant 24 : index
    %c0_330 = arith.constant 0 : index
    %266 = vector.load %arg2[%c2_328, %c24_329, %c0_330] : memref<4x192x84xbf16, #tpu.memory_space<vmem>>, vector<1x16x84xbf16>
    %267 = vector.shape_cast %266 : vector<1x16x84xbf16> to vector<16x84xbf16>
    %c2_331 = arith.constant 2 : index
    %c72_332 = arith.constant 72 : index
    %c0_333 = arith.constant 0 : index
    %268 = vector.load %arg2[%c2_331, %c72_332, %c0_333] : memref<4x192x84xbf16, #tpu.memory_space<vmem>>, vector<1x16x84xbf16>
    %269 = vector.shape_cast %268 : vector<1x16x84xbf16> to vector<16x84xbf16>
    %c2_334 = arith.constant 2 : index
    %c120_335 = arith.constant 120 : index
    %c0_336 = arith.constant 0 : index
    %270 = vector.load %arg2[%c2_334, %c120_335, %c0_336] : memref<4x192x84xbf16, #tpu.memory_space<vmem>>, vector<1x16x84xbf16>
    %271 = vector.shape_cast %270 : vector<1x16x84xbf16> to vector<16x84xbf16>
    %c2_337 = arith.constant 2 : index
    %c168_338 = arith.constant 168 : index
    %c0_339 = arith.constant 0 : index
    %272 = vector.load %arg2[%c2_337, %c168_338, %c0_339] : memref<4x192x84xbf16, #tpu.memory_space<vmem>>, vector<1x16x84xbf16>
    %273 = vector.shape_cast %272 : vector<1x16x84xbf16> to vector<16x84xbf16>
    %c2_340 = arith.constant 2 : index
    %c28_341 = arith.constant 28 : index
    %c0_342 = arith.constant 0 : index
    %274 = vector.load %arg2[%c2_340, %c28_341, %c0_342] : memref<4x192x84xbf16, #tpu.memory_space<vmem>>, vector<1x16x84xbf16>
    %275 = vector.shape_cast %274 : vector<1x16x84xbf16> to vector<16x84xbf16>
    %c2_343 = arith.constant 2 : index
    %c76_344 = arith.constant 76 : index
    %c0_345 = arith.constant 0 : index
    %276 = vector.load %arg2[%c2_343, %c76_344, %c0_345] : memref<4x192x84xbf16, #tpu.memory_space<vmem>>, vector<1x16x84xbf16>
    %277 = vector.shape_cast %276 : vector<1x16x84xbf16> to vector<16x84xbf16>
    %c2_346 = arith.constant 2 : index
    %c124_347 = arith.constant 124 : index
    %c0_348 = arith.constant 0 : index
    %278 = vector.load %arg2[%c2_346, %c124_347, %c0_348] : memref<4x192x84xbf16, #tpu.memory_space<vmem>>, vector<1x16x84xbf16>
    %279 = vector.shape_cast %278 : vector<1x16x84xbf16> to vector<16x84xbf16>
    %280 = tpu.concatenate %267, %269, %271, %273, %275, %277, %279 in 1 : vector<16x84xbf16>, vector<16x84xbf16>, vector<16x84xbf16>, vector<16x84xbf16>, vector<16x84xbf16>, vector<16x84xbf16>, vector<16x84xbf16> -> vector<16x588xbf16>
    %c3_349 = arith.constant 3 : index
    %c24_350 = arith.constant 24 : index
    %c0_351 = arith.constant 0 : index
    %281 = vector.load %arg2[%c3_349, %c24_350, %c0_351] : memref<4x192x84xbf16, #tpu.memory_space<vmem>>, vector<1x16x84xbf16>
    %282 = vector.shape_cast %281 : vector<1x16x84xbf16> to vector<16x84xbf16>
    %c3_352 = arith.constant 3 : index
    %c72_353 = arith.constant 72 : index
    %c0_354 = arith.constant 0 : index
    %283 = vector.load %arg2[%c3_352, %c72_353, %c0_354] : memref<4x192x84xbf16, #tpu.memory_space<vmem>>, vector<1x16x84xbf16>
    %284 = vector.shape_cast %283 : vector<1x16x84xbf16> to vector<16x84xbf16>
    %c3_355 = arith.constant 3 : index
    %c120_356 = arith.constant 120 : index
    %c0_357 = arith.constant 0 : index
    %285 = vector.load %arg2[%c3_355, %c120_356, %c0_357] : memref<4x192x84xbf16, #tpu.memory_space<vmem>>, vector<1x16x84xbf16>
    %286 = vector.shape_cast %285 : vector<1x16x84xbf16> to vector<16x84xbf16>
    %c3_358 = arith.constant 3 : index
    %c168_359 = arith.constant 168 : index
    %c0_360 = arith.constant 0 : index
    %287 = vector.load %arg2[%c3_358, %c168_359, %c0_360] : memref<4x192x84xbf16, #tpu.memory_space<vmem>>, vector<1x16x84xbf16>
    %288 = vector.shape_cast %287 : vector<1x16x84xbf16> to vector<16x84xbf16>
    %c3_361 = arith.constant 3 : index
    %c28_362 = arith.constant 28 : index
    %c0_363 = arith.constant 0 : index
    %289 = vector.load %arg2[%c3_361, %c28_362, %c0_363] : memref<4x192x84xbf16, #tpu.memory_space<vmem>>, vector<1x16x84xbf16>
    %290 = vector.shape_cast %289 : vector<1x16x84xbf16> to vector<16x84xbf16>
    %c3_364 = arith.constant 3 : index
    %c76_365 = arith.constant 76 : index
    %c0_366 = arith.constant 0 : index
    %291 = vector.load %arg2[%c3_364, %c76_365, %c0_366] : memref<4x192x84xbf16, #tpu.memory_space<vmem>>, vector<1x16x84xbf16>
    %292 = vector.shape_cast %291 : vector<1x16x84xbf16> to vector<16x84xbf16>
    %c3_367 = arith.constant 3 : index
    %c124_368 = arith.constant 124 : index
    %c0_369 = arith.constant 0 : index
    %293 = vector.load %arg2[%c3_367, %c124_368, %c0_369] : memref<4x192x84xbf16, #tpu.memory_space<vmem>>, vector<1x16x84xbf16>
    %294 = vector.shape_cast %293 : vector<1x16x84xbf16> to vector<16x84xbf16>
    %295 = tpu.concatenate %282, %284, %286, %288, %290, %292, %294 in 1 : vector<16x84xbf16>, vector<16x84xbf16>, vector<16x84xbf16>, vector<16x84xbf16>, vector<16x84xbf16>, vector<16x84xbf16>, vector<16x84xbf16> -> vector<16x588xbf16>
    %c0_370 = arith.constant 0 : index
    %c148_371 = arith.constant 148 : index
    %c0_372 = arith.constant 0 : index
    %296 = vector.load %arg2[%c0_370, %c148_371, %c0_372] : memref<4x192x84xbf16, #tpu.memory_space<vmem>>, vector<1x16x84xbf16>
    %297 = vector.shape_cast %296 : vector<1x16x84xbf16> to vector<16x84xbf16>
    %c0_373 = arith.constant 0 : index
    %c8_374 = arith.constant 8 : index
    %c0_375 = arith.constant 0 : index
    %298 = vector.load %arg2[%c0_373, %c8_374, %c0_375] : memref<4x192x84xbf16, #tpu.memory_space<vmem>>, vector<1x16x84xbf16>
    %299 = vector.shape_cast %298 : vector<1x16x84xbf16> to vector<16x84xbf16>
    %300 = tpu.concatenate %181, %183, %185, %187, %189, %297, %299 in 1 : vector<16x84xbf16>, vector<16x84xbf16>, vector<16x84xbf16>, vector<16x84xbf16>, vector<16x84xbf16>, vector<16x84xbf16>, vector<16x84xbf16> -> vector<16x588xbf16>
    %c1_376 = arith.constant 1 : index
    %c148_377 = arith.constant 148 : index
    %c0_378 = arith.constant 0 : index
    %301 = vector.load %arg2[%c1_376, %c148_377, %c0_378] : memref<4x192x84xbf16, #tpu.memory_space<vmem>>, vector<1x16x84xbf16>
    %302 = vector.shape_cast %301 : vector<1x16x84xbf16> to vector<16x84xbf16>
    %c1_379 = arith.constant 1 : index
    %c8_380 = arith.constant 8 : index
    %c0_381 = arith.constant 0 : index
    %303 = vector.load %arg2[%c1_379, %c8_380, %c0_381] : memref<4x192x84xbf16, #tpu.memory_space<vmem>>, vector<1x16x84xbf16>
    %304 = vector.shape_cast %303 : vector<1x16x84xbf16> to vector<16x84xbf16>
    %305 = tpu.concatenate %196, %198, %200, %202, %204, %302, %304 in 1 : vector<16x84xbf16>, vector<16x84xbf16>, vector<16x84xbf16>, vector<16x84xbf16>, vector<16x84xbf16>, vector<16x84xbf16>, vector<16x84xbf16> -> vector<16x588xbf16>
    %c2_382 = arith.constant 2 : index
    %c148_383 = arith.constant 148 : index
    %c0_384 = arith.constant 0 : index
    %306 = vector.load %arg2[%c2_382, %c148_383, %c0_384] : memref<4x192x84xbf16, #tpu.memory_space<vmem>>, vector<1x16x84xbf16>
    %307 = vector.shape_cast %306 : vector<1x16x84xbf16> to vector<16x84xbf16>
    %c2_385 = arith.constant 2 : index
    %c8_386 = arith.constant 8 : index
    %c0_387 = arith.constant 0 : index
    %308 = vector.load %arg2[%c2_385, %c8_386, %c0_387] : memref<4x192x84xbf16, #tpu.memory_space<vmem>>, vector<1x16x84xbf16>
    %309 = vector.shape_cast %308 : vector<1x16x84xbf16> to vector<16x84xbf16>
    %310 = tpu.concatenate %211, %213, %215, %217, %219, %307, %309 in 1 : vector<16x84xbf16>, vector<16x84xbf16>, vector<16x84xbf16>, vector<16x84xbf16>, vector<16x84xbf16>, vector<16x84xbf16>, vector<16x84xbf16> -> vector<16x588xbf16>
    %c3_388 = arith.constant 3 : index
    %c148_389 = arith.constant 148 : index
    %c0_390 = arith.constant 0 : index
    %311 = vector.load %arg2[%c3_388, %c148_389, %c0_390] : memref<4x192x84xbf16, #tpu.memory_space<vmem>>, vector<1x16x84xbf16>
    %312 = vector.shape_cast %311 : vector<1x16x84xbf16> to vector<16x84xbf16>
    %c3_391 = arith.constant 3 : index
    %c8_392 = arith.constant 8 : index
    %c0_393 = arith.constant 0 : index
    %313 = vector.load %arg2[%c3_391, %c8_392, %c0_393] : memref<4x192x84xbf16, #tpu.memory_space<vmem>>, vector<1x16x84xbf16>
    %314 = vector.shape_cast %313 : vector<1x16x84xbf16> to vector<16x84xbf16>
    %315 = tpu.concatenate %226, %228, %230, %232, %234, %312, %314 in 1 : vector<16x84xbf16>, vector<16x84xbf16>, vector<16x84xbf16>, vector<16x84xbf16>, vector<16x84xbf16>, vector<16x84xbf16>, vector<16x84xbf16> -> vector<16x588xbf16>
    %c0_394 = arith.constant 0 : index
    %c172_395 = arith.constant 172 : index
    %c0_396 = arith.constant 0 : index
    %316 = vector.load %arg2[%c0_394, %c172_395, %c0_396] : memref<4x192x84xbf16, #tpu.memory_space<vmem>>, vector<1x16x84xbf16>
    %317 = vector.shape_cast %316 : vector<1x16x84xbf16> to vector<16x84xbf16>
    %c0_397 = arith.constant 0 : index
    %c32_398 = arith.constant 32 : index
    %c0_399 = arith.constant 0 : index
    %318 = vector.load %arg2[%c0_397, %c32_398, %c0_399] : memref<4x192x84xbf16, #tpu.memory_space<vmem>>, vector<1x16x84xbf16>
    %319 = vector.shape_cast %318 : vector<1x16x84xbf16> to vector<16x84xbf16>
    %320 = tpu.concatenate %241, %243, %245, %247, %249, %317, %319 in 1 : vector<16x84xbf16>, vector<16x84xbf16>, vector<16x84xbf16>, vector<16x84xbf16>, vector<16x84xbf16>, vector<16x84xbf16>, vector<16x84xbf16> -> vector<16x588xbf16>
    %c1_400 = arith.constant 1 : index
    %c172_401 = arith.constant 172 : index
    %c0_402 = arith.constant 0 : index
    %321 = vector.load %arg2[%c1_400, %c172_401, %c0_402] : memref<4x192x84xbf16, #tpu.memory_space<vmem>>, vector<1x16x84xbf16>
    %322 = vector.shape_cast %321 : vector<1x16x84xbf16> to vector<16x84xbf16>
    %c1_403 = arith.constant 1 : index
    %c32_404 = arith.constant 32 : index
    %c0_405 = arith.constant 0 : index
    %323 = vector.load %arg2[%c1_403, %c32_404, %c0_405] : memref<4x192x84xbf16, #tpu.memory_space<vmem>>, vector<1x16x84xbf16>
    %324 = vector.shape_cast %323 : vector<1x16x84xbf16> to vector<16x84xbf16>
    %325 = tpu.concatenate %256, %258, %260, %262, %264, %322, %324 in 1 : vector<16x84xbf16>, vector<16x84xbf16>, vector<16x84xbf16>, vector<16x84xbf16>, vector<16x84xbf16>, vector<16x84xbf16>, vector<16x84xbf16> -> vector<16x588xbf16>
    %c2_406 = arith.constant 2 : index
    %c172_407 = arith.constant 172 : index
    %c0_408 = arith.constant 0 : index
    %326 = vector.load %arg2[%c2_406, %c172_407, %c0_408] : memref<4x192x84xbf16, #tpu.memory_space<vmem>>, vector<1x16x84xbf16>
    %327 = vector.shape_cast %326 : vector<1x16x84xbf16> to vector<16x84xbf16>
    %c2_409 = arith.constant 2 : index
    %c32_410 = arith.constant 32 : index
    %c0_411 = arith.constant 0 : index
    %328 = vector.load %arg2[%c2_409, %c32_410, %c0_411] : memref<4x192x84xbf16, #tpu.memory_space<vmem>>, vector<1x16x84xbf16>
    %329 = vector.shape_cast %328 : vector<1x16x84xbf16> to vector<16x84xbf16>
    %330 = tpu.concatenate %271, %273, %275, %277, %279, %327, %329 in 1 : vector<16x84xbf16>, vector<16x84xbf16>, vector<16x84xbf16>, vector<16x84xbf16>, vector<16x84xbf16>, vector<16x84xbf16>, vector<16x84xbf16> -> vector<16x588xbf16>
    %c3_412 = arith.constant 3 : index
    %c172_413 = arith.constant 172 : index
    %c0_414 = arith.constant 0 : index
    %331 = vector.load %arg2[%c3_412, %c172_413, %c0_414] : memref<4x192x84xbf16, #tpu.memory_space<vmem>>, vector<1x16x84xbf16>
    %332 = vector.shape_cast %331 : vector<1x16x84xbf16> to vector<16x84xbf16>
    %c3_415 = arith.constant 3 : index
    %c32_416 = arith.constant 32 : index
    %c0_417 = arith.constant 0 : index
    %333 = vector.load %arg2[%c3_415, %c32_416, %c0_417] : memref<4x192x84xbf16, #tpu.memory_space<vmem>>, vector<1x16x84xbf16>
    %334 = vector.shape_cast %333 : vector<1x16x84xbf16> to vector<16x84xbf16>
    %335 = tpu.concatenate %286, %288, %290, %292, %294, %332, %334 in 1 : vector<16x84xbf16>, vector<16x84xbf16>, vector<16x84xbf16>, vector<16x84xbf16>, vector<16x84xbf16>, vector<16x84xbf16>, vector<16x84xbf16> -> vector<16x588xbf16>
    %336 = tpu.concatenate %190, %205, %220, %235, %250, %265, %280, %295, %300, %305, %310, %315, %320, %325, %330, %335 in 0 : vector<16x588xbf16>, vector<16x588xbf16>, vector<16x588xbf16>, vector<16x588xbf16>, vector<16x588xbf16>, vector<16x588xbf16>, vector<16x588xbf16>, vector<16x588xbf16>, vector<16x588xbf16>, vector<16x588xbf16>, vector<16x588xbf16>, vector<16x588xbf16>, vector<16x588xbf16>, vector<16x588xbf16>, vector<16x588xbf16>, vector<16x588xbf16> -> vector<256x588xbf16>
    %cst_418 = arith.constant dense<0.000000e+00> : vector<256x12xf32>
    %337 = tpu.matmul %336, %175, %cst_418 {dimension_numbers = #tpu.dot_dimension_numbers<[1], [0], [0], [1], [0, 0, 1, 1], [], []>} : vector<256x588xbf16>, vector<588x12xbf16>, vector<256x12xf32> -> vector<256x12xf32>
    %338 = vector.extract_strided_slice %337 {offsets = [0, 0], sizes = [64, 12], strides = [1, 1]} : vector<256x12xf32> to vector<64x12xf32>
    %339 = vector.extract_strided_slice %337 {offsets = [64, 0], sizes = [64, 12], strides = [1, 1]} : vector<256x12xf32> to vector<64x12xf32>
    %340 = arith.maximumf %338, %339 : vector<64x12xf32>
    %341 = vector.extract_strided_slice %337 {offsets = [128, 0], sizes = [64, 12], strides = [1, 1]} : vector<256x12xf32> to vector<64x12xf32>
    %342 = vector.extract_strided_slice %337 {offsets = [192, 0], sizes = [64, 12], strides = [1, 1]} : vector<256x12xf32> to vector<64x12xf32>
    %343 = arith.maximumf %341, %342 : vector<64x12xf32>
    %344 = arith.maximumf %340, %343 : vector<64x12xf32>
    %c0_419 = arith.constant 0 : index
    %c0_420 = arith.constant 0 : index
    %345 = vector.load %arg6[%c0_419, %c0_420] : memref<1x12xf32, #tpu.memory_space<vmem>>, vector<1x12xf32>
    %346 = vector.broadcast %345 : vector<1x12xf32> to vector<64x12xf32>
    %347 = arith.addf %344, %346 : vector<64x12xf32>
    %cst_421 = arith.constant 0.000000e+00 : f32
    %348 = vector.broadcast %cst_421 : f32 to vector<64x12xf32>
    %349 = arith.maximumf %347, %348 : vector<64x12xf32>
    %cst_422 = arith.constant 5.000000e-01 : f32
    %350 = vector.broadcast %cst_422 : f32 to vector<64x12xf32>
    %351 = arith.mulf %350, %349 : vector<64x12xf32>
    %352 = arith.addf %174, %351 : vector<64x12xf32>
    %353 = vector.extract_strided_slice %349 {offsets = [0, 0], sizes = [16, 12], strides = [1, 1]} : vector<64x12xf32> to vector<16x12xf32>
    %354 = arith.truncf %353 : vector<16x12xf32> to vector<16x12xbf16>
    %c0_423 = arith.constant 0 : index
    %c0_424 = arith.constant 0 : index
    %c0_425 = arith.constant 0 : index
    %355 = vector.load %arg8[%c0_423, %c0_424, %c0_425] : memref<4x16x12xbf16, #tpu.memory_space<vmem>>, vector<1x16x12xbf16>
    %356 = vector.shape_cast %355 : vector<1x16x12xbf16> to vector<16x12xbf16>
    %357 = vector.shape_cast %354 : vector<16x12xbf16> to vector<1x16x12xbf16>
    tpu.vector_store %arg8[%c0_423, %c0_424, %c0_425], %357 {strides = array<i32>} : memref<4x16x12xbf16, #tpu.memory_space<vmem>>, vector<1x16x12xbf16>,
    %358 = vector.extract_strided_slice %352 {offsets = [0, 0], sizes = [16, 12], strides = [1, 1]} : vector<64x12xf32> to vector<16x12xf32>
    %359 = arith.truncf %358 : vector<16x12xf32> to vector<16x12xbf16>
    %c0_426 = arith.constant 0 : index
    %c0_427 = arith.constant 0 : index
    %c0_428 = arith.constant 0 : index
    %360 = vector.load %arg7[%c0_426, %c0_427, %c0_428] : memref<4x16x12xbf16, #tpu.memory_space<vmem>>, vector<1x16x12xbf16>
    %361 = vector.shape_cast %360 : vector<1x16x12xbf16> to vector<16x12xbf16>
    %362 = vector.shape_cast %359 : vector<16x12xbf16> to vector<1x16x12xbf16>
    tpu.vector_store %arg7[%c0_426, %c0_427, %c0_428], %362 {strides = array<i32>} : memref<4x16x12xbf16, #tpu.memory_space<vmem>>, vector<1x16x12xbf16>,
    %363 = vector.extract_strided_slice %349 {offsets = [16, 0], sizes = [16, 12], strides = [1, 1]} : vector<64x12xf32> to vector<16x12xf32>
    %364 = arith.truncf %363 : vector<16x12xf32> to vector<16x12xbf16>
    %c1_429 = arith.constant 1 : index
    %c0_430 = arith.constant 0 : index
    %c0_431 = arith.constant 0 : index
    %365 = vector.load %arg8[%c1_429, %c0_430, %c0_431] : memref<4x16x12xbf16, #tpu.memory_space<vmem>>, vector<1x16x12xbf16>
    %366 = vector.shape_cast %365 : vector<1x16x12xbf16> to vector<16x12xbf16>
    %367 = vector.shape_cast %364 : vector<16x12xbf16> to vector<1x16x12xbf16>
    tpu.vector_store %arg8[%c1_429, %c0_430, %c0_431], %367 {strides = array<i32>} : memref<4x16x12xbf16, #tpu.memory_space<vmem>>, vector<1x16x12xbf16>,
    %368 = vector.extract_strided_slice %352 {offsets = [16, 0], sizes = [16, 12], strides = [1, 1]} : vector<64x12xf32> to vector<16x12xf32>
    %369 = arith.truncf %368 : vector<16x12xf32> to vector<16x12xbf16>
    %c1_432 = arith.constant 1 : index
    %c0_433 = arith.constant 0 : index
    %c0_434 = arith.constant 0 : index
    %370 = vector.load %arg7[%c1_432, %c0_433, %c0_434] : memref<4x16x12xbf16, #tpu.memory_space<vmem>>, vector<1x16x12xbf16>
    %371 = vector.shape_cast %370 : vector<1x16x12xbf16> to vector<16x12xbf16>
    %372 = vector.shape_cast %369 : vector<16x12xbf16> to vector<1x16x12xbf16>
    tpu.vector_store %arg7[%c1_432, %c0_433, %c0_434], %372 {strides = array<i32>} : memref<4x16x12xbf16, #tpu.memory_space<vmem>>, vector<1x16x12xbf16>,
    %373 = vector.extract_strided_slice %349 {offsets = [32, 0], sizes = [16, 12], strides = [1, 1]} : vector<64x12xf32> to vector<16x12xf32>
    %374 = arith.truncf %373 : vector<16x12xf32> to vector<16x12xbf16>
    %c2_435 = arith.constant 2 : index
    %c0_436 = arith.constant 0 : index
    %c0_437 = arith.constant 0 : index
    %375 = vector.load %arg8[%c2_435, %c0_436, %c0_437] : memref<4x16x12xbf16, #tpu.memory_space<vmem>>, vector<1x16x12xbf16>
    %376 = vector.shape_cast %375 : vector<1x16x12xbf16> to vector<16x12xbf16>
    %377 = vector.shape_cast %374 : vector<16x12xbf16> to vector<1x16x12xbf16>
    tpu.vector_store %arg8[%c2_435, %c0_436, %c0_437], %377 {strides = array<i32>} : memref<4x16x12xbf16, #tpu.memory_space<vmem>>, vector<1x16x12xbf16>,
    %378 = vector.extract_strided_slice %352 {offsets = [32, 0], sizes = [16, 12], strides = [1, 1]} : vector<64x12xf32> to vector<16x12xf32>
    %379 = arith.truncf %378 : vector<16x12xf32> to vector<16x12xbf16>
    %c2_438 = arith.constant 2 : index
    %c0_439 = arith.constant 0 : index
    %c0_440 = arith.constant 0 : index
    %380 = vector.load %arg7[%c2_438, %c0_439, %c0_440] : memref<4x16x12xbf16, #tpu.memory_space<vmem>>, vector<1x16x12xbf16>
    %381 = vector.shape_cast %380 : vector<1x16x12xbf16> to vector<16x12xbf16>
    %382 = vector.shape_cast %379 : vector<16x12xbf16> to vector<1x16x12xbf16>
    tpu.vector_store %arg7[%c2_438, %c0_439, %c0_440], %382 {strides = array<i32>} : memref<4x16x12xbf16, #tpu.memory_space<vmem>>, vector<1x16x12xbf16>,
    %383 = vector.extract_strided_slice %349 {offsets = [48, 0], sizes = [16, 12], strides = [1, 1]} : vector<64x12xf32> to vector<16x12xf32>
    %384 = arith.truncf %383 : vector<16x12xf32> to vector<16x12xbf16>
    %c3_441 = arith.constant 3 : index
    %c0_442 = arith.constant 0 : index
    %c0_443 = arith.constant 0 : index
    %385 = vector.load %arg8[%c3_441, %c0_442, %c0_443] : memref<4x16x12xbf16, #tpu.memory_space<vmem>>, vector<1x16x12xbf16>
    %386 = vector.shape_cast %385 : vector<1x16x12xbf16> to vector<16x12xbf16>
    %387 = vector.shape_cast %384 : vector<16x12xbf16> to vector<1x16x12xbf16>
    tpu.vector_store %arg8[%c3_441, %c0_442, %c0_443], %387 {strides = array<i32>} : memref<4x16x12xbf16, #tpu.memory_space<vmem>>, vector<1x16x12xbf16>,
    %388 = vector.extract_strided_slice %352 {offsets = [48, 0], sizes = [16, 12], strides = [1, 1]} : vector<64x12xf32> to vector<16x12xf32>
    %389 = arith.truncf %388 : vector<16x12xf32> to vector<16x12xbf16>
    %c3_444 = arith.constant 3 : index
    %c0_445 = arith.constant 0 : index
    %c0_446 = arith.constant 0 : index
    %390 = vector.load %arg7[%c3_444, %c0_445, %c0_446] : memref<4x16x12xbf16, #tpu.memory_space<vmem>>, vector<1x16x12xbf16>
    %391 = vector.shape_cast %390 : vector<1x16x12xbf16> to vector<16x12xbf16>
    %392 = vector.shape_cast %389 : vector<16x12xbf16> to vector<1x16x12xbf16>
    tpu.vector_store %arg7[%c3_444, %c0_445, %c0_446], %392 {strides = array<i32>} : memref<4x16x12xbf16, #tpu.memory_space<vmem>>, vector<1x16x12xbf16>,
    return
  }
  func.func @transform_0(%arg0: i32) -> (i32, i32, i32) {
    %c0_i32 = arith.constant 0 : i32
    %c0_i32_0 = arith.constant 0 : i32
    %c0_i32_1 = arith.constant 0 : i32
    return %arg0, %c0_i32, %c0_i32_0 : i32, i32, i32
  }
  func.func @transform_1(%arg0: i32) -> (i32, i32, i32) {
    %c0_i32 = arith.constant 0 : i32
    %c0_i32_0 = arith.constant 0 : i32
    %c0_i32_1 = arith.constant 0 : i32
    return %arg0, %c0_i32, %c0_i32_0 : i32, i32, i32
  }
  func.func @transform_2(%arg0: i32) -> (i32, i32) {
    %c0_i32 = arith.constant 0 : i32
    %c0_i32_0 = arith.constant 0 : i32
    %c0_i32_1 = arith.constant 0 : i32
    return %c0_i32, %c0_i32_0 : i32, i32
  }
  func.func @transform_3(%arg0: i32) -> (i32, i32) {
    %c0_i32 = arith.constant 0 : i32
    %c0_i32_0 = arith.constant 0 : i32
    %c0_i32_1 = arith.constant 0 : i32
    return %c0_i32, %c0_i32_0 : i32, i32
  }
  func.func @transform_4(%arg0: i32) -> (i32, i32) {
    %c0_i32 = arith.constant 0 : i32
    %c0_i32_0 = arith.constant 0 : i32
    %c0_i32_1 = arith.constant 0 : i32
    return %c0_i32, %c0_i32_0 : i32, i32
  }
  func.func @transform_5(%arg0: i32) -> (i32, i32) {
    %c0_i32 = arith.constant 0 : i32
    %c0_i32_0 = arith.constant 0 : i32
    %c0_i32_1 = arith.constant 0 : i32
    return %c0_i32, %c0_i32_0 : i32, i32
  }
  func.func @transform_6(%arg0: i32) -> (i32, i32, i32) {
    %c0_i32 = arith.constant 0 : i32
    %c0_i32_0 = arith.constant 0 : i32
    %c0_i32_1 = arith.constant 0 : i32
    return %arg0, %c0_i32, %c0_i32_0 : i32, i32, i32
  }
  func.func @transform_7(%arg0: i32) -> (i32, i32, i32) {
    %c0_i32 = arith.constant 0 : i32
    %c0_i32_0 = arith.constant 0 : i32
    %c0_i32_1 = arith.constant 0 : i32
    return %arg0, %c0_i32, %c0_i32_0 : i32, i32, i32
  }
}

module attributes {stable_mosaic.version = 11 : i64} {
  func.func @_stem2_kernel(%arg0: i32, %arg1: memref<4x40x84xbf16, #tpu.memory_space<vmem>>, %arg2: memref<4x40x84xbf16, #tpu.memory_space<vmem>>, %arg3: memref<588x24xbf16, #tpu.memory_space<vmem>>, %arg4: memref<1x24xf32, #tpu.memory_space<vmem>>, %arg5: memref<588x24xbf16, #tpu.memory_space<vmem>>, %arg6: memref<1x24xf32, #tpu.memory_space<vmem>>, %arg7: memref<4x4x24xf32, #tpu.memory_space<vmem>>) attributes {dimension_semantics = [#tpu.dimension_semantics<parallel>], iteration_bounds = array<i64: 2>, scalar_prefetch = 0 : i64, scratch_operands = 0 : i64, tpu.core_type = #tpu.core_type<tc>, window_params = [{transform_indices = @transform_0, window_bounds = array<i64: 4, 40, 84>}, {transform_indices = @transform_1, window_bounds = array<i64: 4, 40, 84>}, {pipeline_mode = #tpu.pipeline_mode<synchronous>, transform_indices = @transform_2, window_bounds = array<i64: 588, 24>}, {pipeline_mode = #tpu.pipeline_mode<synchronous>, transform_indices = @transform_3, window_bounds = array<i64: 1, 24>}, {pipeline_mode = #tpu.pipeline_mode<synchronous>, transform_indices = @transform_4, window_bounds = array<i64: 588, 24>}, {pipeline_mode = #tpu.pipeline_mode<synchronous>, transform_indices = @transform_5, window_bounds = array<i64: 1, 24>}, {transform_indices = @transform_6, window_bounds = array<i64: 4, 4, 24>}]} {
    %c0 = arith.constant 0 : index
    %c0_0 = arith.constant 0 : index
    %0 = vector.load %arg3[%c0, %c0_0] : memref<588x24xbf16, #tpu.memory_space<vmem>>, vector<588x24xbf16>
    %c0_1 = arith.constant 0 : index
    %c0_2 = arith.constant 0 : index
    %c0_3 = arith.constant 0 : index
    %1 = vector.load %arg1[%c0_1, %c0_2, %c0_3] : memref<4x40x84xbf16, #tpu.memory_space<vmem>>, vector<1x4x84xbf16>
    %2 = vector.shape_cast %1 : vector<1x4x84xbf16> to vector<4x84xbf16>
    %c0_4 = arith.constant 0 : index
    %c20 = arith.constant 20 : index
    %c0_5 = arith.constant 0 : index
    %3 = vector.load %arg1[%c0_4, %c20, %c0_5] : memref<4x40x84xbf16, #tpu.memory_space<vmem>>, vector<1x4x84xbf16>
    %4 = vector.shape_cast %3 : vector<1x4x84xbf16> to vector<4x84xbf16>
    %c0_6 = arith.constant 0 : index
    %c2 = arith.constant 2 : index
    %c0_7 = arith.constant 0 : index
    %5 = vector.load %arg1[%c0_6, %c2, %c0_7] : memref<4x40x84xbf16, #tpu.memory_space<vmem>>, vector<1x4x84xbf16>
    %6 = vector.shape_cast %5 : vector<1x4x84xbf16> to vector<4x84xbf16>
    %c0_8 = arith.constant 0 : index
    %c22 = arith.constant 22 : index
    %c0_9 = arith.constant 0 : index
    %7 = vector.load %arg1[%c0_8, %c22, %c0_9] : memref<4x40x84xbf16, #tpu.memory_space<vmem>>, vector<1x4x84xbf16>
    %8 = vector.shape_cast %7 : vector<1x4x84xbf16> to vector<4x84xbf16>
    %c0_10 = arith.constant 0 : index
    %c4 = arith.constant 4 : index
    %c0_11 = arith.constant 0 : index
    %9 = vector.load %arg1[%c0_10, %c4, %c0_11] : memref<4x40x84xbf16, #tpu.memory_space<vmem>>, vector<1x4x84xbf16>
    %10 = vector.shape_cast %9 : vector<1x4x84xbf16> to vector<4x84xbf16>
    %c0_12 = arith.constant 0 : index
    %c24 = arith.constant 24 : index
    %c0_13 = arith.constant 0 : index
    %11 = vector.load %arg1[%c0_12, %c24, %c0_13] : memref<4x40x84xbf16, #tpu.memory_space<vmem>>, vector<1x4x84xbf16>
    %12 = vector.shape_cast %11 : vector<1x4x84xbf16> to vector<4x84xbf16>
    %c0_14 = arith.constant 0 : index
    %c6 = arith.constant 6 : index
    %c0_15 = arith.constant 0 : index
    %13 = vector.load %arg1[%c0_14, %c6, %c0_15] : memref<4x40x84xbf16, #tpu.memory_space<vmem>>, vector<1x4x84xbf16>
    %14 = vector.shape_cast %13 : vector<1x4x84xbf16> to vector<4x84xbf16>
    %15 = tpu.concatenate %2, %4, %6, %8, %10, %12, %14 in 1 : vector<4x84xbf16>, vector<4x84xbf16>, vector<4x84xbf16>, vector<4x84xbf16>, vector<4x84xbf16>, vector<4x84xbf16>, vector<4x84xbf16> -> vector<4x588xbf16>
    %c1 = arith.constant 1 : index
    %c0_16 = arith.constant 0 : index
    %c0_17 = arith.constant 0 : index
    %16 = vector.load %arg1[%c1, %c0_16, %c0_17] : memref<4x40x84xbf16, #tpu.memory_space<vmem>>, vector<1x4x84xbf16>
    %17 = vector.shape_cast %16 : vector<1x4x84xbf16> to vector<4x84xbf16>
    %c1_18 = arith.constant 1 : index
    %c20_19 = arith.constant 20 : index
    %c0_20 = arith.constant 0 : index
    %18 = vector.load %arg1[%c1_18, %c20_19, %c0_20] : memref<4x40x84xbf16, #tpu.memory_space<vmem>>, vector<1x4x84xbf16>
    %19 = vector.shape_cast %18 : vector<1x4x84xbf16> to vector<4x84xbf16>
    %c1_21 = arith.constant 1 : index
    %c2_22 = arith.constant 2 : index
    %c0_23 = arith.constant 0 : index
    %20 = vector.load %arg1[%c1_21, %c2_22, %c0_23] : memref<4x40x84xbf16, #tpu.memory_space<vmem>>, vector<1x4x84xbf16>
    %21 = vector.shape_cast %20 : vector<1x4x84xbf16> to vector<4x84xbf16>
    %c1_24 = arith.constant 1 : index
    %c22_25 = arith.constant 22 : index
    %c0_26 = arith.constant 0 : index
    %22 = vector.load %arg1[%c1_24, %c22_25, %c0_26] : memref<4x40x84xbf16, #tpu.memory_space<vmem>>, vector<1x4x84xbf16>
    %23 = vector.shape_cast %22 : vector<1x4x84xbf16> to vector<4x84xbf16>
    %c1_27 = arith.constant 1 : index
    %c4_28 = arith.constant 4 : index
    %c0_29 = arith.constant 0 : index
    %24 = vector.load %arg1[%c1_27, %c4_28, %c0_29] : memref<4x40x84xbf16, #tpu.memory_space<vmem>>, vector<1x4x84xbf16>
    %25 = vector.shape_cast %24 : vector<1x4x84xbf16> to vector<4x84xbf16>
    %c1_30 = arith.constant 1 : index
    %c24_31 = arith.constant 24 : index
    %c0_32 = arith.constant 0 : index
    %26 = vector.load %arg1[%c1_30, %c24_31, %c0_32] : memref<4x40x84xbf16, #tpu.memory_space<vmem>>, vector<1x4x84xbf16>
    %27 = vector.shape_cast %26 : vector<1x4x84xbf16> to vector<4x84xbf16>
    %c1_33 = arith.constant 1 : index
    %c6_34 = arith.constant 6 : index
    %c0_35 = arith.constant 0 : index
    %28 = vector.load %arg1[%c1_33, %c6_34, %c0_35] : memref<4x40x84xbf16, #tpu.memory_space<vmem>>, vector<1x4x84xbf16>
    %29 = vector.shape_cast %28 : vector<1x4x84xbf16> to vector<4x84xbf16>
    %30 = tpu.concatenate %17, %19, %21, %23, %25, %27, %29 in 1 : vector<4x84xbf16>, vector<4x84xbf16>, vector<4x84xbf16>, vector<4x84xbf16>, vector<4x84xbf16>, vector<4x84xbf16>, vector<4x84xbf16> -> vector<4x588xbf16>
    %c2_36 = arith.constant 2 : index
    %c0_37 = arith.constant 0 : index
    %c0_38 = arith.constant 0 : index
    %31 = vector.load %arg1[%c2_36, %c0_37, %c0_38] : memref<4x40x84xbf16, #tpu.memory_space<vmem>>, vector<1x4x84xbf16>
    %32 = vector.shape_cast %31 : vector<1x4x84xbf16> to vector<4x84xbf16>
    %c2_39 = arith.constant 2 : index
    %c20_40 = arith.constant 20 : index
    %c0_41 = arith.constant 0 : index
    %33 = vector.load %arg1[%c2_39, %c20_40, %c0_41] : memref<4x40x84xbf16, #tpu.memory_space<vmem>>, vector<1x4x84xbf16>
    %34 = vector.shape_cast %33 : vector<1x4x84xbf16> to vector<4x84xbf16>
    %c2_42 = arith.constant 2 : index
    %c2_43 = arith.constant 2 : index
    %c0_44 = arith.constant 0 : index
    %35 = vector.load %arg1[%c2_42, %c2_43, %c0_44] : memref<4x40x84xbf16, #tpu.memory_space<vmem>>, vector<1x4x84xbf16>
    %36 = vector.shape_cast %35 : vector<1x4x84xbf16> to vector<4x84xbf16>
    %c2_45 = arith.constant 2 : index
    %c22_46 = arith.constant 22 : index
    %c0_47 = arith.constant 0 : index
    %37 = vector.load %arg1[%c2_45, %c22_46, %c0_47] : memref<4x40x84xbf16, #tpu.memory_space<vmem>>, vector<1x4x84xbf16>
    %38 = vector.shape_cast %37 : vector<1x4x84xbf16> to vector<4x84xbf16>
    %c2_48 = arith.constant 2 : index
    %c4_49 = arith.constant 4 : index
    %c0_50 = arith.constant 0 : index
    %39 = vector.load %arg1[%c2_48, %c4_49, %c0_50] : memref<4x40x84xbf16, #tpu.memory_space<vmem>>, vector<1x4x84xbf16>
    %40 = vector.shape_cast %39 : vector<1x4x84xbf16> to vector<4x84xbf16>
    %c2_51 = arith.constant 2 : index
    %c24_52 = arith.constant 24 : index
    %c0_53 = arith.constant 0 : index
    %41 = vector.load %arg1[%c2_51, %c24_52, %c0_53] : memref<4x40x84xbf16, #tpu.memory_space<vmem>>, vector<1x4x84xbf16>
    %42 = vector.shape_cast %41 : vector<1x4x84xbf16> to vector<4x84xbf16>
    %c2_54 = arith.constant 2 : index
    %c6_55 = arith.constant 6 : index
    %c0_56 = arith.constant 0 : index
    %43 = vector.load %arg1[%c2_54, %c6_55, %c0_56] : memref<4x40x84xbf16, #tpu.memory_space<vmem>>, vector<1x4x84xbf16>
    %44 = vector.shape_cast %43 : vector<1x4x84xbf16> to vector<4x84xbf16>
    %45 = tpu.concatenate %32, %34, %36, %38, %40, %42, %44 in 1 : vector<4x84xbf16>, vector<4x84xbf16>, vector<4x84xbf16>, vector<4x84xbf16>, vector<4x84xbf16>, vector<4x84xbf16>, vector<4x84xbf16> -> vector<4x588xbf16>
    %c3 = arith.constant 3 : index
    %c0_57 = arith.constant 0 : index
    %c0_58 = arith.constant 0 : index
    %46 = vector.load %arg1[%c3, %c0_57, %c0_58] : memref<4x40x84xbf16, #tpu.memory_space<vmem>>, vector<1x4x84xbf16>
    %47 = vector.shape_cast %46 : vector<1x4x84xbf16> to vector<4x84xbf16>
    %c3_59 = arith.constant 3 : index
    %c20_60 = arith.constant 20 : index
    %c0_61 = arith.constant 0 : index
    %48 = vector.load %arg1[%c3_59, %c20_60, %c0_61] : memref<4x40x84xbf16, #tpu.memory_space<vmem>>, vector<1x4x84xbf16>
    %49 = vector.shape_cast %48 : vector<1x4x84xbf16> to vector<4x84xbf16>
    %c3_62 = arith.constant 3 : index
    %c2_63 = arith.constant 2 : index
    %c0_64 = arith.constant 0 : index
    %50 = vector.load %arg1[%c3_62, %c2_63, %c0_64] : memref<4x40x84xbf16, #tpu.memory_space<vmem>>, vector<1x4x84xbf16>
    %51 = vector.shape_cast %50 : vector<1x4x84xbf16> to vector<4x84xbf16>
    %c3_65 = arith.constant 3 : index
    %c22_66 = arith.constant 22 : index
    %c0_67 = arith.constant 0 : index
    %52 = vector.load %arg1[%c3_65, %c22_66, %c0_67] : memref<4x40x84xbf16, #tpu.memory_space<vmem>>, vector<1x4x84xbf16>
    %53 = vector.shape_cast %52 : vector<1x4x84xbf16> to vector<4x84xbf16>
    %c3_68 = arith.constant 3 : index
    %c4_69 = arith.constant 4 : index
    %c0_70 = arith.constant 0 : index
    %54 = vector.load %arg1[%c3_68, %c4_69, %c0_70] : memref<4x40x84xbf16, #tpu.memory_space<vmem>>, vector<1x4x84xbf16>
    %55 = vector.shape_cast %54 : vector<1x4x84xbf16> to vector<4x84xbf16>
    %c3_71 = arith.constant 3 : index
    %c24_72 = arith.constant 24 : index
    %c0_73 = arith.constant 0 : index
    %56 = vector.load %arg1[%c3_71, %c24_72, %c0_73] : memref<4x40x84xbf16, #tpu.memory_space<vmem>>, vector<1x4x84xbf16>
    %57 = vector.shape_cast %56 : vector<1x4x84xbf16> to vector<4x84xbf16>
    %c3_74 = arith.constant 3 : index
    %c6_75 = arith.constant 6 : index
    %c0_76 = arith.constant 0 : index
    %58 = vector.load %arg1[%c3_74, %c6_75, %c0_76] : memref<4x40x84xbf16, #tpu.memory_space<vmem>>, vector<1x4x84xbf16>
    %59 = vector.shape_cast %58 : vector<1x4x84xbf16> to vector<4x84xbf16>
    %60 = tpu.concatenate %47, %49, %51, %53, %55, %57, %59 in 1 : vector<4x84xbf16>, vector<4x84xbf16>, vector<4x84xbf16>, vector<4x84xbf16>, vector<4x84xbf16>, vector<4x84xbf16>, vector<4x84xbf16> -> vector<4x588xbf16>
    %c0_77 = arith.constant 0 : index
    %c10 = arith.constant 10 : index
    %c0_78 = arith.constant 0 : index
    %61 = vector.load %arg1[%c0_77, %c10, %c0_78] : memref<4x40x84xbf16, #tpu.memory_space<vmem>>, vector<1x4x84xbf16>
    %62 = vector.shape_cast %61 : vector<1x4x84xbf16> to vector<4x84xbf16>
    %c0_79 = arith.constant 0 : index
    %c30 = arith.constant 30 : index
    %c0_80 = arith.constant 0 : index
    %63 = vector.load %arg1[%c0_79, %c30, %c0_80] : memref<4x40x84xbf16, #tpu.memory_space<vmem>>, vector<1x4x84xbf16>
    %64 = vector.shape_cast %63 : vector<1x4x84xbf16> to vector<4x84xbf16>
    %c0_81 = arith.constant 0 : index
    %c12 = arith.constant 12 : index
    %c0_82 = arith.constant 0 : index
    %65 = vector.load %arg1[%c0_81, %c12, %c0_82] : memref<4x40x84xbf16, #tpu.memory_space<vmem>>, vector<1x4x84xbf16>
    %66 = vector.shape_cast %65 : vector<1x4x84xbf16> to vector<4x84xbf16>
    %c0_83 = arith.constant 0 : index
    %c32 = arith.constant 32 : index
    %c0_84 = arith.constant 0 : index
    %67 = vector.load %arg1[%c0_83, %c32, %c0_84] : memref<4x40x84xbf16, #tpu.memory_space<vmem>>, vector<1x4x84xbf16>
    %68 = vector.shape_cast %67 : vector<1x4x84xbf16> to vector<4x84xbf16>
    %c0_85 = arith.constant 0 : index
    %c14 = arith.constant 14 : index
    %c0_86 = arith.constant 0 : index
    %69 = vector.load %arg1[%c0_85, %c14, %c0_86] : memref<4x40x84xbf16, #tpu.memory_space<vmem>>, vector<1x4x84xbf16>
    %70 = vector.shape_cast %69 : vector<1x4x84xbf16> to vector<4x84xbf16>
    %c0_87 = arith.constant 0 : index
    %c34 = arith.constant 34 : index
    %c0_88 = arith.constant 0 : index
    %71 = vector.load %arg1[%c0_87, %c34, %c0_88] : memref<4x40x84xbf16, #tpu.memory_space<vmem>>, vector<1x4x84xbf16>
    %72 = vector.shape_cast %71 : vector<1x4x84xbf16> to vector<4x84xbf16>
    %c0_89 = arith.constant 0 : index
    %c16 = arith.constant 16 : index
    %c0_90 = arith.constant 0 : index
    %73 = vector.load %arg1[%c0_89, %c16, %c0_90] : memref<4x40x84xbf16, #tpu.memory_space<vmem>>, vector<1x4x84xbf16>
    %74 = vector.shape_cast %73 : vector<1x4x84xbf16> to vector<4x84xbf16>
    %75 = tpu.concatenate %62, %64, %66, %68, %70, %72, %74 in 1 : vector<4x84xbf16>, vector<4x84xbf16>, vector<4x84xbf16>, vector<4x84xbf16>, vector<4x84xbf16>, vector<4x84xbf16>, vector<4x84xbf16> -> vector<4x588xbf16>
    %c1_91 = arith.constant 1 : index
    %c10_92 = arith.constant 10 : index
    %c0_93 = arith.constant 0 : index
    %76 = vector.load %arg1[%c1_91, %c10_92, %c0_93] : memref<4x40x84xbf16, #tpu.memory_space<vmem>>, vector<1x4x84xbf16>
    %77 = vector.shape_cast %76 : vector<1x4x84xbf16> to vector<4x84xbf16>
    %c1_94 = arith.constant 1 : index
    %c30_95 = arith.constant 30 : index
    %c0_96 = arith.constant 0 : index
    %78 = vector.load %arg1[%c1_94, %c30_95, %c0_96] : memref<4x40x84xbf16, #tpu.memory_space<vmem>>, vector<1x4x84xbf16>
    %79 = vector.shape_cast %78 : vector<1x4x84xbf16> to vector<4x84xbf16>
    %c1_97 = arith.constant 1 : index
    %c12_98 = arith.constant 12 : index
    %c0_99 = arith.constant 0 : index
    %80 = vector.load %arg1[%c1_97, %c12_98, %c0_99] : memref<4x40x84xbf16, #tpu.memory_space<vmem>>, vector<1x4x84xbf16>
    %81 = vector.shape_cast %80 : vector<1x4x84xbf16> to vector<4x84xbf16>
    %c1_100 = arith.constant 1 : index
    %c32_101 = arith.constant 32 : index
    %c0_102 = arith.constant 0 : index
    %82 = vector.load %arg1[%c1_100, %c32_101, %c0_102] : memref<4x40x84xbf16, #tpu.memory_space<vmem>>, vector<1x4x84xbf16>
    %83 = vector.shape_cast %82 : vector<1x4x84xbf16> to vector<4x84xbf16>
    %c1_103 = arith.constant 1 : index
    %c14_104 = arith.constant 14 : index
    %c0_105 = arith.constant 0 : index
    %84 = vector.load %arg1[%c1_103, %c14_104, %c0_105] : memref<4x40x84xbf16, #tpu.memory_space<vmem>>, vector<1x4x84xbf16>
    %85 = vector.shape_cast %84 : vector<1x4x84xbf16> to vector<4x84xbf16>
    %c1_106 = arith.constant 1 : index
    %c34_107 = arith.constant 34 : index
    %c0_108 = arith.constant 0 : index
    %86 = vector.load %arg1[%c1_106, %c34_107, %c0_108] : memref<4x40x84xbf16, #tpu.memory_space<vmem>>, vector<1x4x84xbf16>
    %87 = vector.shape_cast %86 : vector<1x4x84xbf16> to vector<4x84xbf16>
    %c1_109 = arith.constant 1 : index
    %c16_110 = arith.constant 16 : index
    %c0_111 = arith.constant 0 : index
    %88 = vector.load %arg1[%c1_109, %c16_110, %c0_111] : memref<4x40x84xbf16, #tpu.memory_space<vmem>>, vector<1x4x84xbf16>
    %89 = vector.shape_cast %88 : vector<1x4x84xbf16> to vector<4x84xbf16>
    %90 = tpu.concatenate %77, %79, %81, %83, %85, %87, %89 in 1 : vector<4x84xbf16>, vector<4x84xbf16>, vector<4x84xbf16>, vector<4x84xbf16>, vector<4x84xbf16>, vector<4x84xbf16>, vector<4x84xbf16> -> vector<4x588xbf16>
    %c2_112 = arith.constant 2 : index
    %c10_113 = arith.constant 10 : index
    %c0_114 = arith.constant 0 : index
    %91 = vector.load %arg1[%c2_112, %c10_113, %c0_114] : memref<4x40x84xbf16, #tpu.memory_space<vmem>>, vector<1x4x84xbf16>
    %92 = vector.shape_cast %91 : vector<1x4x84xbf16> to vector<4x84xbf16>
    %c2_115 = arith.constant 2 : index
    %c30_116 = arith.constant 30 : index
    %c0_117 = arith.constant 0 : index
    %93 = vector.load %arg1[%c2_115, %c30_116, %c0_117] : memref<4x40x84xbf16, #tpu.memory_space<vmem>>, vector<1x4x84xbf16>
    %94 = vector.shape_cast %93 : vector<1x4x84xbf16> to vector<4x84xbf16>
    %c2_118 = arith.constant 2 : index
    %c12_119 = arith.constant 12 : index
    %c0_120 = arith.constant 0 : index
    %95 = vector.load %arg1[%c2_118, %c12_119, %c0_120] : memref<4x40x84xbf16, #tpu.memory_space<vmem>>, vector<1x4x84xbf16>
    %96 = vector.shape_cast %95 : vector<1x4x84xbf16> to vector<4x84xbf16>
    %c2_121 = arith.constant 2 : index
    %c32_122 = arith.constant 32 : index
    %c0_123 = arith.constant 0 : index
    %97 = vector.load %arg1[%c2_121, %c32_122, %c0_123] : memref<4x40x84xbf16, #tpu.memory_space<vmem>>, vector<1x4x84xbf16>
    %98 = vector.shape_cast %97 : vector<1x4x84xbf16> to vector<4x84xbf16>
    %c2_124 = arith.constant 2 : index
    %c14_125 = arith.constant 14 : index
    %c0_126 = arith.constant 0 : index
    %99 = vector.load %arg1[%c2_124, %c14_125, %c0_126] : memref<4x40x84xbf16, #tpu.memory_space<vmem>>, vector<1x4x84xbf16>
    %100 = vector.shape_cast %99 : vector<1x4x84xbf16> to vector<4x84xbf16>
    %c2_127 = arith.constant 2 : index
    %c34_128 = arith.constant 34 : index
    %c0_129 = arith.constant 0 : index
    %101 = vector.load %arg1[%c2_127, %c34_128, %c0_129] : memref<4x40x84xbf16, #tpu.memory_space<vmem>>, vector<1x4x84xbf16>
    %102 = vector.shape_cast %101 : vector<1x4x84xbf16> to vector<4x84xbf16>
    %c2_130 = arith.constant 2 : index
    %c16_131 = arith.constant 16 : index
    %c0_132 = arith.constant 0 : index
    %103 = vector.load %arg1[%c2_130, %c16_131, %c0_132] : memref<4x40x84xbf16, #tpu.memory_space<vmem>>, vector<1x4x84xbf16>
    %104 = vector.shape_cast %103 : vector<1x4x84xbf16> to vector<4x84xbf16>
    %105 = tpu.concatenate %92, %94, %96, %98, %100, %102, %104 in 1 : vector<4x84xbf16>, vector<4x84xbf16>, vector<4x84xbf16>, vector<4x84xbf16>, vector<4x84xbf16>, vector<4x84xbf16>, vector<4x84xbf16> -> vector<4x588xbf16>
    %c3_133 = arith.constant 3 : index
    %c10_134 = arith.constant 10 : index
    %c0_135 = arith.constant 0 : index
    %106 = vector.load %arg1[%c3_133, %c10_134, %c0_135] : memref<4x40x84xbf16, #tpu.memory_space<vmem>>, vector<1x4x84xbf16>
    %107 = vector.shape_cast %106 : vector<1x4x84xbf16> to vector<4x84xbf16>
    %c3_136 = arith.constant 3 : index
    %c30_137 = arith.constant 30 : index
    %c0_138 = arith.constant 0 : index
    %108 = vector.load %arg1[%c3_136, %c30_137, %c0_138] : memref<4x40x84xbf16, #tpu.memory_space<vmem>>, vector<1x4x84xbf16>
    %109 = vector.shape_cast %108 : vector<1x4x84xbf16> to vector<4x84xbf16>
    %c3_139 = arith.constant 3 : index
    %c12_140 = arith.constant 12 : index
    %c0_141 = arith.constant 0 : index
    %110 = vector.load %arg1[%c3_139, %c12_140, %c0_141] : memref<4x40x84xbf16, #tpu.memory_space<vmem>>, vector<1x4x84xbf16>
    %111 = vector.shape_cast %110 : vector<1x4x84xbf16> to vector<4x84xbf16>
    %c3_142 = arith.constant 3 : index
    %c32_143 = arith.constant 32 : index
    %c0_144 = arith.constant 0 : index
    %112 = vector.load %arg1[%c3_142, %c32_143, %c0_144] : memref<4x40x84xbf16, #tpu.memory_space<vmem>>, vector<1x4x84xbf16>
    %113 = vector.shape_cast %112 : vector<1x4x84xbf16> to vector<4x84xbf16>
    %c3_145 = arith.constant 3 : index
    %c14_146 = arith.constant 14 : index
    %c0_147 = arith.constant 0 : index
    %114 = vector.load %arg1[%c3_145, %c14_146, %c0_147] : memref<4x40x84xbf16, #tpu.memory_space<vmem>>, vector<1x4x84xbf16>
    %115 = vector.shape_cast %114 : vector<1x4x84xbf16> to vector<4x84xbf16>
    %c3_148 = arith.constant 3 : index
    %c34_149 = arith.constant 34 : index
    %c0_150 = arith.constant 0 : index
    %116 = vector.load %arg1[%c3_148, %c34_149, %c0_150] : memref<4x40x84xbf16, #tpu.memory_space<vmem>>, vector<1x4x84xbf16>
    %117 = vector.shape_cast %116 : vector<1x4x84xbf16> to vector<4x84xbf16>
    %c3_151 = arith.constant 3 : index
    %c16_152 = arith.constant 16 : index
    %c0_153 = arith.constant 0 : index
    %118 = vector.load %arg1[%c3_151, %c16_152, %c0_153] : memref<4x40x84xbf16, #tpu.memory_space<vmem>>, vector<1x4x84xbf16>
    %119 = vector.shape_cast %118 : vector<1x4x84xbf16> to vector<4x84xbf16>
    %120 = tpu.concatenate %107, %109, %111, %113, %115, %117, %119 in 1 : vector<4x84xbf16>, vector<4x84xbf16>, vector<4x84xbf16>, vector<4x84xbf16>, vector<4x84xbf16>, vector<4x84xbf16>, vector<4x84xbf16> -> vector<4x588xbf16>
    %c0_154 = arith.constant 0 : index
    %c26 = arith.constant 26 : index
    %c0_155 = arith.constant 0 : index
    %121 = vector.load %arg1[%c0_154, %c26, %c0_155] : memref<4x40x84xbf16, #tpu.memory_space<vmem>>, vector<1x4x84xbf16>
    %122 = vector.shape_cast %121 : vector<1x4x84xbf16> to vector<4x84xbf16>
    %123 = tpu.concatenate %4, %6, %8, %10, %12, %14, %122 in 1 : vector<4x84xbf16>, vector<4x84xbf16>, vector<4x84xbf16>, vector<4x84xbf16>, vector<4x84xbf16>, vector<4x84xbf16>, vector<4x84xbf16> -> vector<4x588xbf16>
    %c1_156 = arith.constant 1 : index
    %c26_157 = arith.constant 26 : index
    %c0_158 = arith.constant 0 : index
    %124 = vector.load %arg1[%c1_156, %c26_157, %c0_158] : memref<4x40x84xbf16, #tpu.memory_space<vmem>>, vector<1x4x84xbf16>
    %125 = vector.shape_cast %124 : vector<1x4x84xbf16> to vector<4x84xbf16>
    %126 = tpu.concatenate %19, %21, %23, %25, %27, %29, %125 in 1 : vector<4x84xbf16>, vector<4x84xbf16>, vector<4x84xbf16>, vector<4x84xbf16>, vector<4x84xbf16>, vector<4x84xbf16>, vector<4x84xbf16> -> vector<4x588xbf16>
    %c2_159 = arith.constant 2 : index
    %c26_160 = arith.constant 26 : index
    %c0_161 = arith.constant 0 : index
    %127 = vector.load %arg1[%c2_159, %c26_160, %c0_161] : memref<4x40x84xbf16, #tpu.memory_space<vmem>>, vector<1x4x84xbf16>
    %128 = vector.shape_cast %127 : vector<1x4x84xbf16> to vector<4x84xbf16>
    %129 = tpu.concatenate %34, %36, %38, %40, %42, %44, %128 in 1 : vector<4x84xbf16>, vector<4x84xbf16>, vector<4x84xbf16>, vector<4x84xbf16>, vector<4x84xbf16>, vector<4x84xbf16>, vector<4x84xbf16> -> vector<4x588xbf16>
    %c3_162 = arith.constant 3 : index
    %c26_163 = arith.constant 26 : index
    %c0_164 = arith.constant 0 : index
    %130 = vector.load %arg1[%c3_162, %c26_163, %c0_164] : memref<4x40x84xbf16, #tpu.memory_space<vmem>>, vector<1x4x84xbf16>
    %131 = vector.shape_cast %130 : vector<1x4x84xbf16> to vector<4x84xbf16>
    %132 = tpu.concatenate %49, %51, %53, %55, %57, %59, %131 in 1 : vector<4x84xbf16>, vector<4x84xbf16>, vector<4x84xbf16>, vector<4x84xbf16>, vector<4x84xbf16>, vector<4x84xbf16>, vector<4x84xbf16> -> vector<4x588xbf16>
    %c0_165 = arith.constant 0 : index
    %c36 = arith.constant 36 : index
    %c0_166 = arith.constant 0 : index
    %133 = vector.load %arg1[%c0_165, %c36, %c0_166] : memref<4x40x84xbf16, #tpu.memory_space<vmem>>, vector<1x4x84xbf16>
    %134 = vector.shape_cast %133 : vector<1x4x84xbf16> to vector<4x84xbf16>
    %135 = tpu.concatenate %64, %66, %68, %70, %72, %74, %134 in 1 : vector<4x84xbf16>, vector<4x84xbf16>, vector<4x84xbf16>, vector<4x84xbf16>, vector<4x84xbf16>, vector<4x84xbf16>, vector<4x84xbf16> -> vector<4x588xbf16>
    %c1_167 = arith.constant 1 : index
    %c36_168 = arith.constant 36 : index
    %c0_169 = arith.constant 0 : index
    %136 = vector.load %arg1[%c1_167, %c36_168, %c0_169] : memref<4x40x84xbf16, #tpu.memory_space<vmem>>, vector<1x4x84xbf16>
    %137 = vector.shape_cast %136 : vector<1x4x84xbf16> to vector<4x84xbf16>
    %138 = tpu.concatenate %79, %81, %83, %85, %87, %89, %137 in 1 : vector<4x84xbf16>, vector<4x84xbf16>, vector<4x84xbf16>, vector<4x84xbf16>, vector<4x84xbf16>, vector<4x84xbf16>, vector<4x84xbf16> -> vector<4x588xbf16>
    %c2_170 = arith.constant 2 : index
    %c36_171 = arith.constant 36 : index
    %c0_172 = arith.constant 0 : index
    %139 = vector.load %arg1[%c2_170, %c36_171, %c0_172] : memref<4x40x84xbf16, #tpu.memory_space<vmem>>, vector<1x4x84xbf16>
    %140 = vector.shape_cast %139 : vector<1x4x84xbf16> to vector<4x84xbf16>
    %141 = tpu.concatenate %94, %96, %98, %100, %102, %104, %140 in 1 : vector<4x84xbf16>, vector<4x84xbf16>, vector<4x84xbf16>, vector<4x84xbf16>, vector<4x84xbf16>, vector<4x84xbf16>, vector<4x84xbf16> -> vector<4x588xbf16>
    %c3_173 = arith.constant 3 : index
    %c36_174 = arith.constant 36 : index
    %c0_175 = arith.constant 0 : index
    %142 = vector.load %arg1[%c3_173, %c36_174, %c0_175] : memref<4x40x84xbf16, #tpu.memory_space<vmem>>, vector<1x4x84xbf16>
    %143 = vector.shape_cast %142 : vector<1x4x84xbf16> to vector<4x84xbf16>
    %144 = tpu.concatenate %109, %111, %113, %115, %117, %119, %143 in 1 : vector<4x84xbf16>, vector<4x84xbf16>, vector<4x84xbf16>, vector<4x84xbf16>, vector<4x84xbf16>, vector<4x84xbf16>, vector<4x84xbf16> -> vector<4x588xbf16>
    %145 = tpu.concatenate %15, %30, %45, %60, %75, %90, %105, %120, %123, %126, %129, %132, %135, %138, %141, %144 in 0 : vector<4x588xbf16>, vector<4x588xbf16>, vector<4x588xbf16>, vector<4x588xbf16>, vector<4x588xbf16>, vector<4x588xbf16>, vector<4x588xbf16>, vector<4x588xbf16>, vector<4x588xbf16>, vector<4x588xbf16>, vector<4x588xbf16>, vector<4x588xbf16>, vector<4x588xbf16>, vector<4x588xbf16>, vector<4x588xbf16>, vector<4x588xbf16> -> vector<64x588xbf16>
    %cst = arith.constant dense<0.000000e+00> : vector<64x24xf32>
    %146 = tpu.matmul %145, %0, %cst {dimension_numbers = #tpu.dot_dimension_numbers<[1], [0], [0], [1], [0, 0, 1, 1], [], []>} : vector<64x588xbf16>, vector<588x24xbf16>, vector<64x24xf32> -> vector<64x24xf32>
    %147 = vector.extract_strided_slice %146 {offsets = [0, 0], sizes = [16, 24], strides = [1, 1]} : vector<64x24xf32> to vector<16x24xf32>
    %148 = vector.extract_strided_slice %146 {offsets = [16, 0], sizes = [16, 24], strides = [1, 1]} : vector<64x24xf32> to vector<16x24xf32>
    %149 = arith.maximumf %147, %148 : vector<16x24xf32>
    %150 = vector.extract_strided_slice %146 {offsets = [32, 0], sizes = [16, 24], strides = [1, 1]} : vector<64x24xf32> to vector<16x24xf32>
    %151 = vector.extract_strided_slice %146 {offsets = [48, 0], sizes = [16, 24], strides = [1, 1]} : vector<64x24xf32> to vector<16x24xf32>
    %152 = arith.maximumf %150, %151 : vector<16x24xf32>
    %153 = arith.maximumf %149, %152 : vector<16x24xf32>
    %c0_176 = arith.constant 0 : index
    %c0_177 = arith.constant 0 : index
    %154 = vector.load %arg4[%c0_176, %c0_177] : memref<1x24xf32, #tpu.memory_space<vmem>>, vector<1x24xf32>
    %155 = vector.broadcast %154 : vector<1x24xf32> to vector<16x24xf32>
    %156 = arith.addf %153, %155 : vector<16x24xf32>
    %cst_178 = arith.constant 0.000000e+00 : f32
    %157 = vector.broadcast %cst_178 : f32 to vector<16x24xf32>
    %158 = arith.maximumf %156, %157 : vector<16x24xf32>
    %c0_179 = arith.constant 0 : index
    %c0_180 = arith.constant 0 : index
    %159 = vector.load %arg5[%c0_179, %c0_180] : memref<588x24xbf16, #tpu.memory_space<vmem>>, vector<588x24xbf16>
    %c0_181 = arith.constant 0 : index
    %c0_182 = arith.constant 0 : index
    %c0_183 = arith.constant 0 : index
    %160 = vector.load %arg2[%c0_181, %c0_182, %c0_183] : memref<4x40x84xbf16, #tpu.memory_space<vmem>>, vector<1x4x84xbf16>
    %161 = vector.shape_cast %160 : vector<1x4x84xbf16> to vector<4x84xbf16>
    %c0_184 = arith.constant 0 : index
    %c20_185 = arith.constant 20 : index
    %c0_186 = arith.constant 0 : index
    %162 = vector.load %arg2[%c0_184, %c20_185, %c0_186] : memref<4x40x84xbf16, #tpu.memory_space<vmem>>, vector<1x4x84xbf16>
    %163 = vector.shape_cast %162 : vector<1x4x84xbf16> to vector<4x84xbf16>
    %c0_187 = arith.constant 0 : index
    %c2_188 = arith.constant 2 : index
    %c0_189 = arith.constant 0 : index
    %164 = vector.load %arg2[%c0_187, %c2_188, %c0_189] : memref<4x40x84xbf16, #tpu.memory_space<vmem>>, vector<1x4x84xbf16>
    %165 = vector.shape_cast %164 : vector<1x4x84xbf16> to vector<4x84xbf16>
    %c0_190 = arith.constant 0 : index
    %c22_191 = arith.constant 22 : index
    %c0_192 = arith.constant 0 : index
    %166 = vector.load %arg2[%c0_190, %c22_191, %c0_192] : memref<4x40x84xbf16, #tpu.memory_space<vmem>>, vector<1x4x84xbf16>
    %167 = vector.shape_cast %166 : vector<1x4x84xbf16> to vector<4x84xbf16>
    %c0_193 = arith.constant 0 : index
    %c4_194 = arith.constant 4 : index
    %c0_195 = arith.constant 0 : index
    %168 = vector.load %arg2[%c0_193, %c4_194, %c0_195] : memref<4x40x84xbf16, #tpu.memory_space<vmem>>, vector<1x4x84xbf16>
    %169 = vector.shape_cast %168 : vector<1x4x84xbf16> to vector<4x84xbf16>
    %c0_196 = arith.constant 0 : index
    %c24_197 = arith.constant 24 : index
    %c0_198 = arith.constant 0 : index
    %170 = vector.load %arg2[%c0_196, %c24_197, %c0_198] : memref<4x40x84xbf16, #tpu.memory_space<vmem>>, vector<1x4x84xbf16>
    %171 = vector.shape_cast %170 : vector<1x4x84xbf16> to vector<4x84xbf16>
    %c0_199 = arith.constant 0 : index
    %c6_200 = arith.constant 6 : index
    %c0_201 = arith.constant 0 : index
    %172 = vector.load %arg2[%c0_199, %c6_200, %c0_201] : memref<4x40x84xbf16, #tpu.memory_space<vmem>>, vector<1x4x84xbf16>
    %173 = vector.shape_cast %172 : vector<1x4x84xbf16> to vector<4x84xbf16>
    %174 = tpu.concatenate %161, %163, %165, %167, %169, %171, %173 in 1 : vector<4x84xbf16>, vector<4x84xbf16>, vector<4x84xbf16>, vector<4x84xbf16>, vector<4x84xbf16>, vector<4x84xbf16>, vector<4x84xbf16> -> vector<4x588xbf16>
    %c1_202 = arith.constant 1 : index
    %c0_203 = arith.constant 0 : index
    %c0_204 = arith.constant 0 : index
    %175 = vector.load %arg2[%c1_202, %c0_203, %c0_204] : memref<4x40x84xbf16, #tpu.memory_space<vmem>>, vector<1x4x84xbf16>
    %176 = vector.shape_cast %175 : vector<1x4x84xbf16> to vector<4x84xbf16>
    %c1_205 = arith.constant 1 : index
    %c20_206 = arith.constant 20 : index
    %c0_207 = arith.constant 0 : index
    %177 = vector.load %arg2[%c1_205, %c20_206, %c0_207] : memref<4x40x84xbf16, #tpu.memory_space<vmem>>, vector<1x4x84xbf16>
    %178 = vector.shape_cast %177 : vector<1x4x84xbf16> to vector<4x84xbf16>
    %c1_208 = arith.constant 1 : index
    %c2_209 = arith.constant 2 : index
    %c0_210 = arith.constant 0 : index
    %179 = vector.load %arg2[%c1_208, %c2_209, %c0_210] : memref<4x40x84xbf16, #tpu.memory_space<vmem>>, vector<1x4x84xbf16>
    %180 = vector.shape_cast %179 : vector<1x4x84xbf16> to vector<4x84xbf16>
    %c1_211 = arith.constant 1 : index
    %c22_212 = arith.constant 22 : index
    %c0_213 = arith.constant 0 : index
    %181 = vector.load %arg2[%c1_211, %c22_212, %c0_213] : memref<4x40x84xbf16, #tpu.memory_space<vmem>>, vector<1x4x84xbf16>
    %182 = vector.shape_cast %181 : vector<1x4x84xbf16> to vector<4x84xbf16>
    %c1_214 = arith.constant 1 : index
    %c4_215 = arith.constant 4 : index
    %c0_216 = arith.constant 0 : index
    %183 = vector.load %arg2[%c1_214, %c4_215, %c0_216] : memref<4x40x84xbf16, #tpu.memory_space<vmem>>, vector<1x4x84xbf16>
    %184 = vector.shape_cast %183 : vector<1x4x84xbf16> to vector<4x84xbf16>
    %c1_217 = arith.constant 1 : index
    %c24_218 = arith.constant 24 : index
    %c0_219 = arith.constant 0 : index
    %185 = vector.load %arg2[%c1_217, %c24_218, %c0_219] : memref<4x40x84xbf16, #tpu.memory_space<vmem>>, vector<1x4x84xbf16>
    %186 = vector.shape_cast %185 : vector<1x4x84xbf16> to vector<4x84xbf16>
    %c1_220 = arith.constant 1 : index
    %c6_221 = arith.constant 6 : index
    %c0_222 = arith.constant 0 : index
    %187 = vector.load %arg2[%c1_220, %c6_221, %c0_222] : memref<4x40x84xbf16, #tpu.memory_space<vmem>>, vector<1x4x84xbf16>
    %188 = vector.shape_cast %187 : vector<1x4x84xbf16> to vector<4x84xbf16>
    %189 = tpu.concatenate %176, %178, %180, %182, %184, %186, %188 in 1 : vector<4x84xbf16>, vector<4x84xbf16>, vector<4x84xbf16>, vector<4x84xbf16>, vector<4x84xbf16>, vector<4x84xbf16>, vector<4x84xbf16> -> vector<4x588xbf16>
    %c2_223 = arith.constant 2 : index
    %c0_224 = arith.constant 0 : index
    %c0_225 = arith.constant 0 : index
    %190 = vector.load %arg2[%c2_223, %c0_224, %c0_225] : memref<4x40x84xbf16, #tpu.memory_space<vmem>>, vector<1x4x84xbf16>
    %191 = vector.shape_cast %190 : vector<1x4x84xbf16> to vector<4x84xbf16>
    %c2_226 = arith.constant 2 : index
    %c20_227 = arith.constant 20 : index
    %c0_228 = arith.constant 0 : index
    %192 = vector.load %arg2[%c2_226, %c20_227, %c0_228] : memref<4x40x84xbf16, #tpu.memory_space<vmem>>, vector<1x4x84xbf16>
    %193 = vector.shape_cast %192 : vector<1x4x84xbf16> to vector<4x84xbf16>
    %c2_229 = arith.constant 2 : index
    %c2_230 = arith.constant 2 : index
    %c0_231 = arith.constant 0 : index
    %194 = vector.load %arg2[%c2_229, %c2_230, %c0_231] : memref<4x40x84xbf16, #tpu.memory_space<vmem>>, vector<1x4x84xbf16>
    %195 = vector.shape_cast %194 : vector<1x4x84xbf16> to vector<4x84xbf16>
    %c2_232 = arith.constant 2 : index
    %c22_233 = arith.constant 22 : index
    %c0_234 = arith.constant 0 : index
    %196 = vector.load %arg2[%c2_232, %c22_233, %c0_234] : memref<4x40x84xbf16, #tpu.memory_space<vmem>>, vector<1x4x84xbf16>
    %197 = vector.shape_cast %196 : vector<1x4x84xbf16> to vector<4x84xbf16>
    %c2_235 = arith.constant 2 : index
    %c4_236 = arith.constant 4 : index
    %c0_237 = arith.constant 0 : index
    %198 = vector.load %arg2[%c2_235, %c4_236, %c0_237] : memref<4x40x84xbf16, #tpu.memory_space<vmem>>, vector<1x4x84xbf16>
    %199 = vector.shape_cast %198 : vector<1x4x84xbf16> to vector<4x84xbf16>
    %c2_238 = arith.constant 2 : index
    %c24_239 = arith.constant 24 : index
    %c0_240 = arith.constant 0 : index
    %200 = vector.load %arg2[%c2_238, %c24_239, %c0_240] : memref<4x40x84xbf16, #tpu.memory_space<vmem>>, vector<1x4x84xbf16>
    %201 = vector.shape_cast %200 : vector<1x4x84xbf16> to vector<4x84xbf16>
    %c2_241 = arith.constant 2 : index
    %c6_242 = arith.constant 6 : index
    %c0_243 = arith.constant 0 : index
    %202 = vector.load %arg2[%c2_241, %c6_242, %c0_243] : memref<4x40x84xbf16, #tpu.memory_space<vmem>>, vector<1x4x84xbf16>
    %203 = vector.shape_cast %202 : vector<1x4x84xbf16> to vector<4x84xbf16>
    %204 = tpu.concatenate %191, %193, %195, %197, %199, %201, %203 in 1 : vector<4x84xbf16>, vector<4x84xbf16>, vector<4x84xbf16>, vector<4x84xbf16>, vector<4x84xbf16>, vector<4x84xbf16>, vector<4x84xbf16> -> vector<4x588xbf16>
    %c3_244 = arith.constant 3 : index
    %c0_245 = arith.constant 0 : index
    %c0_246 = arith.constant 0 : index
    %205 = vector.load %arg2[%c3_244, %c0_245, %c0_246] : memref<4x40x84xbf16, #tpu.memory_space<vmem>>, vector<1x4x84xbf16>
    %206 = vector.shape_cast %205 : vector<1x4x84xbf16> to vector<4x84xbf16>
    %c3_247 = arith.constant 3 : index
    %c20_248 = arith.constant 20 : index
    %c0_249 = arith.constant 0 : index
    %207 = vector.load %arg2[%c3_247, %c20_248, %c0_249] : memref<4x40x84xbf16, #tpu.memory_space<vmem>>, vector<1x4x84xbf16>
    %208 = vector.shape_cast %207 : vector<1x4x84xbf16> to vector<4x84xbf16>
    %c3_250 = arith.constant 3 : index
    %c2_251 = arith.constant 2 : index
    %c0_252 = arith.constant 0 : index
    %209 = vector.load %arg2[%c3_250, %c2_251, %c0_252] : memref<4x40x84xbf16, #tpu.memory_space<vmem>>, vector<1x4x84xbf16>
    %210 = vector.shape_cast %209 : vector<1x4x84xbf16> to vector<4x84xbf16>
    %c3_253 = arith.constant 3 : index
    %c22_254 = arith.constant 22 : index
    %c0_255 = arith.constant 0 : index
    %211 = vector.load %arg2[%c3_253, %c22_254, %c0_255] : memref<4x40x84xbf16, #tpu.memory_space<vmem>>, vector<1x4x84xbf16>
    %212 = vector.shape_cast %211 : vector<1x4x84xbf16> to vector<4x84xbf16>
    %c3_256 = arith.constant 3 : index
    %c4_257 = arith.constant 4 : index
    %c0_258 = arith.constant 0 : index
    %213 = vector.load %arg2[%c3_256, %c4_257, %c0_258] : memref<4x40x84xbf16, #tpu.memory_space<vmem>>, vector<1x4x84xbf16>
    %214 = vector.shape_cast %213 : vector<1x4x84xbf16> to vector<4x84xbf16>
    %c3_259 = arith.constant 3 : index
    %c24_260 = arith.constant 24 : index
    %c0_261 = arith.constant 0 : index
    %215 = vector.load %arg2[%c3_259, %c24_260, %c0_261] : memref<4x40x84xbf16, #tpu.memory_space<vmem>>, vector<1x4x84xbf16>
    %216 = vector.shape_cast %215 : vector<1x4x84xbf16> to vector<4x84xbf16>
    %c3_262 = arith.constant 3 : index
    %c6_263 = arith.constant 6 : index
    %c0_264 = arith.constant 0 : index
    %217 = vector.load %arg2[%c3_262, %c6_263, %c0_264] : memref<4x40x84xbf16, #tpu.memory_space<vmem>>, vector<1x4x84xbf16>
    %218 = vector.shape_cast %217 : vector<1x4x84xbf16> to vector<4x84xbf16>
    %219 = tpu.concatenate %206, %208, %210, %212, %214, %216, %218 in 1 : vector<4x84xbf16>, vector<4x84xbf16>, vector<4x84xbf16>, vector<4x84xbf16>, vector<4x84xbf16>, vector<4x84xbf16>, vector<4x84xbf16> -> vector<4x588xbf16>
    %c0_265 = arith.constant 0 : index
    %c10_266 = arith.constant 10 : index
    %c0_267 = arith.constant 0 : index
    %220 = vector.load %arg2[%c0_265, %c10_266, %c0_267] : memref<4x40x84xbf16, #tpu.memory_space<vmem>>, vector<1x4x84xbf16>
    %221 = vector.shape_cast %220 : vector<1x4x84xbf16> to vector<4x84xbf16>
    %c0_268 = arith.constant 0 : index
    %c30_269 = arith.constant 30 : index
    %c0_270 = arith.constant 0 : index
    %222 = vector.load %arg2[%c0_268, %c30_269, %c0_270] : memref<4x40x84xbf16, #tpu.memory_space<vmem>>, vector<1x4x84xbf16>
    %223 = vector.shape_cast %222 : vector<1x4x84xbf16> to vector<4x84xbf16>
    %c0_271 = arith.constant 0 : index
    %c12_272 = arith.constant 12 : index
    %c0_273 = arith.constant 0 : index
    %224 = vector.load %arg2[%c0_271, %c12_272, %c0_273] : memref<4x40x84xbf16, #tpu.memory_space<vmem>>, vector<1x4x84xbf16>
    %225 = vector.shape_cast %224 : vector<1x4x84xbf16> to vector<4x84xbf16>
    %c0_274 = arith.constant 0 : index
    %c32_275 = arith.constant 32 : index
    %c0_276 = arith.constant 0 : index
    %226 = vector.load %arg2[%c0_274, %c32_275, %c0_276] : memref<4x40x84xbf16, #tpu.memory_space<vmem>>, vector<1x4x84xbf16>
    %227 = vector.shape_cast %226 : vector<1x4x84xbf16> to vector<4x84xbf16>
    %c0_277 = arith.constant 0 : index
    %c14_278 = arith.constant 14 : index
    %c0_279 = arith.constant 0 : index
    %228 = vector.load %arg2[%c0_277, %c14_278, %c0_279] : memref<4x40x84xbf16, #tpu.memory_space<vmem>>, vector<1x4x84xbf16>
    %229 = vector.shape_cast %228 : vector<1x4x84xbf16> to vector<4x84xbf16>
    %c0_280 = arith.constant 0 : index
    %c34_281 = arith.constant 34 : index
    %c0_282 = arith.constant 0 : index
    %230 = vector.load %arg2[%c0_280, %c34_281, %c0_282] : memref<4x40x84xbf16, #tpu.memory_space<vmem>>, vector<1x4x84xbf16>
    %231 = vector.shape_cast %230 : vector<1x4x84xbf16> to vector<4x84xbf16>
    %c0_283 = arith.constant 0 : index
    %c16_284 = arith.constant 16 : index
    %c0_285 = arith.constant 0 : index
    %232 = vector.load %arg2[%c0_283, %c16_284, %c0_285] : memref<4x40x84xbf16, #tpu.memory_space<vmem>>, vector<1x4x84xbf16>
    %233 = vector.shape_cast %232 : vector<1x4x84xbf16> to vector<4x84xbf16>
    %234 = tpu.concatenate %221, %223, %225, %227, %229, %231, %233 in 1 : vector<4x84xbf16>, vector<4x84xbf16>, vector<4x84xbf16>, vector<4x84xbf16>, vector<4x84xbf16>, vector<4x84xbf16>, vector<4x84xbf16> -> vector<4x588xbf16>
    %c1_286 = arith.constant 1 : index
    %c10_287 = arith.constant 10 : index
    %c0_288 = arith.constant 0 : index
    %235 = vector.load %arg2[%c1_286, %c10_287, %c0_288] : memref<4x40x84xbf16, #tpu.memory_space<vmem>>, vector<1x4x84xbf16>
    %236 = vector.shape_cast %235 : vector<1x4x84xbf16> to vector<4x84xbf16>
    %c1_289 = arith.constant 1 : index
    %c30_290 = arith.constant 30 : index
    %c0_291 = arith.constant 0 : index
    %237 = vector.load %arg2[%c1_289, %c30_290, %c0_291] : memref<4x40x84xbf16, #tpu.memory_space<vmem>>, vector<1x4x84xbf16>
    %238 = vector.shape_cast %237 : vector<1x4x84xbf16> to vector<4x84xbf16>
    %c1_292 = arith.constant 1 : index
    %c12_293 = arith.constant 12 : index
    %c0_294 = arith.constant 0 : index
    %239 = vector.load %arg2[%c1_292, %c12_293, %c0_294] : memref<4x40x84xbf16, #tpu.memory_space<vmem>>, vector<1x4x84xbf16>
    %240 = vector.shape_cast %239 : vector<1x4x84xbf16> to vector<4x84xbf16>
    %c1_295 = arith.constant 1 : index
    %c32_296 = arith.constant 32 : index
    %c0_297 = arith.constant 0 : index
    %241 = vector.load %arg2[%c1_295, %c32_296, %c0_297] : memref<4x40x84xbf16, #tpu.memory_space<vmem>>, vector<1x4x84xbf16>
    %242 = vector.shape_cast %241 : vector<1x4x84xbf16> to vector<4x84xbf16>
    %c1_298 = arith.constant 1 : index
    %c14_299 = arith.constant 14 : index
    %c0_300 = arith.constant 0 : index
    %243 = vector.load %arg2[%c1_298, %c14_299, %c0_300] : memref<4x40x84xbf16, #tpu.memory_space<vmem>>, vector<1x4x84xbf16>
    %244 = vector.shape_cast %243 : vector<1x4x84xbf16> to vector<4x84xbf16>
    %c1_301 = arith.constant 1 : index
    %c34_302 = arith.constant 34 : index
    %c0_303 = arith.constant 0 : index
    %245 = vector.load %arg2[%c1_301, %c34_302, %c0_303] : memref<4x40x84xbf16, #tpu.memory_space<vmem>>, vector<1x4x84xbf16>
    %246 = vector.shape_cast %245 : vector<1x4x84xbf16> to vector<4x84xbf16>
    %c1_304 = arith.constant 1 : index
    %c16_305 = arith.constant 16 : index
    %c0_306 = arith.constant 0 : index
    %247 = vector.load %arg2[%c1_304, %c16_305, %c0_306] : memref<4x40x84xbf16, #tpu.memory_space<vmem>>, vector<1x4x84xbf16>
    %248 = vector.shape_cast %247 : vector<1x4x84xbf16> to vector<4x84xbf16>
    %249 = tpu.concatenate %236, %238, %240, %242, %244, %246, %248 in 1 : vector<4x84xbf16>, vector<4x84xbf16>, vector<4x84xbf16>, vector<4x84xbf16>, vector<4x84xbf16>, vector<4x84xbf16>, vector<4x84xbf16> -> vector<4x588xbf16>
    %c2_307 = arith.constant 2 : index
    %c10_308 = arith.constant 10 : index
    %c0_309 = arith.constant 0 : index
    %250 = vector.load %arg2[%c2_307, %c10_308, %c0_309] : memref<4x40x84xbf16, #tpu.memory_space<vmem>>, vector<1x4x84xbf16>
    %251 = vector.shape_cast %250 : vector<1x4x84xbf16> to vector<4x84xbf16>
    %c2_310 = arith.constant 2 : index
    %c30_311 = arith.constant 30 : index
    %c0_312 = arith.constant 0 : index
    %252 = vector.load %arg2[%c2_310, %c30_311, %c0_312] : memref<4x40x84xbf16, #tpu.memory_space<vmem>>, vector<1x4x84xbf16>
    %253 = vector.shape_cast %252 : vector<1x4x84xbf16> to vector<4x84xbf16>
    %c2_313 = arith.constant 2 : index
    %c12_314 = arith.constant 12 : index
    %c0_315 = arith.constant 0 : index
    %254 = vector.load %arg2[%c2_313, %c12_314, %c0_315] : memref<4x40x84xbf16, #tpu.memory_space<vmem>>, vector<1x4x84xbf16>
    %255 = vector.shape_cast %254 : vector<1x4x84xbf16> to vector<4x84xbf16>
    %c2_316 = arith.constant 2 : index
    %c32_317 = arith.constant 32 : index
    %c0_318 = arith.constant 0 : index
    %256 = vector.load %arg2[%c2_316, %c32_317, %c0_318] : memref<4x40x84xbf16, #tpu.memory_space<vmem>>, vector<1x4x84xbf16>
    %257 = vector.shape_cast %256 : vector<1x4x84xbf16> to vector<4x84xbf16>
    %c2_319 = arith.constant 2 : index
    %c14_320 = arith.constant 14 : index
    %c0_321 = arith.constant 0 : index
    %258 = vector.load %arg2[%c2_319, %c14_320, %c0_321] : memref<4x40x84xbf16, #tpu.memory_space<vmem>>, vector<1x4x84xbf16>
    %259 = vector.shape_cast %258 : vector<1x4x84xbf16> to vector<4x84xbf16>
    %c2_322 = arith.constant 2 : index
    %c34_323 = arith.constant 34 : index
    %c0_324 = arith.constant 0 : index
    %260 = vector.load %arg2[%c2_322, %c34_323, %c0_324] : memref<4x40x84xbf16, #tpu.memory_space<vmem>>, vector<1x4x84xbf16>
    %261 = vector.shape_cast %260 : vector<1x4x84xbf16> to vector<4x84xbf16>
    %c2_325 = arith.constant 2 : index
    %c16_326 = arith.constant 16 : index
    %c0_327 = arith.constant 0 : index
    %262 = vector.load %arg2[%c2_325, %c16_326, %c0_327] : memref<4x40x84xbf16, #tpu.memory_space<vmem>>, vector<1x4x84xbf16>
    %263 = vector.shape_cast %262 : vector<1x4x84xbf16> to vector<4x84xbf16>
    %264 = tpu.concatenate %251, %253, %255, %257, %259, %261, %263 in 1 : vector<4x84xbf16>, vector<4x84xbf16>, vector<4x84xbf16>, vector<4x84xbf16>, vector<4x84xbf16>, vector<4x84xbf16>, vector<4x84xbf16> -> vector<4x588xbf16>
    %c3_328 = arith.constant 3 : index
    %c10_329 = arith.constant 10 : index
    %c0_330 = arith.constant 0 : index
    %265 = vector.load %arg2[%c3_328, %c10_329, %c0_330] : memref<4x40x84xbf16, #tpu.memory_space<vmem>>, vector<1x4x84xbf16>
    %266 = vector.shape_cast %265 : vector<1x4x84xbf16> to vector<4x84xbf16>
    %c3_331 = arith.constant 3 : index
    %c30_332 = arith.constant 30 : index
    %c0_333 = arith.constant 0 : index
    %267 = vector.load %arg2[%c3_331, %c30_332, %c0_333] : memref<4x40x84xbf16, #tpu.memory_space<vmem>>, vector<1x4x84xbf16>
    %268 = vector.shape_cast %267 : vector<1x4x84xbf16> to vector<4x84xbf16>
    %c3_334 = arith.constant 3 : index
    %c12_335 = arith.constant 12 : index
    %c0_336 = arith.constant 0 : index
    %269 = vector.load %arg2[%c3_334, %c12_335, %c0_336] : memref<4x40x84xbf16, #tpu.memory_space<vmem>>, vector<1x4x84xbf16>
    %270 = vector.shape_cast %269 : vector<1x4x84xbf16> to vector<4x84xbf16>
    %c3_337 = arith.constant 3 : index
    %c32_338 = arith.constant 32 : index
    %c0_339 = arith.constant 0 : index
    %271 = vector.load %arg2[%c3_337, %c32_338, %c0_339] : memref<4x40x84xbf16, #tpu.memory_space<vmem>>, vector<1x4x84xbf16>
    %272 = vector.shape_cast %271 : vector<1x4x84xbf16> to vector<4x84xbf16>
    %c3_340 = arith.constant 3 : index
    %c14_341 = arith.constant 14 : index
    %c0_342 = arith.constant 0 : index
    %273 = vector.load %arg2[%c3_340, %c14_341, %c0_342] : memref<4x40x84xbf16, #tpu.memory_space<vmem>>, vector<1x4x84xbf16>
    %274 = vector.shape_cast %273 : vector<1x4x84xbf16> to vector<4x84xbf16>
    %c3_343 = arith.constant 3 : index
    %c34_344 = arith.constant 34 : index
    %c0_345 = arith.constant 0 : index
    %275 = vector.load %arg2[%c3_343, %c34_344, %c0_345] : memref<4x40x84xbf16, #tpu.memory_space<vmem>>, vector<1x4x84xbf16>
    %276 = vector.shape_cast %275 : vector<1x4x84xbf16> to vector<4x84xbf16>
    %c3_346 = arith.constant 3 : index
    %c16_347 = arith.constant 16 : index
    %c0_348 = arith.constant 0 : index
    %277 = vector.load %arg2[%c3_346, %c16_347, %c0_348] : memref<4x40x84xbf16, #tpu.memory_space<vmem>>, vector<1x4x84xbf16>
    %278 = vector.shape_cast %277 : vector<1x4x84xbf16> to vector<4x84xbf16>
    %279 = tpu.concatenate %266, %268, %270, %272, %274, %276, %278 in 1 : vector<4x84xbf16>, vector<4x84xbf16>, vector<4x84xbf16>, vector<4x84xbf16>, vector<4x84xbf16>, vector<4x84xbf16>, vector<4x84xbf16> -> vector<4x588xbf16>
    %c0_349 = arith.constant 0 : index
    %c26_350 = arith.constant 26 : index
    %c0_351 = arith.constant 0 : index
    %280 = vector.load %arg2[%c0_349, %c26_350, %c0_351] : memref<4x40x84xbf16, #tpu.memory_space<vmem>>, vector<1x4x84xbf16>
    %281 = vector.shape_cast %280 : vector<1x4x84xbf16> to vector<4x84xbf16>
    %282 = tpu.concatenate %163, %165, %167, %169, %171, %173, %281 in 1 : vector<4x84xbf16>, vector<4x84xbf16>, vector<4x84xbf16>, vector<4x84xbf16>, vector<4x84xbf16>, vector<4x84xbf16>, vector<4x84xbf16> -> vector<4x588xbf16>
    %c1_352 = arith.constant 1 : index
    %c26_353 = arith.constant 26 : index
    %c0_354 = arith.constant 0 : index
    %283 = vector.load %arg2[%c1_352, %c26_353, %c0_354] : memref<4x40x84xbf16, #tpu.memory_space<vmem>>, vector<1x4x84xbf16>
    %284 = vector.shape_cast %283 : vector<1x4x84xbf16> to vector<4x84xbf16>
    %285 = tpu.concatenate %178, %180, %182, %184, %186, %188, %284 in 1 : vector<4x84xbf16>, vector<4x84xbf16>, vector<4x84xbf16>, vector<4x84xbf16>, vector<4x84xbf16>, vector<4x84xbf16>, vector<4x84xbf16> -> vector<4x588xbf16>
    %c2_355 = arith.constant 2 : index
    %c26_356 = arith.constant 26 : index
    %c0_357 = arith.constant 0 : index
    %286 = vector.load %arg2[%c2_355, %c26_356, %c0_357] : memref<4x40x84xbf16, #tpu.memory_space<vmem>>, vector<1x4x84xbf16>
    %287 = vector.shape_cast %286 : vector<1x4x84xbf16> to vector<4x84xbf16>
    %288 = tpu.concatenate %193, %195, %197, %199, %201, %203, %287 in 1 : vector<4x84xbf16>, vector<4x84xbf16>, vector<4x84xbf16>, vector<4x84xbf16>, vector<4x84xbf16>, vector<4x84xbf16>, vector<4x84xbf16> -> vector<4x588xbf16>
    %c3_358 = arith.constant 3 : index
    %c26_359 = arith.constant 26 : index
    %c0_360 = arith.constant 0 : index
    %289 = vector.load %arg2[%c3_358, %c26_359, %c0_360] : memref<4x40x84xbf16, #tpu.memory_space<vmem>>, vector<1x4x84xbf16>
    %290 = vector.shape_cast %289 : vector<1x4x84xbf16> to vector<4x84xbf16>
    %291 = tpu.concatenate %208, %210, %212, %214, %216, %218, %290 in 1 : vector<4x84xbf16>, vector<4x84xbf16>, vector<4x84xbf16>, vector<4x84xbf16>, vector<4x84xbf16>, vector<4x84xbf16>, vector<4x84xbf16> -> vector<4x588xbf16>
    %c0_361 = arith.constant 0 : index
    %c36_362 = arith.constant 36 : index
    %c0_363 = arith.constant 0 : index
    %292 = vector.load %arg2[%c0_361, %c36_362, %c0_363] : memref<4x40x84xbf16, #tpu.memory_space<vmem>>, vector<1x4x84xbf16>
    %293 = vector.shape_cast %292 : vector<1x4x84xbf16> to vector<4x84xbf16>
    %294 = tpu.concatenate %223, %225, %227, %229, %231, %233, %293 in 1 : vector<4x84xbf16>, vector<4x84xbf16>, vector<4x84xbf16>, vector<4x84xbf16>, vector<4x84xbf16>, vector<4x84xbf16>, vector<4x84xbf16> -> vector<4x588xbf16>
    %c1_364 = arith.constant 1 : index
    %c36_365 = arith.constant 36 : index
    %c0_366 = arith.constant 0 : index
    %295 = vector.load %arg2[%c1_364, %c36_365, %c0_366] : memref<4x40x84xbf16, #tpu.memory_space<vmem>>, vector<1x4x84xbf16>
    %296 = vector.shape_cast %295 : vector<1x4x84xbf16> to vector<4x84xbf16>
    %297 = tpu.concatenate %238, %240, %242, %244, %246, %248, %296 in 1 : vector<4x84xbf16>, vector<4x84xbf16>, vector<4x84xbf16>, vector<4x84xbf16>, vector<4x84xbf16>, vector<4x84xbf16>, vector<4x84xbf16> -> vector<4x588xbf16>
    %c2_367 = arith.constant 2 : index
    %c36_368 = arith.constant 36 : index
    %c0_369 = arith.constant 0 : index
    %298 = vector.load %arg2[%c2_367, %c36_368, %c0_369] : memref<4x40x84xbf16, #tpu.memory_space<vmem>>, vector<1x4x84xbf16>
    %299 = vector.shape_cast %298 : vector<1x4x84xbf16> to vector<4x84xbf16>
    %300 = tpu.concatenate %253, %255, %257, %259, %261, %263, %299 in 1 : vector<4x84xbf16>, vector<4x84xbf16>, vector<4x84xbf16>, vector<4x84xbf16>, vector<4x84xbf16>, vector<4x84xbf16>, vector<4x84xbf16> -> vector<4x588xbf16>
    %c3_370 = arith.constant 3 : index
    %c36_371 = arith.constant 36 : index
    %c0_372 = arith.constant 0 : index
    %301 = vector.load %arg2[%c3_370, %c36_371, %c0_372] : memref<4x40x84xbf16, #tpu.memory_space<vmem>>, vector<1x4x84xbf16>
    %302 = vector.shape_cast %301 : vector<1x4x84xbf16> to vector<4x84xbf16>
    %303 = tpu.concatenate %268, %270, %272, %274, %276, %278, %302 in 1 : vector<4x84xbf16>, vector<4x84xbf16>, vector<4x84xbf16>, vector<4x84xbf16>, vector<4x84xbf16>, vector<4x84xbf16>, vector<4x84xbf16> -> vector<4x588xbf16>
    %304 = tpu.concatenate %174, %189, %204, %219, %234, %249, %264, %279, %282, %285, %288, %291, %294, %297, %300, %303 in 0 : vector<4x588xbf16>, vector<4x588xbf16>, vector<4x588xbf16>, vector<4x588xbf16>, vector<4x588xbf16>, vector<4x588xbf16>, vector<4x588xbf16>, vector<4x588xbf16>, vector<4x588xbf16>, vector<4x588xbf16>, vector<4x588xbf16>, vector<4x588xbf16>, vector<4x588xbf16>, vector<4x588xbf16>, vector<4x588xbf16>, vector<4x588xbf16> -> vector<64x588xbf16>
    %cst_373 = arith.constant dense<0.000000e+00> : vector<64x24xf32>
    %305 = tpu.matmul %304, %159, %cst_373 {dimension_numbers = #tpu.dot_dimension_numbers<[1], [0], [0], [1], [0, 0, 1, 1], [], []>} : vector<64x588xbf16>, vector<588x24xbf16>, vector<64x24xf32> -> vector<64x24xf32>
    %306 = vector.extract_strided_slice %305 {offsets = [0, 0], sizes = [16, 24], strides = [1, 1]} : vector<64x24xf32> to vector<16x24xf32>
    %307 = vector.extract_strided_slice %305 {offsets = [16, 0], sizes = [16, 24], strides = [1, 1]} : vector<64x24xf32> to vector<16x24xf32>
    %308 = arith.maximumf %306, %307 : vector<16x24xf32>
    %309 = vector.extract_strided_slice %305 {offsets = [32, 0], sizes = [16, 24], strides = [1, 1]} : vector<64x24xf32> to vector<16x24xf32>
    %310 = vector.extract_strided_slice %305 {offsets = [48, 0], sizes = [16, 24], strides = [1, 1]} : vector<64x24xf32> to vector<16x24xf32>
    %311 = arith.maximumf %309, %310 : vector<16x24xf32>
    %312 = arith.maximumf %308, %311 : vector<16x24xf32>
    %c0_374 = arith.constant 0 : index
    %c0_375 = arith.constant 0 : index
    %313 = vector.load %arg6[%c0_374, %c0_375] : memref<1x24xf32, #tpu.memory_space<vmem>>, vector<1x24xf32>
    %314 = vector.broadcast %313 : vector<1x24xf32> to vector<16x24xf32>
    %315 = arith.addf %312, %314 : vector<16x24xf32>
    %cst_376 = arith.constant 0.000000e+00 : f32
    %316 = vector.broadcast %cst_376 : f32 to vector<16x24xf32>
    %317 = arith.maximumf %315, %316 : vector<16x24xf32>
    %318 = arith.addf %158, %317 : vector<16x24xf32>
    %319 = vector.extract_strided_slice %318 {offsets = [0, 0], sizes = [4, 24], strides = [1, 1]} : vector<16x24xf32> to vector<4x24xf32>
    %c0_377 = arith.constant 0 : index
    %c0_378 = arith.constant 0 : index
    %c0_379 = arith.constant 0 : index
    %320 = vector.load %arg7[%c0_377, %c0_378, %c0_379] : memref<4x4x24xf32, #tpu.memory_space<vmem>>, vector<1x4x24xf32>
    %321 = vector.shape_cast %320 : vector<1x4x24xf32> to vector<4x24xf32>
    %322 = vector.shape_cast %319 : vector<4x24xf32> to vector<1x4x24xf32>
    tpu.vector_store %arg7[%c0_377, %c0_378, %c0_379], %322 {strides = array<i32>} : memref<4x4x24xf32, #tpu.memory_space<vmem>>, vector<1x4x24xf32>,
    %323 = vector.extract_strided_slice %318 {offsets = [4, 0], sizes = [4, 24], strides = [1, 1]} : vector<16x24xf32> to vector<4x24xf32>
    %c1_380 = arith.constant 1 : index
    %c0_381 = arith.constant 0 : index
    %c0_382 = arith.constant 0 : index
    %324 = vector.load %arg7[%c1_380, %c0_381, %c0_382] : memref<4x4x24xf32, #tpu.memory_space<vmem>>, vector<1x4x24xf32>
    %325 = vector.shape_cast %324 : vector<1x4x24xf32> to vector<4x24xf32>
    %326 = vector.shape_cast %323 : vector<4x24xf32> to vector<1x4x24xf32>
    tpu.vector_store %arg7[%c1_380, %c0_381, %c0_382], %326 {strides = array<i32>} : memref<4x4x24xf32, #tpu.memory_space<vmem>>, vector<1x4x24xf32>,
    %327 = vector.extract_strided_slice %318 {offsets = [8, 0], sizes = [4, 24], strides = [1, 1]} : vector<16x24xf32> to vector<4x24xf32>
    %c2_383 = arith.constant 2 : index
    %c0_384 = arith.constant 0 : index
    %c0_385 = arith.constant 0 : index
    %328 = vector.load %arg7[%c2_383, %c0_384, %c0_385] : memref<4x4x24xf32, #tpu.memory_space<vmem>>, vector<1x4x24xf32>
    %329 = vector.shape_cast %328 : vector<1x4x24xf32> to vector<4x24xf32>
    %330 = vector.shape_cast %327 : vector<4x24xf32> to vector<1x4x24xf32>
    tpu.vector_store %arg7[%c2_383, %c0_384, %c0_385], %330 {strides = array<i32>} : memref<4x4x24xf32, #tpu.memory_space<vmem>>, vector<1x4x24xf32>,
    %331 = vector.extract_strided_slice %318 {offsets = [12, 0], sizes = [4, 24], strides = [1, 1]} : vector<16x24xf32> to vector<4x24xf32>
    %c3_386 = arith.constant 3 : index
    %c0_387 = arith.constant 0 : index
    %c0_388 = arith.constant 0 : index
    %332 = vector.load %arg7[%c3_386, %c0_387, %c0_388] : memref<4x4x24xf32, #tpu.memory_space<vmem>>, vector<1x4x24xf32>
    %333 = vector.shape_cast %332 : vector<1x4x24xf32> to vector<4x24xf32>
    %334 = vector.shape_cast %331 : vector<4x24xf32> to vector<1x4x24xf32>
    tpu.vector_store %arg7[%c3_386, %c0_387, %c0_388], %334 {strides = array<i32>} : memref<4x4x24xf32, #tpu.memory_space<vmem>>, vector<1x4x24xf32>,
    return
  }
  func.func @transform_0(%arg0: i32) -> (i32, i32, i32) {
    %c0_i32 = arith.constant 0 : i32
    %c0_i32_0 = arith.constant 0 : i32
    %c0_i32_1 = arith.constant 0 : i32
    return %arg0, %c0_i32, %c0_i32_0 : i32, i32, i32
  }
  func.func @transform_1(%arg0: i32) -> (i32, i32, i32) {
    %c0_i32 = arith.constant 0 : i32
    %c0_i32_0 = arith.constant 0 : i32
    %c0_i32_1 = arith.constant 0 : i32
    return %arg0, %c0_i32, %c0_i32_0 : i32, i32, i32
  }
  func.func @transform_2(%arg0: i32) -> (i32, i32) {
    %c0_i32 = arith.constant 0 : i32
    %c0_i32_0 = arith.constant 0 : i32
    %c0_i32_1 = arith.constant 0 : i32
    return %c0_i32, %c0_i32_0 : i32, i32
  }
  func.func @transform_3(%arg0: i32) -> (i32, i32) {
    %c0_i32 = arith.constant 0 : i32
    %c0_i32_0 = arith.constant 0 : i32
    %c0_i32_1 = arith.constant 0 : i32
    return %c0_i32, %c0_i32_0 : i32, i32
  }
  func.func @transform_4(%arg0: i32) -> (i32, i32) {
    %c0_i32 = arith.constant 0 : i32
    %c0_i32_0 = arith.constant 0 : i32
    %c0_i32_1 = arith.constant 0 : i32
    return %c0_i32, %c0_i32_0 : i32, i32
  }
  func.func @transform_5(%arg0: i32) -> (i32, i32) {
    %c0_i32 = arith.constant 0 : i32
    %c0_i32_0 = arith.constant 0 : i32
    %c0_i32_1 = arith.constant 0 : i32
    return %c0_i32, %c0_i32_0 : i32, i32
  }
  func.func @transform_6(%arg0: i32) -> (i32, i32, i32) {
    %c0_i32 = arith.constant 0 : i32
    %c0_i32_0 = arith.constant 0 : i32
    %c0_i32_1 = arith.constant 0 : i32
    return %arg0, %c0_i32, %c0_i32_0 : i32, i32, i32
  }
}

</mosaic_0001>

<llo_original>
// kernel: cafusion_stem_forward.2
$region0: #{cafusion_stem_forward.2}
  #allocation0 [shape = 'u32[]', space=smem, size = 0x4, offset = 0x4, fixed_abs, tag = 'smem constant byte address 0x4 - core index']
  #allocation1 [shape = 'u32[144,128]{1,0:T(1,128)}', space=vmem, size = 0x12000, scoped, tag = 'internal scratch']
  %s0 = inlined_call_operand.vmem [shape: bf16[8,192,21], index: 0, kind: input, shape index: {}]
  %s1 = inlined_call_operand.vmem [shape: bf16[8,192,84], index: 1, kind: input, shape index: {}]
  %s2 = inlined_call_operand.vmem [shape: bf16[147,12], index: 2, kind: input, shape index: {}]
  %s3 = inlined_call_operand.vmem [shape: f32[1,12], index: 3, kind: input, shape index: {}]
  %s4 = inlined_call_operand.vmem [shape: bf16[588,12], index: 4, kind: input, shape index: {}]
  %s5 = inlined_call_operand.vmem [shape: f32[1,12], index: 5, kind: input, shape index: {}]
  %s6 = inlined_call_operand.vmem [shape: bf16[8,16,12], index: 6, kind: output, shape index: {0}]
  %s7 = inlined_call_operand.vmem [shape: bf16[8,16,12], index: 7, kind: output, shape index: {1}]
  %8 = xla_tuple %s6, %s7
  %s9 = sld [smem:[#allocation0]]
  $region65: #{cafusion_stem_forward.2} parent=0
    _
  %s11 = ssub.s32 1, %s9
  %s12 = scalar_select 0, %s11, %s9
  loop: start=0, step=1, limit=4
  $region2: #{cafusion_stem_forward.2} parent=0 // loop_pre_header
    _
  $region3: #{cafusion_stem_forward.2} parent=0 // loop_header
    %s14 = sphi 0, %s18
    %p15 = scmp.ge.s32.totalorder %s14, 4
    %s24 = sphi 0, %s26
    %s27 = sphi 0, %s24
    %s28 = sphi 0, %s27
    %s44 = sphi 0, %s28
    %s50 = sphi 0, %s52
    %s53 = sphi 0, %s50
    %s54 = sphi 0, %s53
    %s70 = sphi 0, %s54
    %s74 = sphi 0, %s74
    %s76 = sphi 0, %s74
    %s77 = sphi 0, %s76
    %s91 = sphi 0, %s77
    %s95 = sphi 0, %s95
    %s97 = sphi 0, %s95
    %s98 = sphi 0, %s97
    %s112 = sphi 0, %s98
    %s116 = sphi 0, %s116
    %s118 = sphi 0, %s116
    %s119 = sphi 0, %s118
    %s133 = sphi 0, %s119
    %s137 = sphi 0, %s137
    %s139 = sphi 0, %s137
    %s140 = sphi 0, %s139
    %s154 = sphi 0, %s140
    %s160 = sphi 0, %s162
    %s163 = sphi 0, %s160
    %s164 = sphi 0, %s163
    %s180 = sphi 0, %s164
    %s186 = sphi 0, %s188
    %s189 = sphi 0, %s186
    %s190 = sphi 0, %s189
    %s206 = sphi 0, %s190
  $region4: #{cafusion_stem_forward.2} parent=0 // loop_header_branch
    %17 = sbr.rel (%p15) target = $region8
  $region5: #{cafusion_stem_forward.2} parent=0 // loop_body
    %s19 = ssub.s32 %s14, 1
    %s20 = ssub.s32 %s14, 2
    %s21 = sadd.s32 %s14, 1
    %s22 = ssub.s32 %s14, %s21
    %p23 = scmp.eq.s32.totalorder %s22, 0
    %s25 = sadd.s32 %s24, 1
    %s26 = scalar_select %p23, %s24, %s25
    %p29 = pneg %p23
    %p30 = scmp.eq.s32.totalorder %s14, 1
    %p31 = por %p29, %p30
    %p32 = scmp.ne.s32.totalorder %s24, %s27
    %p33 = scmp.eq.s32.totalorder %s14, 0
    %p34 = por %p32, %p33
    %p35 = scmp.ne.s32.totalorder %s24, %s27
    %p36 = scmp.eq.s32.totalorder %s19, 1
    %p37 = por %p35, %p36
    %p38 = scmp.ne.s32.totalorder %s27, %s28
    %p39 = scmp.eq.s32.totalorder %s19, 0
    %p40 = por %p38, %p39
    %p41 = scmp.ne.s32.totalorder %s27, %s28
    %p42 = scmp.eq.s32.totalorder %s20, 1
    %p43 = por %p41, %p42
    %p45 = scmp.ne.s32.totalorder %s28, %s44
    %p46 = scmp.eq.s32.totalorder %s20, 0
    %p47 = por %p45, %p46
    %s48 = ssub.s32 %s14, %s21
    %p49 = scmp.eq.s32.totalorder %s48, 0
    %s51 = sadd.s32 %s50, 1
    %s52 = scalar_select %p49, %s50, %s51
    %p55 = pneg %p49
    %p56 = scmp.eq.s32.totalorder %s14, 1
    %p57 = por %p55, %p56
    %p58 = scmp.ne.s32.totalorder %s50, %s53
    %p59 = scmp.eq.s32.totalorder %s14, 0
    %p60 = por %p58, %p59
    %p61 = scmp.ne.s32.totalorder %s50, %s53
    %p62 = scmp.eq.s32.totalorder %s19, 1
    %p63 = por %p61, %p62
    %p64 = scmp.ne.s32.totalorder %s53, %s54
    %p65 = scmp.eq.s32.totalorder %s19, 0
    %p66 = por %p64, %p65
    %p67 = scmp.ne.s32.totalorder %s53, %s54
    %p68 = scmp.eq.s32.totalorder %s20, 1
    %p69 = por %p67, %p68
    %p71 = scmp.ne.s32.totalorder %s54, %s70
    %p72 = scmp.eq.s32.totalorder %s20, 0
    %p73 = por %p71, %p72
    %s75 = sadd.s32 %s74, 1
    %p78 = scmp.eq.s32.totalorder %s14, 1
    %p79 = scmp.ne.s32.totalorder %s74, %s76
    %p80 = scmp.eq.s32.totalorder %s14, 0
    %p81 = por %p79, %p80
    %p82 = scmp.ne.s32.totalorder %s74, %s76
    %p83 = scmp.eq.s32.totalorder %s19, 1
    %p84 = por %p82, %p83
    %p85 = scmp.ne.s32.totalorder %s76, %s77
    %p86 = scmp.eq.s32.totalorder %s19, 0
    %p87 = por %p85, %p86
    %p88 = scmp.ne.s32.totalorder %s76, %s77
    %p89 = scmp.eq.s32.totalorder %s20, 1
    %p90 = por %p88, %p89
    %p92 = scmp.ne.s32.totalorder %s77, %s91
    %p93 = scmp.eq.s32.totalorder %s20, 0
    %p94 = por %p92, %p93
    %s96 = sadd.s32 %s95, 1
    %p99 = scmp.eq.s32.totalorder %s14, 1
    %p100 = scmp.ne.s32.totalorder %s95, %s97
    %p101 = scmp.eq.s32.totalorder %s14, 0
    %p102 = por %p100, %p101
    %p103 = scmp.ne.s32.totalorder %s95, %s97
    %p104 = scmp.eq.s32.totalorder %s19, 1
    %p105 = por %p103, %p104
    %p106 = scmp.ne.s32.totalorder %s97, %s98
    %p107 = scmp.eq.s32.totalorder %s19, 0
    %p108 = por %p106, %p107
    %p109 = scmp.ne.s32.totalorder %s97, %s98
    %p110 = scmp.eq.s32.totalorder %s20, 1
    %p111 = por %p109, %p110
    %p113 = scmp.ne.s32.totalorder %s98, %s112
    %p114 = scmp.eq.s32.totalorder %s20, 0
    %p115 = por %p113, %p114
    %s117 = sadd.s32 %s116, 1
    %p120 = scmp.eq.s32.totalorder %s14, 1
    %p121 = scmp.ne.s32.totalorder %s116, %s118
    %p122 = scmp.eq.s32.totalorder %s14, 0
    %p123 = por %p121, %p122
    %p124 = scmp.ne.s32.totalorder %s116, %s118
    %p125 = scmp.eq.s32.totalorder %s19, 1
    %p126 = por %p124, %p125
    %p127 = scmp.ne.s32.totalorder %s118, %s119
    %p128 = scmp.eq.s32.totalorder %s19, 0
    %p129 = por %p127, %p128
    %p130 = scmp.ne.s32.totalorder %s118, %s119
    %p131 = scmp.eq.s32.totalorder %s20, 1
    %p132 = por %p130, %p131
    %p134 = scmp.ne.s32.totalorder %s119, %s133
    %p135 = scmp.eq.s32.totalorder %s20, 0
    %p136 = por %p134, %p135
    %s138 = sadd.s32 %s137, 1
    %p141 = scmp.eq.s32.totalorder %s14, 1
    %p142 = scmp.ne.s32.totalorder %s137, %s139
    %p143 = scmp.eq.s32.totalorder %s14, 0
    %p144 = por %p142, %p143
    %p145 = scmp.ne.s32.totalorder %s137, %s139
    %p146 = scmp.eq.s32.totalorder %s19, 1
    %p147 = por %p145, %p146
    %p148 = scmp.ne.s32.totalorder %s139, %s140
    %p149 = scmp.eq.s32.totalorder %s19, 0
    %p150 = por %p148, %p149
    %p151 = scmp.ne.s32.totalorder %s139, %s140
    %p152 = scmp.eq.s32.totalorder %s20, 1
    %p153 = por %p151, %p152
    %p155 = scmp.ne.s32.totalorder %s140, %s154
    %p156 = scmp.eq.s32.totalorder %s20, 0
    %p157 = por %p155, %p156
    %s158 = ssub.s32 %s14, %s21
    %p159 = scmp.eq.s32.totalorder %s158, 0
    %s161 = sadd.s32 %s160, 1
    %s162 = scalar_select %p159, %s160, %s161
    %p165 = pneg %p159
    %p166 = scmp.eq.s32.totalorder %s14, 1
    %p167 = por %p165, %p166
    %p168 = scmp.ne.s32.totalorder %s160, %s163
    %p169 = scmp.eq.s32.totalorder %s14, 0
    %p170 = por %p168, %p169
    %p171 = scmp.ne.s32.totalorder %s160, %s163
    %p172 = scmp.eq.s32.totalorder %s19, 1
    %p173 = por %p171, %p172
    %p174 = scmp.ne.s32.totalorder %s163, %s164
    %p175 = scmp.eq.s32.totalorder %s19, 0
    %p176 = por %p174, %p175
    %p177 = scmp.ne.s32.totalorder %s163, %s164
    %p178 = scmp.eq.s32.totalorder %s20, 1
    %p179 = por %p177, %p178
    %p181 = scmp.ne.s32.totalorder %s164, %s180
    %p182 = scmp.eq.s32.totalorder %s20, 0
    %p183 = por %p181, %p182
    %s184 = ssub.s32 %s14, %s21
    %p185 = scmp.eq.s32.totalorder %s184, 0
    %s187 = sadd.s32 %s186, 1
    %s188 = scalar_select %p185, %s186, %s187
    %p191 = pneg %p185
    %p192 = scmp.eq.s32.totalorder %s14, 1
    %p193 = por %p191, %p192
    %p194 = scmp.ne.s32.totalorder %s186, %s189
    %p195 = scmp.eq.s32.totalorder %s14, 0
    %p196 = por %p194, %p195
    %p197 = scmp.ne.s32.totalorder %s186, %s189
    %p198 = scmp.eq.s32.totalorder %s19, 1
    %p199 = por %p197, %p198
    %p200 = scmp.ne.s32.totalorder %s189, %s190
    %p201 = scmp.eq.s32.totalorder %s19, 0
    %p202 = por %p200, %p201
    %p203 = scmp.ne.s32.totalorder %s189, %s190
    %p204 = scmp.eq.s32.totalorder %s20, 1
    %p205 = por %p203, %p204
    %p207 = scmp.ne.s32.totalorder %s190, %s206
    %p208 = scmp.eq.s32.totalorder %s20, 0
    %p209 = por %p207, %p208
    %p210 = scmp.le.s32.totalorder 1, %s14
    %p211 = scmp.lt.s32.totalorder %s14, 3
    %p212 = pnand %p210, %p211
    %p213 = pneg %p212
    // Predicated region
    $region9: #{cafusion_stem_forward.2} parent=5 // pred_check
      _
    $region10: #{cafusion_stem_forward.2} parent=5 // pred_check_branch
      %215 = sbr.rel (%p212) target = $region12
    $region11: #{cafusion_stem_forward.2} parent=5 // pred_region
      %s216 = ssub.s32 %s14, 1
      // Predicated region
      $region13: #{cafusion_stem_forward.2} parent=11 // pred_check
        %p217 = pneg %p87
      $region14: #{cafusion_stem_forward.2} parent=11 // pred_check_branch
        %219 = sbr.rel (%p217) target = $region16
      $region15: #{cafusion_stem_forward.2} parent=11 // pred_region
        _
      $region16: #{cafusion_stem_forward.2} parent=11 // pred_fallthru
        _
      // Predicated region
      $region17: #{cafusion_stem_forward.2} parent=11 // pred_check
        %p220 = pneg %p108
      $region18: #{cafusion_stem_forward.2} parent=11 // pred_check_branch
        %222 = sbr.rel (%p220) target = $region20
      $region19: #{cafusion_stem_forward.2} parent=11 // pred_region
        _
      $region20: #{cafusion_stem_forward.2} parent=11 // pred_fallthru
        _
      // Predicated region
      $region21: #{cafusion_stem_forward.2} parent=11 // pred_check
        %p223 = pneg %p129
      $region22: #{cafusion_stem_forward.2} parent=11 // pred_check_branch
        %225 = sbr.rel (%p223) target = $region24
      $region23: #{cafusion_stem_forward.2} parent=11 // pred_region
        _
      $region24: #{cafusion_stem_forward.2} parent=11 // pred_fallthru
        _
      // Predicated region
      $region25: #{cafusion_stem_forward.2} parent=11 // pred_check
        %p226 = pneg %p150
      $region26: #{cafusion_stem_forward.2} parent=11 // pred_check_branch
        %228 = sbr.rel (%p226) target = $region28
      $region27: #{cafusion_stem_forward.2} parent=11 // pred_region
        _
      $region28: #{cafusion_stem_forward.2} parent=11 // pred_fallthru
        _
    $region12: #{cafusion_stem_forward.2} parent=5 // pred_fallthru
      _
    %p229 = scmp.lt.s32.totalorder %s14, 2
    // Predicated region
    $region29: #{cafusion_stem_forward.2} parent=5 // pred_check
      %p230 = pneg %p229
    $region30: #{cafusion_stem_forward.2} parent=5 // pred_check_branch
      %232 = sbr.rel (%p230) target = $region32
    $region31: #{cafusion_stem_forward.2} parent=5 // pred_region
      // Predicated region
      $region33: #{cafusion_stem_forward.2} parent=31 // pred_check
        %p233 = pneg %p34
      $region34: #{cafusion_stem_forward.2} parent=31 // pred_check_branch
        %235 = sbr.rel (%p233) target = $region36
      $region35: #{cafusion_stem_forward.2} parent=31 // pred_region
        %s236 = smul.u32 4, %s14
        %p237 = scmp.lt.s32.totalorder %s236, 7
        %s238 = scalar_select %p237, %s236, 7
        %s239 = smul.addr %s238, 24
        %s240 = smul.addr %s239, 4
        %s241 = scalar_lea.vmem %s0, %s240
        %s242 = smul.u32 4, %s14
      $region36: #{cafusion_stem_forward.2} parent=31 // pred_fallthru
        _
      // Predicated region
      $region37: #{cafusion_stem_forward.2} parent=31 // pred_check
        %p243 = pneg %p60
      $region38: #{cafusion_stem_forward.2} parent=31 // pred_check_branch
        %245 = sbr.rel (%p243) target = $region40
      $region39: #{cafusion_stem_forward.2} parent=31 // pred_region
        %s246 = smul.u32 4, %s14
        %p247 = scmp.lt.s32.totalorder %s246, 7
        %s248 = scalar_select %p247, %s246, 7
        %s249 = smul.addr %s248, 24
        %s250 = smul.addr %s249, 4
        %s251 = scalar_lea.vmem %s1, %s250
        %s252 = smul.u32 4, %s14
      $region40: #{cafusion_stem_forward.2} parent=31 // pred_fallthru
        _
    $region32: #{cafusion_stem_forward.2} parent=5 // pred_fallthru
      _
    %p253 = scmp.le.s32.totalorder 1, %s14
    %p254 = scmp.lt.s32.totalorder %s14, 3
    %p255 = pnand %p253, %p254
    %p256 = pneg %p255
    // Predicated region
    $region41: #{cafusion_stem_forward.2} parent=5 // pred_check
      _
    $region42: #{cafusion_stem_forward.2} parent=5 // pred_check_branch
      %258 = sbr.rel (%p255) target = $region44
    $region43: #{cafusion_stem_forward.2} parent=5 // pred_region
      %s259 = ssub.s32 %s14, 1
      %s260 = smul.u32 4, %s19
      %p261 = scmp.lt.s32.totalorder %s260, 7
      %s262 = scalar_select %p261, %s260, 7
      %s263 = smul.addr %s262, 24
      %s264 = smul.addr %s263, 4
      %s265 = scalar_lea.vmem %s0, %s264
      %p266 = pneg %p40
      %p267 = pneg %p37
      %s268 = smul.u32 4, %s19
      %p269 = scmp.lt.s32.totalorder %s268, 7
      %s270 = scalar_select %p269, %s268, 7
      %s271 = smul.addr %s270, 24
      %s272 = smul.addr %s271, 4
      %s273 = scalar_lea.vmem %s1, %s272
      %p274 = pneg %p66
      %p275 = pneg %p63
      %p276 = pneg %p87
      %p277 = pneg %p84
      %p278 = pneg %p108
      %p279 = pneg %p105
      %p280 = pneg %p129
      %p281 = pneg %p126
      %p282 = pneg %p150
      %p283 = pneg %p147
      %p284 = pneg %p176
      %p285 = pneg %p173
      %s286 = smul.u32 4, %s19
      %p287 = scmp.lt.s32.totalorder %s286, 7
      %s288 = scalar_select %p287, %s286, 7
      %s289 = smul.addr %s288, 2
      %s290 = smul.addr %s289, 4
      %s291 = scalar_lea.vmem %s6, %s290
      %p292 = pneg %p202
      %p293 = pneg %p199
      %s294 = smul.u32 4, %s19
      %p295 = scmp.lt.s32.totalorder %s294, 7
      %s296 = scalar_select %p295, %s294, 7
      %s297 = smul.addr %s296, 2
      %s298 = smul.addr %s297, 4
      %s299 = scalar_lea.vmem %s7, %s298
      %s300 = smul.u32 4, %s19
      %p301 = scmp.lt.s32.totalorder %s300, 7
      %s302 = scalar_select %p301, %s300, 7
      %s303 = smul.addr %s302, 24
      %s304 = smul.addr %s303, 4
      %s305 = scalar_lea.vmem %s0, %s304
      %s306 = smul.u32 4, %s19
      %s307 = smul.u32 4, %s19
      %p308 = scmp.lt.s32.totalorder %s307, 7
      %s309 = scalar_select %p308, %s307, 7
      %s310 = smul.addr %s309, 24
      %s311 = smul.addr %s310, 4
      %s312 = scalar_lea.vmem %s1, %s311
      %s313 = smul.u32 4, %s19
      %s314 = smul.u32 4, %s19
      %p315 = scmp.lt.s32.totalorder %s314, 7
      %s316 = scalar_select %p315, %s314, 7
      %s317 = smul.addr %s316, 2
      %s318 = smul.addr %s317, 4
      %s319 = scalar_lea.vmem %s6, %s318
      %s320 = smul.u32 4, %s19
      %s321 = smul.u32 4, %s19
      %p322 = scmp.lt.s32.totalorder %s321, 7
      %s323 = scalar_select %p322, %s321, 7
      %s324 = smul.addr %s323, 2
      %s325 = smul.addr %s324, 4
      %s326 = scalar_lea.vmem %s7, %s325
      %s327 = smul.u32 4, %s19
      %v329 = vld [vmem:[%s2] sm:$0xf]
      %v330 = vld [vmem:[%s2 + $0x4] sm:$0xf]
      %v331 = vld [vmem:[%s2 + $0x8] sm:$0xf]
      %v332 = vld [vmem:[%s2 + $0xc] sm:$0xf]
      %v333 = vld [vmem:[%s2 + $0x10] sm:$0xf]
      %v334 = vld [vmem:[%s2 + $0x14] sm:$0xf]
      %v335 = vld [vmem:[%s2 + $0x18] sm:$0xf]
      %v336 = vld [vmem:[%s2 + $0x1c] sm:$0xf]
      %v337 = vld [vmem:[%s2 + $0x20] sm:$0xf]
      %v338 = vld [vmem:[%s2 + $0x24] sm:$0xf]
      %v339 = vld [vmem:[%s2 + $0x28] sm:$0xf]
      %v340 = vld [vmem:[%s2 + $0x2c] sm:$0xf]
      %v341 = vld [vmem:[%s2 + $0x30] sm:$0xf]
      %v342 = vld [vmem:[%s2 + $0x34] sm:$0xf]
      %v343 = vld [vmem:[%s2 + $0x38] sm:$0xf]
      %v344 = vld [vmem:[%s2 + $0x3c] sm:$0xf]
      %v345 = vld [vmem:[%s2 + $0x40] sm:$0xf]
      %v346 = vld [vmem:[%s2 + $0x44] sm:$0xf]
      %v347 = vld [vmem:[%s2 + $0x48] sm:$0x3]
      %v348 = vld [vmem:[%s305] sm:$0xf]
      %v349 = vld [vmem:[%s305 + $0x4] sm:$0xf]
      %v350 = vld [vmem:[%s305 + $0x18] sm:$0xf]
      %v351 = vld [vmem:[%s305 + $0x1c] sm:$0xf]
      %v352 = vld [vmem:[%s305 + $0x30] sm:$0xf]
      %v353 = vld [vmem:[%s305 + $0x34] sm:$0xf]
      %v354 = vld [vmem:[%s305 + $0x48] sm:$0xf]
      %v355 = vld [vmem:[%s305 + $0x4c] sm:$0xf]
      %v356 = vld [vmem:[%s305] sm:$0xc]
      %v357 = vld [vmem:[%s305 + $0x8] sm:$0x3]
      %v358 = vld [vmem:[%s305 + $0x18] sm:$0xc]
      %v359 = vld [vmem:[%s305 + $0x20] sm:$0x3]
      %v360 = vld [vmem:[%s305 + $0x30] sm:$0xc]
      %v361 = vld [vmem:[%s305 + $0x38] sm:$0x3]
      %v364 = vunpack.c.l.b16 %v348
      %v365 = vunpack.c.l.b16 %v349
      %v366 = vpack.c.b16 %v365, %v364
      %v369 = vunpack.c.l.b16 %v350
      %v370 = vunpack.c.l.b16 %v351
      %v371 = vpack.c.b16 %v370, %v369
      %372 = vrot.lane.b32.xlu0 %v371, 21
      %v373 = vpop.permute.xlu0 %372
      %v376 = vunpack.c.l.b16 %v352
      %v377 = vunpack.c.l.b16 %v353
      %v378 = vpack.c.b16 %v377, %v376
      %379 = vrot.lane.b32.xlu0 %v378, 42
      %v380 = vpop.permute.xlu0 %379
      %v383 = vunpack.c.l.b16 %v354
      %v384 = vunpack.c.l.b16 %v355
      %v385 = vpack.c.b16 %v384, %v383
      %386 = vrot.lane.b32.xlu0 %v385, 63
      %v387 = vpop.permute.xlu0 %386
      %v390 = vunpack.c.l.b16 %v356
      %v391 = vunpack.c.l.b16 %v357
      %v392 = vpack.c.b16 %v365, %v390
      %v393 = vpack.c.b16 %v391, %v391
      %vm394 = vcmask 1045504
      %v395 = vrot.slane %v392, 2
      %v396 = vrot.slane %v393, 2
      %v397 = vsel %vm394, %v395, %v396
      %398 = vrot.lane.b32.xlu0 %v397, 84
      %v399 = vpop.permute.xlu0 %398
      %v402 = vunpack.c.l.b16 %v358
      %v403 = vunpack.c.l.b16 %v359
      %v404 = vpack.c.b16 %v370, %v402
      %v405 = vpack.c.b16 %v403, %v403
      %v406 = vrot.slane %v404, 2
      %v407 = vrot.slane %v405, 2
      %v408 = vsel %vm394, %v406, %v407
      %409 = vrot.lane.b32.xlu0 %v408, 105
      %v410 = vpop.permute.xlu0 %409
      %v413 = vunpack.c.l.b16 %v360
      %v414 = vunpack.c.l.b16 %v361
      %v415 = vpack.c.b16 %v377, %v413
      %v416 = vpack.c.b16 %v414, %v414
      %v417 = vrot.slane %v415, 2
      %v418 = vrot.slane %v416, 2
      %v419 = vsel %vm394, %v417, %v418
      %420 = vrot.lane.b32.xlu0 %v419, 126
      %v421 = vpop.permute.xlu0 %420
      %vm422 = vcmask 171008
      %v425 = vsel %vm422, %v366, %v373
      %vm426 = vcmask 343040
      %v428 = vsel %vm426, %v425, %v380
      %vm429 = vcmask 515072
      %v431 = vsel %vm429, %v428, %v387
      %vm432 = vcmask 687104
      %v434 = vsel %vm432, %v431, %v399
      %vm435 = vcmask 859136
      %v437 = vsel %vm435, %v434, %v410
      %vm438 = vcmask 1031168
      %v440 = vsel %vm438, %v437, %v421
      %s442 = scalar_lea.vmem %s305, 96
      %v443 = vld [vmem:[%s442] sm:$0xf]
      %v444 = vld [vmem:[%s442 + $0x4] sm:$0xf]
      %v445 = vld [vmem:[%s442 + $0x18] sm:$0xf]
      %v446 = vld [vmem:[%s442 + $0x1c] sm:$0xf]
      %v447 = vld [vmem:[%s442 + $0x30] sm:$0xf]
      %v448 = vld [vmem:[%s442 + $0x34] sm:$0xf]
      %v449 = vld [vmem:[%s442 + $0x48] sm:$0xf]
      %v450 = vld [vmem:[%s442 + $0x4c] sm:$0xf]
      %v451 = vld [vmem:[%s442] sm:$0xc]
      %v452 = vld [vmem:[%s442 + $0x8] sm:$0x3]
      %v453 = vld [vmem:[%s442 + $0x18] sm:$0xc]
      %v454 = vld [vmem:[%s442 + $0x20] sm:$0x3]
      %v455 = vld [vmem:[%s442 + $0x30] sm:$0xc]
      %v456 = vld [vmem:[%s442 + $0x38] sm:$0x3]
      %v459 = vunpack.c.l.b16 %v443
      %v460 = vunpack.c.l.b16 %v444
      %v461 = vpack.c.b16 %v460, %v459
      %v464 = vunpack.c.l.b16 %v445
      %v465 = vunpack.c.l.b16 %v446
      %v466 = vpack.c.b16 %v465, %v464
      %467 = vrot.lane.b32.xlu0 %v466, 21
      %v468 = vpop.permute.xlu0 %467
      %v471 = vunpack.c.l.b16 %v447
      %v472 = vunpack.c.l.b16 %v448
      %v473 = vpack.c.b16 %v472, %v471
      %474 = vrot.lane.b32.xlu0 %v473, 42
      %v475 = vpop.permute.xlu0 %474
      %v478 = vunpack.c.l.b16 %v449
      %v479 = vunpack.c.l.b16 %v450
      %v480 = vpack.c.b16 %v479, %v478
      %481 = vrot.lane.b32.xlu0 %v480, 63
      %v482 = vpop.permute.xlu0 %481
      %v485 = vunpack.c.l.b16 %v451
      %v486 = vunpack.c.l.b16 %v452
      %v487 = vpack.c.b16 %v460, %v485
      %v488 = vpack.c.b16 %v486, %v486
      %v489 = vrot.slane %v487, 2
      %v490 = vrot.slane %v488, 2
      %v491 = vsel %vm394, %v489, %v490
      %492 = vrot.lane.b32.xlu0 %v491, 84
      %v493 = vpop.permute.xlu0 %492
      %v496 = vunpack.c.l.b16 %v453
      %v497 = vunpack.c.l.b16 %v454
      %v498 = vpack.c.b16 %v465, %v496
      %v499 = vpack.c.b16 %v497, %v497
      %v500 = vrot.slane %v498, 2
      %v501 = vrot.slane %v499, 2
      %v502 = vsel %vm394, %v500, %v501
      %503 = vrot.lane.b32.xlu0 %v502, 105
      %v504 = vpop.permute.xlu0 %503
      %v507 = vunpack.c.l.b16 %v455
      %v508 = vunpack.c.l.b16 %v456
      %v509 = vpack.c.b16 %v472, %v507
      %v510 = vpack.c.b16 %v508, %v508
      %v511 = vrot.slane %v509, 2
      %v512 = vrot.slane %v510, 2
      %v513 = vsel %vm394, %v511, %v512
      %514 = vrot.lane.b32.xlu0 %v513, 126
      %v515 = vpop.permute.xlu0 %514
      %v518 = vsel %vm422, %v461, %v468
      %v520 = vsel %vm426, %v518, %v475
      %v522 = vsel %vm429, %v520, %v482
      %v524 = vsel %vm432, %v522, %v493
      %v526 = vsel %vm435, %v524, %v504
      %v528 = vsel %vm438, %v526, %v515
      %s530 = scalar_lea.vmem %s305, 192
      %v531 = vld [vmem:[%s530] sm:$0xf]
      %v532 = vld [vmem:[%s530 + $0x4] sm:$0xf]
      %v533 = vld [vmem:[%s530 + $0x18] sm:$0xf]
      %v534 = vld [vmem:[%s530 + $0x1c] sm:$0xf]
      %v535 = vld [vmem:[%s530 + $0x30] sm:$0xf]
      %v536 = vld [vmem:[%s530 + $0x34] sm:$0xf]
      %v537 = vld [vmem:[%s530 + $0x48] sm:$0xf]
      %v538 = vld [vmem:[%s530 + $0x4c] sm:$0xf]
      %v539 = vld [vmem:[%s530] sm:$0xc]
      %v540 = vld [vmem:[%s530 + $0x8] sm:$0x3]
      %v541 = vld [vmem:[%s530 + $0x18] sm:$0xc]
      %v542 = vld [vmem:[%s530 + $0x20] sm:$0x3]
      %v543 = vld [vmem:[%s530 + $0x30] sm:$0xc]
      %v544 = vld [vmem:[%s530 + $0x38] sm:$0x3]
      %v547 = vunpack.c.l.b16 %v531
      %v548 = vunpack.c.l.b16 %v532
      %v549 = vpack.c.b16 %v548, %v547
      %v552 = vunpack.c.l.b16 %v533
      %v553 = vunpack.c.l.b16 %v534
      %v554 = vpack.c.b16 %v553, %v552
      %555 = vrot.lane.b32.xlu0 %v554, 21
      %v556 = vpop.permute.xlu0 %555
      %v559 = vunpack.c.l.b16 %v535
      %v560 = vunpack.c.l.b16 %v536
      %v561 = vpack.c.b16 %v560, %v559
      %562 = vrot.lane.b32.xlu0 %v561, 42
      %v563 = vpop.permute.xlu0 %562
      %v566 = vunpack.c.l.b16 %v537
      %v567 = vunpack.c.l.b16 %v538
      %v568 = vpack.c.b16 %v567, %v566
      %569 = vrot.lane.b32.xlu0 %v568, 63
      %v570 = vpop.permute.xlu0 %569
      %v573 = vunpack.c.l.b16 %v539
      %v574 = vunpack.c.l.b16 %v540
      %v575 = vpack.c.b16 %v548, %v573
      %v576 = vpack.c.b16 %v574, %v574
      %v577 = vrot.slane %v575, 2
      %v578 = vrot.slane %v576, 2
      %v579 = vsel %vm394, %v577, %v578
      %580 = vrot.lane.b32.xlu0 %v579, 84
      %v581 = vpop.permute.xlu0 %580
      %v584 = vunpack.c.l.b16 %v541
      %v585 = vunpack.c.l.b16 %v542
      %v586 = vpack.c.b16 %v553, %v584
      %v587 = vpack.c.b16 %v585, %v585
      %v588 = vrot.slane %v586, 2
      %v589 = vrot.slane %v587, 2
      %v590 = vsel %vm394, %v588, %v589
      %591 = vrot.lane.b32.xlu0 %v590, 105
      %v592 = vpop.permute.xlu0 %591
      %v595 = vunpack.c.l.b16 %v543
      %v596 = vunpack.c.l.b16 %v544
      %v597 = vpack.c.b16 %v560, %v595
      %v598 = vpack.c.b16 %v596, %v596
      %v599 = vrot.slane %v597, 2
      %v600 = vrot.slane %v598, 2
      %v601 = vsel %vm394, %v599, %v600
      %602 = vrot.lane.b32.xlu0 %v601, 126
      %v603 = vpop.permute.xlu0 %602
      %v606 = vsel %vm422, %v549, %v556
      %v608 = vsel %vm426, %v606, %v563
      %v610 = vsel %vm429, %v608, %v570
      %v612 = vsel %vm432, %v610, %v581
      %v614 = vsel %vm435, %v612, %v592
      %v616 = vsel %vm438, %v614, %v603
      %s618 = scalar_lea.vmem %s305, 288
      %v619 = vld [vmem:[%s618] sm:$0xf]
      %v620 = vld [vmem:[%s618 + $0x4] sm:$0xf]
      %v621 = vld [vmem:[%s618 + $0x18] sm:$0xf]
      %v622 = vld [vmem:[%s618 + $0x1c] sm:$0xf]
      %v623 = vld [vmem:[%s618 + $0x30] sm:$0xf]
      %v624 = vld [vmem:[%s618 + $0x34] sm:$0xf]
      %v625 = vld [vmem:[%s618 + $0x48] sm:$0xf]
      %v626 = vld [vmem:[%s618 + $0x4c] sm:$0xf]
      %v627 = vld [vmem:[%s618] sm:$0xc]
      %v628 = vld [vmem:[%s618 + $0x8] sm:$0x3]
      %v629 = vld [vmem:[%s618 + $0x18] sm:$0xc]
      %v630 = vld [vmem:[%s618 + $0x20] sm:$0x3]
      %v631 = vld [vmem:[%s618 + $0x30] sm:$0xc]
      %v632 = vld [vmem:[%s618 + $0x38] sm:$0x3]
      %v635 = vunpack.c.l.b16 %v619
      %v636 = vunpack.c.l.b16 %v620
      %v637 = vpack.c.b16 %v636, %v635
      %v640 = vunpack.c.l.b16 %v621
      %v641 = vunpack.c.l.b16 %v622
      %v642 = vpack.c.b16 %v641, %v640
      %643 = vrot.lane.b32.xlu0 %v642, 21
      %v644 = vpop.permute.xlu0 %643
      %v647 = vunpack.c.l.b16 %v623
      %v648 = vunpack.c.l.b16 %v624
      %v649 = vpack.c.b16 %v648, %v647
      %650 = vrot.lane.b32.xlu0 %v649, 42
      %v651 = vpop.permute.xlu0 %650
      %v654 = vunpack.c.l.b16 %v625
      %v655 = vunpack.c.l.b16 %v626
      %v656 = vpack.c.b16 %v655, %v654
      %657 = vrot.lane.b32.xlu0 %v656, 63
      %v658 = vpop.permute.xlu0 %657
      %v661 = vunpack.c.l.b16 %v627
      %v662 = vunpack.c.l.b16 %v628
      %v663 = vpack.c.b16 %v636, %v661
      %v664 = vpack.c.b16 %v662, %v662
      %v665 = vrot.slane %v663, 2
      %v666 = vrot.slane %v664, 2
      %v667 = vsel %vm394, %v665, %v666
      %668 = vrot.lane.b32.xlu0 %v667, 84
      %v669 = vpop.permute.xlu0 %668
      %v672 = vunpack.c.l.b16 %v629
      %v673 = vunpack.c.l.b16 %v630
      %v674 = vpack.c.b16 %v641, %v672
      %v675 = vpack.c.b16 %v673, %v673
      %v676 = vrot.slane %v674, 2
      %v677 = vrot.slane %v675, 2
      %v678 = vsel %vm394, %v676, %v677
      %679 = vrot.lane.b32.xlu0 %v678, 105
      %v680 = vpop.permute.xlu0 %679
      %v683 = vunpack.c.l.b16 %v631
      %v684 = vunpack.c.l.b16 %v632
      %v685 = vpack.c.b16 %v648, %v683
      %v686 = vpack.c.b16 %v684, %v684
      %v687 = vrot.slane %v685, 2
      %v688 = vrot.slane %v686, 2
      %v689 = vsel %vm394, %v687, %v688
      %690 = vrot.lane.b32.xlu0 %v689, 126
      %v691 = vpop.permute.xlu0 %690
      %v694 = vsel %vm422, %v637, %v644
      %v696 = vsel %vm426, %v694, %v651
      %v698 = vsel %vm429, %v696, %v658
      %v700 = vsel %vm432, %v698, %v669
      %v702 = vsel %vm435, %v700, %v680
      %v704 = vsel %vm438, %v702, %v691
      %v706 = vld [vmem:[%s305 + $0xc] sm:$0xf]
      %v707 = vld [vmem:[%s305 + $0x10] sm:$0xf]
      %v708 = vld [vmem:[%s305 + $0x24] sm:$0xf]
      %v709 = vld [vmem:[%s305 + $0x28] sm:$0xf]
      %v710 = vld [vmem:[%s305 + $0x3c] sm:$0xf]
      %v711 = vld [vmem:[%s305 + $0x40] sm:$0xf]
      %v712 = vld [vmem:[%s305 + $0x54] sm:$0xf]
      %v713 = vld [vmem:[%s305 + $0x58] sm:$0xf]
      %v714 = vld [vmem:[%s305 + $0xc] sm:$0xc]
      %v715 = vld [vmem:[%s305 + $0x14] sm:$0x3]
      %v716 = vld [vmem:[%s305 + $0x24] sm:$0xc]
      %v717 = vld [vmem:[%s305 + $0x2c] sm:$0x3]
      %v718 = vld [vmem:[%s305 + $0x3c] sm:$0xc]
      %v719 = vld [vmem:[%s305 + $0x44] sm:$0x3]
      %v722 = vunpack.c.l.b16 %v706
      %v723 = vunpack.c.l.b16 %v707
      %v724 = vpack.c.b16 %v723, %v722
      %v727 = vunpack.c.l.b16 %v708
      %v728 = vunpack.c.l.b16 %v709
      %v729 = vpack.c.b16 %v728, %v727
      %730 = vrot.lane.b32.xlu0 %v729, 21
      %v731 = vpop.permute.xlu0 %730
      %v734 = vunpack.c.l.b16 %v710
      %v735 = vunpack.c.l.b16 %v711
      %v736 = vpack.c.b16 %v735, %v734
      %737 = vrot.lane.b32.xlu0 %v736, 42
      %v738 = vpop.permute.xlu0 %737
      %v741 = vunpack.c.l.b16 %v712
      %v742 = vunpack.c.l.b16 %v713
      %v743 = vpack.c.b16 %v742, %v741
      %744 = vrot.lane.b32.xlu0 %v743, 63
      %v745 = vpop.permute.xlu0 %744
      %v748 = vunpack.c.l.b16 %v714
      %v749 = vunpack.c.l.b16 %v715
      %v750 = vpack.c.b16 %v723, %v748
      %v751 = vpack.c.b16 %v749, %v749
      %v752 = vrot.slane %v750, 2
      %v753 = vrot.slane %v751, 2
      %v754 = vsel %vm394, %v752, %v753
      %755 = vrot.lane.b32.xlu0 %v754, 84
      %v756 = vpop.permute.xlu0 %755
      %v759 = vunpack.c.l.b16 %v716
      %v760 = vunpack.c.l.b16 %v717
      %v761 = vpack.c.b16 %v728, %v759
      %v762 = vpack.c.b16 %v760, %v760
      %v763 = vrot.slane %v761, 2
      %v764 = vrot.slane %v762, 2
      %v765 = vsel %vm394, %v763, %v764
      %766 = vrot.lane.b32.xlu0 %v765, 105
      %v767 = vpop.permute.xlu0 %766
      %v770 = vunpack.c.l.b16 %v718
      %v771 = vunpack.c.l.b16 %v719
      %v772 = vpack.c.b16 %v735, %v770
      %v773 = vpack.c.b16 %v771, %v771
      %v774 = vrot.slane %v772, 2
      %v775 = vrot.slane %v773, 2
      %v776 = vsel %vm394, %v774, %v775
      %777 = vrot.lane.b32.xlu0 %v776, 126
      %v778 = vpop.permute.xlu0 %777
      %v781 = vsel %vm422, %v724, %v731
      %v783 = vsel %vm426, %v781, %v738
      %v785 = vsel %vm429, %v783, %v745
      %v787 = vsel %vm432, %v785, %v756
      %v789 = vsel %vm435, %v787, %v767
      %v791 = vsel %vm438, %v789, %v778
      %v793 = vld [vmem:[%s442 + $0xc] sm:$0xf]
      %v794 = vld [vmem:[%s442 + $0x10] sm:$0xf]
      %v795 = vld [vmem:[%s442 + $0x24] sm:$0xf]
      %v796 = vld [vmem:[%s442 + $0x28] sm:$0xf]
      %v797 = vld [vmem:[%s442 + $0x3c] sm:$0xf]
      %v798 = vld [vmem:[%s442 + $0x40] sm:$0xf]
      %v799 = vld [vmem:[%s442 + $0x54] sm:$0xf]
      %v800 = vld [vmem:[%s442 + $0x58] sm:$0xf]
      %v801 = vld [vmem:[%s442 + $0xc] sm:$0xc]
      %v802 = vld [vmem:[%s442 + $0x14] sm:$0x3]
      %v803 = vld [vmem:[%s442 + $0x24] sm:$0xc]
      %v804 = vld [vmem:[%s442 + $0x2c] sm:$0x3]
      %v805 = vld [vmem:[%s442 + $0x3c] sm:$0xc]
      %v806 = vld [vmem:[%s442 + $0x44] sm:$0x3]
      %v809 = vunpack.c.l.b16 %v793
      %v810 = vunpack.c.l.b16 %v794
      %v811 = vpack.c.b16 %v810, %v809
      %v814 = vunpack.c.l.b16 %v795
      %v815 = vunpack.c.l.b16 %v796
      %v816 = vpack.c.b16 %v815, %v814
      %817 = vrot.lane.b32.xlu0 %v816, 21
      %v818 = vpop.permute.xlu0 %817
      %v821 = vunpack.c.l.b16 %v797
      %v822 = vunpack.c.l.b16 %v798
      %v823 = vpack.c.b16 %v822, %v821
      %824 = vrot.lane.b32.xlu0 %v823, 42
      %v825 = vpop.permute.xlu0 %824
      %v828 = vunpack.c.l.b16 %v799
      %v829 = vunpack.c.l.b16 %v800
      %v830 = vpack.c.b16 %v829, %v828
      %831 = vrot.lane.b32.xlu0 %v830, 63
      %v832 = vpop.permute.xlu0 %831
      %v835 = vunpack.c.l.b16 %v801
      %v836 = vunpack.c.l.b16 %v802
      %v837 = vpack.c.b16 %v810, %v835
      %v838 = vpack.c.b16 %v836, %v836
      %v839 = vrot.slane %v837, 2
      %v840 = vrot.slane %v838, 2
      %v841 = vsel %vm394, %v839, %v840
      %842 = vrot.lane.b32.xlu0 %v841, 84
      %v843 = vpop.permute.xlu0 %842
      %v846 = vunpack.c.l.b16 %v803
      %v847 = vunpack.c.l.b16 %v804
      %v848 = vpack.c.b16 %v815, %v846
      %v849 = vpack.c.b16 %v847, %v847
      %v850 = vrot.slane %v848, 2
      %v851 = vrot.slane %v849, 2
      %v852 = vsel %vm394, %v850, %v851
      %853 = vrot.lane.b32.xlu0 %v852, 105
      %v854 = vpop.permute.xlu0 %853
      %v857 = vunpack.c.l.b16 %v805
      %v858 = vunpack.c.l.b16 %v806
      %v859 = vpack.c.b16 %v822, %v857
      %v860 = vpack.c.b16 %v858, %v858
      %v861 = vrot.slane %v859, 2
      %v862 = vrot.slane %v860, 2
      %v863 = vsel %vm394, %v861, %v862
      %864 = vrot.lane.b32.xlu0 %v863, 126
      %v865 = vpop.permute.xlu0 %864
      %v868 = vsel %vm422, %v811, %v818
      %v870 = vsel %vm426, %v868, %v825
      %v872 = vsel %vm429, %v870, %v832
      %v874 = vsel %vm432, %v872, %v843
      %v876 = vsel %vm435, %v874, %v854
      %v878 = vsel %vm438, %v876, %v865
      %v880 = vld [vmem:[%s530 + $0xc] sm:$0xf]
      %v881 = vld [vmem:[%s530 + $0x10] sm:$0xf]
      %v882 = vld [vmem:[%s530 + $0x24] sm:$0xf]
      %v883 = vld [vmem:[%s530 + $0x28] sm:$0xf]
      %v884 = vld [vmem:[%s530 + $0x3c] sm:$0xf]
      %v885 = vld [vmem:[%s530 + $0x40] sm:$0xf]
      %v886 = vld [vmem:[%s530 + $0x54] sm:$0xf]
      %v887 = vld [vmem:[%s530 + $0x58] sm:$0xf]
      %v888 = vld [vmem:[%s530 + $0xc] sm:$0xc]
      %v889 = vld [vmem:[%s530 + $0x14] sm:$0x3]
      %v890 = vld [vmem:[%s530 + $0x24] sm:$0xc]
      %v891 = vld [vmem:[%s530 + $0x2c] sm:$0x3]
      %v892 = vld [vmem:[%s530 + $0x3c] sm:$0xc]
      %v893 = vld [vmem:[%s530 + $0x44] sm:$0x3]
      %v896 = vunpack.c.l.b16 %v880
      %v897 = vunpack.c.l.b16 %v881
      %v898 = vpack.c.b16 %v897, %v896
      %v901 = vunpack.c.l.b16 %v882
      %v902 = vunpack.c.l.b16 %v883
      %v903 = vpack.c.b16 %v902, %v901
      %904 = vrot.lane.b32.xlu0 %v903, 21
      %v905 = vpop.permute.xlu0 %904
      %v908 = vunpack.c.l.b16 %v884
      %v909 = vunpack.c.l.b16 %v885
      %v910 = vpack.c.b16 %v909, %v908
      %911 = vrot.lane.b32.xlu0 %v910, 42
      %v912 = vpop.permute.xlu0 %911
      %v915 = vunpack.c.l.b16 %v886
      %v916 = vunpack.c.l.b16 %v887
      %v917 = vpack.c.b16 %v916, %v915
      %918 = vrot.lane.b32.xlu0 %v917, 63
      %v919 = vpop.permute.xlu0 %918
      %v922 = vunpack.c.l.b16 %v888
      %v923 = vunpack.c.l.b16 %v889
      %v924 = vpack.c.b16 %v897, %v922
      %v925 = vpack.c.b16 %v923, %v923
      %v926 = vrot.slane %v924, 2
      %v927 = vrot.slane %v925, 2
      %v928 = vsel %vm394, %v926, %v927
      %929 = vrot.lane.b32.xlu0 %v928, 84
      %v930 = vpop.permute.xlu0 %929
      %v933 = vunpack.c.l.b16 %v890
      %v934 = vunpack.c.l.b16 %v891
      %v935 = vpack.c.b16 %v902, %v933
      %v936 = vpack.c.b16 %v934, %v934
      %v937 = vrot.slane %v935, 2
      %v938 = vrot.slane %v936, 2
      %v939 = vsel %vm394, %v937, %v938
      %940 = vrot.lane.b32.xlu0 %v939, 105
      %v941 = vpop.permute.xlu0 %940
      %v944 = vunpack.c.l.b16 %v892
      %v945 = vunpack.c.l.b16 %v893
      %v946 = vpack.c.b16 %v909, %v944
      %v947 = vpack.c.b16 %v945, %v945
      %v948 = vrot.slane %v946, 2
      %v949 = vrot.slane %v947, 2
      %v950 = vsel %vm394, %v948, %v949
      %951 = vrot.lane.b32.xlu0 %v950, 126
      %v952 = vpop.permute.xlu0 %951
      %v955 = vsel %vm422, %v898, %v905
      %v957 = vsel %vm426, %v955, %v912
      %v959 = vsel %vm429, %v957, %v919
      %v961 = vsel %vm432, %v959, %v930
      %v963 = vsel %vm435, %v961, %v941
      %v965 = vsel %vm438, %v963, %v952
      %v967 = vld [vmem:[%s618 + $0xc] sm:$0xf]
      %v968 = vld [vmem:[%s618 + $0x10] sm:$0xf]
      %v969 = vld [vmem:[%s618 + $0x24] sm:$0xf]
      %v970 = vld [vmem:[%s618 + $0x28] sm:$0xf]
      %v971 = vld [vmem:[%s618 + $0x3c] sm:$0xf]
      %v972 = vld [vmem:[%s618 + $0x40] sm:$0xf]
      %v973 = vld [vmem:[%s618 + $0x54] sm:$0xf]
      %v974 = vld [vmem:[%s618 + $0x58] sm:$0xf]
      %v975 = vld [vmem:[%s618 + $0xc] sm:$0xc]
      %v976 = vld [vmem:[%s618 + $0x14] sm:$0x3]
      %v977 = vld [vmem:[%s618 + $0x24] sm:$0xc]
      %v978 = vld [vmem:[%s618 + $0x2c] sm:$0x3]
      %v979 = vld [vmem:[%s618 + $0x3c] sm:$0xc]
      %v980 = vld [vmem:[%s618 + $0x44] sm:$0x3]
      %v983 = vunpack.c.l.b16 %v967
      %v984 = vunpack.c.l.b16 %v968
      %v985 = vpack.c.b16 %v984, %v983
      %v988 = vunpack.c.l.b16 %v969
      %v989 = vunpack.c.l.b16 %v970
      %v990 = vpack.c.b16 %v989, %v988
      %991 = vrot.lane.b32.xlu0 %v990, 21
      %v992 = vpop.permute.xlu0 %991
      %v995 = vunpack.c.l.b16 %v971
      %v996 = vunpack.c.l.b16 %v972
      %v997 = vpack.c.b16 %v996, %v995
      %998 = vrot.lane.b32.xlu0 %v997, 42
      %v999 = vpop.permute.xlu0 %998
      %v1002 = vunpack.c.l.b16 %v973
      %v1003 = vunpack.c.l.b16 %v974
      %v1004 = vpack.c.b16 %v1003, %v1002
      %1005 = vrot.lane.b32.xlu0 %v1004, 63
      %v1006 = vpop.permute.xlu0 %1005
      %v1009 = vunpack.c.l.b16 %v975
      %v1010 = vunpack.c.l.b16 %v976
      %v1011 = vpack.c.b16 %v984, %v1009
      %v1012 = vpack.c.b16 %v1010, %v1010
      %v1013 = vrot.slane %v1011, 2
      %v1014 = vrot.slane %v1012, 2
      %v1015 = vsel %vm394, %v1013, %v1014
      %1016 = vrot.lane.b32.xlu0 %v1015, 84
      %v1017 = vpop.permute.xlu0 %1016
      %v1020 = vunpack.c.l.b16 %v977
      %v1021 = vunpack.c.l.b16 %v978
      %v1022 = vpack.c.b16 %v989, %v1020
      %v1023 = vpack.c.b16 %v1021, %v1021
      %v1024 = vrot.slane %v1022, 2
      %v1025 = vrot.slane %v1023, 2
      %v1026 = vsel %vm394, %v1024, %v1025
      %1027 = vrot.lane.b32.xlu0 %v1026, 105
      %v1028 = vpop.permute.xlu0 %1027
      %v1031 = vunpack.c.l.b16 %v979
      %v1032 = vunpack.c.l.b16 %v980
      %v1033 = vpack.c.b16 %v996, %v1031
      %v1034 = vpack.c.b16 %v1032, %v1032
      %v1035 = vrot.slane %v1033, 2
      %v1036 = vrot.slane %v1034, 2
      %v1037 = vsel %vm394, %v1035, %v1036
      %1038 = vrot.lane.b32.xlu0 %v1037, 126
      %v1039 = vpop.permute.xlu0 %1038
      %v1042 = vsel %vm422, %v985, %v992
      %v1044 = vsel %vm426, %v1042, %v999
      %v1046 = vsel %vm429, %v1044, %v1006
      %v1048 = vsel %vm432, %v1046, %v1017
      %v1050 = vsel %vm435, %v1048, %v1028
      %v1052 = vsel %vm438, %v1050, %v1039
      %v1054 = vld [vmem:[%s305 + $0x48] sm:$0xc]
      %v1055 = vld [vmem:[%s305 + $0x50] sm:$0x3]
      %v1056 = vld [vmem:[%s305 + $0x8] sm:$0xf]
      %1057 = vrot.lane.b32.xlu0 %v385, 21
      %v1058 = vpop.permute.xlu0 %1057
      %1059 = vrot.lane.b32.xlu0 %v397, 42
      %v1060 = vpop.permute.xlu0 %1059
      %1061 = vrot.lane.b32.xlu0 %v408, 63
      %v1062 = vpop.permute.xlu0 %1061
      %1063 = vrot.lane.b32.xlu0 %v419, 84
      %v1064 = vpop.permute.xlu0 %1063
      %v1067 = vunpack.c.l.b16 %v1054
      %v1068 = vunpack.c.l.b16 %v1055
      %v1069 = vpack.c.b16 %v384, %v1067
      %v1070 = vpack.c.b16 %v1068, %v1068
      %v1071 = vrot.slane %v1069, 2
      %v1072 = vrot.slane %v1070, 2
      %v1073 = vsel %vm394, %v1071, %v1072
      %1074 = vrot.lane.b32.xlu0 %v1073, 105
      %v1075 = vpop.permute.xlu0 %1074
      %v1077 = vunpack.c.l.b16 %v1056
      %v1078 = vpack.c.b16 %v1077, %v365
      %1079 = vrot.lane.b32.xlu0 %v1078, 126
      %v1080 = vpop.permute.xlu0 %1079
      %v1083 = vsel %vm422, %v378, %v1058
      %v1085 = vsel %vm426, %v1083, %v1060
      %v1087 = vsel %vm429, %v1085, %v1062
      %v1089 = vsel %vm432, %v1087, %v1064
      %v1091 = vsel %vm435, %v1089, %v1075
      %v1093 = vsel %vm438, %v1091, %v1080
      %v1095 = vld [vmem:[%s442 + $0x48] sm:$0xc]
      %v1096 = vld [vmem:[%s442 + $0x50] sm:$0x3]
      %v1097 = vld [vmem:[%s442 + $0x8] sm:$0xf]
      %1098 = vrot.lane.b32.xlu0 %v480, 21
      %v1099 = vpop.permute.xlu0 %1098
      %1100 = vrot.lane.b32.xlu0 %v491, 42
      %v1101 = vpop.permute.xlu0 %1100
      %1102 = vrot.lane.b32.xlu0 %v502, 63
      %v1103 = vpop.permute.xlu0 %1102
      %1104 = vrot.lane.b32.xlu0 %v513, 84
      %v1105 = vpop.permute.xlu0 %1104
      %v1108 = vunpack.c.l.b16 %v1095
      %v1109 = vunpack.c.l.b16 %v1096
      %v1110 = vpack.c.b16 %v479, %v1108
      %v1111 = vpack.c.b16 %v1109, %v1109
      %v1112 = vrot.slane %v1110, 2
      %v1113 = vrot.slane %v1111, 2
      %v1114 = vsel %vm394, %v1112, %v1113
      %1115 = vrot.lane.b32.xlu0 %v1114, 105
      %v1116 = vpop.permute.xlu0 %1115
      %v1118 = vunpack.c.l.b16 %v1097
      %v1119 = vpack.c.b16 %v1118, %v460
      %1120 = vrot.lane.b32.xlu0 %v1119, 126
      %v1121 = vpop.permute.xlu0 %1120
      %v1124 = vsel %vm422, %v473, %v1099
      %v1126 = vsel %vm426, %v1124, %v1101
      %v1128 = vsel %vm429, %v1126, %v1103
      %v1130 = vsel %vm432, %v1128, %v1105
      %v1132 = vsel %vm435, %v1130, %v1116
      %v1134 = vsel %vm438, %v1132, %v1121
      %v1136 = vld [vmem:[%s530 + $0x48] sm:$0xc]
      %v1137 = vld [vmem:[%s530 + $0x50] sm:$0x3]
      %v1138 = vld [vmem:[%s530 + $0x8] sm:$0xf]
      %1139 = vrot.lane.b32.xlu0 %v568, 21
      %v1140 = vpop.permute.xlu0 %1139
      %1141 = vrot.lane.b32.xlu0 %v579, 42
      %v1142 = vpop.permute.xlu0 %1141
      %1143 = vrot.lane.b32.xlu0 %v590, 63
      %v1144 = vpop.permute.xlu0 %1143
      %1145 = vrot.lane.b32.xlu0 %v601, 84
      %v1146 = vpop.permute.xlu0 %1145
      %v1149 = vunpack.c.l.b16 %v1136
      %v1150 = vunpack.c.l.b16 %v1137
      %v1151 = vpack.c.b16 %v567, %v1149
      %v1152 = vpack.c.b16 %v1150, %v1150
      %v1153 = vrot.slane %v1151, 2
      %v1154 = vrot.slane %v1152, 2
      %v1155 = vsel %vm394, %v1153, %v1154
      %1156 = vrot.lane.b32.xlu0 %v1155, 105
      %v1157 = vpop.permute.xlu0 %1156
      %v1159 = vunpack.c.l.b16 %v1138
      %v1160 = vpack.c.b16 %v1159, %v548
      %1161 = vrot.lane.b32.xlu0 %v1160, 126
      %v1162 = vpop.permute.xlu0 %1161
      %v1165 = vsel %vm422, %v561, %v1140
      %v1167 = vsel %vm426, %v1165, %v1142
      %v1169 = vsel %vm429, %v1167, %v1144
      %v1171 = vsel %vm432, %v1169, %v1146
      %v1173 = vsel %vm435, %v1171, %v1157
      %v1175 = vsel %vm438, %v1173, %v1162
      %v1177 = vld [vmem:[%s618 + $0x48] sm:$0xc]
      %v1178 = vld [vmem:[%s618 + $0x50] sm:$0x3]
      %v1179 = vld [vmem:[%s618 + $0x8] sm:$0xf]
      %1180 = vrot.lane.b32.xlu0 %v656, 21
      %v1181 = vpop.permute.xlu0 %1180
      %1182 = vrot.lane.b32.xlu0 %v667, 42
      %v1183 = vpop.permute.xlu0 %1182
      %1184 = vrot.lane.b32.xlu0 %v678, 63
      %v1185 = vpop.permute.xlu0 %1184
      %1186 = vrot.lane.b32.xlu0 %v689, 84
      %v1187 = vpop.permute.xlu0 %1186
      %v1190 = vunpack.c.l.b16 %v1177
      %v1191 = vunpack.c.l.b16 %v1178
      %v1192 = vpack.c.b16 %v655, %v1190
      %v1193 = vpack.c.b16 %v1191, %v1191
      %v1194 = vrot.slane %v1192, 2
      %v1195 = vrot.slane %v1193, 2
      %v1196 = vsel %vm394, %v1194, %v1195
      %1197 = vrot.lane.b32.xlu0 %v1196, 105
      %v1198 = vpop.permute.xlu0 %1197
      %v1200 = vunpack.c.l.b16 %v1179
      %v1201 = vpack.c.b16 %v1200, %v636
      %1202 = vrot.lane.b32.xlu0 %v1201, 126
      %v1203 = vpop.permute.xlu0 %1202
      %v1206 = vsel %vm422, %v649, %v1181
      %v1208 = vsel %vm426, %v1206, %v1183
      %v1210 = vsel %vm429, %v1208, %v1185
      %v1212 = vsel %vm432, %v1210, %v1187
      %v1214 = vsel %vm435, %v1212, %v1198
      %v1216 = vsel %vm438, %v1214, %v1203
      %v1218 = vld [vmem:[%s305 + $0x54] sm:$0xc]
      %v1219 = vld [vmem:[%s305 + $0x5c] sm:$0x3]
      %v1220 = vld [vmem:[%s305 + $0x14] sm:$0xf]
      %1221 = vrot.lane.b32.xlu0 %v743, 21
      %v1222 = vpop.permute.xlu0 %1221
      %1223 = vrot.lane.b32.xlu0 %v754, 42
      %v1224 = vpop.permute.xlu0 %1223
      %1225 = vrot.lane.b32.xlu0 %v765, 63
      %v1226 = vpop.permute.xlu0 %1225
      %1227 = vrot.lane.b32.xlu0 %v776, 84
      %v1228 = vpop.permute.xlu0 %1227
      %v1231 = vunpack.c.l.b16 %v1218
      %v1232 = vunpack.c.l.b16 %v1219
      %v1233 = vpack.c.b16 %v742, %v1231
      %v1234 = vpack.c.b16 %v1232, %v1232
      %v1235 = vrot.slane %v1233, 2
      %v1236 = vrot.slane %v1234, 2
      %v1237 = vsel %vm394, %v1235, %v1236
      %1238 = vrot.lane.b32.xlu0 %v1237, 105
      %v1239 = vpop.permute.xlu0 %1238
      %v1241 = vunpack.c.l.b16 %v1220
      %v1242 = vpack.c.b16 %v1241, %v723
      %1243 = vrot.lane.b32.xlu0 %v1242, 126
      %v1244 = vpop.permute.xlu0 %1243
      %v1247 = vsel %vm422, %v736, %v1222
      %v1249 = vsel %vm426, %v1247, %v1224
      %v1251 = vsel %vm429, %v1249, %v1226
      %v1253 = vsel %vm432, %v1251, %v1228
      %v1255 = vsel %vm435, %v1253, %v1239
      %v1257 = vsel %vm438, %v1255, %v1244
      %v1259 = vld [vmem:[%s442 + $0x54] sm:$0xc]
      %v1260 = vld [vmem:[%s442 + $0x5c] sm:$0x3]
      %v1261 = vld [vmem:[%s442 + $0x14] sm:$0xf]
      %1262 = vrot.lane.b32.xlu0 %v830, 21
      %v1263 = vpop.permute.xlu0 %1262
      %1264 = vrot.lane.b32.xlu0 %v841, 42
      %v1265 = vpop.permute.xlu0 %1264
      %1266 = vrot.lane.b32.xlu0 %v852, 63
      %v1267 = vpop.permute.xlu0 %1266
      %1268 = vrot.lane.b32.xlu0 %v863, 84
      %v1269 = vpop.permute.xlu0 %1268
      %v1272 = vunpack.c.l.b16 %v1259
      %v1273 = vunpack.c.l.b16 %v1260
      %v1274 = vpack.c.b16 %v829, %v1272
      %v1275 = vpack.c.b16 %v1273, %v1273
      %v1276 = vrot.slane %v1274, 2
      %v1277 = vrot.slane %v1275, 2
      %v1278 = vsel %vm394, %v1276, %v1277
      %1279 = vrot.lane.b32.xlu0 %v1278, 105
      %v1280 = vpop.permute.xlu0 %1279
      %v1282 = vunpack.c.l.b16 %v1261
      %v1283 = vpack.c.b16 %v1282, %v810
      %1284 = vrot.lane.b32.xlu0 %v1283, 126
      %v1285 = vpop.permute.xlu0 %1284
      %v1288 = vsel %vm422, %v823, %v1263
      %v1290 = vsel %vm426, %v1288, %v1265
      %v1292 = vsel %vm429, %v1290, %v1267
      %v1294 = vsel %vm432, %v1292, %v1269
      %v1296 = vsel %vm435, %v1294, %v1280
      %v1298 = vsel %vm438, %v1296, %v1285
      %v1300 = vld [vmem:[%s530 + $0x54] sm:$0xc]
      %v1301 = vld [vmem:[%s530 + $0x5c] sm:$0x3]
      %v1302 = vld [vmem:[%s530 + $0x14] sm:$0xf]
      %1303 = vrot.lane.b32.xlu0 %v917, 21
      %v1304 = vpop.permute.xlu0 %1303
      %1305 = vrot.lane.b32.xlu0 %v928, 42
      %v1306 = vpop.permute.xlu0 %1305
      %1307 = vrot.lane.b32.xlu0 %v939, 63
      %v1308 = vpop.permute.xlu0 %1307
      %1309 = vrot.lane.b32.xlu0 %v950, 84
      %v1310 = vpop.permute.xlu0 %1309
      %v1313 = vunpack.c.l.b16 %v1300
      %v1314 = vunpack.c.l.b16 %v1301
      %v1315 = vpack.c.b16 %v916, %v1313
      %v1316 = vpack.c.b16 %v1314, %v1314
      %v1317 = vrot.slane %v1315, 2
      %v1318 = vrot.slane %v1316, 2
      %v1319 = vsel %vm394, %v1317, %v1318
      %1320 = vrot.lane.b32.xlu0 %v1319, 105
      %v1321 = vpop.permute.xlu0 %1320
      %v1323 = vunpack.c.l.b16 %v1302
      %v1324 = vpack.c.b16 %v1323, %v897
      %1325 = vrot.lane.b32.xlu0 %v1324, 126
      %v1326 = vpop.permute.xlu0 %1325
      %v1329 = vsel %vm422, %v910, %v1304
      %v1331 = vsel %vm426, %v1329, %v1306
      %v1333 = vsel %vm429, %v1331, %v1308
      %v1335 = vsel %vm432, %v1333, %v1310
      %v1337 = vsel %vm435, %v1335, %v1321
      %v1339 = vsel %vm438, %v1337, %v1326
      %v1341 = vld [vmem:[%s618 + $0x54] sm:$0xc]
      %v1342 = vld [vmem:[%s618 + $0x5c] sm:$0x3]
      %v1343 = vld [vmem:[%s618 + $0x14] sm:$0xf]
      %1344 = vrot.lane.b32.xlu0 %v1004, 21
      %v1345 = vpop.permute.xlu0 %1344
      %1346 = vrot.lane.b32.xlu0 %v1015, 42
      %v1347 = vpop.permute.xlu0 %1346
      %1348 = vrot.lane.b32.xlu0 %v1026, 63
      %v1349 = vpop.permute.xlu0 %1348
      %1350 = vrot.lane.b32.xlu0 %v1037, 84
      %v1351 = vpop.permute.xlu0 %1350
      %v1354 = vunpack.c.l.b16 %v1341
      %v1355 = vunpack.c.l.b16 %v1342
      %v1356 = vpack.c.b16 %v1003, %v1354
      %v1357 = vpack.c.b16 %v1355, %v1355
      %v1358 = vrot.slane %v1356, 2
      %v1359 = vrot.slane %v1357, 2
      %v1360 = vsel %vm394, %v1358, %v1359
      %1361 = vrot.lane.b32.xlu0 %v1360, 105
      %v1362 = vpop.permute.xlu0 %1361
      %v1364 = vunpack.c.l.b16 %v1343
      %v1365 = vpack.c.b16 %v1364, %v984
      %1366 = vrot.lane.b32.xlu0 %v1365, 126
      %v1367 = vpop.permute.xlu0 %1366
      %v1370 = vsel %vm422, %v997, %v1345
      %v1372 = vsel %vm426, %v1370, %v1347
      %v1374 = vsel %vm429, %v1372, %v1349
      %v1376 = vsel %vm432, %v1374, %v1351
      %v1378 = vsel %vm435, %v1376, %v1362
      %v1380 = vsel %vm438, %v1378, %v1367
      %v1401 = vunpack.c.l.b16 %v329
      %v1402 = vunpack.c.l.b16 %v330
      %v1403 = vunpack.c.l.b16 %v331
      %v1404 = vunpack.c.l.b16 %v332
      %v1405 = vunpack.c.l.b16 %v333
      %v1406 = vunpack.c.l.b16 %v334
      %v1407 = vunpack.c.l.b16 %v335
      %v1408 = vunpack.c.l.b16 %v336
      %v1409 = vunpack.c.l.b16 %v337
      %v1410 = vunpack.c.l.b16 %v338
      %v1411 = vunpack.c.l.b16 %v339
      %v1412 = vunpack.c.l.b16 %v340
      %v1413 = vunpack.c.l.b16 %v341
      %v1414 = vunpack.c.l.b16 %v342
      %v1415 = vunpack.c.l.b16 %v343
      %v1416 = vunpack.c.l.b16 %v344
      %v1417 = vunpack.c.l.b16 %v345
      %v1418 = vunpack.c.l.b16 %v346
      %v1419 = vunpack.c.l.b16 %v347
      %v1420 = vpack.c.b16 %v1402, %v1401
      %v1421 = vpack.c.b16 %v1404, %v1403
      %v1422 = vpack.c.b16 %v1406, %v1405
      %v1423 = vpack.c.b16 %v1408, %v1407
      %v1424 = vpack.c.b16 %v1410, %v1409
      %v1425 = vpack.c.b16 %v1412, %v1411
      %v1426 = vpack.c.b16 %v1414, %v1413
      %v1427 = vpack.c.b16 %v1416, %v1415
      %v1428 = vpack.c.b16 %v1418, %v1417
      %v1429 = vpack.c.b16 %v1419, %v1419
      %vm1439 = vcmask 154624
      %v1440 = vsel %vm1439, %v421, 0
      %v1442 = vsel %vm1439, %v515, 0
      %v1444 = vsel %vm1439, %v603, 0
      %v1446 = vsel %vm1439, %v691, 0
      %v1448 = vsel %vm1439, %v778, 0
      %v1450 = vsel %vm1439, %v865, 0
      %v1452 = vsel %vm1439, %v952, 0
      %v1454 = vsel %vm1439, %v1039, 0
      %v1456 = vsel %vm1439, %v1080, 0
      %v1458 = vsel %vm1439, %v1121, 0
      %v1460 = vsel %vm1439, %v1162, 0
      %v1462 = vsel %vm1439, %v1203, 0
      %v1464 = vsel %vm1439, %v1244, 0
      %v1466 = vsel %vm1439, %v1285, 0
      %v1468 = vsel %vm1439, %v1326, 0
      %v1470 = vsel %vm1439, %v1367, 0
      %vm1472 = vcmask 1040384
      %vm1473 = vcmask 1041408
      %v1474 = vsel %vm1472, 4294967295, 65535
      %v1475 = vsel %vm1473, %v1474, 0
      %v1477 = vand.u32 %v1429, %v1475
      %1479 = vmatprep.subr.bf16.mxu0 0
      %1480 = vmatpush1.bf16.msra.mxu0 %v1420
      %1481 = vmatprep.subr.bf16.mxu0 0
      %1482 = vmatpush1.bf16.msra.mxu0 %v1421
      %1483 = vmatprep.subr.bf16.mxu0 0
      %1484 = vmatpush1.bf16.msra.mxu0 %v1422
      %1485 = vmatprep.subr.bf16.mxu0 0
      %1486 = vmatpush1.bf16.msra.mxu0 %v1423
      %1487 = vmatprep.subr.bf16.mxu0 0
      %1488 = vmatpush1.bf16.msra.mxu0 %v1424
      %1489 = vmatprep.subr.bf16.mxu0 0
      %1490 = vmatpush1.bf16.msra.mxu0 %v1425
      %1491 = vmatprep.subr.bf16.mxu0 0
      %1492 = vmatpush1.bf16.msra.mxu0 %v1426
      %1493 = vmatprep.subr.bf16.mxu0 0
      %1494 = vmatpush1.bf16.msra.mxu0 %v1427
      %1495 = vmatprep.subr.bf16.mxu0 0
      %1496 = vmatpush1.bf16.msra.mxu0 %v1428
      %1497 = vmatprep.subr.bf16.mxu0 0
      %1498 = vmatpush1.bf16.msra.mxu0 %v1477
      %1499 = vmatprep.subr.bf16.mxu0 0
      %1500 = vmatpush1.bf16.msra.mxu0 0
      %1501 = vmatprep.subr.bf16.mxu0 0
      %1502 = vmatpush1.bf16.msra.mxu0 0
      %1503 = vmatprep.subr.bf16.mxu0 0
      %1504 = vmatpush1.bf16.msra.mxu0 0
      %1505 = vmatprep.subr.bf16.mxu0 0
      %1506 = vmatpush1.bf16.msra.mxu0 0
      %1507 = vmatprep.subr.bf16.mxu0 0
      %1508 = vmatpush1.bf16.msra.mxu0 0
      %1509 = vmatprep.subr.bf16.mxu0 0
      %1510 = vmatpush1.bf16.msra.mxu0 0
      %1511 = vmatprep.mubr.bf16.mxu0 %v1440
      %1512 = vmatmul.mubr.bf16.gmra.mrb[0].mxu0 %v440
      %v1513 = vpop.f32.mrb[0].mxu0
      %v1514 = vadd.f32 0.0, %v1513
      %v1515 = vpop.f32.mrb[0].mxu0
      %v1516 = vpop.f32.mrb[0].mxu0
      %v1517 = vadd.f32 0.0, %v1516
      %v1518 = vpop.f32.mrb[0].mxu0
      %1519 = vmatprep.mubr.bf16.mxu0 %v1442
      %1520 = vmatmul.mubr.bf16.gmra.mrb[0].mxu0 %v528
      %v1521 = vpop.f32.mrb[0].mxu0
      %v1522 = vadd.f32 0.0, %v1521
      %v1523 = vpop.f32.mrb[0].mxu0
      %v1524 = vpop.f32.mrb[0].mxu0
      %v1525 = vadd.f32 0.0, %v1524
      %v1526 = vpop.f32.mrb[0].mxu0
      %1527 = vmatprep.mubr.bf16.mxu0 %v1444
      %1528 = vmatmul.mubr.bf16.gmra.mrb[0].mxu0 %v616
      %v1529 = vpop.f32.mrb[0].mxu0
      %v1530 = vadd.f32 0.0, %v1529
      %v1531 = vpop.f32.mrb[0].mxu0
      %v1532 = vpop.f32.mrb[0].mxu0
      %v1533 = vadd.f32 0.0, %v1532
      %v1534 = vpop.f32.mrb[0].mxu0
      %1535 = vmatprep.mubr.bf16.mxu0 %v1446
      %1536 = vmatmul.mubr.bf16.gmra.mrb[0].mxu0 %v704
      %v1537 = vpop.f32.mrb[0].mxu0
      %v1538 = vadd.f32 0.0, %v1537
      %v1539 = vpop.f32.mrb[0].mxu0
      %v1540 = vpop.f32.mrb[0].mxu0
      %v1541 = vadd.f32 0.0, %v1540
      %v1542 = vpop.f32.mrb[0].mxu0
      %1543 = vmatprep.mubr.bf16.mxu0 %v1448
      %1544 = vmatmul.mubr.bf16.gmra.mrb[0].mxu0 %v791
      %v1545 = vpop.f32.mrb[0].mxu0
      %v1546 = vadd.f32 0.0, %v1545
      %v1547 = vpop.f32.mrb[0].mxu0
      %v1548 = vpop.f32.mrb[0].mxu0
      %v1549 = vadd.f32 0.0, %v1548
      %v1550 = vpop.f32.mrb[0].mxu0
      %1551 = vmatprep.mubr.bf16.mxu0 %v1450
      %1552 = vmatmul.mubr.bf16.gmra.mrb[0].mxu0 %v878
      %v1553 = vpop.f32.mrb[0].mxu0
      %v1554 = vadd.f32 0.0, %v1553
      %v1555 = vpop.f32.mrb[0].mxu0
      %v1556 = vpop.f32.mrb[0].mxu0
      %v1557 = vadd.f32 0.0, %v1556
      %v1558 = vpop.f32.mrb[0].mxu0
      %1559 = vmatprep.mubr.bf16.mxu0 %v1452
      %1560 = vmatmul.mubr.bf16.gmra.mrb[0].mxu0 %v965
      %v1561 = vpop.f32.mrb[0].mxu0
      %v1562 = vadd.f32 0.0, %v1561
      %v1563 = vpop.f32.mrb[0].mxu0
      %v1564 = vpop.f32.mrb[0].mxu0
      %v1565 = vadd.f32 0.0, %v1564
      %v1566 = vpop.f32.mrb[0].mxu0
      %1567 = vmatprep.mubr.bf16.mxu0 %v1454
      %1568 = vmatmul.mubr.bf16.gmra.mrb[0].mxu0 %v1052
      %v1569 = vpop.f32.mrb[0].mxu0
      %v1570 = vadd.f32 0.0, %v1569
      %v1571 = vpop.f32.mrb[0].mxu0
      %v1572 = vpop.f32.mrb[0].mxu0
      %v1573 = vadd.f32 0.0, %v1572
      %v1574 = vpop.f32.mrb[0].mxu0
      %1575 = vmatprep.mubr.bf16.mxu0 %v1456
      %1576 = vmatmul.mubr.bf16.gmra.mrb[0].mxu0 %v1093
      %v1577 = vpop.f32.mrb[0].mxu0
      %v1578 = vadd.f32 0.0, %v1577
      %v1579 = vpop.f32.mrb[0].mxu0
      %v1580 = vpop.f32.mrb[0].mxu0
      %v1581 = vadd.f32 0.0, %v1580
      %v1582 = vpop.f32.mrb[0].mxu0
      %1583 = vmatprep.mubr.bf16.mxu0 %v1458
      %1584 = vmatmul.mubr.bf16.gmra.mrb[0].mxu0 %v1134
      %v1585 = vpop.f32.mrb[0].mxu0
      %v1586 = vadd.f32 0.0, %v1585
      %v1587 = vpop.f32.mrb[0].mxu0
      %v1588 = vpop.f32.mrb[0].mxu0
      %v1589 = vadd.f32 0.0, %v1588
      %v1590 = vpop.f32.mrb[0].mxu0
      %1591 = vmatprep.mubr.bf16.mxu0 %v1460
      %1592 = vmatmul.mubr.bf16.gmra.mrb[0].mxu0 %v1175
      %v1593 = vpop.f32.mrb[0].mxu0
      %v1594 = vadd.f32 0.0, %v1593
      %v1595 = vpop.f32.mrb[0].mxu0
      %v1596 = vpop.f32.mrb[0].mxu0
      %v1597 = vadd.f32 0.0, %v1596
      %v1598 = vpop.f32.mrb[0].mxu0
      %1599 = vmatprep.mubr.bf16.mxu0 %v1462
      %1600 = vmatmul.mubr.bf16.gmra.mrb[0].mxu0 %v1216
      %v1601 = vpop.f32.mrb[0].mxu0
      %v1602 = vadd.f32 0.0, %v1601
      %v1603 = vpop.f32.mrb[0].mxu0
      %v1604 = vpop.f32.mrb[0].mxu0
      %v1605 = vadd.f32 0.0, %v1604
      %v1606 = vpop.f32.mrb[0].mxu0
      %1607 = vmatprep.mubr.bf16.mxu0 %v1464
      %1608 = vmatmul.mubr.bf16.gmra.mrb[0].mxu0 %v1257
      %v1609 = vpop.f32.mrb[0].mxu0
      %v1610 = vadd.f32 0.0, %v1609
      %v1611 = vpop.f32.mrb[0].mxu0
      %v1612 = vpop.f32.mrb[0].mxu0
      %v1613 = vadd.f32 0.0, %v1612
      %v1614 = vpop.f32.mrb[0].mxu0
      %1615 = vmatprep.mubr.bf16.mxu0 %v1466
      %1616 = vmatmul.mubr.bf16.gmra.mrb[0].mxu0 %v1298
      %v1617 = vpop.f32.mrb[0].mxu0
      %v1618 = vadd.f32 0.0, %v1617
      %v1619 = vpop.f32.mrb[0].mxu0
      %v1620 = vpop.f32.mrb[0].mxu0
      %v1621 = vadd.f32 0.0, %v1620
      %v1622 = vpop.f32.mrb[0].mxu0
      %1623 = vmatprep.mubr.bf16.mxu0 %v1468
      %1624 = vmatmul.mubr.bf16.gmra.mrb[0].mxu0 %v1339
      %v1625 = vpop.f32.mrb[0].mxu0
      %v1626 = vadd.f32 0.0, %v1625
      %v1627 = vpop.f32.mrb[0].mxu0
      %v1628 = vpop.f32.mrb[0].mxu0
      %v1629 = vadd.f32 0.0, %v1628
      %v1630 = vpop.f32.mrb[0].mxu0
      %1631 = vmatprep.mubr.bf16.mxu0 %v1470
      %1632 = vmatmul.mubr.bf16.gmra.mrb[0].mxu0 %v1380
      %v1633 = vpop.f32.mrb[0].mxu0
      %v1634 = vadd.f32 0.0, %v1633
      %v1635 = vpop.f32.mrb[0].mxu0
      %v1636 = vpop.f32.mrb[0].mxu0
      %v1637 = vadd.f32 0.0, %v1636
      %v1638 = vpop.f32.mrb[0].mxu0
      %1639 = vdwg.mxu0
      %v1640 = vmax.f32 %v1514, %v1546
      %v1641 = vmax.f32 %v1517, %v1549
      %v1642 = vmax.f32 %v1522, %v1554
      %v1643 = vmax.f32 %v1525, %v1557
      %v1644 = vmax.f32 %v1530, %v1562
      %v1645 = vmax.f32 %v1533, %v1565
      %v1646 = vmax.f32 %v1538, %v1570
      %v1647 = vmax.f32 %v1541, %v1573
      %v1648 = vmax.f32 %v1578, %v1610
      %v1649 = vmax.f32 %v1581, %v1613
      %v1650 = vmax.f32 %v1586, %v1618
      %v1651 = vmax.f32 %v1589, %v1621
      %v1652 = vmax.f32 %v1594, %v1626
      %v1653 = vmax.f32 %v1597, %v1629
      %v1654 = vmax.f32 %v1602, %v1634
      %v1655 = vmax.f32 %v1605, %v1637
      %v1656 = vmax.f32 %v1640, %v1648
      %v1657 = vmax.f32 %v1641, %v1649
      %v1658 = vmax.f32 %v1642, %v1650
      %v1659 = vmax.f32 %v1643, %v1651
      %v1660 = vmax.f32 %v1644, %v1652
      %v1661 = vmax.f32 %v1645, %v1653
      %v1662 = vmax.f32 %v1646, %v1654
      %v1663 = vmax.f32 %v1647, %v1655
      %v1664 = vld [vmem:[%s3] sm:$0x1]
      %v1666 = vlaneseq
      %v1667 = vshrl.u32 %v1666, 7
      %v1668 = vsub.s32 0, %v1667
      %v1669 = vrot.slane %v1664, %v1668
      %v1671 = vadd.f32 %v1656, %v1669
      %v1672 = vadd.f32 %v1657, %v1669
      %v1673 = vadd.f32 %v1658, %v1669
      %v1674 = vadd.f32 %v1659, %v1669
      %v1675 = vadd.f32 %v1660, %v1669
      %v1676 = vadd.f32 %v1661, %v1669
      %v1677 = vadd.f32 %v1662, %v1669
      %v1678 = vadd.f32 %v1663, %v1669
      %v1679 = vmax.f32 %v1671, 0.0
      %v1680 = vmax.f32 %v1672, 0.0
      %v1681 = vmax.f32 %v1673, 0.0
      %v1682 = vmax.f32 %v1674, 0.0
      %v1683 = vmax.f32 %v1675, 0.0
      %v1684 = vmax.f32 %v1676, 0.0
      %v1685 = vmax.f32 %v1677, 0.0
      %v1686 = vmax.f32 %v1678, 0.0
      %v1687 = vld [vmem:[%s4] sm:$0xf]
      %v1688 = vld [vmem:[%s4 + $0x4] sm:$0xf]
      %v1689 = vld [vmem:[%s4 + $0x8] sm:$0xf]
      %v1690 = vld [vmem:[%s4 + $0xc] sm:$0xf]
      %v1691 = vld [vmem:[%s4 + $0x10] sm:$0xf]
      %v1692 = vld [vmem:[%s4 + $0x14] sm:$0xf]
      %v1693 = vld [vmem:[%s4 + $0x18] sm:$0xf]
      %v1694 = vld [vmem:[%s4 + $0x1c] sm:$0xf]
      %v1695 = vld [vmem:[%s4 + $0x20] sm:$0xf]
      %v1696 = vld [vmem:[%s4 + $0x24] sm:$0xf]
      %v1697 = vld [vmem:[%s4 + $0x28] sm:$0xf]
      %v1698 = vld [vmem:[%s4 + $0x2c] sm:$0xf]
      %v1699 = vld [vmem:[%s4 + $0x30] sm:$0xf]
      %v1700 = vld [vmem:[%s4 + $0x34] sm:$0xf]
      %v1701 = vld [vmem:[%s4 + $0x38] sm:$0xf]
      %v1702 = vld [vmem:[%s4 + $0x3c] sm:$0xf]
      %v1703 = vld [vmem:[%s4 + $0x40] sm:$0xf]
      %v1704 = vld [vmem:[%s4 + $0x44] sm:$0xf]
      %v1705 = vld [vmem:[%s4 + $0x48] sm:$0xf]
      %v1706 = vld [vmem:[%s4 + $0x4c] sm:$0xf]
      %v1707 = vld [vmem:[%s4 + $0x50] sm:$0xf]
      %v1708 = vld [vmem:[%s4 + $0x54] sm:$0xf]
      %v1709 = vld [vmem:[%s4 + $0x58] sm:$0xf]
      %v1710 = vld [vmem:[%s4 + $0x5c] sm:$0xf]
      %v1711 = vld [vmem:[%s4 + $0x60] sm:$0xf]
      %v1712 = vld [vmem:[%s4 + $0x64] sm:$0xf]
      %v1713 = vld [vmem:[%s4 + $0x68] sm:$0xf]
      %v1714 = vld [vmem:[%s4 + $0x6c] sm:$0xf]
      %v1715 = vld [vmem:[%s4 + $0x70] sm:$0xf]
      %v1716 = vld [vmem:[%s4 + $0x74] sm:$0xf]
      %v1717 = vld [vmem:[%s4 + $0x78] sm:$0xf]
      %v1718 = vld [vmem:[%s4 + $0x7c] sm:$0xf]
      %v1719 = vld [vmem:[%s4 + $0x80] sm:$0xf]
      %v1720 = vld [vmem:[%s4 + $0x84] sm:$0xf]
      %v1721 = vld [vmem:[%s4 + $0x88] sm:$0xf]
      %v1722 = vld [vmem:[%s4 + $0x8c] sm:$0xf]
      %v1723 = vld [vmem:[%s4 + $0x90] sm:$0xf]
      %v1724 = vld [vmem:[%s4 + $0x94] sm:$0xf]
      %v1725 = vld [vmem:[%s4 + $0x98] sm:$0xf]
      %v1726 = vld [vmem:[%s4 + $0x9c] sm:$0xf]
      %v1727 = vld [vmem:[%s4 + $0xa0] sm:$0xf]
      %v1728 = vld [vmem:[%s4 + $0xa4] sm:$0xf]
      %v1729 = vld [vmem:[%s4 + $0xa8] sm:$0xf]
      %v1730 = vld [vmem:[%s4 + $0xac] sm:$0xf]
      %v1731 = vld [vmem:[%s4 + $0xb0] sm:$0xf]
      %v1732 = vld [vmem:[%s4 + $0xb4] sm:$0xf]
      %v1733 = vld [vmem:[%s4 + $0xb8] sm:$0xf]
      %v1734 = vld [vmem:[%s4 + $0xbc] sm:$0xf]
      %v1735 = vld [vmem:[%s4 + $0xc0] sm:$0xf]
      %v1736 = vld [vmem:[%s4 + $0xc4] sm:$0xf]
      %v1737 = vld [vmem:[%s4 + $0xc8] sm:$0xf]
      %v1738 = vld [vmem:[%s4 + $0xcc] sm:$0xf]
      %v1739 = vld [vmem:[%s4 + $0xd0] sm:$0xf]
      %v1740 = vld [vmem:[%s4 + $0xd4] sm:$0xf]
      %v1741 = vld [vmem:[%s4 + $0xd8] sm:$0xf]
      %v1742 = vld [vmem:[%s4 + $0xdc] sm:$0xf]
      %v1743 = vld [vmem:[%s4 + $0xe0] sm:$0xf]
      %v1744 = vld [vmem:[%s4 + $0xe4] sm:$0xf]
      %v1745 = vld [vmem:[%s4 + $0xe8] sm:$0xf]
      %v1746 = vld [vmem:[%s4 + $0xec] sm:$0xf]
      %v1747 = vld [vmem:[%s4 + $0xf0] sm:$0xf]
      %v1748 = vld [vmem:[%s4 + $0xf4] sm:$0xf]
      %v1749 = vld [vmem:[%s4 + $0xf8] sm:$0xf]
      %v1750 = vld [vmem:[%s4 + $0xfc] sm:$0xf]
      %v1751 = vld [vmem:[%s4 + $0x100] sm:$0xf]
      %v1752 = vld [vmem:[%s4 + $0x104] sm:$0xf]
      %v1753 = vld [vmem:[%s4 + $0x108] sm:$0xf]
      %v1754 = vld [vmem:[%s4 + $0x10c] sm:$0xf]
      %v1755 = vld [vmem:[%s4 + $0x110] sm:$0xf]
      %v1756 = vld [vmem:[%s4 + $0x114] sm:$0xf]
      %v1757 = vld [vmem:[%s4 + $0x118] sm:$0xf]
      %v1758 = vld [vmem:[%s4 + $0x11c] sm:$0xf]
      %v1759 = vld [vmem:[%s4 + $0x120] sm:$0xf]
      %v1760 = vld [vmem:[%s4 + $0x124] sm:$0x3]
      %v1761 = vld [vmem:[%s312] sm:$0xf]
      %v1762 = vld [vmem:[%s312 + $0x4] sm:$0xf]
      %v1763 = vld [vmem:[%s312 + $0x18] sm:$0xf]
      %v1764 = vld [vmem:[%s312 + $0x1c] sm:$0xf]
      %v1765 = vld [vmem:[%s312 + $0x30] sm:$0xf]
      %v1766 = vld [vmem:[%s312 + $0x34] sm:$0xf]
      %v1767 = vld [vmem:[%s312 + $0x48] sm:$0xf]
      %v1768 = vld [vmem:[%s312 + $0x4c] sm:$0xf]
      %v1769 = vld [vmem:[%s312] sm:$0xc]
      %v1770 = vld [vmem:[%s312 + $0x8] sm:$0x3]
      %v1771 = vld [vmem:[%s312 + $0x18] sm:$0xc]
      %v1772 = vld [vmem:[%s312 + $0x20] sm:$0x3]
      %v1773 = vld [vmem:[%s312 + $0x30] sm:$0xc]
      %v1774 = vld [vmem:[%s312 + $0x38] sm:$0x3]
      %v1777 = vunpack.c.l.b16 %v1761
      %v1778 = vunpack.c.l.b16 %v1762
      %v1779 = vpack.c.b16 %v1778, %v1777
      %v1782 = vunpack.c.l.b16 %v1763
      %v1783 = vunpack.c.l.b16 %v1764
      %v1784 = vpack.c.b16 %v1783, %v1782
      %1785 = vrot.lane.b32.xlu0 %v1784, 84
      %v1786 = vpop.permute.xlu0 %1785
      %v1789 = vunpack.c.l.b16 %v1765
      %v1790 = vunpack.c.l.b16 %v1766
      %v1791 = vpack.c.b16 %v1790, %v1789
      %1792 = vrot.lane.b32.xlu0 %v1791, 40
      %v1793 = vpop.permute.xlu0 %1792
      %v1796 = vunpack.c.l.b16 %v1767
      %v1797 = vunpack.c.l.b16 %v1768
      %v1798 = vpack.c.b16 %v1797, %v1796
      %1799 = vrot.lane.b32.xlu0 %v1798, 124
      %v1800 = vpop.permute.xlu0 %1799
      %v1803 = vunpack.c.l.b16 %v1769
      %v1804 = vunpack.c.l.b16 %v1770
      %v1805 = vpack.c.b16 %v1778, %v1803
      %v1806 = vpack.c.b16 %v1804, %v1804
      %v1807 = vrot.slane %v1805, 2
      %v1808 = vrot.slane %v1806, 2
      %v1809 = vsel %vm394, %v1807, %v1808
      %1810 = vrot.lane.b32.xlu0 %v1809, 80
      %v1811 = vpop.permute.xlu0 %1810
      %v1814 = vunpack.c.l.b16 %v1771
      %v1815 = vunpack.c.l.b16 %v1772
      %v1816 = vpack.c.b16 %v1783, %v1814
      %v1817 = vpack.c.b16 %v1815, %v1815
      %v1818 = vrot.slane %v1816, 2
      %v1819 = vrot.slane %v1817, 2
      %v1820 = vsel %vm394, %v1818, %v1819
      %1821 = vrot.lane.b32.xlu0 %v1820, 36
      %v1822 = vpop.permute.xlu0 %1821
      %v1825 = vunpack.c.l.b16 %v1773
      %v1826 = vunpack.c.l.b16 %v1774
      %v1827 = vpack.c.b16 %v1790, %v1825
      %v1828 = vpack.c.b16 %v1826, %v1826
      %v1829 = vrot.slane %v1827, 2
      %v1830 = vrot.slane %v1828, 2
      %v1831 = vsel %vm394, %v1829, %v1830
      %1832 = vrot.lane.b32.xlu0 %v1831, 120
      %v1833 = vpop.permute.xlu0 %1832
      %v1836 = vsel %vm432, %v1779, %v1786
      %vm1838 = vcmask 326656
      %v1840 = vsel %vm1838, %v1786, %v1793
      %vm1841 = vcmask 1014784
      %v1843 = vsel %vm1841, %v1840, %v1800
      %vm1845 = vcmask 654336
      %v1847 = vsel %vm1845, %v1800, %v1811
      %vm1849 = vcmask 293888
      %v1851 = vsel %vm1849, %v1811, %v1822
      %vm1852 = vcmask 982016
      %v1854 = vsel %vm1852, %v1851, %v1833
      %s1856 = scalar_lea.vmem %s312, 96
      %v1857 = vld [vmem:[%s1856] sm:$0xf]
      %v1858 = vld [vmem:[%s1856 + $0x4] sm:$0xf]
      %v1859 = vld [vmem:[%s1856 + $0x18] sm:$0xf]
      %v1860 = vld [vmem:[%s1856 + $0x1c] sm:$0xf]
      %v1861 = vld [vmem:[%s1856 + $0x30] sm:$0xf]
      %v1862 = vld [vmem:[%s1856 + $0x34] sm:$0xf]
      %v1863 = vld [vmem:[%s1856 + $0x48] sm:$0xf]
      %v1864 = vld [vmem:[%s1856 + $0x4c] sm:$0xf]
      %v1865 = vld [vmem:[%s1856] sm:$0xc]
      %v1866 = vld [vmem:[%s1856 + $0x8] sm:$0x3]
      %v1867 = vld [vmem:[%s1856 + $0x18] sm:$0xc]
      %v1868 = vld [vmem:[%s1856 + $0x20] sm:$0x3]
      %v1869 = vld [vmem:[%s1856 + $0x30] sm:$0xc]
      %v1870 = vld [vmem:[%s1856 + $0x38] sm:$0x3]
      %v1873 = vunpack.c.l.b16 %v1857
      %v1874 = vunpack.c.l.b16 %v1858
      %v1875 = vpack.c.b16 %v1874, %v1873
      %v1878 = vunpack.c.l.b16 %v1859
      %v1879 = vunpack.c.l.b16 %v1860
      %v1880 = vpack.c.b16 %v1879, %v1878
      %1881 = vrot.lane.b32.xlu0 %v1880, 84
      %v1882 = vpop.permute.xlu0 %1881
      %v1885 = vunpack.c.l.b16 %v1861
      %v1886 = vunpack.c.l.b16 %v1862
      %v1887 = vpack.c.b16 %v1886, %v1885
      %1888 = vrot.lane.b32.xlu0 %v1887, 40
      %v1889 = vpop.permute.xlu0 %1888
      %v1892 = vunpack.c.l.b16 %v1863
      %v1893 = vunpack.c.l.b16 %v1864
      %v1894 = vpack.c.b16 %v1893, %v1892
      %1895 = vrot.lane.b32.xlu0 %v1894, 124
      %v1896 = vpop.permute.xlu0 %1895
      %v1899 = vunpack.c.l.b16 %v1865
      %v1900 = vunpack.c.l.b16 %v1866
      %v1901 = vpack.c.b16 %v1874, %v1899
      %v1902 = vpack.c.b16 %v1900, %v1900
      %v1903 = vrot.slane %v1901, 2
      %v1904 = vrot.slane %v1902, 2
      %v1905 = vsel %vm394, %v1903, %v1904
      %1906 = vrot.lane.b32.xlu0 %v1905, 80
      %v1907 = vpop.permute.xlu0 %1906
      %v1910 = vunpack.c.l.b16 %v1867
      %v1911 = vunpack.c.l.b16 %v1868
      %v1912 = vpack.c.b16 %v1879, %v1910
      %v1913 = vpack.c.b16 %v1911, %v1911
      %v1914 = vrot.slane %v1912, 2
      %v1915 = vrot.slane %v1913, 2
      %v1916 = vsel %vm394, %v1914, %v1915
      %1917 = vrot.lane.b32.xlu0 %v1916, 36
      %v1918 = vpop.permute.xlu0 %1917
      %v1921 = vunpack.c.l.b16 %v1869
      %v1922 = vunpack.c.l.b16 %v1870
      %v1923 = vpack.c.b16 %v1886, %v1921
      %v1924 = vpack.c.b16 %v1922, %v1922
      %v1925 = vrot.slane %v1923, 2
      %v1926 = vrot.slane %v1924, 2
      %v1927 = vsel %vm394, %v1925, %v1926
      %1928 = vrot.lane.b32.xlu0 %v1927, 120
      %v1929 = vpop.permute.xlu0 %1928
      %v1932 = vsel %vm432, %v1875, %v1882
      %v1935 = vsel %vm1838, %v1882, %v1889
      %v1937 = vsel %vm1841, %v1935, %v1896
      %v1940 = vsel %vm1845, %v1896, %v1907
      %v1943 = vsel %vm1849, %v1907, %v1918
      %v1945 = vsel %vm1852, %v1943, %v1929
      %s1947 = scalar_lea.vmem %s312, 192
      %v1948 = vld [vmem:[%s1947] sm:$0xf]
      %v1949 = vld [vmem:[%s1947 + $0x4] sm:$0xf]
      %v1950 = vld [vmem:[%s1947 + $0x18] sm:$0xf]
      %v1951 = vld [vmem:[%s1947 + $0x1c] sm:$0xf]
      %v1952 = vld [vmem:[%s1947 + $0x30] sm:$0xf]
      %v1953 = vld [vmem:[%s1947 + $0x34] sm:$0xf]
      %v1954 = vld [vmem:[%s1947 + $0x48] sm:$0xf]
      %v1955 = vld [vmem:[%s1947 + $0x4c] sm:$0xf]
      %v1956 = vld [vmem:[%s1947] sm:$0xc]
      %v1957 = vld [vmem:[%s1947 + $0x8] sm:$0x3]
      %v1958 = vld [vmem:[%s1947 + $0x18] sm:$0xc]
      %v1959 = vld [vmem:[%s1947 + $0x20] sm:$0x3]
      %v1960 = vld [vmem:[%s1947 + $0x30] sm:$0xc]
      %v1961 = vld [vmem:[%s1947 + $0x38] sm:$0x3]
      %v1964 = vunpack.c.l.b16 %v1948
      %v1965 = vunpack.c.l.b16 %v1949
      %v1966 = vpack.c.b16 %v1965, %v1964
      %v1969 = vunpack.c.l.b16 %v1950
      %v1970 = vunpack.c.l.b16 %v1951
      %v1971 = vpack.c.b16 %v1970, %v1969
      %1972 = vrot.lane.b32.xlu0 %v1971, 84
      %v1973 = vpop.permute.xlu0 %1972
      %v1976 = vunpack.c.l.b16 %v1952
      %v1977 = vunpack.c.l.b16 %v1953
      %v1978 = vpack.c.b16 %v1977, %v1976
      %1979 = vrot.lane.b32.xlu0 %v1978, 40
      %v1980 = vpop.permute.xlu0 %1979
      %v1983 = vunpack.c.l.b16 %v1954
      %v1984 = vunpack.c.l.b16 %v1955
      %v1985 = vpack.c.b16 %v1984, %v1983
      %1986 = vrot.lane.b32.xlu0 %v1985, 124
      %v1987 = vpop.permute.xlu0 %1986
      %v1990 = vunpack.c.l.b16 %v1956
      %v1991 = vunpack.c.l.b16 %v1957
      %v1992 = vpack.c.b16 %v1965, %v1990
      %v1993 = vpack.c.b16 %v1991, %v1991
      %v1994 = vrot.slane %v1992, 2
      %v1995 = vrot.slane %v1993, 2
      %v1996 = vsel %vm394, %v1994, %v1995
      %1997 = vrot.lane.b32.xlu0 %v1996, 80
      %v1998 = vpop.permute.xlu0 %1997
      %v2001 = vunpack.c.l.b16 %v1958
      %v2002 = vunpack.c.l.b16 %v1959
      %v2003 = vpack.c.b16 %v1970, %v2001
      %v2004 = vpack.c.b16 %v2002, %v2002
      %v2005 = vrot.slane %v2003, 2
      %v2006 = vrot.slane %v2004, 2
      %v2007 = vsel %vm394, %v2005, %v2006
      %2008 = vrot.lane.b32.xlu0 %v2007, 36
      %v2009 = vpop.permute.xlu0 %2008
      %v2012 = vunpack.c.l.b16 %v1960
      %v2013 = vunpack.c.l.b16 %v1961
      %v2014 = vpack.c.b16 %v1977, %v2012
      %v2015 = vpack.c.b16 %v2013, %v2013
      %v2016 = vrot.slane %v2014, 2
      %v2017 = vrot.slane %v2015, 2
      %v2018 = vsel %vm394, %v2016, %v2017
      %2019 = vrot.lane.b32.xlu0 %v2018, 120
      %v2020 = vpop.permute.xlu0 %2019
      %v2023 = vsel %vm432, %v1966, %v1973
      %v2026 = vsel %vm1838, %v1973, %v1980
      %v2028 = vsel %vm1841, %v2026, %v1987
      %v2031 = vsel %vm1845, %v1987, %v1998
      %v2034 = vsel %vm1849, %v1998, %v2009
      %v2036 = vsel %vm1852, %v2034, %v2020
      %s2038 = scalar_lea.vmem %s312, 288
      %v2039 = vld [vmem:[%s2038] sm:$0xf]
      %v2040 = vld [vmem:[%s2038 + $0x4] sm:$0xf]
      %v2041 = vld [vmem:[%s2038 + $0x18] sm:$0xf]
      %v2042 = vld [vmem:[%s2038 + $0x1c] sm:$0xf]
      %v2043 = vld [vmem:[%s2038 + $0x30] sm:$0xf]
      %v2044 = vld [vmem:[%s2038 + $0x34] sm:$0xf]
      %v2045 = vld [vmem:[%s2038 + $0x48] sm:$0xf]
      %v2046 = vld [vmem:[%s2038 + $0x4c] sm:$0xf]
      %v2047 = vld [vmem:[%s2038] sm:$0xc]
      %v2048 = vld [vmem:[%s2038 + $0x8] sm:$0x3]
      %v2049 = vld [vmem:[%s2038 + $0x18] sm:$0xc]
      %v2050 = vld [vmem:[%s2038 + $0x20] sm:$0x3]
      %v2051 = vld [vmem:[%s2038 + $0x30] sm:$0xc]
      %v2052 = vld [vmem:[%s2038 + $0x38] sm:$0x3]
      %v2055 = vunpack.c.l.b16 %v2039
      %v2056 = vunpack.c.l.b16 %v2040
      %v2057 = vpack.c.b16 %v2056, %v2055
      %v2060 = vunpack.c.l.b16 %v2041
      %v2061 = vunpack.c.l.b16 %v2042
      %v2062 = vpack.c.b16 %v2061, %v2060
      %2063 = vrot.lane.b32.xlu0 %v2062, 84
      %v2064 = vpop.permute.xlu0 %2063
      %v2067 = vunpack.c.l.b16 %v2043
      %v2068 = vunpack.c.l.b16 %v2044
      %v2069 = vpack.c.b16 %v2068, %v2067
      %2070 = vrot.lane.b32.xlu0 %v2069, 40
      %v2071 = vpop.permute.xlu0 %2070
      %v2074 = vunpack.c.l.b16 %v2045
      %v2075 = vunpack.c.l.b16 %v2046
      %v2076 = vpack.c.b16 %v2075, %v2074
      %2077 = vrot.lane.b32.xlu0 %v2076, 124
      %v2078 = vpop.permute.xlu0 %2077
      %v2081 = vunpack.c.l.b16 %v2047
      %v2082 = vunpack.c.l.b16 %v2048
      %v2083 = vpack.c.b16 %v2056, %v2081
      %v2084 = vpack.c.b16 %v2082, %v2082
      %v2085 = vrot.slane %v2083, 2
      %v2086 = vrot.slane %v2084, 2
      %v2087 = vsel %vm394, %v2085, %v2086
      %2088 = vrot.lane.b32.xlu0 %v2087, 80
      %v2089 = vpop.permute.xlu0 %2088
      %v2092 = vunpack.c.l.b16 %v2049
      %v2093 = vunpack.c.l.b16 %v2050
      %v2094 = vpack.c.b16 %v2061, %v2092
      %v2095 = vpack.c.b16 %v2093, %v2093
      %v2096 = vrot.slane %v2094, 2
      %v2097 = vrot.slane %v2095, 2
      %v2098 = vsel %vm394, %v2096, %v2097
      %2099 = vrot.lane.b32.xlu0 %v2098, 36
      %v2100 = vpop.permute.xlu0 %2099
      %v2103 = vunpack.c.l.b16 %v2051
      %v2104 = vunpack.c.l.b16 %v2052
      %v2105 = vpack.c.b16 %v2068, %v2103
      %v2106 = vpack.c.b16 %v2104, %v2104
      %v2107 = vrot.slane %v2105, 2
      %v2108 = vrot.slane %v2106, 2
      %v2109 = vsel %vm394, %v2107, %v2108
      %2110 = vrot.lane.b32.xlu0 %v2109, 120
      %v2111 = vpop.permute.xlu0 %2110
      %v2114 = vsel %vm432, %v2057, %v2064
      %v2117 = vsel %vm1838, %v2064, %v2071
      %v2119 = vsel %vm1841, %v2117, %v2078
      %v2122 = vsel %vm1845, %v2078, %v2089
      %v2125 = vsel %vm1849, %v2089, %v2100
      %v2127 = vsel %vm1852, %v2125, %v2111
      %v2129 = vld [vmem:[%s312 + $0xc] sm:$0xf]
      %v2130 = vld [vmem:[%s312 + $0x10] sm:$0xf]
      %v2131 = vld [vmem:[%s312 + $0x24] sm:$0xf]
      %v2132 = vld [vmem:[%s312 + $0x28] sm:$0xf]
      %v2133 = vld [vmem:[%s312 + $0x3c] sm:$0xf]
      %v2134 = vld [vmem:[%s312 + $0x40] sm:$0xf]
      %v2135 = vld [vmem:[%s312 + $0x54] sm:$0xf]
      %v2136 = vld [vmem:[%s312 + $0x58] sm:$0xf]
      %v2137 = vld [vmem:[%s312 + $0xc] sm:$0xc]
      %v2138 = vld [vmem:[%s312 + $0x14] sm:$0x3]
      %v2139 = vld [vmem:[%s312 + $0x24] sm:$0xc]
      %v2140 = vld [vmem:[%s312 + $0x2c] sm:$0x3]
      %v2141 = vld [vmem:[%s312 + $0x3c] sm:$0xc]
      %v2142 = vld [vmem:[%s312 + $0x44] sm:$0x3]
      %v2145 = vunpack.c.l.b16 %v2129
      %v2146 = vunpack.c.l.b16 %v2130
      %v2147 = vpack.c.b16 %v2146, %v2145
      %v2150 = vunpack.c.l.b16 %v2131
      %v2151 = vunpack.c.l.b16 %v2132
      %v2152 = vpack.c.b16 %v2151, %v2150
      %2153 = vrot.lane.b32.xlu0 %v2152, 84
      %v2154 = vpop.permute.xlu0 %2153
      %v2157 = vunpack.c.l.b16 %v2133
      %v2158 = vunpack.c.l.b16 %v2134
      %v2159 = vpack.c.b16 %v2158, %v2157
      %2160 = vrot.lane.b32.xlu0 %v2159, 40
      %v2161 = vpop.permute.xlu0 %2160
      %v2164 = vunpack.c.l.b16 %v2135
      %v2165 = vunpack.c.l.b16 %v2136
      %v2166 = vpack.c.b16 %v2165, %v2164
      %2167 = vrot.lane.b32.xlu0 %v2166, 124
      %v2168 = vpop.permute.xlu0 %2167
      %v2171 = vunpack.c.l.b16 %v2137
      %v2172 = vunpack.c.l.b16 %v2138
      %v2173 = vpack.c.b16 %v2146, %v2171
      %v2174 = vpack.c.b16 %v2172, %v2172
      %v2175 = vrot.slane %v2173, 2
      %v2176 = vrot.slane %v2174, 2
      %v2177 = vsel %vm394, %v2175, %v2176
      %2178 = vrot.lane.b32.xlu0 %v2177, 80
      %v2179 = vpop.permute.xlu0 %2178
      %v2182 = vunpack.c.l.b16 %v2139
      %v2183 = vunpack.c.l.b16 %v2140
      %v2184 = vpack.c.b16 %v2151, %v2182
      %v2185 = vpack.c.b16 %v2183, %v2183
      %v2186 = vrot.slane %v2184, 2
      %v2187 = vrot.slane %v2185, 2
      %v2188 = vsel %vm394, %v2186, %v2187
      %2189 = vrot.lane.b32.xlu0 %v2188, 36
      %v2190 = vpop.permute.xlu0 %2189
      %v2193 = vunpack.c.l.b16 %v2141
      %v2194 = vunpack.c.l.b16 %v2142
      %v2195 = vpack.c.b16 %v2158, %v2193
      %v2196 = vpack.c.b16 %v2194, %v2194
      %v2197 = vrot.slane %v2195, 2
      %v2198 = vrot.slane %v2196, 2
      %v2199 = vsel %vm394, %v2197, %v2198
      %2200 = vrot.lane.b32.xlu0 %v2199, 120
      %v2201 = vpop.permute.xlu0 %2200
      %v2204 = vsel %vm432, %v2147, %v2154
      %v2207 = vsel %vm1838, %v2154, %v2161
      %v2209 = vsel %vm1841, %v2207, %v2168
      %v2212 = vsel %vm1845, %v2168, %v2179
      %v2215 = vsel %vm1849, %v2179, %v2190
      %v2217 = vsel %vm1852, %v2215, %v2201
      %v2219 = vld [vmem:[%s1856 + $0xc] sm:$0xf]
      %v2220 = vld [vmem:[%s1856 + $0x10] sm:$0xf]
      %v2221 = vld [vmem:[%s1856 + $0x24] sm:$0xf]
      %v2222 = vld [vmem:[%s1856 + $0x28] sm:$0xf]
      %v2223 = vld [vmem:[%s1856 + $0x3c] sm:$0xf]
      %v2224 = vld [vmem:[%s1856 + $0x40] sm:$0xf]
      %v2225 = vld [vmem:[%s1856 + $0x54] sm:$0xf]
      %v2226 = vld [vmem:[%s1856 + $0x58] sm:$0xf]
      %v2227 = vld [vmem:[%s1856 + $0xc] sm:$0xc]
      %v2228 = vld [vmem:[%s1856 + $0x14] sm:$0x3]
      %v2229 = vld [vmem:[%s1856 + $0x24] sm:$0xc]
      %v2230 = vld [vmem:[%s1856 + $0x2c] sm:$0x3]
      %v2231 = vld [vmem:[%s1856 + $0x3c] sm:$0xc]
      %v2232 = vld [vmem:[%s1856 + $0x44] sm:$0x3]
      %v2235 = vunpack.c.l.b16 %v2219
      %v2236 = vunpack.c.l.b16 %v2220
      %v2237 = vpack.c.b16 %v2236, %v2235
      %v2240 = vunpack.c.l.b16 %v2221
      %v2241 = vunpack.c.l.b16 %v2222
      %v2242 = vpack.c.b16 %v2241, %v2240
      %2243 = vrot.lane.b32.xlu0 %v2242, 84
      %v2244 = vpop.permute.xlu0 %2243
      %v2247 = vunpack.c.l.b16 %v2223
      %v2248 = vunpack.c.l.b16 %v2224
      %v2249 = vpack.c.b16 %v2248, %v2247
      %2250 = vrot.lane.b32.xlu0 %v2249, 40
      %v2251 = vpop.permute.xlu0 %2250
      %v2254 = vunpack.c.l.b16 %v2225
      %v2255 = vunpack.c.l.b16 %v2226
      %v2256 = vpack.c.b16 %v2255, %v2254
      %2257 = vrot.lane.b32.xlu0 %v2256, 124
      %v2258 = vpop.permute.xlu0 %2257
      %v2261 = vunpack.c.l.b16 %v2227
      %v2262 = vunpack.c.l.b16 %v2228
      %v2263 = vpack.c.b16 %v2236, %v2261
      %v2264 = vpack.c.b16 %v2262, %v2262
      %v2265 = vrot.slane %v2263, 2
      %v2266 = vrot.slane %v2264, 2
      %v2267 = vsel %vm394, %v2265, %v2266
      %2268 = vrot.lane.b32.xlu0 %v2267, 80
      %v2269 = vpop.permute.xlu0 %2268
      %v2272 = vunpack.c.l.b16 %v2229
      %v2273 = vunpack.c.l.b16 %v2230
      %v2274 = vpack.c.b16 %v2241, %v2272
      %v2275 = vpack.c.b16 %v2273, %v2273
      %v2276 = vrot.slane %v2274, 2
      %v2277 = vrot.slane %v2275, 2
      %v2278 = vsel %vm394, %v2276, %v2277
      %2279 = vrot.lane.b32.xlu0 %v2278, 36
      %v2280 = vpop.permute.xlu0 %2279
      %v2283 = vunpack.c.l.b16 %v2231
      %v2284 = vunpack.c.l.b16 %v2232
      %v2285 = vpack.c.b16 %v2248, %v2283
      %v2286 = vpack.c.b16 %v2284, %v2284
      %v2287 = vrot.slane %v2285, 2
      %v2288 = vrot.slane %v2286, 2
      %v2289 = vsel %vm394, %v2287, %v2288
      %2290 = vrot.lane.b32.xlu0 %v2289, 120
      %v2291 = vpop.permute.xlu0 %2290
      %v2294 = vsel %vm432, %v2237, %v2244
      %v2297 = vsel %vm1838, %v2244, %v2251
      %v2299 = vsel %vm1841, %v2297, %v2258
      %v2302 = vsel %vm1845, %v2258, %v2269
      %v2305 = vsel %vm1849, %v2269, %v2280
      %v2307 = vsel %vm1852, %v2305, %v2291
      %v2309 = vld [vmem:[%s1947 + $0xc] sm:$0xf]
      %v2310 = vld [vmem:[%s1947 + $0x10] sm:$0xf]
      %v2311 = vld [vmem:[%s1947 + $0x24] sm:$0xf]
      %v2312 = vld [vmem:[%s1947 + $0x28] sm:$0xf]
      %v2313 = vld [vmem:[%s1947 + $0x3c] sm:$0xf]
      %v2314 = vld [vmem:[%s1947 + $0x40] sm:$0xf]
      %v2315 = vld [vmem:[%s1947 + $0x54] sm:$0xf]
      %v2316 = vld [vmem:[%s1947 + $0x58] sm:$0xf]
      %v2317 = vld [vmem:[%s1947 + $0xc] sm:$0xc]
      %v2318 = vld [vmem:[%s1947 + $0x14] sm:$0x3]
      %v2319 = vld [vmem:[%s1947 + $0x24] sm:$0xc]
      %v2320 = vld [vmem:[%s1947 + $0x2c] sm:$0x3]
      %v2321 = vld [vmem:[%s1947 + $0x3c] sm:$0xc]
      %v2322 = vld [vmem:[%s1947 + $0x44] sm:$0x3]
      %v2325 = vunpack.c.l.b16 %v2309
      %v2326 = vunpack.c.l.b16 %v2310
      %v2327 = vpack.c.b16 %v2326, %v2325
      %v2330 = vunpack.c.l.b16 %v2311
      %v2331 = vunpack.c.l.b16 %v2312
      %v2332 = vpack.c.b16 %v2331, %v2330
      %2333 = vrot.lane.b32.xlu0 %v2332, 84
      %v2334 = vpop.permute.xlu0 %2333
      %v2337 = vunpack.c.l.b16 %v2313
      %v2338 = vunpack.c.l.b16 %v2314
      %v2339 = vpack.c.b16 %v2338, %v2337
      %2340 = vrot.lane.b32.xlu0 %v2339, 40
      %v2341 = vpop.permute.xlu0 %2340
      %v2344 = vunpack.c.l.b16 %v2315
      %v2345 = vunpack.c.l.b16 %v2316
      %v2346 = vpack.c.b16 %v2345, %v2344
      %2347 = vrot.lane.b32.xlu0 %v2346, 124
      %v2348 = vpop.permute.xlu0 %2347
      %v2351 = vunpack.c.l.b16 %v2317
      %v2352 = vunpack.c.l.b16 %v2318
      %v2353 = vpack.c.b16 %v2326, %v2351
      %v2354 = vpack.c.b16 %v2352, %v2352
      %v2355 = vrot.slane %v2353, 2
      %v2356 = vrot.slane %v2354, 2
      %v2357 = vsel %vm394, %v2355, %v2356
      %2358 = vrot.lane.b32.xlu0 %v2357, 80
      %v2359 = vpop.permute.xlu0 %2358
      %v2362 = vunpack.c.l.b16 %v2319
      %v2363 = vunpack.c.l.b16 %v2320
      %v2364 = vpack.c.b16 %v2331, %v2362
      %v2365 = vpack.c.b16 %v2363, %v2363
      %v2366 = vrot.slane %v2364, 2
      %v2367 = vrot.slane %v2365, 2
      %v2368 = vsel %vm394, %v2366, %v2367
      %2369 = vrot.lane.b32.xlu0 %v2368, 36
      %v2370 = vpop.permute.xlu0 %2369
      %v2373 = vunpack.c.l.b16 %v2321
      %v2374 = vunpack.c.l.b16 %v2322
      %v2375 = vpack.c.b16 %v2338, %v2373
      %v2376 = vpack.c.b16 %v2374, %v2374
      %v2377 = vrot.slane %v2375, 2
      %v2378 = vrot.slane %v2376, 2
      %v2379 = vsel %vm394, %v2377, %v2378
      %2380 = vrot.lane.b32.xlu0 %v2379, 120
      %v2381 = vpop.permute.xlu0 %2380
      %v2384 = vsel %vm432, %v2327, %v2334
      %v2387 = vsel %vm1838, %v2334, %v2341
      %v2389 = vsel %vm1841, %v2387, %v2348
      %v2392 = vsel %vm1845, %v2348, %v2359
      %v2395 = vsel %vm1849, %v2359, %v2370
      %v2397 = vsel %vm1852, %v2395, %v2381
      %v2399 = vld [vmem:[%s2038 + $0xc] sm:$0xf]
      %v2400 = vld [vmem:[%s2038 + $0x10] sm:$0xf]
      %v2401 = vld [vmem:[%s2038 + $0x24] sm:$0xf]
      %v2402 = vld [vmem:[%s2038 + $0x28] sm:$0xf]
      %v2403 = vld [vmem:[%s2038 + $0x3c] sm:$0xf]
      %v2404 = vld [vmem:[%s2038 + $0x40] sm:$0xf]
      %v2405 = vld [vmem:[%s2038 + $0x54] sm:$0xf]
      %v2406 = vld [vmem:[%s2038 + $0x58] sm:$0xf]
      %v2407 = vld [vmem:[%s2038 + $0xc] sm:$0xc]
      %v2408 = vld [vmem:[%s2038 + $0x14] sm:$0x3]
      %v2409 = vld [vmem:[%s2038 + $0x24] sm:$0xc]
      %v2410 = vld [vmem:[%s2038 + $0x2c] sm:$0x3]
      %v2411 = vld [vmem:[%s2038 + $0x3c] sm:$0xc]
      %v2412 = vld [vmem:[%s2038 + $0x44] sm:$0x3]
      %v2415 = vunpack.c.l.b16 %v2399
      %v2416 = vunpack.c.l.b16 %v2400
      %v2417 = vpack.c.b16 %v2416, %v2415
      %v2420 = vunpack.c.l.b16 %v2401
      %v2421 = vunpack.c.l.b16 %v2402
      %v2422 = vpack.c.b16 %v2421, %v2420
      %2423 = vrot.lane.b32.xlu0 %v2422, 84
      %v2424 = vpop.permute.xlu0 %2423
      %v2427 = vunpack.c.l.b16 %v2403
      %v2428 = vunpack.c.l.b16 %v2404
      %v2429 = vpack.c.b16 %v2428, %v2427
      %2430 = vrot.lane.b32.xlu0 %v2429, 40
      %v2431 = vpop.permute.xlu0 %2430
      %v2434 = vunpack.c.l.b16 %v2405
      %v2435 = vunpack.c.l.b16 %v2406
      %v2436 = vpack.c.b16 %v2435, %v2434
      %2437 = vrot.lane.b32.xlu0 %v2436, 124
      %v2438 = vpop.permute.xlu0 %2437
      %v2441 = vunpack.c.l.b16 %v2407
      %v2442 = vunpack.c.l.b16 %v2408
      %v2443 = vpack.c.b16 %v2416, %v2441
      %v2444 = vpack.c.b16 %v2442, %v2442
      %v2445 = vrot.slane %v2443, 2
      %v2446 = vrot.slane %v2444, 2
      %v2447 = vsel %vm394, %v2445, %v2446
      %2448 = vrot.lane.b32.xlu0 %v2447, 80
      %v2449 = vpop.permute.xlu0 %2448
      %v2452 = vunpack.c.l.b16 %v2409
      %v2453 = vunpack.c.l.b16 %v2410
      %v2454 = vpack.c.b16 %v2421, %v2452
      %v2455 = vpack.c.b16 %v2453, %v2453
      %v2456 = vrot.slane %v2454, 2
      %v2457 = vrot.slane %v2455, 2
      %v2458 = vsel %vm394, %v2456, %v2457
      %2459 = vrot.lane.b32.xlu0 %v2458, 36
      %v2460 = vpop.permute.xlu0 %2459
      %v2463 = vunpack.c.l.b16 %v2411
      %v2464 = vunpack.c.l.b16 %v2412
      %v2465 = vpack.c.b16 %v2428, %v2463
      %v2466 = vpack.c.b16 %v2464, %v2464
      %v2467 = vrot.slane %v2465, 2
      %v2468 = vrot.slane %v2466, 2
      %v2469 = vsel %vm394, %v2467, %v2468
      %2470 = vrot.lane.b32.xlu0 %v2469, 120
      %v2471 = vpop.permute.xlu0 %2470
      %v2474 = vsel %vm432, %v2417, %v2424
      %v2477 = vsel %vm1838, %v2424, %v2431
      %v2479 = vsel %vm1841, %v2477, %v2438
      %v2482 = vsel %vm1845, %v2438, %v2449
      %v2485 = vsel %vm1849, %v2449, %v2460
      %v2487 = vsel %vm1852, %v2485, %v2471
      %v2489 = vld [vmem:[%s312 + $0x48] sm:$0xc]
      %v2490 = vld [vmem:[%s312 + $0x50] sm:$0x3]
      %v2491 = vld [vmem:[%s312 + $0x8] sm:$0xf]
      %2492 = vrot.lane.b32.xlu0 %v1798, 84
      %v2493 = vpop.permute.xlu0 %2492
      %2494 = vrot.lane.b32.xlu0 %v1809, 40
      %v2495 = vpop.permute.xlu0 %2494
      %2496 = vrot.lane.b32.xlu0 %v1820, 124
      %v2497 = vpop.permute.xlu0 %2496
      %2498 = vrot.lane.b32.xlu0 %v1831, 80
      %v2499 = vpop.permute.xlu0 %2498
      %v2502 = vunpack.c.l.b16 %v2489
      %v2503 = vunpack.c.l.b16 %v2490
      %v2504 = vpack.c.b16 %v1797, %v2502
      %v2505 = vpack.c.b16 %v2503, %v2503
      %v2506 = vrot.slane %v2504, 2
      %v2507 = vrot.slane %v2505, 2
      %v2508 = vsel %vm394, %v2506, %v2507
      %2509 = vrot.lane.b32.xlu0 %v2508, 36
      %v2510 = vpop.permute.xlu0 %2509
      %v2512 = vunpack.c.l.b16 %v2491
      %v2513 = vpack.c.b16 %v2512, %v1778
      %2514 = vrot.lane.b32.xlu0 %v2513, 120
      %v2515 = vpop.permute.xlu0 %2514
      %v2518 = vsel %vm432, %v1791, %v2493
      %v2521 = vsel %vm1838, %v2493, %v2495
      %v2523 = vsel %vm1841, %v2521, %v2497
      %v2526 = vsel %vm1845, %v2497, %v2499
      %v2529 = vsel %vm1849, %v2499, %v2510
      %v2531 = vsel %vm1852, %v2529, %v2515
      %v2533 = vld [vmem:[%s1856 + $0x48] sm:$0xc]
      %v2534 = vld [vmem:[%s1856 + $0x50] sm:$0x3]
      %v2535 = vld [vmem:[%s1856 + $0x8] sm:$0xf]
      %2536 = vrot.lane.b32.xlu0 %v1894, 84
      %v2537 = vpop.permute.xlu0 %2536
      %2538 = vrot.lane.b32.xlu0 %v1905, 40
      %v2539 = vpop.permute.xlu0 %2538
      %2540 = vrot.lane.b32.xlu0 %v1916, 124
      %v2541 = vpop.permute.xlu0 %2540
      %2542 = vrot.lane.b32.xlu0 %v1927, 80
      %v2543 = vpop.permute.xlu0 %2542
      %v2546 = vunpack.c.l.b16 %v2533
      %v2547 = vunpack.c.l.b16 %v2534
      %v2548 = vpack.c.b16 %v1893, %v2546
      %v2549 = vpack.c.b16 %v2547, %v2547
      %v2550 = vrot.slane %v2548, 2
      %v2551 = vrot.slane %v2549, 2
      %v2552 = vsel %vm394, %v2550, %v2551
      %2553 = vrot.lane.b32.xlu0 %v2552, 36
      %v2554 = vpop.permute.xlu0 %2553
      %v2556 = vunpack.c.l.b16 %v2535
      %v2557 = vpack.c.b16 %v2556, %v1874
      %2558 = vrot.lane.b32.xlu0 %v2557, 120
      %v2559 = vpop.permute.xlu0 %2558
      %v2562 = vsel %vm432, %v1887, %v2537
      %v2565 = vsel %vm1838, %v2537, %v2539
      %v2567 = vsel %vm1841, %v2565, %v2541
      %v2570 = vsel %vm1845, %v2541, %v2543
      %v2573 = vsel %vm1849, %v2543, %v2554
      %v2575 = vsel %vm1852, %v2573, %v2559
      %v2577 = vld [vmem:[%s1947 + $0x48] sm:$0xc]
      %v2578 = vld [vmem:[%s1947 + $0x50] sm:$0x3]
      %v2579 = vld [vmem:[%s1947 + $0x8] sm:$0xf]
      %2580 = vrot.lane.b32.xlu0 %v1985, 84
      %v2581 = vpop.permute.xlu0 %2580
      %2582 = vrot.lane.b32.xlu0 %v1996, 40
      %v2583 = vpop.permute.xlu0 %2582
      %2584 = vrot.lane.b32.xlu0 %v2007, 124
      %v2585 = vpop.permute.xlu0 %2584
      %2586 = vrot.lane.b32.xlu0 %v2018, 80
      %v2587 = vpop.permute.xlu0 %2586
      %v2590 = vunpack.c.l.b16 %v2577
      %v2591 = vunpack.c.l.b16 %v2578
      %v2592 = vpack.c.b16 %v1984, %v2590
      %v2593 = vpack.c.b16 %v2591, %v2591
      %v2594 = vrot.slane %v2592, 2
      %v2595 = vrot.slane %v2593, 2
      %v2596 = vsel %vm394, %v2594, %v2595
      %2597 = vrot.lane.b32.xlu0 %v2596, 36
      %v2598 = vpop.permute.xlu0 %2597
      %v2600 = vunpack.c.l.b16 %v2579
      %v2601 = vpack.c.b16 %v2600, %v1965
      %2602 = vrot.lane.b32.xlu0 %v2601, 120
      %v2603 = vpop.permute.xlu0 %2602
      %v2606 = vsel %vm432, %v1978, %v2581
      %v2609 = vsel %vm1838, %v2581, %v2583
      %v2611 = vsel %vm1841, %v2609, %v2585
      %v2614 = vsel %vm1845, %v2585, %v2587
      %v2617 = vsel %vm1849, %v2587, %v2598
      %v2619 = vsel %vm1852, %v2617, %v2603
      %v2621 = vld [vmem:[%s2038 + $0x48] sm:$0xc]
      %v2622 = vld [vmem:[%s2038 + $0x50] sm:$0x3]
      %v2623 = vld [vmem:[%s2038 + $0x8] sm:$0xf]
      %2624 = vrot.lane.b32.xlu0 %v2076, 84
      %v2625 = vpop.permute.xlu0 %2624
      %2626 = vrot.lane.b32.xlu0 %v2087, 40
      %v2627 = vpop.permute.xlu0 %2626
      %2628 = vrot.lane.b32.xlu0 %v2098, 124
      %v2629 = vpop.permute.xlu0 %2628
      %2630 = vrot.lane.b32.xlu0 %v2109, 80
      %v2631 = vpop.permute.xlu0 %2630
      %v2634 = vunpack.c.l.b16 %v2621
      %v2635 = vunpack.c.l.b16 %v2622
      %v2636 = vpack.c.b16 %v2075, %v2634
      %v2637 = vpack.c.b16 %v2635, %v2635
      %v2638 = vrot.slane %v2636, 2
      %v2639 = vrot.slane %v2637, 2
      %v2640 = vsel %vm394, %v2638, %v2639
      %2641 = vrot.lane.b32.xlu0 %v2640, 36
      %v2642 = vpop.permute.xlu0 %2641
      %v2644 = vunpack.c.l.b16 %v2623
      %v2645 = vpack.c.b16 %v2644, %v2056
      %2646 = vrot.lane.b32.xlu0 %v2645, 120
      %v2647 = vpop.permute.xlu0 %2646
      %v2650 = vsel %vm432, %v2069, %v2625
      %v2653 = vsel %vm1838, %v2625, %v2627
      %v2655 = vsel %vm1841, %v2653, %v2629
      %v2658 = vsel %vm1845, %v2629, %v2631
      %v2661 = vsel %vm1849, %v2631, %v2642
      %v2663 = vsel %vm1852, %v2661, %v2647
      %v2665 = vld [vmem:[%s312 + $0x54] sm:$0xc]
      %v2666 = vld [vmem:[%s312 + $0x5c] sm:$0x3]
      %v2667 = vld [vmem:[%s312 + $0x14] sm:$0xf]
      %2668 = vrot.lane.b32.xlu0 %v2166, 84
      %v2669 = vpop.permute.xlu0 %2668
      %2670 = vrot.lane.b32.xlu0 %v2177, 40
      %v2671 = vpop.permute.xlu0 %2670
      %2672 = vrot.lane.b32.xlu0 %v2188, 124
      %v2673 = vpop.permute.xlu0 %2672
      %2674 = vrot.lane.b32.xlu0 %v2199, 80
      %v2675 = vpop.permute.xlu0 %2674
      %v2678 = vunpack.c.l.b16 %v2665
      %v2679 = vunpack.c.l.b16 %v2666
      %v2680 = vpack.c.b16 %v2165, %v2678
      %v2681 = vpack.c.b16 %v2679, %v2679
      %v2682 = vrot.slane %v2680, 2
      %v2683 = vrot.slane %v2681, 2
      %v2684 = vsel %vm394, %v2682, %v2683
      %2685 = vrot.lane.b32.xlu0 %v2684, 36
      %v2686 = vpop.permute.xlu0 %2685
      %v2688 = vunpack.c.l.b16 %v2667
      %v2689 = vpack.c.b16 %v2688, %v2146
      %2690 = vrot.lane.b32.xlu0 %v2689, 120
      %v2691 = vpop.permute.xlu0 %2690
      %v2694 = vsel %vm432, %v2159, %v2669
      %v2697 = vsel %vm1838, %v2669, %v2671
      %v2699 = vsel %vm1841, %v2697, %v2673
      %v2702 = vsel %vm1845, %v2673, %v2675
      %v2705 = vsel %vm1849, %v2675, %v2686
      %v2707 = vsel %vm1852, %v2705, %v2691
      %v2709 = vld [vmem:[%s1856 + $0x54] sm:$0xc]
      %v2710 = vld [vmem:[%s1856 + $0x5c] sm:$0x3]
      %v2711 = vld [vmem:[%s1856 + $0x14] sm:$0xf]
      %2712 = vrot.lane.b32.xlu0 %v2256, 84
      %v2713 = vpop.permute.xlu0 %2712
      %2714 = vrot.lane.b32.xlu0 %v2267, 40
      %v2715 = vpop.permute.xlu0 %2714
      %2716 = vrot.lane.b32.xlu0 %v2278, 124
      %v2717 = vpop.permute.xlu0 %2716
      %2718 = vrot.lane.b32.xlu0 %v2289, 80
      %v2719 = vpop.permute.xlu0 %2718
      %v2722 = vunpack.c.l.b16 %v2709
      %v2723 = vunpack.c.l.b16 %v2710
      %v2724 = vpack.c.b16 %v2255, %v2722
      %v2725 = vpack.c.b16 %v2723, %v2723
      %v2726 = vrot.slane %v2724, 2
      %v2727 = vrot.slane %v2725, 2
      %v2728 = vsel %vm394, %v2726, %v2727
      %2729 = vrot.lane.b32.xlu0 %v2728, 36
      %v2730 = vpop.permute.xlu0 %2729
      %v2732 = vunpack.c.l.b16 %v2711
      %v2733 = vpack.c.b16 %v2732, %v2236
      %2734 = vrot.lane.b32.xlu0 %v2733, 120
      %v2735 = vpop.permute.xlu0 %2734
      %v2738 = vsel %vm432, %v2249, %v2713
      %v2741 = vsel %vm1838, %v2713, %v2715
      %v2743 = vsel %vm1841, %v2741, %v2717
      %v2746 = vsel %vm1845, %v2717, %v2719
      %v2749 = vsel %vm1849, %v2719, %v2730
      %v2751 = vsel %vm1852, %v2749, %v2735
      %v2753 = vld [vmem:[%s1947 + $0x54] sm:$0xc]
      %v2754 = vld [vmem:[%s1947 + $0x5c] sm:$0x3]
      %v2755 = vld [vmem:[%s1947 + $0x14] sm:$0xf]
      %2756 = vrot.lane.b32.xlu0 %v2346, 84
      %v2757 = vpop.permute.xlu0 %2756
      %2758 = vrot.lane.b32.xlu0 %v2357, 40
      %v2759 = vpop.permute.xlu0 %2758
      %2760 = vrot.lane.b32.xlu0 %v2368, 124
      %v2761 = vpop.permute.xlu0 %2760
      %2762 = vrot.lane.b32.xlu0 %v2379, 80
      %v2763 = vpop.permute.xlu0 %2762
      %v2766 = vunpack.c.l.b16 %v2753
      %v2767 = vunpack.c.l.b16 %v2754
      %v2768 = vpack.c.b16 %v2345, %v2766
      %v2769 = vpack.c.b16 %v2767, %v2767
      %v2770 = vrot.slane %v2768, 2
      %v2771 = vrot.slane %v2769, 2
      %v2772 = vsel %vm394, %v2770, %v2771
      %2773 = vrot.lane.b32.xlu0 %v2772, 36
      %v2774 = vpop.permute.xlu0 %2773
      %v2776 = vunpack.c.l.b16 %v2755
      %v2777 = vpack.c.b16 %v2776, %v2326
      %2778 = vrot.lane.b32.xlu0 %v2777, 120
      %v2779 = vpop.permute.xlu0 %2778
      %v2782 = vsel %vm432, %v2339, %v2757
      %v2785 = vsel %vm1838, %v2757, %v2759
      %v2787 = vsel %vm1841, %v2785, %v2761
      %v2790 = vsel %vm1845, %v2761, %v2763
      %v2793 = vsel %vm1849, %v2763, %v2774
      %v2795 = vsel %vm1852, %v2793, %v2779
      %v2797 = vld [vmem:[%s2038 + $0x54] sm:$0xc]
      %v2798 = vld [vmem:[%s2038 + $0x5c] sm:$0x3]
      %v2799 = vld [vmem:[%s2038 + $0x14] sm:$0xf]
      %2800 = vrot.lane.b32.xlu0 %v2436, 84
      %v2801 = vpop.permute.xlu0 %2800
      %2802 = vrot.lane.b32.xlu0 %v2447, 40
      %v2803 = vpop.permute.xlu0 %2802
      %2804 = vrot.lane.b32.xlu0 %v2458, 124
      %v2805 = vpop.permute.xlu0 %2804
      %2806 = vrot.lane.b32.xlu0 %v2469, 80
      %v2807 = vpop.permute.xlu0 %2806
      %v2810 = vunpack.c.l.b16 %v2797
      %v2811 = vunpack.c.l.b16 %v2798
      %v2812 = vpack.c.b16 %v2435, %v2810
      %v2813 = vpack.c.b16 %v2811, %v2811
      %v2814 = vrot.slane %v2812, 2
      %v2815 = vrot.slane %v2813, 2
      %v2816 = vsel %vm394, %v2814, %v2815
      %2817 = vrot.lane.b32.xlu0 %v2816, 36
      %v2818 = vpop.permute.xlu0 %2817
      %v2820 = vunpack.c.l.b16 %v2799
      %v2821 = vpack.c.b16 %v2820, %v2416
      %2822 = vrot.lane.b32.xlu0 %v2821, 120
      %v2823 = vpop.permute.xlu0 %2822
      %v2826 = vsel %vm432, %v2429, %v2801
      %v2829 = vsel %vm1838, %v2801, %v2803
      %v2831 = vsel %vm1841, %v2829, %v2805
      %v2834 = vsel %vm1845, %v2805, %v2807
      %v2837 = vsel %vm1849, %v2807, %v2818
      %v2839 = vsel %vm1852, %v2837, %v2823
      %v2915 = vunpack.c.l.b16 %v1687
      %v2916 = vunpack.c.l.b16 %v1688
      %v2917 = vunpack.c.l.b16 %v1689
      %v2918 = vunpack.c.l.b16 %v1690
      %v2919 = vunpack.c.l.b16 %v1691
      %v2920 = vunpack.c.l.b16 %v1692
      %v2921 = vunpack.c.l.b16 %v1693
      %v2922 = vunpack.c.l.b16 %v1694
      %v2923 = vunpack.c.l.b16 %v1695
      %v2924 = vunpack.c.l.b16 %v1696
      %v2925 = vunpack.c.l.b16 %v1697
      %v2926 = vunpack.c.l.b16 %v1698
      %v2927 = vunpack.c.l.b16 %v1699
      %v2928 = vunpack.c.l.b16 %v1700
      %v2929 = vunpack.c.l.b16 %v1701
      %v2930 = vunpack.c.l.b16 %v1702
      %v2931 = vunpack.c.l.b16 %v1703
      %v2932 = vunpack.c.l.b16 %v1704
      %v2933 = vunpack.c.l.b16 %v1705
      %v2934 = vunpack.c.l.b16 %v1706
      %v2935 = vunpack.c.l.b16 %v1707
      %v2936 = vunpack.c.l.b16 %v1708
      %v2937 = vunpack.c.l.b16 %v1709
      %v2938 = vunpack.c.l.b16 %v1710
      %v2939 = vunpack.c.l.b16 %v1711
      %v2940 = vunpack.c.l.b16 %v1712
      %v2941 = vunpack.c.l.b16 %v1713
      %v2942 = vunpack.c.l.b16 %v1714
      %v2943 = vunpack.c.l.b16 %v1715
      %v2944 = vunpack.c.l.b16 %v1716
      %v2945 = vunpack.c.l.b16 %v1717
      %v2946 = vunpack.c.l.b16 %v1718
      %v2947 = vunpack.c.l.b16 %v1719
      %v2948 = vunpack.c.l.b16 %v1720
      %v2949 = vunpack.c.l.b16 %v1721
      %v2950 = vunpack.c.l.b16 %v1722
      %v2951 = vunpack.c.l.b16 %v1723
      %v2952 = vunpack.c.l.b16 %v1724
      %v2953 = vunpack.c.l.b16 %v1725
      %v2954 = vunpack.c.l.b16 %v1726
      %v2955 = vunpack.c.l.b16 %v1727
      %v2956 = vunpack.c.l.b16 %v1728
      %v2957 = vunpack.c.l.b16 %v1729
      %v2958 = vunpack.c.l.b16 %v1730
      %v2959 = vunpack.c.l.b16 %v1731
      %v2960 = vunpack.c.l.b16 %v1732
      %v2961 = vunpack.c.l.b16 %v1733
      %v2962 = vunpack.c.l.b16 %v1734
      %v2963 = vunpack.c.l.b16 %v1735
      %v2964 = vunpack.c.l.b16 %v1736
      %v2965 = vunpack.c.l.b16 %v1737
      %v2966 = vunpack.c.l.b16 %v1738
      %v2967 = vunpack.c.l.b16 %v1739
      %v2968 = vunpack.c.l.b16 %v1740
      %v2969 = vunpack.c.l.b16 %v1741
      %v2970 = vunpack.c.l.b16 %v1742
      %v2971 = vunpack.c.l.b16 %v1743
      %v2972 = vunpack.c.l.b16 %v1744
      %v2973 = vunpack.c.l.b16 %v1745
      %v2974 = vunpack.c.l.b16 %v1746
      %v2975 = vunpack.c.l.b16 %v1747
      %v2976 = vunpack.c.l.b16 %v1748
      %v2977 = vunpack.c.l.b16 %v1749
      %v2978 = vunpack.c.l.b16 %v1750
      %v2979 = vunpack.c.l.b16 %v1751
      %v2980 = vunpack.c.l.b16 %v1752
      %v2981 = vunpack.c.l.b16 %v1753
      %v2982 = vunpack.c.l.b16 %v1754
      %v2983 = vunpack.c.l.b16 %v1755
      %v2984 = vunpack.c.l.b16 %v1756
      %v2985 = vunpack.c.l.b16 %v1757
      %v2986 = vunpack.c.l.b16 %v1758
      %v2987 = vunpack.c.l.b16 %v1759
      %v2988 = vunpack.c.l.b16 %v1760
      %v2989 = vpack.c.b16 %v2916, %v2915
      %v2990 = vpack.c.b16 %v2918, %v2917
      %v2991 = vpack.c.b16 %v2920, %v2919
      %v2992 = vpack.c.b16 %v2922, %v2921
      %v2993 = vpack.c.b16 %v2924, %v2923
      %v2994 = vpack.c.b16 %v2926, %v2925
      %v2995 = vpack.c.b16 %v2928, %v2927
      %v2996 = vpack.c.b16 %v2930, %v2929
      %v2997 = vpack.c.b16 %v2932, %v2931
      %v2998 = vpack.c.b16 %v2934, %v2933
      %v2999 = vpack.c.b16 %v2936, %v2935
      %v3000 = vpack.c.b16 %v2938, %v2937
      %v3001 = vpack.c.b16 %v2940, %v2939
      %v3002 = vpack.c.b16 %v2942, %v2941
      %v3003 = vpack.c.b16 %v2944, %v2943
      %v3004 = vpack.c.b16 %v2946, %v2945
      %v3005 = vpack.c.b16 %v2948, %v2947
      %v3006 = vpack.c.b16 %v2950, %v2949
      %v3007 = vpack.c.b16 %v2952, %v2951
      %v3008 = vpack.c.b16 %v2954, %v2953
      %v3009 = vpack.c.b16 %v2956, %v2955
      %v3010 = vpack.c.b16 %v2958, %v2957
      %v3011 = vpack.c.b16 %v2960, %v2959
      %v3012 = vpack.c.b16 %v2962, %v2961
      %v3013 = vpack.c.b16 %v2964, %v2963
      %v3014 = vpack.c.b16 %v2966, %v2965
      %v3015 = vpack.c.b16 %v2968, %v2967
      %v3016 = vpack.c.b16 %v2970, %v2969
      %v3017 = vpack.c.b16 %v2972, %v2971
      %v3018 = vpack.c.b16 %v2974, %v2973
      %v3019 = vpack.c.b16 %v2976, %v2975
      %v3020 = vpack.c.b16 %v2978, %v2977
      %v3021 = vpack.c.b16 %v2980, %v2979
      %v3022 = vpack.c.b16 %v2982, %v2981
      %v3023 = vpack.c.b16 %v2984, %v2983
      %v3024 = vpack.c.b16 %v2986, %v2985
      %v3025 = vpack.c.b16 %v2988, %v2987
      %vm3062 = vcmask 621568
      %v3063 = vsel %vm3062, %v1833, 0
      %v3065 = vsel %vm3062, %v1929, 0
      %v3067 = vsel %vm3062, %v2020, 0
      %v3069 = vsel %vm3062, %v2111, 0
      %v3071 = vsel %vm3062, %v2201, 0
      %v3073 = vsel %vm3062, %v2291, 0
      %v3075 = vsel %vm3062, %v2381, 0
      %v3077 = vsel %vm3062, %v2471, 0
      %v3079 = vsel %vm3062, %v2515, 0
      %v3081 = vsel %vm3062, %v2559, 0
      %v3083 = vsel %vm3062, %v2603, 0
      %v3085 = vsel %vm3062, %v2647, 0
      %v3087 = vsel %vm3062, %v2691, 0
      %v3089 = vsel %vm3062, %v2735, 0
      %v3091 = vsel %vm3062, %v2779, 0
      %v3093 = vsel %vm3062, %v2823, 0
      %vm3095 = vcmask 1045504
      %v3097 = vsel %vm3095, %v3025, 0
      %3099 = vmatprep.subr.bf16.mxu0 0
      %3100 = vmatpush1.bf16.msra.mxu0 %v2989
      %3101 = vmatprep.subr.bf16.mxu0 0
      %3102 = vmatpush1.bf16.msra.mxu0 %v2990
      %3103 = vmatprep.subr.bf16.mxu0 0
      %3104 = vmatpush1.bf16.msra.mxu0 %v2991
      %3105 = vmatprep.subr.bf16.mxu0 0
      %3106 = vmatpush1.bf16.msra.mxu0 %v2992
      %3107 = vmatprep.subr.bf16.mxu0 0
      %3108 = vmatpush1.bf16.msra.mxu0 %v2993
      %3109 = vmatprep.subr.bf16.mxu0 0
      %3110 = vmatpush1.bf16.msra.mxu0 %v2994
      %3111 = vmatprep.subr.bf16.mxu0 0
      %3112 = vmatpush1.bf16.msra.mxu0 %v2995
      %3113 = vmatprep.subr.bf16.mxu0 0
      %3114 = vmatpush1.bf16.msra.mxu0 %v2996
      %3115 = vmatprep.subr.bf16.mxu0 0
      %3116 = vmatpush1.bf16.msra.mxu0 %v2997
      %3117 = vmatprep.subr.bf16.mxu0 0
      %3118 = vmatpush1.bf16.msra.mxu0 %v2998
      %3119 = vmatprep.subr.bf16.mxu0 0
      %3120 = vmatpush1.bf16.msra.mxu0 %v2999
      %3121 = vmatprep.subr.bf16.mxu0 0
      %3122 = vmatpush1.bf16.msra.mxu0 %v3000
      %3123 = vmatprep.subr.bf16.mxu0 0
      %3124 = vmatpush1.bf16.msra.mxu0 %v3001
      %3125 = vmatprep.subr.bf16.mxu0 0
      %3126 = vmatpush1.bf16.msra.mxu0 %v3002
      %3127 = vmatprep.subr.bf16.mxu0 0
      %3128 = vmatpush1.bf16.msra.mxu0 %v3003
      %3129 = vmatprep.subr.bf16.mxu0 0
      %3130 = vmatpush1.bf16.msra.mxu0 %v3004
      %3131 = vmatprep.mubr.bf16.mxu0 %v1843
      %3132 = vmatmul.mubr.bf16.gmra.mrb[0].mxu0 %v1836
      %v3133 = vpop.f32.mrb[0].mxu0
      %v3134 = vadd.f32 0.0, %v3133
      %v3135 = vpop.f32.mrb[0].mxu0
      %v3136 = vpop.f32.mrb[0].mxu0
      %v3137 = vadd.f32 0.0, %v3136
      %v3138 = vpop.f32.mrb[0].mxu0
      %3139 = vmatprep.mubr.bf16.mxu0 %v1937
      %3140 = vmatmul.mubr.bf16.gmra.mrb[0].mxu0 %v1932
      %v3141 = vpop.f32.mrb[0].mxu0
      %v3142 = vadd.f32 0.0, %v3141
      %v3143 = vpop.f32.mrb[0].mxu0
      %v3144 = vpop.f32.mrb[0].mxu0
      %v3145 = vadd.f32 0.0, %v3144
      %v3146 = vpop.f32.mrb[0].mxu0
      %3147 = vmatprep.mubr.bf16.mxu0 %v2028
      %3148 = vmatmul.mubr.bf16.gmra.mrb[0].mxu0 %v2023
      %v3149 = vpop.f32.mrb[0].mxu0
      %v3150 = vadd.f32 0.0, %v3149
      %v3151 = vpop.f32.mrb[0].mxu0
      %v3152 = vpop.f32.mrb[0].mxu0
      %v3153 = vadd.f32 0.0, %v3152
      %v3154 = vpop.f32.mrb[0].mxu0
      %3155 = vmatprep.mubr.bf16.mxu0 %v2119
      %3156 = vmatmul.mubr.bf16.gmra.mrb[0].mxu0 %v2114
      %v3157 = vpop.f32.mrb[0].mxu0
      %v3158 = vadd.f32 0.0, %v3157
      %v3159 = vpop.f32.mrb[0].mxu0
      %v3160 = vpop.f32.mrb[0].mxu0
      %v3161 = vadd.f32 0.0, %v3160
      %v3162 = vpop.f32.mrb[0].mxu0
      %3163 = vmatprep.mubr.bf16.mxu0 %v2209
      %3164 = vmatmul.mubr.bf16.gmra.mrb[0].mxu0 %v2204
      %v3165 = vpop.f32.mrb[0].mxu0
      %v3166 = vadd.f32 0.0, %v3165
      %v3167 = vpop.f32.mrb[0].mxu0
      %v3168 = vpop.f32.mrb[0].mxu0
      %v3169 = vadd.f32 0.0, %v3168
      %v3170 = vpop.f32.mrb[0].mxu0
      %3171 = vmatprep.mubr.bf16.mxu0 %v2299
      %3172 = vmatmul.mubr.bf16.gmra.mrb[0].mxu0 %v2294
      %v3173 = vpop.f32.mrb[0].mxu0
      %v3174 = vadd.f32 0.0, %v3173
      %v3175 = vpop.f32.mrb[0].mxu0
      %v3176 = vpop.f32.mrb[0].mxu0
      %v3177 = vadd.f32 0.0, %v3176
      %v3178 = vpop.f32.mrb[0].mxu0
      %3179 = vmatprep.mubr.bf16.mxu0 %v2389
      %3180 = vmatmul.mubr.bf16.gmra.mrb[0].mxu0 %v2384
      %v3181 = vpop.f32.mrb[0].mxu0
      %v3182 = vadd.f32 0.0, %v3181
      %v3183 = vpop.f32.mrb[0].mxu0
      %v3184 = vpop.f32.mrb[0].mxu0
      %v3185 = vadd.f32 0.0, %v3184
      %v3186 = vpop.f32.mrb[0].mxu0
      %3187 = vmatprep.mubr.bf16.mxu0 %v2479
      %3188 = vmatmul.mubr.bf16.gmra.mrb[0].mxu0 %v2474
      %v3189 = vpop.f32.mrb[0].mxu0
      %v3190 = vadd.f32 0.0, %v3189
      %v3191 = vpop.f32.mrb[0].mxu0
      %v3192 = vpop.f32.mrb[0].mxu0
      %v3193 = vadd.f32 0.0, %v3192
      %v3194 = vpop.f32.mrb[0].mxu0
      %3195 = vmatprep.mubr.bf16.mxu0 %v2523
      %3196 = vmatmul.mubr.bf16.gmra.mrb[0].mxu0 %v2518
      %v3197 = vpop.f32.mrb[0].mxu0
      %v3198 = vadd.f32 0.0, %v3197
      %v3199 = vpop.f32.mrb[0].mxu0
      %v3200 = vpop.f32.mrb[0].mxu0
      %v3201 = vadd.f32 0.0, %v3200
      %v3202 = vpop.f32.mrb[0].mxu0
      %3203 = vmatprep.mubr.bf16.mxu0 %v2567
      %3204 = vmatmul.mubr.bf16.gmra.mrb[0].mxu0 %v2562
      %v3205 = vpop.f32.mrb[0].mxu0
      %v3206 = vadd.f32 0.0, %v3205
      %v3207 = vpop.f32.mrb[0].mxu0
      %v3208 = vpop.f32.mrb[0].mxu0
      %v3209 = vadd.f32 0.0, %v3208
      %v3210 = vpop.f32.mrb[0].mxu0
      %3211 = vmatprep.mubr.bf16.mxu0 %v2611
      %3212 = vmatmul.mubr.bf16.gmra.mrb[0].mxu0 %v2606
      %v3213 = vpop.f32.mrb[0].mxu0
      %v3214 = vadd.f32 0.0, %v3213
      %v3215 = vpop.f32.mrb[0].mxu0
      %v3216 = vpop.f32.mrb[0].mxu0
      %v3217 = vadd.f32 0.0, %v3216
      %v3218 = vpop.f32.mrb[0].mxu0
      %3219 = vmatprep.mubr.bf16.mxu0 %v2655
      %3220 = vmatmul.mubr.bf16.gmra.mrb[0].mxu0 %v2650
      %v3221 = vpop.f32.mrb[0].mxu0
      %v3222 = vadd.f32 0.0, %v3221
      %v3223 = vpop.f32.mrb[0].mxu0
      %v3224 = vpop.f32.mrb[0].mxu0
      %v3225 = vadd.f32 0.0, %v3224
      %v3226 = vpop.f32.mrb[0].mxu0
      %3227 = vmatprep.mubr.bf16.mxu0 %v2699
      %3228 = vmatmul.mubr.bf16.gmra.mrb[0].mxu0 %v2694
      %v3229 = vpop.f32.mrb[0].mxu0
      %v3230 = vadd.f32 0.0, %v3229
      %v3231 = vpop.f32.mrb[0].mxu0
      %v3232 = vpop.f32.mrb[0].mxu0
      %v3233 = vadd.f32 0.0, %v3232
      %v3234 = vpop.f32.mrb[0].mxu0
      %3235 = vmatprep.mubr.bf16.mxu0 %v2743
      %3236 = vmatmul.mubr.bf16.gmra.mrb[0].mxu0 %v2738
      %v3237 = vpop.f32.mrb[0].mxu0
      %v3238 = vadd.f32 0.0, %v3237
      %v3239 = vpop.f32.mrb[0].mxu0
      %v3240 = vpop.f32.mrb[0].mxu0
      %v3241 = vadd.f32 0.0, %v3240
      %v3242 = vpop.f32.mrb[0].mxu0
      %3243 = vmatprep.mubr.bf16.mxu0 %v2787
      %3244 = vmatmul.mubr.bf16.gmra.mrb[0].mxu0 %v2782
      %v3245 = vpop.f32.mrb[0].mxu0
      %v3246 = vadd.f32 0.0, %v3245
      %v3247 = vpop.f32.mrb[0].mxu0
      %v3248 = vpop.f32.mrb[0].mxu0
      %v3249 = vadd.f32 0.0, %v3248
      %v3250 = vpop.f32.mrb[0].mxu0
      %3251 = vmatprep.mubr.bf16.mxu0 %v2831
      %3252 = vmatmul.mubr.bf16.gmra.mrb[0].mxu0 %v2826
      %v3253 = vpop.f32.mrb[0].mxu0
      %v3254 = vadd.f32 0.0, %v3253
      %v3255 = vpop.f32.mrb[0].mxu0
      %v3256 = vpop.f32.mrb[0].mxu0
      %v3257 = vadd.f32 0.0, %v3256
      %v3258 = vpop.f32.mrb[0].mxu0
      %3259 = vdwg.mxu0
      %3260 = vmatprep.subr.bf16.mxu0 0
      %3261 = vmatpush1.bf16.msra.mxu0 %v3005
      %3262 = vmatprep.subr.bf16.mxu0 0
      %3263 = vmatpush1.bf16.msra.mxu0 %v3006
      %3264 = vmatprep.subr.bf16.mxu0 0
      %3265 = vmatpush1.bf16.msra.mxu0 %v3007
      %3266 = vmatprep.subr.bf16.mxu0 0
      %3267 = vmatpush1.bf16.msra.mxu0 %v3008
      %3268 = vmatprep.subr.bf16.mxu0 0
      %3269 = vmatpush1.bf16.msra.mxu0 %v3009
      %3270 = vmatprep.subr.bf16.mxu0 0
      %3271 = vmatpush1.bf16.msra.mxu0 %v3010
      %3272 = vmatprep.subr.bf16.mxu0 0
      %3273 = vmatpush1.bf16.msra.mxu0 %v3011
      %3274 = vmatprep.subr.bf16.mxu0 0
      %3275 = vmatpush1.bf16.msra.mxu0 %v3012
      %3276 = vmatprep.subr.bf16.mxu0 0
      %3277 = vmatpush1.bf16.msra.mxu0 %v3013
      %3278 = vmatprep.subr.bf16.mxu0 0
      %3279 = vmatpush1.bf16.msra.mxu0 %v3014
      %3280 = vmatprep.subr.bf16.mxu0 0
      %3281 = vmatpush1.bf16.msra.mxu0 %v3015
      %3282 = vmatprep.subr.bf16.mxu0 0
      %3283 = vmatpush1.bf16.msra.mxu0 %v3016
      %3284 = vmatprep.subr.bf16.mxu0 0
      %3285 = vmatpush1.bf16.msra.mxu0 %v3017
      %3286 = vmatprep.subr.bf16.mxu0 0
      %3287 = vmatpush1.bf16.msra.mxu0 %v3018
      %3288 = vmatprep.subr.bf16.mxu0 0
      %3289 = vmatpush1.bf16.msra.mxu0 %v3019
      %3290 = vmatprep.subr.bf16.mxu0 0
      %3291 = vmatpush1.bf16.msra.mxu0 %v3020
      %3292 = vmatprep.mubr.bf16.mxu0 %v1854
      %3293 = vmatmul.mubr.bf16.gmra.mrb[0].mxu0 %v1847
      %v3294 = vpop.f32.mrb[0].mxu0
      %v3295 = vadd.f32 %v3134, %v3294
      %v3296 = vpop.f32.mrb[0].mxu0
      %v3297 = vpop.f32.mrb[0].mxu0
      %v3298 = vadd.f32 %v3137, %v3297
      %v3299 = vpop.f32.mrb[0].mxu0
      %3300 = vmatprep.mubr.bf16.mxu0 %v1945
      %3301 = vmatmul.mubr.bf16.gmra.mrb[0].mxu0 %v1940
      %v3302 = vpop.f32.mrb[0].mxu0
      %v3303 = vadd.f32 %v3142, %v3302
      %v3304 = vpop.f32.mrb[0].mxu0
      %v3305 = vpop.f32.mrb[0].mxu0
      %v3306 = vadd.f32 %v3145, %v3305
      %v3307 = vpop.f32.mrb[0].mxu0
      %3308 = vmatprep.mubr.bf16.mxu0 %v2036
      %3309 = vmatmul.mubr.bf16.gmra.mrb[0].mxu0 %v2031
      %v3310 = vpop.f32.mrb[0].mxu0
      %v3311 = vadd.f32 %v3150, %v3310
      %v3312 = vpop.f32.mrb[0].mxu0
      %v3313 = vpop.f32.mrb[0].mxu0
      %v3314 = vadd.f32 %v3153, %v3313
      %v3315 = vpop.f32.mrb[0].mxu0
      %3316 = vmatprep.mubr.bf16.mxu0 %v2127
      %3317 = vmatmul.mubr.bf16.gmra.mrb[0].mxu0 %v2122
      %v3318 = vpop.f32.mrb[0].mxu0
      %v3319 = vadd.f32 %v3158, %v3318
      %v3320 = vpop.f32.mrb[0].mxu0
      %v3321 = vpop.f32.mrb[0].mxu0
      %v3322 = vadd.f32 %v3161, %v3321
      %v3323 = vpop.f32.mrb[0].mxu0
      %3324 = vmatprep.mubr.bf16.mxu0 %v2217
      %3325 = vmatmul.mubr.bf16.gmra.mrb[0].mxu0 %v2212
      %v3326 = vpop.f32.mrb[0].mxu0
      %v3327 = vadd.f32 %v3166, %v3326
      %v3328 = vpop.f32.mrb[0].mxu0
      %v3329 = vpop.f32.mrb[0].mxu0
      %v3330 = vadd.f32 %v3169, %v3329
      %v3331 = vpop.f32.mrb[0].mxu0
      %3332 = vmatprep.mubr.bf16.mxu0 %v2307
      %3333 = vmatmul.mubr.bf16.gmra.mrb[0].mxu0 %v2302
      %v3334 = vpop.f32.mrb[0].mxu0
      %v3335 = vadd.f32 %v3174, %v3334
      %v3336 = vpop.f32.mrb[0].mxu0
      %v3337 = vpop.f32.mrb[0].mxu0
      %v3338 = vadd.f32 %v3177, %v3337
      %v3339 = vpop.f32.mrb[0].mxu0
      %3340 = vmatprep.mubr.bf16.mxu0 %v2397
      %3341 = vmatmul.mubr.bf16.gmra.mrb[0].mxu0 %v2392
      %v3342 = vpop.f32.mrb[0].mxu0
      %v3343 = vadd.f32 %v3182, %v3342
      %v3344 = vpop.f32.mrb[0].mxu0
      %v3345 = vpop.f32.mrb[0].mxu0
      %v3346 = vadd.f32 %v3185, %v3345
      %v3347 = vpop.f32.mrb[0].mxu0
      %3348 = vmatprep.mubr.bf16.mxu0 %v2487
      %3349 = vmatmul.mubr.bf16.gmra.mrb[0].mxu0 %v2482
      %v3350 = vpop.f32.mrb[0].mxu0
      %v3351 = vadd.f32 %v3190, %v3350
      %v3352 = vpop.f32.mrb[0].mxu0
      %v3353 = vpop.f32.mrb[0].mxu0
      %v3354 = vadd.f32 %v3193, %v3353
      %v3355 = vpop.f32.mrb[0].mxu0
      %3356 = vmatprep.mubr.bf16.mxu0 %v2531
      %3357 = vmatmul.mubr.bf16.gmra.mrb[0].mxu0 %v2526
      %v3358 = vpop.f32.mrb[0].mxu0
      %v3359 = vadd.f32 %v3198, %v3358
      %v3360 = vpop.f32.mrb[0].mxu0
      %v3361 = vpop.f32.mrb[0].mxu0
      %v3362 = vadd.f32 %v3201, %v3361
      %v3363 = vpop.f32.mrb[0].mxu0
      %3364 = vmatprep.mubr.bf16.mxu0 %v2575
      %3365 = vmatmul.mubr.bf16.gmra.mrb[0].mxu0 %v2570
      %v3366 = vpop.f32.mrb[0].mxu0
      %v3367 = vadd.f32 %v3206, %v3366
      %v3368 = vpop.f32.mrb[0].mxu0
      %v3369 = vpop.f32.mrb[0].mxu0
      %v3370 = vadd.f32 %v3209, %v3369
      %v3371 = vpop.f32.mrb[0].mxu0
      %3372 = vmatprep.mubr.bf16.mxu0 %v2619
      %3373 = vmatmul.mubr.bf16.gmra.mrb[0].mxu0 %v2614
      %v3374 = vpop.f32.mrb[0].mxu0
      %v3375 = vadd.f32 %v3214, %v3374
      %v3376 = vpop.f32.mrb[0].mxu0
      %v3377 = vpop.f32.mrb[0].mxu0
      %v3378 = vadd.f32 %v3217, %v3377
      %v3379 = vpop.f32.mrb[0].mxu0
      %3380 = vmatprep.mubr.bf16.mxu0 %v2663
      %3381 = vmatmul.mubr.bf16.gmra.mrb[0].mxu0 %v2658
      %v3382 = vpop.f32.mrb[0].mxu0
      %v3383 = vadd.f32 %v3222, %v3382
      %v3384 = vpop.f32.mrb[0].mxu0
      %v3385 = vpop.f32.mrb[0].mxu0
      %v3386 = vadd.f32 %v3225, %v3385
      %v3387 = vpop.f32.mrb[0].mxu0
      %3388 = vmatprep.mubr.bf16.mxu0 %v2707
      %3389 = vmatmul.mubr.bf16.gmra.mrb[0].mxu0 %v2702
      %v3390 = vpop.f32.mrb[0].mxu0
      %v3391 = vadd.f32 %v3230, %v3390
      %v3392 = vpop.f32.mrb[0].mxu0
      %v3393 = vpop.f32.mrb[0].mxu0
      %v3394 = vadd.f32 %v3233, %v3393
      %v3395 = vpop.f32.mrb[0].mxu0
      %3396 = vmatprep.mubr.bf16.mxu0 %v2751
      %3397 = vmatmul.mubr.bf16.gmra.mrb[0].mxu0 %v2746
      %v3398 = vpop.f32.mrb[0].mxu0
      %v3399 = vadd.f32 %v3238, %v3398
      %v3400 = vpop.f32.mrb[0].mxu0
      %v3401 = vpop.f32.mrb[0].mxu0
      %v3402 = vadd.f32 %v3241, %v3401
      %v3403 = vpop.f32.mrb[0].mxu0
      %3404 = vmatprep.mubr.bf16.mxu0 %v2795
      %3405 = vmatmul.mubr.bf16.gmra.mrb[0].mxu0 %v2790
      %v3406 = vpop.f32.mrb[0].mxu0
      %v3407 = vadd.f32 %v3246, %v3406
      %v3408 = vpop.f32.mrb[0].mxu0
      %v3409 = vpop.f32.mrb[0].mxu0
      %v3410 = vadd.f32 %v3249, %v3409
      %v3411 = vpop.f32.mrb[0].mxu0
      %3412 = vmatprep.mubr.bf16.mxu0 %v2839
      %3413 = vmatmul.mubr.bf16.gmra.mrb[0].mxu0 %v2834
      %v3414 = vpop.f32.mrb[0].mxu0
      %v3415 = vadd.f32 %v3254, %v3414
      %v3416 = vpop.f32.mrb[0].mxu0
      %v3417 = vpop.f32.mrb[0].mxu0
      %v3418 = vadd.f32 %v3257, %v3417
      %v3419 = vpop.f32.mrb[0].mxu0
      %3420 = vdwg.mxu0
      %3421 = vmatprep.subr.bf16.mxu0 0
      %3422 = vmatpush1.bf16.msra.mxu0 %v3021
      %3423 = vmatprep.subr.bf16.mxu0 0
      %3424 = vmatpush1.bf16.msra.mxu0 %v3022
      %3425 = vmatprep.subr.bf16.mxu0 0
      %3426 = vmatpush1.bf16.msra.mxu0 %v3023
      %3427 = vmatprep.subr.bf16.mxu0 0
      %3428 = vmatpush1.bf16.msra.mxu0 %v3024
      %3429 = vmatprep.subr.bf16.mxu0 0
      %3430 = vmatpush1.bf16.msra.mxu0 %v3097
      %3431 = vmatprep.subr.bf16.mxu0 0
      %3432 = vmatpush1.bf16.msra.mxu0 0
      %3433 = vmatprep.subr.bf16.mxu0 0
      %3434 = vmatpush1.bf16.msra.mxu0 0
      %3435 = vmatprep.subr.bf16.mxu0 0
      %3436 = vmatpush1.bf16.msra.mxu0 0
      %3437 = vmatprep.subr.bf16.mxu0 0
      %3438 = vmatpush1.bf16.msra.mxu0 0
      %3439 = vmatprep.subr.bf16.mxu0 0
      %3440 = vmatpush1.bf16.msra.mxu0 0
      %3441 = vmatprep.subr.bf16.mxu0 0
      %3442 = vmatpush1.bf16.msra.mxu0 0
      %3443 = vmatprep.subr.bf16.mxu0 0
      %3444 = vmatpush1.bf16.msra.mxu0 0
      %3445 = vmatprep.subr.bf16.mxu0 0
      %3446 = vmatpush1.bf16.msra.mxu0 0
      %3447 = vmatprep.subr.bf16.mxu0 0
      %3448 = vmatpush1.bf16.msra.mxu0 0
      %3449 = vmatprep.subr.bf16.mxu0 0
      %3450 = vmatpush1.bf16.msra.mxu0 0
      %3451 = vmatprep.subr.bf16.mxu0 0
      %3452 = vmatpush1.bf16.msra.mxu0 0
      %3453 = vmatprep.mubr.bf16.mxu0 0
      %3454 = vmatmul.mubr.bf16.gmra.mrb[0].mxu0 %v3063
      %v3455 = vpop.f32.mrb[0].mxu0
      %v3456 = vadd.f32 %v3295, %v3455
      %v3457 = vpop.f32.mrb[0].mxu0
      %v3458 = vpop.f32.mrb[0].mxu0
      %v3459 = vadd.f32 %v3298, %v3458
      %v3460 = vpop.f32.mrb[0].mxu0
      %3461 = vmatprep.mubr.bf16.mxu0 0
      %3462 = vmatmul.mubr.bf16.gmra.mrb[0].mxu0 %v3065
      %v3463 = vpop.f32.mrb[0].mxu0
      %v3464 = vadd.f32 %v3303, %v3463
      %v3465 = vpop.f32.mrb[0].mxu0
      %v3466 = vpop.f32.mrb[0].mxu0
      %v3467 = vadd.f32 %v3306, %v3466
      %v3468 = vpop.f32.mrb[0].mxu0
      %3469 = vmatprep.mubr.bf16.mxu0 0
      %3470 = vmatmul.mubr.bf16.gmra.mrb[0].mxu0 %v3067
      %v3471 = vpop.f32.mrb[0].mxu0
      %v3472 = vadd.f32 %v3311, %v3471
      %v3473 = vpop.f32.mrb[0].mxu0
      %v3474 = vpop.f32.mrb[0].mxu0
      %v3475 = vadd.f32 %v3314, %v3474
      %v3476 = vpop.f32.mrb[0].mxu0
      %3477 = vmatprep.mubr.bf16.mxu0 0
      %3478 = vmatmul.mubr.bf16.gmra.mrb[0].mxu0 %v3069
      %v3479 = vpop.f32.mrb[0].mxu0
      %v3480 = vadd.f32 %v3319, %v3479
      %v3481 = vpop.f32.mrb[0].mxu0
      %v3482 = vpop.f32.mrb[0].mxu0
      %v3483 = vadd.f32 %v3322, %v3482
      %v3484 = vpop.f32.mrb[0].mxu0
      %3485 = vmatprep.mubr.bf16.mxu0 0
      %3486 = vmatmul.mubr.bf16.gmra.mrb[0].mxu0 %v3071
      %v3487 = vpop.f32.mrb[0].mxu0
      %v3488 = vadd.f32 %v3327, %v3487
      %v3489 = vpop.f32.mrb[0].mxu0
      %v3490 = vpop.f32.mrb[0].mxu0
      %v3491 = vadd.f32 %v3330, %v3490
      %v3492 = vpop.f32.mrb[0].mxu0
      %3493 = vmatprep.mubr.bf16.mxu0 0
      %3494 = vmatmul.mubr.bf16.gmra.mrb[0].mxu0 %v3073
      %v3495 = vpop.f32.mrb[0].mxu0
      %v3496 = vadd.f32 %v3335, %v3495
      %v3497 = vpop.f32.mrb[0].mxu0
      %v3498 = vpop.f32.mrb[0].mxu0
      %v3499 = vadd.f32 %v3338, %v3498
      %v3500 = vpop.f32.mrb[0].mxu0
      %3501 = vmatprep.mubr.bf16.mxu0 0
      %3502 = vmatmul.mubr.bf16.gmra.mrb[0].mxu0 %v3075
      %v3503 = vpop.f32.mrb[0].mxu0
      %v3504 = vadd.f32 %v3343, %v3503
      %v3505 = vpop.f32.mrb[0].mxu0
      %v3506 = vpop.f32.mrb[0].mxu0
      %v3507 = vadd.f32 %v3346, %v3506
      %v3508 = vpop.f32.mrb[0].mxu0
      %3509 = vmatprep.mubr.bf16.mxu0 0
      %3510 = vmatmul.mubr.bf16.gmra.mrb[0].mxu0 %v3077
      %v3511 = vpop.f32.mrb[0].mxu0
      %v3512 = vadd.f32 %v3351, %v3511
      %v3513 = vpop.f32.mrb[0].mxu0
      %v3514 = vpop.f32.mrb[0].mxu0
      %v3515 = vadd.f32 %v3354, %v3514
      %v3516 = vpop.f32.mrb[0].mxu0
      %3517 = vmatprep.mubr.bf16.mxu0 0
      %3518 = vmatmul.mubr.bf16.gmra.mrb[0].mxu0 %v3079
      %v3519 = vpop.f32.mrb[0].mxu0
      %v3520 = vadd.f32 %v3359, %v3519
      %v3521 = vpop.f32.mrb[0].mxu0
      %v3522 = vpop.f32.mrb[0].mxu0
      %v3523 = vadd.f32 %v3362, %v3522
      %v3524 = vpop.f32.mrb[0].mxu0
      %3525 = vmatprep.mubr.bf16.mxu0 0
      %3526 = vmatmul.mubr.bf16.gmra.mrb[0].mxu0 %v3081
      %v3527 = vpop.f32.mrb[0].mxu0
      %v3528 = vadd.f32 %v3367, %v3527
      %v3529 = vpop.f32.mrb[0].mxu0
      %v3530 = vpop.f32.mrb[0].mxu0
      %v3531 = vadd.f32 %v3370, %v3530
      %v3532 = vpop.f32.mrb[0].mxu0
      %3533 = vmatprep.mubr.bf16.mxu0 0
      %3534 = vmatmul.mubr.bf16.gmra.mrb[0].mxu0 %v3083
      %v3535 = vpop.f32.mrb[0].mxu0
      %v3536 = vadd.f32 %v3375, %v3535
      %v3537 = vpop.f32.mrb[0].mxu0
      %v3538 = vpop.f32.mrb[0].mxu0
      %v3539 = vadd.f32 %v3378, %v3538
      %v3540 = vpop.f32.mrb[0].mxu0
      %3541 = vmatprep.mubr.bf16.mxu0 0
      %3542 = vmatmul.mubr.bf16.gmra.mrb[0].mxu0 %v3085
      %v3543 = vpop.f32.mrb[0].mxu0
      %v3544 = vadd.f32 %v3383, %v3543
      %v3545 = vpop.f32.mrb[0].mxu0
      %v3546 = vpop.f32.mrb[0].mxu0
      %v3547 = vadd.f32 %v3386, %v3546
      %v3548 = vpop.f32.mrb[0].mxu0
      %3549 = vmatprep.mubr.bf16.mxu0 0
      %3550 = vmatmul.mubr.bf16.gmra.mrb[0].mxu0 %v3087
      %v3551 = vpop.f32.mrb[0].mxu0
      %v3552 = vadd.f32 %v3391, %v3551
      %v3553 = vpop.f32.mrb[0].mxu0
      %v3554 = vpop.f32.mrb[0].mxu0
      %v3555 = vadd.f32 %v3394, %v3554
      %v3556 = vpop.f32.mrb[0].mxu0
      %3557 = vmatprep.mubr.bf16.mxu0 0
      %3558 = vmatmul.mubr.bf16.gmra.mrb[0].mxu0 %v3089
      %v3559 = vpop.f32.mrb[0].mxu0
      %v3560 = vadd.f32 %v3399, %v3559
      %v3561 = vpop.f32.mrb[0].mxu0
      %v3562 = vpop.f32.mrb[0].mxu0
      %v3563 = vadd.f32 %v3402, %v3562
      %v3564 = vpop.f32.mrb[0].mxu0
      %3565 = vmatprep.mubr.bf16.mxu0 0
      %3566 = vmatmul.mubr.bf16.gmra.mrb[0].mxu0 %v3091
      %v3567 = vpop.f32.mrb[0].mxu0
      %v3568 = vadd.f32 %v3407, %v3567
      %v3569 = vpop.f32.mrb[0].mxu0
      %v3570 = vpop.f32.mrb[0].mxu0
      %v3571 = vadd.f32 %v3410, %v3570
      %v3572 = vpop.f32.mrb[0].mxu0
      %3573 = vmatprep.mubr.bf16.mxu0 0
      %3574 = vmatmul.mubr.bf16.gmra.mrb[0].mxu0 %v3093
      %v3575 = vpop.f32.mrb[0].mxu0
      %v3576 = vadd.f32 %v3415, %v3575
      %v3577 = vpop.f32.mrb[0].mxu0
      %v3578 = vpop.f32.mrb[0].mxu0
      %v3579 = vadd.f32 %v3418, %v3578
      %v3580 = vpop.f32.mrb[0].mxu0
      %3581 = vdwg.mxu0
      %v3582 = vmax.f32 %v3456, %v3488
      %v3583 = vmax.f32 %v3459, %v3491
      %v3584 = vmax.f32 %v3464, %v3496
      %v3585 = vmax.f32 %v3467, %v3499
      %v3586 = vmax.f32 %v3472, %v3504
      %v3587 = vmax.f32 %v3475, %v3507
      %v3588 = vmax.f32 %v3480, %v3512
      %v3589 = vmax.f32 %v3483, %v3515
      %v3590 = vmax.f32 %v3520, %v3552
      %v3591 = vmax.f32 %v3523, %v3555
      %v3592 = vmax.f32 %v3528, %v3560
      %v3593 = vmax.f32 %v3531, %v3563
      %v3594 = vmax.f32 %v3536, %v3568
      %v3595 = vmax.f32 %v3539, %v3571
      %v3596 = vmax.f32 %v3544, %v3576
      %v3597 = vmax.f32 %v3547, %v3579
      %v3598 = vmax.f32 %v3582, %v3590
      %v3599 = vmax.f32 %v3583, %v3591
      %v3600 = vmax.f32 %v3584, %v3592
      %v3601 = vmax.f32 %v3585, %v3593
      %v3602 = vmax.f32 %v3586, %v3594
      %v3603 = vmax.f32 %v3587, %v3595
      %v3604 = vmax.f32 %v3588, %v3596
      %v3605 = vmax.f32 %v3589, %v3597
      %v3606 = vld [vmem:[%s5] sm:$0x1]
      %v3608 = vlaneseq
      %v3609 = vshrl.u32 %v3608, 7
      %v3610 = vsub.s32 0, %v3609
      %v3611 = vrot.slane %v3606, %v3610
      %v3613 = vadd.f32 %v3598, %v3611
      %v3614 = vadd.f32 %v3599, %v3611
      %v3615 = vadd.f32 %v3600, %v3611
      %v3616 = vadd.f32 %v3601, %v3611
      %v3617 = vadd.f32 %v3602, %v3611
      %v3618 = vadd.f32 %v3603, %v3611
      %v3619 = vadd.f32 %v3604, %v3611
      %v3620 = vadd.f32 %v3605, %v3611
      %v3621 = vmax.f32 %v3613, 0.0
      %v3622 = vmax.f32 %v3614, 0.0
      %v3623 = vmax.f32 %v3615, 0.0
      %v3624 = vmax.f32 %v3616, 0.0
      %v3625 = vmax.f32 %v3617, 0.0
      %v3626 = vmax.f32 %v3618, 0.0
      %v3627 = vmax.f32 %v3619, 0.0
      %v3628 = vmax.f32 %v3620, 0.0
      %v3629 = vmul.f32 %v3621, 0.5
      %v3630 = vmul.f32 %v3622, 0.5
      %v3631 = vmul.f32 %v3623, 0.5
      %v3632 = vmul.f32 %v3624, 0.5
      %v3633 = vmul.f32 %v3625, 0.5
      %v3634 = vmul.f32 %v3626, 0.5
      %v3635 = vmul.f32 %v3627, 0.5
      %v3636 = vmul.f32 %v3628, 0.5
      %v3637 = vadd.f32 %v1679, %v3629
      %v3638 = vadd.f32 %v1680, %v3630
      %v3639 = vadd.f32 %v1681, %v3631
      %v3640 = vadd.f32 %v1682, %v3632
      %v3641 = vadd.f32 %v1683, %v3633
      %v3642 = vadd.f32 %v1684, %v3634
      %v3643 = vadd.f32 %v1685, %v3635
      %v3644 = vadd.f32 %v1686, %v3636
      %v3645 = vpack.c.bf16 %v3622, %v3621
      %v3647 = vunpack.c.l.b16 %v3645
      %v3648 = vunpack.c.h.b16 %v3645
      %v3649 = vpack.c.b16 %v3647, %v3647
      %v3650 = vpack.c.b16 %v3648, %v3648
      %vm3653 = vcmask 93184
      %3654 = vst.msk [vmem:[%s326] sm:$0xf] %vm3653, %v3649
      %3655 = vst.msk [vmem:[%s326 + $0x4] sm:$0xf] %vm3653, %v3650
      %v3656 = vpack.c.bf16 %v3638, %v3637
      %v3658 = vunpack.c.l.b16 %v3656
      %v3659 = vunpack.c.h.b16 %v3656
      %v3660 = vpack.c.b16 %v3658, %v3658
      %v3661 = vpack.c.b16 %v3659, %v3659
      %3664 = vst.msk [vmem:[%s319] sm:$0xf] %vm3653, %v3660
      %3665 = vst.msk [vmem:[%s319 + $0x4] sm:$0xf] %vm3653, %v3661
      %v3666 = vpack.c.bf16 %v3624, %v3623
      %v3668 = vunpack.c.l.b16 %v3666
      %v3669 = vunpack.c.h.b16 %v3666
      %v3670 = vpack.c.b16 %v3668, %v3668
      %v3671 = vpack.c.b16 %v3669, %v3669
      %s3674 = scalar_lea.vmem %s326, 8
      %3675 = vst.msk [vmem:[%s3674] sm:$0xf] %vm3653, %v3670
      %3676 = vst.msk [vmem:[%s3674 + $0x4] sm:$0xf] %vm3653, %v3671
      %v3677 = vpack.c.bf16 %v3640, %v3639
      %v3679 = vunpack.c.l.b16 %v3677
      %v3680 = vunpack.c.h.b16 %v3677
      %v3681 = vpack.c.b16 %v3679, %v3679
      %v3682 = vpack.c.b16 %v3680, %v3680
      %s3685 = scalar_lea.vmem %s319, 8
      %3686 = vst.msk [vmem:[%s3685] sm:$0xf] %vm3653, %v3681
      %3687 = vst.msk [vmem:[%s3685 + $0x4] sm:$0xf] %vm3653, %v3682
      %v3688 = vpack.c.bf16 %v3626, %v3625
      %v3690 = vunpack.c.l.b16 %v3688
      %v3691 = vunpack.c.h.b16 %v3688
      %v3692 = vpack.c.b16 %v3690, %v3690
      %v3693 = vpack.c.b16 %v3691, %v3691
      %s3696 = scalar_lea.vmem %s326, 16
      %3697 = vst.msk [vmem:[%s3696] sm:$0xf] %vm3653, %v3692
      %3698 = vst.msk [vmem:[%s3696 + $0x4] sm:$0xf] %vm3653, %v3693
      %v3699 = vpack.c.bf16 %v3642, %v3641
      %v3701 = vunpack.c.l.b16 %v3699
      %v3702 = vunpack.c.h.b16 %v3699
      %v3703 = vpack.c.b16 %v3701, %v3701
      %v3704 = vpack.c.b16 %v3702, %v3702
      %s3707 = scalar_lea.vmem %s319, 16
      %3708 = vst.msk [vmem:[%s3707] sm:$0xf] %vm3653, %v3703
      %3709 = vst.msk [vmem:[%s3707 + $0x4] sm:$0xf] %vm3653, %v3704
      %v3710 = vpack.c.bf16 %v3628, %v3627
      %v3712 = vunpack.c.l.b16 %v3710
      %v3713 = vunpack.c.h.b16 %v3710
      %v3714 = vpack.c.b16 %v3712, %v3712
      %v3715 = vpack.c.b16 %v3713, %v3713
      %s3718 = scalar_lea.vmem %s326, 24
      %3719 = vst.msk [vmem:[%s3718] sm:$0xf] %vm3653, %v3714
      %3720 = vst.msk [vmem:[%s3718 + $0x4] sm:$0xf] %vm3653, %v3715
      %v3721 = vpack.c.bf16 %v3644, %v3643
      %v3723 = vunpack.c.l.b16 %v3721
      %v3724 = vunpack.c.h.b16 %v3721
      %v3725 = vpack.c.b16 %v3723, %v3723
      %v3726 = vpack.c.b16 %v3724, %v3724
      %s3729 = scalar_lea.vmem %s319, 24
      %3730 = vst.msk [vmem:[%s3729] sm:$0xf] %vm3653, %v3725
      %3731 = vst.msk [vmem:[%s3729 + $0x4] sm:$0xf] %vm3653, %v3726
      %s3732 = smul.u32 4, %s19
      %p3733 = scmp.lt.s32.totalorder %s3732, 7
      %s3734 = scalar_select %p3733, %s3732, 7
      %s3735 = smul.addr %s3734, 2
      %s3736 = smul.addr %s3735, 4
      %s3737 = scalar_lea.vmem %s6, %s3736
      %s3738 = smul.u32 4, %s19
      %p3739 = scmp.lt.s32.totalorder %s3738, 7
      %s3740 = scalar_select %p3739, %s3738, 7
      %s3741 = smul.addr %s3740, 2
      %s3742 = smul.addr %s3741, 4
      %s3743 = scalar_lea.vmem %s7, %s3742
      // Predicated region
      $region45: #{cafusion_stem_forward.2} parent=43 // pred_check
        %p3744 = pneg %p173
      $region46: #{cafusion_stem_forward.2} parent=43 // pred_check_branch
        %3746 = sbr.rel (%p3744) target = $region48
      $region47: #{cafusion_stem_forward.2} parent=43 // pred_region
        %s3747 = smul.u32 4, %s19
      $region48: #{cafusion_stem_forward.2} parent=43 // pred_fallthru
        _
      // Predicated region
      $region49: #{cafusion_stem_forward.2} parent=43 // pred_check
        %p3748 = pneg %p199
      $region50: #{cafusion_stem_forward.2} parent=43 // pred_check_branch
        %3750 = sbr.rel (%p3748) target = $region52
      $region51: #{cafusion_stem_forward.2} parent=43 // pred_region
        %s3751 = smul.u32 4, %s19
      $region52: #{cafusion_stem_forward.2} parent=43 // pred_fallthru
        _
    $region44: #{cafusion_stem_forward.2} parent=5 // pred_fallthru
      _
    %p3752 = scmp.le.s32.totalorder 2, %s14
    // Predicated region
    $region53: #{cafusion_stem_forward.2} parent=5 // pred_check
      %p3753 = pneg %p3752
    $region54: #{cafusion_stem_forward.2} parent=5 // pred_check_branch
      %3755 = sbr.rel (%p3753) target = $region56
    $region55: #{cafusion_stem_forward.2} parent=5 // pred_region
      %s3756 = ssub.s32 %s14, 2
      // Predicated region
      $region57: #{cafusion_stem_forward.2} parent=55 // pred_check
        %p3757 = pneg %p179
      $region58: #{cafusion_stem_forward.2} parent=55 // pred_check_branch
        %3759 = sbr.rel (%p3757) target = $region60
      $region59: #{cafusion_stem_forward.2} parent=55 // pred_region
        %s3760 = smul.u32 4, %s20
        %p3761 = scmp.lt.s32.totalorder %s3760, 7
        %s3762 = scalar_select %p3761, %s3760, 7
        %s3763 = smul.addr %s3762, 2
        %s3764 = smul.addr %s3763, 4
        %s3765 = scalar_lea.vmem %s6, %s3764
      $region60: #{cafusion_stem_forward.2} parent=55 // pred_fallthru
        _
      // Predicated region
      $region61: #{cafusion_stem_forward.2} parent=55 // pred_check
        %p3766 = pneg %p205
      $region62: #{cafusion_stem_forward.2} parent=55 // pred_check_branch
        %3768 = sbr.rel (%p3766) target = $region64
      $region63: #{cafusion_stem_forward.2} parent=55 // pred_region
        %s3769 = smul.u32 4, %s20
        %p3770 = scmp.lt.s32.totalorder %s3769, 7
        %s3771 = scalar_select %p3770, %s3769, 7
        %s3772 = smul.addr %s3771, 2
        %s3773 = smul.addr %s3772, 4
        %s3774 = scalar_lea.vmem %s7, %s3773
      $region64: #{cafusion_stem_forward.2} parent=55 // pred_fallthru
        _
    $region56: #{cafusion_stem_forward.2} parent=5 // pred_fallthru
      _
  $region6: #{cafusion_stem_forward.2} parent=0 // loop_footer
    %s18 = sadd.s32 1, %s14
  $region7: #{cafusion_stem_forward.2} parent=0 // loop_footer_branch
    %13 = sbr.rel target = $region3
  $region8: #{cafusion_stem_forward.2} parent=0 // loop_exit
    _

// kernel: cafusion_stem_forward.3
$region0: #{cafusion_stem_forward.3}
  #allocation0 [shape = 'u32[]', space=smem, size = 0x4, offset = 0x4, fixed_abs, tag = 'smem constant byte address 0x4 - core index']
  #allocation1 [shape = 'u32[144,128]{1,0:T(1,128)}', space=vmem, size = 0x12000, scoped, tag = 'internal scratch']
  %s0 = inlined_call_operand.vmem [shape: bf16[8,40,84], index: 0, kind: input, shape index: {}]
  %s1 = inlined_call_operand.vmem [shape: bf16[8,40,84], index: 1, kind: input, shape index: {}]
  %s2 = inlined_call_operand.vmem [shape: bf16[588,24], index: 2, kind: input, shape index: {}]
  %s3 = inlined_call_operand.vmem [shape: f32[1,24], index: 3, kind: input, shape index: {}]
  %s4 = inlined_call_operand.vmem [shape: bf16[588,24], index: 4, kind: input, shape index: {}]
  %s5 = inlined_call_operand.vmem [shape: f32[1,24], index: 5, kind: input, shape index: {}]
  %s6 = inlined_call_operand.hbm [shape: f32[8,4,24], index: 6, kind: output, shape index: {}]
  %s7 = sld [smem:[#allocation0]]
  $region57: #{cafusion_stem_forward.3} parent=0
    _
  %s9 = ssub.s32 1, %s7
  %s10 = scalar_select 0, %s9, %s7
  $region1: #{cafusion_stem_forward.3} parent=0
    #allocation2 [shape = 'u8[16384]{0}', space=vmem, size = 0x4000, scoped, tag = 'output window, operand 0']
    #allocation3 [shape = 's32[2]{0}', space=sflag, size = 0x8, scoped, tag = 'scoped memory for cafusion_stem_forward.3']
    %11 = vsyncpa [#allocation3], 0
    %s12 = scalar_lea.sflag [#allocation3], 1
    %13 = vsyncpa %s12, 0
    loop: start=0, step=1, limit=4
    $region2: #{cafusion_stem_forward.3} parent=1 // loop_pre_header
      _
    $region3: #{cafusion_stem_forward.3} parent=1 // loop_header
      %s15 = sphi 0, %s19
      %p16 = scmp.ge.s32.totalorder %s15, 4
      %s25 = sphi 0, %s27
      %s28 = sphi 0, %s25
      %s29 = sphi 0, %s28
      %s45 = sphi 0, %s29
      %s51 = sphi 0, %s53
      %s54 = sphi 0, %s51
      %s55 = sphi 0, %s54
      %s71 = sphi 0, %s55
      %s75 = sphi 0, %s75
      %s77 = sphi 0, %s75
      %s78 = sphi 0, %s77
      %s92 = sphi 0, %s78
      %s96 = sphi 0, %s96
      %s98 = sphi 0, %s96
      %s99 = sphi 0, %s98
      %s113 = sphi 0, %s99
      %s117 = sphi 0, %s117
      %s119 = sphi 0, %s117
      %s120 = sphi 0, %s119
      %s134 = sphi 0, %s120
      %s138 = sphi 0, %s138
      %s140 = sphi 0, %s138
      %s141 = sphi 0, %s140
      %s155 = sphi 0, %s141
      %s161 = sphi 0, %s163
      %s164 = sphi 0, %s161
      %s165 = sphi 0, %s164
      %s181 = sphi 0, %s165
    $region4: #{cafusion_stem_forward.3} parent=1 // loop_header_branch
      %18 = sbr.rel (%p16) target = $region8
    $region5: #{cafusion_stem_forward.3} parent=1 // loop_body
      %s20 = ssub.s32 %s15, 1
      %s21 = ssub.s32 %s15, 2
      %s22 = sadd.s32 %s15, 1
      %s23 = ssub.s32 %s15, %s22
      %p24 = scmp.eq.s32.totalorder %s23, 0
      %s26 = sadd.s32 %s25, 1
      %s27 = scalar_select %p24, %s25, %s26
      %p30 = pneg %p24
      %p31 = scmp.eq.s32.totalorder %s15, 1
      %p32 = por %p30, %p31
      %p33 = scmp.ne.s32.totalorder %s25, %s28
      %p34 = scmp.eq.s32.totalorder %s15, 0
      %p35 = por %p33, %p34
      %p36 = scmp.ne.s32.totalorder %s25, %s28
      %p37 = scmp.eq.s32.totalorder %s20, 1
      %p38 = por %p36, %p37
      %p39 = scmp.ne.s32.totalorder %s28, %s29
      %p40 = scmp.eq.s32.totalorder %s20, 0
      %p41 = por %p39, %p40
      %p42 = scmp.ne.s32.totalorder %s28, %s29
      %p43 = scmp.eq.s32.totalorder %s21, 1
      %p44 = por %p42, %p43
      %p46 = scmp.ne.s32.totalorder %s29, %s45
      %p47 = scmp.eq.s32.totalorder %s21, 0
      %p48 = por %p46, %p47
      %s49 = ssub.s32 %s15, %s22
      %p50 = scmp.eq.s32.totalorder %s49, 0
      %s52 = sadd.s32 %s51, 1
      %s53 = scalar_select %p50, %s51, %s52
      %p56 = pneg %p50
      %p57 = scmp.eq.s32.totalorder %s15, 1
      %p58 = por %p56, %p57
      %p59 = scmp.ne.s32.totalorder %s51, %s54
      %p60 = scmp.eq.s32.totalorder %s15, 0
      %p61 = por %p59, %p60
      %p62 = scmp.ne.s32.totalorder %s51, %s54
      %p63 = scmp.eq.s32.totalorder %s20, 1
      %p64 = por %p62, %p63
      %p65 = scmp.ne.s32.totalorder %s54, %s55
      %p66 = scmp.eq.s32.totalorder %s20, 0
      %p67 = por %p65, %p66
      %p68 = scmp.ne.s32.totalorder %s54, %s55
      %p69 = scmp.eq.s32.totalorder %s21, 1
      %p70 = por %p68, %p69
      %p72 = scmp.ne.s32.totalorder %s55, %s71
      %p73 = scmp.eq.s32.totalorder %s21, 0
      %p74 = por %p72, %p73
      %s76 = sadd.s32 %s75, 1
      %p79 = scmp.eq.s32.totalorder %s15, 1
      %p80 = scmp.ne.s32.totalorder %s75, %s77
      %p81 = scmp.eq.s32.totalorder %s15, 0
      %p82 = por %p80, %p81
      %p83 = scmp.ne.s32.totalorder %s75, %s77
      %p84 = scmp.eq.s32.totalorder %s20, 1
      %p85 = por %p83, %p84
      %p86 = scmp.ne.s32.totalorder %s77, %s78
      %p87 = scmp.eq.s32.totalorder %s20, 0
      %p88 = por %p86, %p87
      %p89 = scmp.ne.s32.totalorder %s77, %s78
      %p90 = scmp.eq.s32.totalorder %s21, 1
      %p91 = por %p89, %p90
      %p93 = scmp.ne.s32.totalorder %s78, %s92
      %p94 = scmp.eq.s32.totalorder %s21, 0
      %p95 = por %p93, %p94
      %s97 = sadd.s32 %s96, 1
      %p100 = scmp.eq.s32.totalorder %s15, 1
      %p101 = scmp.ne.s32.totalorder %s96, %s98
      %p102 = scmp.eq.s32.totalorder %s15, 0
      %p103 = por %p101, %p102
      %p104 = scmp.ne.s32.totalorder %s96, %s98
      %p105 = scmp.eq.s32.totalorder %s20, 1
      %p106 = por %p104, %p105
      %p107 = scmp.ne.s32.totalorder %s98, %s99
      %p108 = scmp.eq.s32.totalorder %s20, 0
      %p109 = por %p107, %p108
      %p110 = scmp.ne.s32.totalorder %s98, %s99
      %p111 = scmp.eq.s32.totalorder %s21, 1
      %p112 = por %p110, %p111
      %p114 = scmp.ne.s32.totalorder %s99, %s113
      %p115 = scmp.eq.s32.totalorder %s21, 0
      %p116 = por %p114, %p115
      %s118 = sadd.s32 %s117, 1
      %p121 = scmp.eq.s32.totalorder %s15, 1
      %p122 = scmp.ne.s32.totalorder %s117, %s119
      %p123 = scmp.eq.s32.totalorder %s15, 0
      %p124 = por %p122, %p123
      %p125 = scmp.ne.s32.totalorder %s117, %s119
      %p126 = scmp.eq.s32.totalorder %s20, 1
      %p127 = por %p125, %p126
      %p128 = scmp.ne.s32.totalorder %s119, %s120
      %p129 = scmp.eq.s32.totalorder %s20, 0
      %p130 = por %p128, %p129
      %p131 = scmp.ne.s32.totalorder %s119, %s120
      %p132 = scmp.eq.s32.totalorder %s21, 1
      %p133 = por %p131, %p132
      %p135 = scmp.ne.s32.totalorder %s120, %s134
      %p136 = scmp.eq.s32.totalorder %s21, 0
      %p137 = por %p135, %p136
      %s139 = sadd.s32 %s138, 1
      %p142 = scmp.eq.s32.totalorder %s15, 1
      %p143 = scmp.ne.s32.totalorder %s138, %s140
      %p144 = scmp.eq.s32.totalorder %s15, 0
      %p145 = por %p143, %p144
      %p146 = scmp.ne.s32.totalorder %s138, %s140
      %p147 = scmp.eq.s32.totalorder %s20, 1
      %p148 = por %p146, %p147
      %p149 = scmp.ne.s32.totalorder %s140, %s141
      %p150 = scmp.eq.s32.totalorder %s20, 0
      %p151 = por %p149, %p150
      %p152 = scmp.ne.s32.totalorder %s140, %s141
      %p153 = scmp.eq.s32.totalorder %s21, 1
      %p154 = por %p152, %p153
      %p156 = scmp.ne.s32.totalorder %s141, %s155
      %p157 = scmp.eq.s32.totalorder %s21, 0
      %p158 = por %p156, %p157
      %s159 = ssub.s32 %s15, %s22
      %p160 = scmp.eq.s32.totalorder %s159, 0
      %s162 = sadd.s32 %s161, 1
      %s163 = scalar_select %p160, %s161, %s162
      %p166 = pneg %p160
      %p167 = scmp.eq.s32.totalorder %s15, 1
      %p168 = por %p166, %p167
      %p169 = scmp.ne.s32.totalorder %s161, %s164
      %p170 = scmp.eq.s32.totalorder %s15, 0
      %p171 = por %p169, %p170
      %p172 = scmp.ne.s32.totalorder %s161, %s164
      %p173 = scmp.eq.s32.totalorder %s20, 1
      %p174 = por %p172, %p173
      %p175 = scmp.ne.s32.totalorder %s164, %s165
      %p176 = scmp.eq.s32.totalorder %s20, 0
      %p177 = por %p175, %p176
      %p178 = scmp.ne.s32.totalorder %s164, %s165
      %p179 = scmp.eq.s32.totalorder %s21, 1
      %p180 = por %p178, %p179
      %p182 = scmp.ne.s32.totalorder %s165, %s181
      %p183 = scmp.eq.s32.totalorder %s21, 0
      %p184 = por %p182, %p183
      %p185 = scmp.le.s32.totalorder 1, %s15
      %p186 = scmp.lt.s32.totalorder %s15, 3
      %p187 = pnand %p185, %p186
      %p188 = pneg %p187
      // Predicated region
      $region9: #{cafusion_stem_forward.3} parent=5 // pred_check
        _
      $region10: #{cafusion_stem_forward.3} parent=5 // pred_check_branch
        %190 = sbr.rel (%p187) target = $region12
      $region11: #{cafusion_stem_forward.3} parent=5 // pred_region
        %s191 = ssub.s32 %s15, 1
        // Predicated region
        $region13: #{cafusion_stem_forward.3} parent=11 // pred_check
          %p192 = pneg %p88
        $region14: #{cafusion_stem_forward.3} parent=11 // pred_check_branch
          %194 = sbr.rel (%p192) target = $region16
        $region15: #{cafusion_stem_forward.3} parent=11 // pred_region
          _
        $region16: #{cafusion_stem_forward.3} parent=11 // pred_fallthru
          _
        // Predicated region
        $region17: #{cafusion_stem_forward.3} parent=11 // pred_check
          %p195 = pneg %p109
        $region18: #{cafusion_stem_forward.3} parent=11 // pred_check_branch
          %197 = sbr.rel (%p195) target = $region20
        $region19: #{cafusion_stem_forward.3} parent=11 // pred_region
          _
        $region20: #{cafusion_stem_forward.3} parent=11 // pred_fallthru
          _
        // Predicated region
        $region21: #{cafusion_stem_forward.3} parent=11 // pred_check
          %p198 = pneg %p130
        $region22: #{cafusion_stem_forward.3} parent=11 // pred_check_branch
          %200 = sbr.rel (%p198) target = $region24
        $region23: #{cafusion_stem_forward.3} parent=11 // pred_region
          _
        $region24: #{cafusion_stem_forward.3} parent=11 // pred_fallthru
          _
        // Predicated region
        $region25: #{cafusion_stem_forward.3} parent=11 // pred_check
          %p201 = pneg %p151
        $region26: #{cafusion_stem_forward.3} parent=11 // pred_check_branch
          %203 = sbr.rel (%p201) target = $region28
        $region27: #{cafusion_stem_forward.3} parent=11 // pred_region
          _
        $region28: #{cafusion_stem_forward.3} parent=11 // pred_fallthru
          _
      $region12: #{cafusion_stem_forward.3} parent=5 // pred_fallthru
        _
      %p204 = scmp.lt.s32.totalorder %s15, 2
      // Predicated region
      $region29: #{cafusion_stem_forward.3} parent=5 // pred_check
        %p205 = pneg %p204
      $region30: #{cafusion_stem_forward.3} parent=5 // pred_check_branch
        %207 = sbr.rel (%p205) target = $region32
      $region31: #{cafusion_stem_forward.3} parent=5 // pred_region
        // Predicated region
        $region33: #{cafusion_stem_forward.3} parent=31 // pred_check
          %p208 = pneg %p35
        $region34: #{cafusion_stem_forward.3} parent=31 // pred_check_branch
          %210 = sbr.rel (%p208) target = $region36
        $region35: #{cafusion_stem_forward.3} parent=31 // pred_region
          %s211 = smul.u32 4, %s15
          %p212 = scmp.lt.s32.totalorder %s211, 7
          %s213 = scalar_select %p212, %s211, 7
          %s214 = smul.addr %s213, 5
          %s215 = smul.addr %s214, 4
          %s216 = scalar_lea.vmem %s0, %s215
          %s217 = smul.u32 4, %s15
        $region36: #{cafusion_stem_forward.3} parent=31 // pred_fallthru
          _
        // Predicated region
        $region37: #{cafusion_stem_forward.3} parent=31 // pred_check
          %p218 = pneg %p61
        $region38: #{cafusion_stem_forward.3} parent=31 // pred_check_branch
          %220 = sbr.rel (%p218) target = $region40
        $region39: #{cafusion_stem_forward.3} parent=31 // pred_region
          %s221 = smul.u32 4, %s15
          %p222 = scmp.lt.s32.totalorder %s221, 7
          %s223 = scalar_select %p222, %s221, 7
          %s224 = smul.addr %s223, 5
          %s225 = smul.addr %s224, 4
          %s226 = scalar_lea.vmem %s1, %s225
          %s227 = smul.u32 4, %s15
        $region40: #{cafusion_stem_forward.3} parent=31 // pred_fallthru
          _
      $region32: #{cafusion_stem_forward.3} parent=5 // pred_fallthru
        _
      %p228 = scmp.le.s32.totalorder 1, %s15
      %p229 = scmp.lt.s32.totalorder %s15, 3
      %p230 = pnand %p228, %p229
      %p231 = pneg %p230
      // Predicated region
      $region41: #{cafusion_stem_forward.3} parent=5 // pred_check
        _
      $region42: #{cafusion_stem_forward.3} parent=5 // pred_check_branch
        %233 = sbr.rel (%p230) target = $region44
      $region43: #{cafusion_stem_forward.3} parent=5 // pred_region
        %s234 = ssub.s32 %s15, 1
        %s235 = smul.u32 4, %s20
        %p236 = scmp.lt.s32.totalorder %s235, 7
        %s237 = scalar_select %p236, %s235, 7
        %s238 = smul.addr %s237, 5
        %s239 = smul.addr %s238, 4
        %s240 = scalar_lea.vmem %s0, %s239
        %p241 = pneg %p41
        %p242 = pneg %p38
        %s243 = smul.u32 4, %s20
        %p244 = scmp.lt.s32.totalorder %s243, 7
        %s245 = scalar_select %p244, %s243, 7
        %s246 = smul.addr %s245, 5
        %s247 = smul.addr %s246, 4
        %s248 = scalar_lea.vmem %s1, %s247
        %p249 = pneg %p67
        %p250 = pneg %p64
        %p251 = pneg %p88
        %p252 = pneg %p85
        %p253 = pneg %p109
        %p254 = pneg %p106
        %p255 = pneg %p130
        %p256 = pneg %p127
        %p257 = pneg %p151
        %p258 = pneg %p148
        %p259 = pneg %p177
        %p260 = pneg %p174
        %s261 = sand.u32 %s164, 1
        %s262 = scalar_lea.sflag [#allocation3], %s261
        %s263 = sand.u32 %s164, 1
        %s264 = smul.addr %s263, 16
        %s265 = scalar_lea.vmem [#allocation2], %s264
        %s266 = smul.u32 4, %s20
        %p267 = scmp.lt.s32.totalorder %s266, 7
        %s268 = scalar_select %p267, %s266, 7
        %s269 = smul.addr %s268, 5
        %s270 = smul.addr %s269, 4
        %s271 = scalar_lea.vmem %s0, %s270
        %s272 = smul.u32 4, %s20
        %s273 = smul.u32 4, %s20
        %p274 = scmp.lt.s32.totalorder %s273, 7
        %s275 = scalar_select %p274, %s273, 7
        %s276 = smul.addr %s275, 5
        %s277 = smul.addr %s276, 4
        %s278 = scalar_lea.vmem %s1, %s277
        %s279 = smul.u32 4, %s20
        %s280 = smul.u32 4, %s20
        %v282 = vld [vmem:[%s2] sm:$0xf]
        %v283 = vld [vmem:[%s2 + $0x4] sm:$0xf]
        %v284 = vld [vmem:[%s2 + $0x8] sm:$0xf]
        %v285 = vld [vmem:[%s2 + $0xc] sm:$0xf]
        %v286 = vld [vmem:[%s2 + $0x10] sm:$0xf]
        %v287 = vld [vmem:[%s2 + $0x14] sm:$0xf]
        %v288 = vld [vmem:[%s2 + $0x18] sm:$0xf]
        %v289 = vld [vmem:[%s2 + $0x1c] sm:$0xf]
        %v290 = vld [vmem:[%s2 + $0x20] sm:$0xf]
        %v291 = vld [vmem:[%s2 + $0x24] sm:$0xf]
        %v292 = vld [vmem:[%s2 + $0x28] sm:$0xf]
        %v293 = vld [vmem:[%s2 + $0x2c] sm:$0xf]
        %v294 = vld [vmem:[%s2 + $0x30] sm:$0xf]
        %v295 = vld [vmem:[%s2 + $0x34] sm:$0xf]
        %v296 = vld [vmem:[%s2 + $0x38] sm:$0xf]
        %v297 = vld [vmem:[%s2 + $0x3c] sm:$0xf]
        %v298 = vld [vmem:[%s2 + $0x40] sm:$0xf]
        %v299 = vld [vmem:[%s2 + $0x44] sm:$0xf]
        %v300 = vld [vmem:[%s2 + $0x48] sm:$0xf]
        %v301 = vld [vmem:[%s2 + $0x4c] sm:$0xf]
        %v302 = vld [vmem:[%s2 + $0x50] sm:$0xf]
        %v303 = vld [vmem:[%s2 + $0x54] sm:$0xf]
        %v304 = vld [vmem:[%s2 + $0x58] sm:$0xf]
        %v305 = vld [vmem:[%s2 + $0x5c] sm:$0xf]
        %v306 = vld [vmem:[%s2 + $0x60] sm:$0xf]
        %v307 = vld [vmem:[%s2 + $0x64] sm:$0xf]
        %v308 = vld [vmem:[%s2 + $0x68] sm:$0xf]
        %v309 = vld [vmem:[%s2 + $0x6c] sm:$0xf]
        %v310 = vld [vmem:[%s2 + $0x70] sm:$0xf]
        %v311 = vld [vmem:[%s2 + $0x74] sm:$0xf]
        %v312 = vld [vmem:[%s2 + $0x78] sm:$0xf]
        %v313 = vld [vmem:[%s2 + $0x7c] sm:$0xf]
        %v314 = vld [vmem:[%s2 + $0x80] sm:$0xf]
        %v315 = vld [vmem:[%s2 + $0x84] sm:$0xf]
        %v316 = vld [vmem:[%s2 + $0x88] sm:$0xf]
        %v317 = vld [vmem:[%s2 + $0x8c] sm:$0xf]
        %v318 = vld [vmem:[%s2 + $0x90] sm:$0xf]
        %v319 = vld [vmem:[%s2 + $0x94] sm:$0xf]
        %v320 = vld [vmem:[%s2 + $0x98] sm:$0xf]
        %v321 = vld [vmem:[%s2 + $0x9c] sm:$0xf]
        %v322 = vld [vmem:[%s2 + $0xa0] sm:$0xf]
        %v323 = vld [vmem:[%s2 + $0xa4] sm:$0xf]
        %v324 = vld [vmem:[%s2 + $0xa8] sm:$0xf]
        %v325 = vld [vmem:[%s2 + $0xac] sm:$0xf]
        %v326 = vld [vmem:[%s2 + $0xb0] sm:$0xf]
        %v327 = vld [vmem:[%s2 + $0xb4] sm:$0xf]
        %v328 = vld [vmem:[%s2 + $0xb8] sm:$0xf]
        %v329 = vld [vmem:[%s2 + $0xbc] sm:$0xf]
        %v330 = vld [vmem:[%s2 + $0xc0] sm:$0xf]
        %v331 = vld [vmem:[%s2 + $0xc4] sm:$0xf]
        %v332 = vld [vmem:[%s2 + $0xc8] sm:$0xf]
        %v333 = vld [vmem:[%s2 + $0xcc] sm:$0xf]
        %v334 = vld [vmem:[%s2 + $0xd0] sm:$0xf]
        %v335 = vld [vmem:[%s2 + $0xd4] sm:$0xf]
        %v336 = vld [vmem:[%s2 + $0xd8] sm:$0xf]
        %v337 = vld [vmem:[%s2 + $0xdc] sm:$0xf]
        %v338 = vld [vmem:[%s2 + $0xe0] sm:$0xf]
        %v339 = vld [vmem:[%s2 + $0xe4] sm:$0xf]
        %v340 = vld [vmem:[%s2 + $0xe8] sm:$0xf]
        %v341 = vld [vmem:[%s2 + $0xec] sm:$0xf]
        %v342 = vld [vmem:[%s2 + $0xf0] sm:$0xf]
        %v343 = vld [vmem:[%s2 + $0xf4] sm:$0xf]
        %v344 = vld [vmem:[%s2 + $0xf8] sm:$0xf]
        %v345 = vld [vmem:[%s2 + $0xfc] sm:$0xf]
        %v346 = vld [vmem:[%s2 + $0x100] sm:$0xf]
        %v347 = vld [vmem:[%s2 + $0x104] sm:$0xf]
        %v348 = vld [vmem:[%s2 + $0x108] sm:$0xf]
        %v349 = vld [vmem:[%s2 + $0x10c] sm:$0xf]
        %v350 = vld [vmem:[%s2 + $0x110] sm:$0xf]
        %v351 = vld [vmem:[%s2 + $0x114] sm:$0xf]
        %v352 = vld [vmem:[%s2 + $0x118] sm:$0xf]
        %v353 = vld [vmem:[%s2 + $0x11c] sm:$0xf]
        %v354 = vld [vmem:[%s2 + $0x120] sm:$0xf]
        %v355 = vld [vmem:[%s2 + $0x124] sm:$0x3]
        %v356 = vld [vmem:[%s271] sm:$0x3]
        %v357 = vld [vmem:[%s271 + $0x8] sm:$0xc]
        %v358 = vld [vmem:[%s271] sm:$0x6]
        %v359 = vld [vmem:[%s271 + $0x8] sm:$0x8]
        %v360 = vld [vmem:[%s271 + $0xc] sm:$0x1]
        %v361 = vld [vmem:[%s271] sm:$0xc]
        %v362 = vld [vmem:[%s271 + $0xc] sm:$0x3]
        %v363 = vld [vmem:[%s271] sm:$0x8]
        %v364 = vld [vmem:[%s271 + $0x4] sm:$0x1]
        %v366 = vunpack.c.l.b16 %v357
        %v367 = vpack.c.b16 %v366, %v366
        %v368 = vrot.slane %v367, 2
        %369 = vrot.lane.b32.xlu0 %v368, 84
        %v370 = vpop.permute.xlu0 %369
        %v372 = vunpack.c.l.b16 %v358
        %v373 = vpack.c.b16 %v372, %v372
        %v374 = vrot.slane %v373, 1
        %375 = vrot.lane.b32.xlu0 %v374, 40
        %v376 = vpop.permute.xlu0 %375
        %v379 = vunpack.c.l.b16 %v359
        %v380 = vunpack.c.l.b16 %v360
        %v381 = vpack.c.b16 %v380, %v379
        %v382 = vrot.slane %v381, 3
        %383 = vrot.lane.b32.xlu0 %v382, 124
        %v384 = vpop.permute.xlu0 %383
        %v386 = vunpack.c.l.b16 %v361
        %v387 = vpack.c.b16 %v386, %v386
        %v388 = vrot.slane %v387, 2
        %389 = vrot.lane.b32.xlu0 %v388, 80
        %v390 = vpop.permute.xlu0 %389
        %v392 = vunpack.c.l.b16 %v362
        %v393 = vpack.c.b16 %v392, %v392
        %394 = vrot.lane.b32.xlu0 %v393, 36
        %v395 = vpop.permute.xlu0 %394
        %v398 = vunpack.c.l.b16 %v363
        %v399 = vunpack.c.l.b16 %v364
        %v400 = vpack.c.b16 %v399, %v398
        %v401 = vrot.slane %v400, 3
        %402 = vrot.lane.b32.xlu0 %v401, 120
        %v403 = vpop.permute.xlu0 %402
        %vm404 = vcmask 687104
        %v407 = vsel %vm404, %v356, %v370
        %vm408 = vcmask 326656
        %v410 = vsel %vm408, %v370, %v376
        %vm411 = vcmask 1014784
        %v413 = vsel %vm411, %v410, %v384
        %vm414 = vcmask 654336
        %v416 = vsel %vm414, %v384, %v390
        %vm417 = vcmask 293888
        %v419 = vsel %vm417, %v390, %v395
        %vm420 = vcmask 982016
        %v422 = vsel %vm420, %v419, %v403
        %s423 = scalar_lea.vmem %s271, 20
        %v424 = vld [vmem:[%s423] sm:$0x3]
        %v425 = vld [vmem:[%s423 + $0x8] sm:$0xc]
        %v426 = vld [vmem:[%s423] sm:$0x6]
        %v427 = vld [vmem:[%s423 + $0x8] sm:$0x8]
        %v428 = vld [vmem:[%s423 + $0xc] sm:$0x1]
        %v429 = vld [vmem:[%s423] sm:$0xc]
        %v430 = vld [vmem:[%s423 + $0xc] sm:$0x3]
        %v431 = vld [vmem:[%s423] sm:$0x8]
        %v432 = vld [vmem:[%s423 + $0x4] sm:$0x1]
        %v434 = vunpack.c.l.b16 %v425
        %v435 = vpack.c.b16 %v434, %v434
        %v436 = vrot.slane %v435, 2
        %437 = vrot.lane.b32.xlu0 %v436, 84
        %v438 = vpop.permute.xlu0 %437
        %v440 = vunpack.c.l.b16 %v426
        %v441 = vpack.c.b16 %v440, %v440
        %v442 = vrot.slane %v441, 1
        %443 = vrot.lane.b32.xlu0 %v442, 40
        %v444 = vpop.permute.xlu0 %443
        %v447 = vunpack.c.l.b16 %v427
        %v448 = vunpack.c.l.b16 %v428
        %v449 = vpack.c.b16 %v448, %v447
        %v450 = vrot.slane %v449, 3
        %451 = vrot.lane.b32.xlu0 %v450, 124
        %v452 = vpop.permute.xlu0 %451
        %v454 = vunpack.c.l.b16 %v429
        %v455 = vpack.c.b16 %v454, %v454
        %v456 = vrot.slane %v455, 2
        %457 = vrot.lane.b32.xlu0 %v456, 80
        %v458 = vpop.permute.xlu0 %457
        %v460 = vunpack.c.l.b16 %v430
        %v461 = vpack.c.b16 %v460, %v460
        %462 = vrot.lane.b32.xlu0 %v461, 36
        %v463 = vpop.permute.xlu0 %462
        %v466 = vunpack.c.l.b16 %v431
        %v467 = vunpack.c.l.b16 %v432
        %v468 = vpack.c.b16 %v467, %v466
        %v469 = vrot.slane %v468, 3
        %470 = vrot.lane.b32.xlu0 %v469, 120
        %v471 = vpop.permute.xlu0 %470
        %v474 = vsel %vm404, %v424, %v438
        %v476 = vsel %vm408, %v438, %v444
        %v478 = vsel %vm411, %v476, %v452
        %v480 = vsel %vm414, %v452, %v458
        %v482 = vsel %vm417, %v458, %v463
        %v484 = vsel %vm420, %v482, %v471
        %s485 = scalar_lea.vmem %s271, 40
        %v486 = vld [vmem:[%s485] sm:$0x3]
        %v487 = vld [vmem:[%s485 + $0x8] sm:$0xc]
        %v488 = vld [vmem:[%s485] sm:$0x6]
        %v489 = vld [vmem:[%s485 + $0x8] sm:$0x8]
        %v490 = vld [vmem:[%s485 + $0xc] sm:$0x1]
        %v491 = vld [vmem:[%s485] sm:$0xc]
        %v492 = vld [vmem:[%s485 + $0xc] sm:$0x3]
        %v493 = vld [vmem:[%s485] sm:$0x8]
        %v494 = vld [vmem:[%s485 + $0x4] sm:$0x1]
        %v496 = vunpack.c.l.b16 %v487
        %v497 = vpack.c.b16 %v496, %v496
        %v498 = vrot.slane %v497, 2
        %499 = vrot.lane.b32.xlu0 %v498, 84
        %v500 = vpop.permute.xlu0 %499
        %v502 = vunpack.c.l.b16 %v488
        %v503 = vpack.c.b16 %v502, %v502
        %v504 = vrot.slane %v503, 1
        %505 = vrot.lane.b32.xlu0 %v504, 40
        %v506 = vpop.permute.xlu0 %505
        %v509 = vunpack.c.l.b16 %v489
        %v510 = vunpack.c.l.b16 %v490
        %v511 = vpack.c.b16 %v510, %v509
        %v512 = vrot.slane %v511, 3
        %513 = vrot.lane.b32.xlu0 %v512, 124
        %v514 = vpop.permute.xlu0 %513
        %v516 = vunpack.c.l.b16 %v491
        %v517 = vpack.c.b16 %v516, %v516
        %v518 = vrot.slane %v517, 2
        %519 = vrot.lane.b32.xlu0 %v518, 80
        %v520 = vpop.permute.xlu0 %519
        %v522 = vunpack.c.l.b16 %v492
        %v523 = vpack.c.b16 %v522, %v522
        %524 = vrot.lane.b32.xlu0 %v523, 36
        %v525 = vpop.permute.xlu0 %524
        %v528 = vunpack.c.l.b16 %v493
        %v529 = vunpack.c.l.b16 %v494
        %v530 = vpack.c.b16 %v529, %v528
        %v531 = vrot.slane %v530, 3
        %532 = vrot.lane.b32.xlu0 %v531, 120
        %v533 = vpop.permute.xlu0 %532
        %v536 = vsel %vm404, %v486, %v500
        %v538 = vsel %vm408, %v500, %v506
        %v540 = vsel %vm411, %v538, %v514
        %v542 = vsel %vm414, %v514, %v520
        %v544 = vsel %vm417, %v520, %v525
        %v546 = vsel %vm420, %v544, %v533
        %s547 = scalar_lea.vmem %s271, 60
        %v548 = vld [vmem:[%s547] sm:$0x3]
        %v549 = vld [vmem:[%s547 + $0x8] sm:$0xc]
        %v550 = vld [vmem:[%s547] sm:$0x6]
        %v551 = vld [vmem:[%s547 + $0x8] sm:$0x8]
        %v552 = vld [vmem:[%s547 + $0xc] sm:$0x1]
        %v553 = vld [vmem:[%s547] sm:$0xc]
        %v554 = vld [vmem:[%s547 + $0xc] sm:$0x3]
        %v555 = vld [vmem:[%s547] sm:$0x8]
        %v556 = vld [vmem:[%s547 + $0x4] sm:$0x1]
        %v558 = vunpack.c.l.b16 %v549
        %v559 = vpack.c.b16 %v558, %v558
        %v560 = vrot.slane %v559, 2
        %561 = vrot.lane.b32.xlu0 %v560, 84
        %v562 = vpop.permute.xlu0 %561
        %v564 = vunpack.c.l.b16 %v550
        %v565 = vpack.c.b16 %v564, %v564
        %v566 = vrot.slane %v565, 1
        %567 = vrot.lane.b32.xlu0 %v566, 40
        %v568 = vpop.permute.xlu0 %567
        %v571 = vunpack.c.l.b16 %v551
        %v572 = vunpack.c.l.b16 %v552
        %v573 = vpack.c.b16 %v572, %v571
        %v574 = vrot.slane %v573, 3
        %575 = vrot.lane.b32.xlu0 %v574, 124
        %v576 = vpop.permute.xlu0 %575
        %v578 = vunpack.c.l.b16 %v553
        %v579 = vpack.c.b16 %v578, %v578
        %v580 = vrot.slane %v579, 2
        %581 = vrot.lane.b32.xlu0 %v580, 80
        %v582 = vpop.permute.xlu0 %581
        %v584 = vunpack.c.l.b16 %v554
        %v585 = vpack.c.b16 %v584, %v584
        %586 = vrot.lane.b32.xlu0 %v585, 36
        %v587 = vpop.permute.xlu0 %586
        %v590 = vunpack.c.l.b16 %v555
        %v591 = vunpack.c.l.b16 %v556
        %v592 = vpack.c.b16 %v591, %v590
        %v593 = vrot.slane %v592, 3
        %594 = vrot.lane.b32.xlu0 %v593, 120
        %v595 = vpop.permute.xlu0 %594
        %v598 = vsel %vm404, %v548, %v562
        %v600 = vsel %vm408, %v562, %v568
        %v602 = vsel %vm411, %v600, %v576
        %v604 = vsel %vm414, %v576, %v582
        %v606 = vsel %vm417, %v582, %v587
        %v608 = vsel %vm420, %v606, %v595
        %v609 = vld [vmem:[%s271 + $0x4] sm:$0x6]
        %v610 = vld [vmem:[%s271 + $0xc] sm:$0x8]
        %v611 = vld [vmem:[%s271 + $0x10] sm:$0x1]
        %v612 = vld [vmem:[%s271 + $0x4] sm:$0xc]
        %v613 = vld [vmem:[%s271 + $0x10] sm:$0x3]
        %v614 = vld [vmem:[%s271 + $0x4] sm:$0x8]
        %v615 = vld [vmem:[%s271 + $0x8] sm:$0x1]
        %v616 = vld [vmem:[%s271 + $0x10] sm:$0x6]
        %v617 = vld [vmem:[%s271 + $0x8] sm:$0x3]
        %v620 = vunpack.c.l.b16 %v610
        %v621 = vunpack.c.l.b16 %v611
        %v622 = vpack.c.b16 %v621, %v620
        %v623 = vrot.slane %v622, 2
        %624 = vrot.lane.b32.xlu0 %v623, 84
        %v625 = vpop.permute.xlu0 %624
        %v627 = vunpack.c.l.b16 %v612
        %v628 = vpack.c.b16 %v627, %v627
        %v629 = vrot.slane %v628, 1
        %630 = vrot.lane.b32.xlu0 %v629, 40
        %v631 = vpop.permute.xlu0 %630
        %v633 = vunpack.c.l.b16 %v613
        %v634 = vpack.c.b16 %v633, %v633
        %v635 = vrot.slane %v634, 7
        %636 = vrot.lane.b32.xlu0 %v635, 124
        %v637 = vpop.permute.xlu0 %636
        %v640 = vunpack.c.l.b16 %v614
        %v641 = vunpack.c.l.b16 %v615
        %v642 = vpack.c.b16 %v641, %v640
        %v643 = vrot.slane %v642, 2
        %644 = vrot.lane.b32.xlu0 %v643, 80
        %v645 = vpop.permute.xlu0 %644
        %v647 = vunpack.c.l.b16 %v616
        %v648 = vpack.c.b16 %v647, %v647
        %649 = vrot.lane.b32.xlu0 %v648, 36
        %v650 = vpop.permute.xlu0 %649
        %v652 = vunpack.c.l.b16 %v617
        %v653 = vpack.c.b16 %v652, %v652
        %v654 = vrot.slane %v653, 7
        %655 = vrot.lane.b32.xlu0 %v654, 120
        %v656 = vpop.permute.xlu0 %655
        %v659 = vsel %vm404, %v609, %v625
        %v661 = vsel %vm408, %v625, %v631
        %v663 = vsel %vm411, %v661, %v637
        %v665 = vsel %vm414, %v637, %v645
        %v667 = vsel %vm417, %v645, %v650
        %v669 = vsel %vm420, %v667, %v656
        %v670 = vld [vmem:[%s423 + $0x4] sm:$0x6]
        %v671 = vld [vmem:[%s423 + $0xc] sm:$0x8]
        %v672 = vld [vmem:[%s423 + $0x10] sm:$0x1]
        %v673 = vld [vmem:[%s423 + $0x4] sm:$0xc]
        %v674 = vld [vmem:[%s423 + $0x10] sm:$0x3]
        %v675 = vld [vmem:[%s423 + $0x4] sm:$0x8]
        %v676 = vld [vmem:[%s423 + $0x8] sm:$0x1]
        %v677 = vld [vmem:[%s423 + $0x10] sm:$0x6]
        %v678 = vld [vmem:[%s423 + $0x8] sm:$0x3]
        %v681 = vunpack.c.l.b16 %v671
        %v682 = vunpack.c.l.b16 %v672
        %v683 = vpack.c.b16 %v682, %v681
        %v684 = vrot.slane %v683, 2
        %685 = vrot.lane.b32.xlu0 %v684, 84
        %v686 = vpop.permute.xlu0 %685
        %v688 = vunpack.c.l.b16 %v673
        %v689 = vpack.c.b16 %v688, %v688
        %v690 = vrot.slane %v689, 1
        %691 = vrot.lane.b32.xlu0 %v690, 40
        %v692 = vpop.permute.xlu0 %691
        %v694 = vunpack.c.l.b16 %v674
        %v695 = vpack.c.b16 %v694, %v694
        %v696 = vrot.slane %v695, 7
        %697 = vrot.lane.b32.xlu0 %v696, 124
        %v698 = vpop.permute.xlu0 %697
        %v701 = vunpack.c.l.b16 %v675
        %v702 = vunpack.c.l.b16 %v676
        %v703 = vpack.c.b16 %v702, %v701
        %v704 = vrot.slane %v703, 2
        %705 = vrot.lane.b32.xlu0 %v704, 80
        %v706 = vpop.permute.xlu0 %705
        %v708 = vunpack.c.l.b16 %v677
        %v709 = vpack.c.b16 %v708, %v708
        %710 = vrot.lane.b32.xlu0 %v709, 36
        %v711 = vpop.permute.xlu0 %710
        %v713 = vunpack.c.l.b16 %v678
        %v714 = vpack.c.b16 %v713, %v713
        %v715 = vrot.slane %v714, 7
        %716 = vrot.lane.b32.xlu0 %v715, 120
        %v717 = vpop.permute.xlu0 %716
        %v720 = vsel %vm404, %v670, %v686
        %v722 = vsel %vm408, %v686, %v692
        %v724 = vsel %vm411, %v722, %v698
        %v726 = vsel %vm414, %v698, %v706
        %v728 = vsel %vm417, %v706, %v711
        %v730 = vsel %vm420, %v728, %v717
        %v731 = vld [vmem:[%s485 + $0x4] sm:$0x6]
        %v732 = vld [vmem:[%s485 + $0xc] sm:$0x8]
        %v733 = vld [vmem:[%s485 + $0x10] sm:$0x1]
        %v734 = vld [vmem:[%s485 + $0x4] sm:$0xc]
        %v735 = vld [vmem:[%s485 + $0x10] sm:$0x3]
        %v736 = vld [vmem:[%s485 + $0x4] sm:$0x8]
        %v737 = vld [vmem:[%s485 + $0x8] sm:$0x1]
        %v738 = vld [vmem:[%s485 + $0x10] sm:$0x6]
        %v739 = vld [vmem:[%s485 + $0x8] sm:$0x3]
        %v742 = vunpack.c.l.b16 %v732
        %v743 = vunpack.c.l.b16 %v733
        %v744 = vpack.c.b16 %v743, %v742
        %v745 = vrot.slane %v744, 2
        %746 = vrot.lane.b32.xlu0 %v745, 84
        %v747 = vpop.permute.xlu0 %746
        %v749 = vunpack.c.l.b16 %v734
        %v750 = vpack.c.b16 %v749, %v749
        %v751 = vrot.slane %v750, 1
        %752 = vrot.lane.b32.xlu0 %v751, 40
        %v753 = vpop.permute.xlu0 %752
        %v755 = vunpack.c.l.b16 %v735
        %v756 = vpack.c.b16 %v755, %v755
        %v757 = vrot.slane %v756, 7
        %758 = vrot.lane.b32.xlu0 %v757, 124
        %v759 = vpop.permute.xlu0 %758
        %v762 = vunpack.c.l.b16 %v736
        %v763 = vunpack.c.l.b16 %v737
        %v764 = vpack.c.b16 %v763, %v762
        %v765 = vrot.slane %v764, 2
        %766 = vrot.lane.b32.xlu0 %v765, 80
        %v767 = vpop.permute.xlu0 %766
        %v769 = vunpack.c.l.b16 %v738
        %v770 = vpack.c.b16 %v769, %v769
        %771 = vrot.lane.b32.xlu0 %v770, 36
        %v772 = vpop.permute.xlu0 %771
        %v774 = vunpack.c.l.b16 %v739
        %v775 = vpack.c.b16 %v774, %v774
        %v776 = vrot.slane %v775, 7
        %777 = vrot.lane.b32.xlu0 %v776, 120
        %v778 = vpop.permute.xlu0 %777
        %v781 = vsel %vm404, %v731, %v747
        %v783 = vsel %vm408, %v747, %v753
        %v785 = vsel %vm411, %v783, %v759
        %v787 = vsel %vm414, %v759, %v767
        %v789 = vsel %vm417, %v767, %v772
        %v791 = vsel %vm420, %v789, %v778
        %v792 = vld [vmem:[%s547 + $0x4] sm:$0x6]
        %v793 = vld [vmem:[%s547 + $0xc] sm:$0x8]
        %v794 = vld [vmem:[%s547 + $0x10] sm:$0x1]
        %v795 = vld [vmem:[%s547 + $0x4] sm:$0xc]
        %v796 = vld [vmem:[%s547 + $0x10] sm:$0x3]
        %v797 = vld [vmem:[%s547 + $0x4] sm:$0x8]
        %v798 = vld [vmem:[%s547 + $0x8] sm:$0x1]
        %v799 = vld [vmem:[%s547 + $0x10] sm:$0x6]
        %v800 = vld [vmem:[%s547 + $0x8] sm:$0x3]
        %v803 = vunpack.c.l.b16 %v793
        %v804 = vunpack.c.l.b16 %v794
        %v805 = vpack.c.b16 %v804, %v803
        %v806 = vrot.slane %v805, 2
        %807 = vrot.lane.b32.xlu0 %v806, 84
        %v808 = vpop.permute.xlu0 %807
        %v810 = vunpack.c.l.b16 %v795
        %v811 = vpack.c.b16 %v810, %v810
        %v812 = vrot.slane %v811, 1
        %813 = vrot.lane.b32.xlu0 %v812, 40
        %v814 = vpop.permute.xlu0 %813
        %v816 = vunpack.c.l.b16 %v796
        %v817 = vpack.c.b16 %v816, %v816
        %v818 = vrot.slane %v817, 7
        %819 = vrot.lane.b32.xlu0 %v818, 124
        %v820 = vpop.permute.xlu0 %819
        %v823 = vunpack.c.l.b16 %v797
        %v824 = vunpack.c.l.b16 %v798
        %v825 = vpack.c.b16 %v824, %v823
        %v826 = vrot.slane %v825, 2
        %827 = vrot.lane.b32.xlu0 %v826, 80
        %v828 = vpop.permute.xlu0 %827
        %v830 = vunpack.c.l.b16 %v799
        %v831 = vpack.c.b16 %v830, %v830
        %832 = vrot.lane.b32.xlu0 %v831, 36
        %v833 = vpop.permute.xlu0 %832
        %v835 = vunpack.c.l.b16 %v800
        %v836 = vpack.c.b16 %v835, %v835
        %v837 = vrot.slane %v836, 7
        %838 = vrot.lane.b32.xlu0 %v837, 120
        %v839 = vpop.permute.xlu0 %838
        %v842 = vsel %vm404, %v792, %v808
        %v844 = vsel %vm408, %v808, %v814
        %v846 = vsel %vm411, %v844, %v820
        %v848 = vsel %vm414, %v820, %v828
        %v850 = vsel %vm417, %v828, %v833
        %v852 = vsel %vm420, %v850, %v839
        %v853 = vld [vmem:[%s271 + $0xc] sm:$0x6]
        %v854 = vrot.slane %v373, 7
        %855 = vrot.lane.b32.xlu0 %v854, 84
        %v856 = vpop.permute.xlu0 %855
        %v857 = vrot.slane %v381, 1
        %858 = vrot.lane.b32.xlu0 %v857, 40
        %v859 = vpop.permute.xlu0 %858
        %860 = vrot.lane.b32.xlu0 %v387, 124
        %v861 = vpop.permute.xlu0 %860
        %v862 = vrot.slane %v393, 6
        %863 = vrot.lane.b32.xlu0 %v862, 80
        %v864 = vpop.permute.xlu0 %863
        %v865 = vrot.slane %v400, 1
        %866 = vrot.lane.b32.xlu0 %v865, 36
        %v867 = vpop.permute.xlu0 %866
        %v869 = vunpack.c.l.b16 %v853
        %v870 = vpack.c.b16 %v869, %v869
        %v871 = vrot.slane %v870, 7
        %872 = vrot.lane.b32.xlu0 %v871, 120
        %v873 = vpop.permute.xlu0 %872
        %v876 = vsel %vm404, %v357, %v856
        %v878 = vsel %vm408, %v856, %v859
        %v880 = vsel %vm411, %v878, %v861
        %v882 = vsel %vm414, %v861, %v864
        %v884 = vsel %vm417, %v864, %v867
        %v886 = vsel %vm420, %v884, %v873
        %v887 = vld [vmem:[%s423 + $0xc] sm:$0x6]
        %v888 = vrot.slane %v441, 7
        %889 = vrot.lane.b32.xlu0 %v888, 84
        %v890 = vpop.permute.xlu0 %889
        %v891 = vrot.slane %v449, 1
        %892 = vrot.lane.b32.xlu0 %v891, 40
        %v893 = vpop.permute.xlu0 %892
        %894 = vrot.lane.b32.xlu0 %v455, 124
        %v895 = vpop.permute.xlu0 %894
        %v896 = vrot.slane %v461, 6
        %897 = vrot.lane.b32.xlu0 %v896, 80
        %v898 = vpop.permute.xlu0 %897
        %v899 = vrot.slane %v468, 1
        %900 = vrot.lane.b32.xlu0 %v899, 36
        %v901 = vpop.permute.xlu0 %900
        %v903 = vunpack.c.l.b16 %v887
        %v904 = vpack.c.b16 %v903, %v903
        %v905 = vrot.slane %v904, 7
        %906 = vrot.lane.b32.xlu0 %v905, 120
        %v907 = vpop.permute.xlu0 %906
        %v910 = vsel %vm404, %v425, %v890
        %v912 = vsel %vm408, %v890, %v893
        %v914 = vsel %vm411, %v912, %v895
        %v916 = vsel %vm414, %v895, %v898
        %v918 = vsel %vm417, %v898, %v901
        %v920 = vsel %vm420, %v918, %v907
        %v921 = vld [vmem:[%s485 + $0xc] sm:$0x6]
        %v922 = vrot.slane %v503, 7
        %923 = vrot.lane.b32.xlu0 %v922, 84
        %v924 = vpop.permute.xlu0 %923
        %v925 = vrot.slane %v511, 1
        %926 = vrot.lane.b32.xlu0 %v925, 40
        %v927 = vpop.permute.xlu0 %926
        %928 = vrot.lane.b32.xlu0 %v517, 124
        %v929 = vpop.permute.xlu0 %928
        %v930 = vrot.slane %v523, 6
        %931 = vrot.lane.b32.xlu0 %v930, 80
        %v932 = vpop.permute.xlu0 %931
        %v933 = vrot.slane %v530, 1
        %934 = vrot.lane.b32.xlu0 %v933, 36
        %v935 = vpop.permute.xlu0 %934
        %v937 = vunpack.c.l.b16 %v921
        %v938 = vpack.c.b16 %v937, %v937
        %v939 = vrot.slane %v938, 7
        %940 = vrot.lane.b32.xlu0 %v939, 120
        %v941 = vpop.permute.xlu0 %940
        %v944 = vsel %vm404, %v487, %v924
        %v946 = vsel %vm408, %v924, %v927
        %v948 = vsel %vm411, %v946, %v929
        %v950 = vsel %vm414, %v929, %v932
        %v952 = vsel %vm417, %v932, %v935
        %v954 = vsel %vm420, %v952, %v941
        %v955 = vld [vmem:[%s547 + $0xc] sm:$0x6]
        %v956 = vrot.slane %v565, 7
        %957 = vrot.lane.b32.xlu0 %v956, 84
        %v958 = vpop.permute.xlu0 %957
        %v959 = vrot.slane %v573, 1
        %960 = vrot.lane.b32.xlu0 %v959, 40
        %v961 = vpop.permute.xlu0 %960
        %962 = vrot.lane.b32.xlu0 %v579, 124
        %v963 = vpop.permute.xlu0 %962
        %v964 = vrot.slane %v585, 6
        %965 = vrot.lane.b32.xlu0 %v964, 80
        %v966 = vpop.permute.xlu0 %965
        %v967 = vrot.slane %v592, 1
        %968 = vrot.lane.b32.xlu0 %v967, 36
        %v969 = vpop.permute.xlu0 %968
        %v971 = vunpack.c.l.b16 %v955
        %v972 = vpack.c.b16 %v971, %v971
        %v973 = vrot.slane %v972, 7
        %974 = vrot.lane.b32.xlu0 %v973, 120
        %v975 = vpop.permute.xlu0 %974
        %v978 = vsel %vm404, %v549, %v958
        %v980 = vsel %vm408, %v958, %v961
        %v982 = vsel %vm411, %v980, %v963
        %v984 = vsel %vm414, %v963, %v966
        %v986 = vsel %vm417, %v966, %v969
        %v988 = vsel %vm420, %v986, %v975
        %v989 = vld [vmem:[%s271 + $0x10] sm:$0xc]
        %v990 = vrot.slane %v628, 7
        %991 = vrot.lane.b32.xlu0 %v990, 84
        %v992 = vpop.permute.xlu0 %991
        %v993 = vrot.slane %v634, 5
        %994 = vrot.lane.b32.xlu0 %v993, 40
        %v995 = vpop.permute.xlu0 %994
        %996 = vrot.lane.b32.xlu0 %v642, 124
        %v997 = vpop.permute.xlu0 %996
        %v998 = vrot.slane %v648, 6
        %999 = vrot.lane.b32.xlu0 %v998, 80
        %v1000 = vpop.permute.xlu0 %999
        %v1001 = vrot.slane %v653, 5
        %1002 = vrot.lane.b32.xlu0 %v1001, 36
        %v1003 = vpop.permute.xlu0 %1002
        %v1005 = vunpack.c.l.b16 %v989
        %v1006 = vpack.c.b16 %v1005, %v1005
        %v1007 = vrot.slane %v1006, 7
        %1008 = vrot.lane.b32.xlu0 %v1007, 120
        %v1009 = vpop.permute.xlu0 %1008
        %v1012 = vsel %vm404, %v622, %v992
        %v1014 = vsel %vm408, %v992, %v995
        %v1016 = vsel %vm411, %v1014, %v997
        %v1018 = vsel %vm414, %v997, %v1000
        %v1020 = vsel %vm417, %v1000, %v1003
        %v1022 = vsel %vm420, %v1020, %v1009
        %v1023 = vld [vmem:[%s423 + $0x10] sm:$0xc]
        %v1024 = vrot.slane %v689, 7
        %1025 = vrot.lane.b32.xlu0 %v1024, 84
        %v1026 = vpop.permute.xlu0 %1025
        %v1027 = vrot.slane %v695, 5
        %1028 = vrot.lane.b32.xlu0 %v1027, 40
        %v1029 = vpop.permute.xlu0 %1028
        %1030 = vrot.lane.b32.xlu0 %v703, 124
        %v1031 = vpop.permute.xlu0 %1030
        %v1032 = vrot.slane %v709, 6
        %1033 = vrot.lane.b32.xlu0 %v1032, 80
        %v1034 = vpop.permute.xlu0 %1033
        %v1035 = vrot.slane %v714, 5
        %1036 = vrot.lane.b32.xlu0 %v1035, 36
        %v1037 = vpop.permute.xlu0 %1036
        %v1039 = vunpack.c.l.b16 %v1023
        %v1040 = vpack.c.b16 %v1039, %v1039
        %v1041 = vrot.slane %v1040, 7
        %1042 = vrot.lane.b32.xlu0 %v1041, 120
        %v1043 = vpop.permute.xlu0 %1042
        %v1046 = vsel %vm404, %v683, %v1026
        %v1048 = vsel %vm408, %v1026, %v1029
        %v1050 = vsel %vm411, %v1048, %v1031
        %v1052 = vsel %vm414, %v1031, %v1034
        %v1054 = vsel %vm417, %v1034, %v1037
        %v1056 = vsel %vm420, %v1054, %v1043
        %v1057 = vld [vmem:[%s485 + $0x10] sm:$0xc]
        %v1058 = vrot.slane %v750, 7
        %1059 = vrot.lane.b32.xlu0 %v1058, 84
        %v1060 = vpop.permute.xlu0 %1059
        %v1061 = vrot.slane %v756, 5
        %1062 = vrot.lane.b32.xlu0 %v1061, 40
        %v1063 = vpop.permute.xlu0 %1062
        %1064 = vrot.lane.b32.xlu0 %v764, 124
        %v1065 = vpop.permute.xlu0 %1064
        %v1066 = vrot.slane %v770, 6
        %1067 = vrot.lane.b32.xlu0 %v1066, 80
        %v1068 = vpop.permute.xlu0 %1067
        %v1069 = vrot.slane %v775, 5
        %1070 = vrot.lane.b32.xlu0 %v1069, 36
        %v1071 = vpop.permute.xlu0 %1070
        %v1073 = vunpack.c.l.b16 %v1057
        %v1074 = vpack.c.b16 %v1073, %v1073
        %v1075 = vrot.slane %v1074, 7
        %1076 = vrot.lane.b32.xlu0 %v1075, 120
        %v1077 = vpop.permute.xlu0 %1076
        %v1080 = vsel %vm404, %v744, %v1060
        %v1082 = vsel %vm408, %v1060, %v1063
        %v1084 = vsel %vm411, %v1082, %v1065
        %v1086 = vsel %vm414, %v1065, %v1068
        %v1088 = vsel %vm417, %v1068, %v1071
        %v1090 = vsel %vm420, %v1088, %v1077
        %v1091 = vld [vmem:[%s547 + $0x10] sm:$0xc]
        %v1092 = vrot.slane %v811, 7
        %1093 = vrot.lane.b32.xlu0 %v1092, 84
        %v1094 = vpop.permute.xlu0 %1093
        %v1095 = vrot.slane %v817, 5
        %1096 = vrot.lane.b32.xlu0 %v1095, 40
        %v1097 = vpop.permute.xlu0 %1096
        %1098 = vrot.lane.b32.xlu0 %v825, 124
        %v1099 = vpop.permute.xlu0 %1098
        %v1100 = vrot.slane %v831, 6
        %1101 = vrot.lane.b32.xlu0 %v1100, 80
        %v1102 = vpop.permute.xlu0 %1101
        %v1103 = vrot.slane %v836, 5
        %1104 = vrot.lane.b32.xlu0 %v1103, 36
        %v1105 = vpop.permute.xlu0 %1104
        %v1107 = vunpack.c.l.b16 %v1091
        %v1108 = vpack.c.b16 %v1107, %v1107
        %v1109 = vrot.slane %v1108, 7
        %1110 = vrot.lane.b32.xlu0 %v1109, 120
        %v1111 = vpop.permute.xlu0 %1110
        %v1114 = vsel %vm404, %v805, %v1094
        %v1116 = vsel %vm408, %v1094, %v1097
        %v1118 = vsel %vm411, %v1116, %v1099
        %v1120 = vsel %vm414, %v1099, %v1102
        %v1122 = vsel %vm417, %v1102, %v1105
        %v1124 = vsel %vm420, %v1122, %v1111
        %v1129 = vrot.slane %v474, 6
        %v1130 = vrot.slane %v478, 6
        %v1131 = vrot.slane %v480, 6
        %v1132 = vrot.slane %v484, 6
        %v1133 = vrot.slane %v471, 6
        %v1138 = vrot.slane %v536, 4
        %v1139 = vrot.slane %v540, 4
        %v1140 = vrot.slane %v542, 4
        %v1141 = vrot.slane %v546, 4
        %v1142 = vrot.slane %v533, 4
        %v1147 = vrot.slane %v598, 2
        %v1148 = vrot.slane %v602, 2
        %v1149 = vrot.slane %v604, 2
        %v1150 = vrot.slane %v608, 2
        %v1151 = vrot.slane %v595, 2
        %v1156 = vrot.slane %v659, 1
        %v1157 = vrot.slane %v663, 1
        %v1158 = vrot.slane %v665, 1
        %v1159 = vrot.slane %v669, 1
        %v1160 = vrot.slane %v656, 1
        %v1165 = vrot.slane %v720, 7
        %v1166 = vrot.slane %v724, 7
        %v1167 = vrot.slane %v726, 7
        %v1168 = vrot.slane %v730, 7
        %v1169 = vrot.slane %v717, 7
        %v1174 = vrot.slane %v781, 5
        %v1175 = vrot.slane %v785, 5
        %v1176 = vrot.slane %v787, 5
        %v1177 = vrot.slane %v791, 5
        %v1178 = vrot.slane %v778, 5
        %v1183 = vrot.slane %v842, 3
        %v1184 = vrot.slane %v846, 3
        %v1185 = vrot.slane %v848, 3
        %v1186 = vrot.slane %v852, 3
        %v1187 = vrot.slane %v839, 3
        %v1192 = vrot.slane %v876, 2
        %v1193 = vrot.slane %v880, 2
        %v1194 = vrot.slane %v882, 2
        %v1195 = vrot.slane %v886, 2
        %v1196 = vrot.slane %v873, 2
        %v1201 = vrot.slane %v944, 6
        %v1202 = vrot.slane %v948, 6
        %v1203 = vrot.slane %v950, 6
        %v1204 = vrot.slane %v954, 6
        %v1205 = vrot.slane %v941, 6
        %v1210 = vrot.slane %v978, 4
        %v1211 = vrot.slane %v982, 4
        %v1212 = vrot.slane %v984, 4
        %v1213 = vrot.slane %v988, 4
        %v1214 = vrot.slane %v975, 4
        %v1219 = vrot.slane %v1012, 3
        %v1220 = vrot.slane %v1016, 3
        %v1221 = vrot.slane %v1018, 3
        %v1222 = vrot.slane %v1022, 3
        %v1223 = vrot.slane %v1009, 3
        %v1228 = vrot.slane %v1046, 1
        %v1229 = vrot.slane %v1050, 1
        %v1230 = vrot.slane %v1052, 1
        %v1231 = vrot.slane %v1056, 1
        %v1232 = vrot.slane %v1043, 1
        %v1237 = vrot.slane %v1080, 7
        %v1238 = vrot.slane %v1084, 7
        %v1239 = vrot.slane %v1086, 7
        %v1240 = vrot.slane %v1090, 7
        %v1241 = vrot.slane %v1077, 7
        %v1246 = vrot.slane %v1114, 5
        %v1247 = vrot.slane %v1118, 5
        %v1248 = vrot.slane %v1120, 5
        %v1249 = vrot.slane %v1124, 5
        %v1250 = vrot.slane %v1111, 5
        %vm1251 = vcmask 1041408
        %v1253 = vsel %vm1251, %v407, %v1129
        %v1255 = vsel %vm1251, %v413, %v1130
        %v1257 = vsel %vm1251, %v416, %v1131
        %v1259 = vsel %vm1251, %v422, %v1132
        %v1261 = vsel %vm1251, %v403, %v1133
        %vm1262 = vcmask 1043456
        %v1264 = vsel %vm1262, %v1253, %v1138
        %v1266 = vsel %vm1262, %v1255, %v1139
        %v1268 = vsel %vm1262, %v1257, %v1140
        %v1270 = vsel %vm1262, %v1259, %v1141
        %v1272 = vsel %vm1262, %v1261, %v1142
        %vm1273 = vcmask 1045504
        %v1275 = vsel %vm1273, %v1264, %v1147
        %v1278 = vsel %vm1273, %v1266, %v1148
        %v1281 = vsel %vm1273, %v1268, %v1149
        %v1284 = vsel %vm1273, %v1270, %v1150
        %v1287 = vsel %vm1273, %v1272, %v1151
        %v1290 = vsel %vm1251, %v1156, %v1165
        %v1293 = vsel %vm1251, %v1157, %v1166
        %v1296 = vsel %vm1251, %v1158, %v1167
        %v1299 = vsel %vm1251, %v1159, %v1168
        %v1302 = vsel %vm1251, %v1160, %v1169
        %v1304 = vsel %vm1262, %v1290, %v1174
        %v1306 = vsel %vm1262, %v1293, %v1175
        %v1308 = vsel %vm1262, %v1296, %v1176
        %v1310 = vsel %vm1262, %v1299, %v1177
        %v1312 = vsel %vm1262, %v1302, %v1178
        %v1314 = vsel %vm1273, %v1304, %v1183
        %v1317 = vsel %vm1273, %v1306, %v1184
        %v1320 = vsel %vm1273, %v1308, %v1185
        %v1323 = vsel %vm1273, %v1310, %v1186
        %v1326 = vsel %vm1273, %v1312, %v1187
        %v1328 = vsel %vm1251, %v1192, %v910
        %v1330 = vsel %vm1251, %v1193, %v914
        %v1332 = vsel %vm1251, %v1194, %v916
        %v1334 = vsel %vm1251, %v1195, %v920
        %v1336 = vsel %vm1251, %v1196, %v907
        %v1338 = vsel %vm1262, %v1328, %v1201
        %v1340 = vsel %vm1262, %v1330, %v1202
        %v1342 = vsel %vm1262, %v1332, %v1203
        %v1344 = vsel %vm1262, %v1334, %v1204
        %v1346 = vsel %vm1262, %v1336, %v1205
        %v1348 = vsel %vm1273, %v1338, %v1210
        %v1351 = vsel %vm1273, %v1340, %v1211
        %v1354 = vsel %vm1273, %v1342, %v1212
        %v1357 = vsel %vm1273, %v1344, %v1213
        %v1360 = vsel %vm1273, %v1346, %v1214
        %v1363 = vsel %vm1251, %v1219, %v1228
        %v1366 = vsel %vm1251, %v1220, %v1229
        %v1369 = vsel %vm1251, %v1221, %v1230
        %v1372 = vsel %vm1251, %v1222, %v1231
        %v1375 = vsel %vm1251, %v1223, %v1232
        %v1377 = vsel %vm1262, %v1363, %v1237
        %v1379 = vsel %vm1262, %v1366, %v1238
        %v1381 = vsel %vm1262, %v1369, %v1239
        %v1383 = vsel %vm1262, %v1372, %v1240
        %v1385 = vsel %vm1262, %v1375, %v1241
        %v1387 = vsel %vm1273, %v1377, %v1246
        %v1390 = vsel %vm1273, %v1379, %v1247
        %v1393 = vsel %vm1273, %v1381, %v1248
        %v1396 = vsel %vm1273, %v1383, %v1249
        %v1399 = vsel %vm1273, %v1385, %v1250
        %v1474 = vunpack.c.l.b16 %v282
        %v1475 = vunpack.c.l.b16 %v283
        %v1476 = vunpack.c.l.b16 %v284
        %v1477 = vunpack.c.l.b16 %v285
        %v1478 = vunpack.c.l.b16 %v286
        %v1479 = vunpack.c.l.b16 %v287
        %v1480 = vunpack.c.l.b16 %v288
        %v1481 = vunpack.c.l.b16 %v289
        %v1482 = vunpack.c.l.b16 %v290
        %v1483 = vunpack.c.l.b16 %v291
        %v1484 = vunpack.c.l.b16 %v292
        %v1485 = vunpack.c.l.b16 %v293
        %v1486 = vunpack.c.l.b16 %v294
        %v1487 = vunpack.c.l.b16 %v295
        %v1488 = vunpack.c.l.b16 %v296
        %v1489 = vunpack.c.l.b16 %v297
        %v1490 = vunpack.c.l.b16 %v298
        %v1491 = vunpack.c.l.b16 %v299
        %v1492 = vunpack.c.l.b16 %v300
        %v1493 = vunpack.c.l.b16 %v301
        %v1494 = vunpack.c.l.b16 %v302
        %v1495 = vunpack.c.l.b16 %v303
        %v1496 = vunpack.c.l.b16 %v304
        %v1497 = vunpack.c.l.b16 %v305
        %v1498 = vunpack.c.l.b16 %v306
        %v1499 = vunpack.c.l.b16 %v307
        %v1500 = vunpack.c.l.b16 %v308
        %v1501 = vunpack.c.l.b16 %v309
        %v1502 = vunpack.c.l.b16 %v310
        %v1503 = vunpack.c.l.b16 %v311
        %v1504 = vunpack.c.l.b16 %v312
        %v1505 = vunpack.c.l.b16 %v313
        %v1506 = vunpack.c.l.b16 %v314
        %v1507 = vunpack.c.l.b16 %v315
        %v1508 = vunpack.c.l.b16 %v316
        %v1509 = vunpack.c.l.b16 %v317
        %v1510 = vunpack.c.l.b16 %v318
        %v1511 = vunpack.c.l.b16 %v319
        %v1512 = vunpack.c.l.b16 %v320
        %v1513 = vunpack.c.l.b16 %v321
        %v1514 = vunpack.c.l.b16 %v322
        %v1515 = vunpack.c.l.b16 %v323
        %v1516 = vunpack.c.l.b16 %v324
        %v1517 = vunpack.c.l.b16 %v325
        %v1518 = vunpack.c.l.b16 %v326
        %v1519 = vunpack.c.l.b16 %v327
        %v1520 = vunpack.c.l.b16 %v328
        %v1521 = vunpack.c.l.b16 %v329
        %v1522 = vunpack.c.l.b16 %v330
        %v1523 = vunpack.c.l.b16 %v331
        %v1524 = vunpack.c.l.b16 %v332
        %v1525 = vunpack.c.l.b16 %v333
        %v1526 = vunpack.c.l.b16 %v334
        %v1527 = vunpack.c.l.b16 %v335
        %v1528 = vunpack.c.l.b16 %v336
        %v1529 = vunpack.c.l.b16 %v337
        %v1530 = vunpack.c.l.b16 %v338
        %v1531 = vunpack.c.l.b16 %v339
        %v1532 = vunpack.c.l.b16 %v340
        %v1533 = vunpack.c.l.b16 %v341
        %v1534 = vunpack.c.l.b16 %v342
        %v1535 = vunpack.c.l.b16 %v343
        %v1536 = vunpack.c.l.b16 %v344
        %v1537 = vunpack.c.l.b16 %v345
        %v1538 = vunpack.c.l.b16 %v346
        %v1539 = vunpack.c.l.b16 %v347
        %v1540 = vunpack.c.l.b16 %v348
        %v1541 = vunpack.c.l.b16 %v349
        %v1542 = vunpack.c.l.b16 %v350
        %v1543 = vunpack.c.l.b16 %v351
        %v1544 = vunpack.c.l.b16 %v352
        %v1545 = vunpack.c.l.b16 %v353
        %v1546 = vunpack.c.l.b16 %v354
        %v1547 = vunpack.c.l.b16 %v355
        %v1548 = vpack.c.b16 %v1475, %v1474
        %v1549 = vpack.c.b16 %v1477, %v1476
        %v1550 = vpack.c.b16 %v1479, %v1478
        %v1551 = vpack.c.b16 %v1481, %v1480
        %v1552 = vpack.c.b16 %v1483, %v1482
        %v1553 = vpack.c.b16 %v1485, %v1484
        %v1554 = vpack.c.b16 %v1487, %v1486
        %v1555 = vpack.c.b16 %v1489, %v1488
        %v1556 = vpack.c.b16 %v1491, %v1490
        %v1557 = vpack.c.b16 %v1493, %v1492
        %v1558 = vpack.c.b16 %v1495, %v1494
        %v1559 = vpack.c.b16 %v1497, %v1496
        %v1560 = vpack.c.b16 %v1499, %v1498
        %v1561 = vpack.c.b16 %v1501, %v1500
        %v1562 = vpack.c.b16 %v1503, %v1502
        %v1563 = vpack.c.b16 %v1505, %v1504
        %v1564 = vpack.c.b16 %v1507, %v1506
        %v1565 = vpack.c.b16 %v1509, %v1508
        %v1566 = vpack.c.b16 %v1511, %v1510
        %v1567 = vpack.c.b16 %v1513, %v1512
        %v1568 = vpack.c.b16 %v1515, %v1514
        %v1569 = vpack.c.b16 %v1517, %v1516
        %v1570 = vpack.c.b16 %v1519, %v1518
        %v1571 = vpack.c.b16 %v1521, %v1520
        %v1572 = vpack.c.b16 %v1523, %v1522
        %v1573 = vpack.c.b16 %v1525, %v1524
        %v1574 = vpack.c.b16 %v1527, %v1526
        %v1575 = vpack.c.b16 %v1529, %v1528
        %v1576 = vpack.c.b16 %v1531, %v1530
        %v1577 = vpack.c.b16 %v1533, %v1532
        %v1578 = vpack.c.b16 %v1535, %v1534
        %v1579 = vpack.c.b16 %v1537, %v1536
        %v1580 = vpack.c.b16 %v1539, %v1538
        %v1581 = vpack.c.b16 %v1541, %v1540
        %v1582 = vpack.c.b16 %v1543, %v1542
        %v1583 = vpack.c.b16 %v1545, %v1544
        %v1584 = vpack.c.b16 %v1547, %v1546
        %vm1621 = vcmask 621568
        %v1622 = vsel %vm1621, %v1287, 0
        %v1624 = vsel %vm1621, %v1326, 0
        %v1626 = vsel %vm1621, %v1360, 0
        %v1628 = vsel %vm1621, %v1399, 0
        %v1631 = vsel %vm1273, %v1584, 0
        %1633 = vmatprep.subr.bf16.mxu0 0
        %1634 = vmatpush1.bf16.msra.mxu0 %v1548
        %1635 = vmatprep.subr.bf16.mxu0 0
        %1636 = vmatpush1.bf16.msra.mxu0 %v1549
        %1637 = vmatprep.subr.bf16.mxu0 0
        %1638 = vmatpush1.bf16.msra.mxu0 %v1550
        %1639 = vmatprep.subr.bf16.mxu0 0
        %1640 = vmatpush1.bf16.msra.mxu0 %v1551
        %1641 = vmatprep.subr.bf16.mxu0 0
        %1642 = vmatpush1.bf16.msra.mxu0 %v1552
        %1643 = vmatprep.subr.bf16.mxu0 0
        %1644 = vmatpush1.bf16.msra.mxu0 %v1553
        %1645 = vmatprep.subr.bf16.mxu0 0
        %1646 = vmatpush1.bf16.msra.mxu0 %v1554
        %1647 = vmatprep.subr.bf16.mxu0 0
        %1648 = vmatpush1.bf16.msra.mxu0 %v1555
        %1649 = vmatprep.subr.bf16.mxu0 0
        %1650 = vmatpush1.bf16.msra.mxu0 %v1556
        %1651 = vmatprep.subr.bf16.mxu0 0
        %1652 = vmatpush1.bf16.msra.mxu0 %v1557
        %1653 = vmatprep.subr.bf16.mxu0 0
        %1654 = vmatpush1.bf16.msra.mxu0 %v1558
        %1655 = vmatprep.subr.bf16.mxu0 0
        %1656 = vmatpush1.bf16.msra.mxu0 %v1559
        %1657 = vmatprep.subr.bf16.mxu0 0
        %1658 = vmatpush1.bf16.msra.mxu0 %v1560
        %1659 = vmatprep.subr.bf16.mxu0 0
        %1660 = vmatpush1.bf16.msra.mxu0 %v1561
        %1661 = vmatprep.subr.bf16.mxu0 0
        %1662 = vmatpush1.bf16.msra.mxu0 %v1562
        %1663 = vmatprep.subr.bf16.mxu0 0
        %1664 = vmatpush1.bf16.msra.mxu0 %v1563
        %1665 = vmatprep.mubr.bf16.mxu0 %v1278
        %1666 = vmatmul.mubr.bf16.gmra.mrb[0].mxu0 %v1275
        %v1667 = vpop.f32.mrb[0].mxu0
        %v1668 = vadd.f32 0.0, %v1667
        %v1669 = vpop.f32.mrb[0].mxu0
        %v1670 = vpop.f32.mrb[0].mxu0
        %v1671 = vadd.f32 0.0, %v1670
        %v1672 = vpop.f32.mrb[0].mxu0
        %1673 = vmatprep.mubr.bf16.mxu0 %v1317
        %1674 = vmatmul.mubr.bf16.gmra.mrb[0].mxu0 %v1314
        %v1675 = vpop.f32.mrb[0].mxu0
        %v1676 = vadd.f32 0.0, %v1675
        %v1677 = vpop.f32.mrb[0].mxu0
        %v1678 = vpop.f32.mrb[0].mxu0
        %v1679 = vadd.f32 0.0, %v1678
        %v1680 = vpop.f32.mrb[0].mxu0
        %1681 = vmatprep.mubr.bf16.mxu0 %v1351
        %1682 = vmatmul.mubr.bf16.gmra.mrb[0].mxu0 %v1348
        %v1683 = vpop.f32.mrb[0].mxu0
        %v1684 = vadd.f32 0.0, %v1683
        %v1685 = vpop.f32.mrb[0].mxu0
        %v1686 = vpop.f32.mrb[0].mxu0
        %v1687 = vadd.f32 0.0, %v1686
        %v1688 = vpop.f32.mrb[0].mxu0
        %1689 = vmatprep.mubr.bf16.mxu0 %v1390
        %1690 = vmatmul.mubr.bf16.gmra.mrb[0].mxu0 %v1387
        %v1691 = vpop.f32.mrb[0].mxu0
        %v1692 = vadd.f32 0.0, %v1691
        %v1693 = vpop.f32.mrb[0].mxu0
        %v1694 = vpop.f32.mrb[0].mxu0
        %v1695 = vadd.f32 0.0, %v1694
        %v1696 = vpop.f32.mrb[0].mxu0
        %1697 = vdwg.mxu0
        %1698 = vmatprep.subr.bf16.mxu0 0
        %1699 = vmatpush1.bf16.msra.mxu0 %v1564
        %1700 = vmatprep.subr.bf16.mxu0 0
        %1701 = vmatpush1.bf16.msra.mxu0 %v1565
        %1702 = vmatprep.subr.bf16.mxu0 0
        %1703 = vmatpush1.bf16.msra.mxu0 %v1566
        %1704 = vmatprep.subr.bf16.mxu0 0
        %1705 = vmatpush1.bf16.msra.mxu0 %v1567
        %1706 = vmatprep.subr.bf16.mxu0 0
        %1707 = vmatpush1.bf16.msra.mxu0 %v1568
        %1708 = vmatprep.subr.bf16.mxu0 0
        %1709 = vmatpush1.bf16.msra.mxu0 %v1569
        %1710 = vmatprep.subr.bf16.mxu0 0
        %1711 = vmatpush1.bf16.msra.mxu0 %v1570
        %1712 = vmatprep.subr.bf16.mxu0 0
        %1713 = vmatpush1.bf16.msra.mxu0 %v1571
        %1714 = vmatprep.subr.bf16.mxu0 0
        %1715 = vmatpush1.bf16.msra.mxu0 %v1572
        %1716 = vmatprep.subr.bf16.mxu0 0
        %1717 = vmatpush1.bf16.msra.mxu0 %v1573
        %1718 = vmatprep.subr.bf16.mxu0 0
        %1719 = vmatpush1.bf16.msra.mxu0 %v1574
        %1720 = vmatprep.subr.bf16.mxu0 0
        %1721 = vmatpush1.bf16.msra.mxu0 %v1575
        %1722 = vmatprep.subr.bf16.mxu0 0
        %1723 = vmatpush1.bf16.msra.mxu0 %v1576
        %1724 = vmatprep.subr.bf16.mxu0 0
        %1725 = vmatpush1.bf16.msra.mxu0 %v1577
        %1726 = vmatprep.subr.bf16.mxu0 0
        %1727 = vmatpush1.bf16.msra.mxu0 %v1578
        %1728 = vmatprep.subr.bf16.mxu0 0
        %1729 = vmatpush1.bf16.msra.mxu0 %v1579
        %1730 = vmatprep.mubr.bf16.mxu0 %v1284
        %1731 = vmatmul.mubr.bf16.gmra.mrb[0].mxu0 %v1281
        %v1732 = vpop.f32.mrb[0].mxu0
        %v1733 = vadd.f32 %v1668, %v1732
        %v1734 = vpop.f32.mrb[0].mxu0
        %v1735 = vpop.f32.mrb[0].mxu0
        %v1736 = vadd.f32 %v1671, %v1735
        %v1737 = vpop.f32.mrb[0].mxu0
        %1738 = vmatprep.mubr.bf16.mxu0 %v1323
        %1739 = vmatmul.mubr.bf16.gmra.mrb[0].mxu0 %v1320
        %v1740 = vpop.f32.mrb[0].mxu0
        %v1741 = vadd.f32 %v1676, %v1740
        %v1742 = vpop.f32.mrb[0].mxu0
        %v1743 = vpop.f32.mrb[0].mxu0
        %v1744 = vadd.f32 %v1679, %v1743
        %v1745 = vpop.f32.mrb[0].mxu0
        %1746 = vmatprep.mubr.bf16.mxu0 %v1357
        %1747 = vmatmul.mubr.bf16.gmra.mrb[0].mxu0 %v1354
        %v1748 = vpop.f32.mrb[0].mxu0
        %v1749 = vadd.f32 %v1684, %v1748
        %v1750 = vpop.f32.mrb[0].mxu0
        %v1751 = vpop.f32.mrb[0].mxu0
        %v1752 = vadd.f32 %v1687, %v1751
        %v1753 = vpop.f32.mrb[0].mxu0
        %1754 = vmatprep.mubr.bf16.mxu0 %v1396
        %1755 = vmatmul.mubr.bf16.gmra.mrb[0].mxu0 %v1393
        %v1756 = vpop.f32.mrb[0].mxu0
        %v1757 = vadd.f32 %v1692, %v1756
        %v1758 = vpop.f32.mrb[0].mxu0
        %v1759 = vpop.f32.mrb[0].mxu0
        %v1760 = vadd.f32 %v1695, %v1759
        %v1761 = vpop.f32.mrb[0].mxu0
        %1762 = vdwg.mxu0
        %1763 = vmatprep.subr.bf16.mxu0 0
        %1764 = vmatpush1.bf16.msra.mxu0 %v1580
        %1765 = vmatprep.subr.bf16.mxu0 0
        %1766 = vmatpush1.bf16.msra.mxu0 %v1581
        %1767 = vmatprep.subr.bf16.mxu0 0
        %1768 = vmatpush1.bf16.msra.mxu0 %v1582
        %1769 = vmatprep.subr.bf16.mxu0 0
        %1770 = vmatpush1.bf16.msra.mxu0 %v1583
        %1771 = vmatprep.subr.bf16.mxu0 0
        %1772 = vmatpush1.bf16.msra.mxu0 %v1631
        %1773 = vmatprep.subr.bf16.mxu0 0
        %1774 = vmatpush1.bf16.msra.mxu0 0
        %1775 = vmatprep.subr.bf16.mxu0 0
        %1776 = vmatpush1.bf16.msra.mxu0 0
        %1777 = vmatprep.subr.bf16.mxu0 0
        %1778 = vmatpush1.bf16.msra.mxu0 0
        %1779 = vmatprep.subr.bf16.mxu0 0
        %1780 = vmatpush1.bf16.msra.mxu0 0
        %1781 = vmatprep.subr.bf16.mxu0 0
        %1782 = vmatpush1.bf16.msra.mxu0 0
        %1783 = vmatprep.subr.bf16.mxu0 0
        %1784 = vmatpush1.bf16.msra.mxu0 0
        %1785 = vmatprep.subr.bf16.mxu0 0
        %1786 = vmatpush1.bf16.msra.mxu0 0
        %1787 = vmatprep.subr.bf16.mxu0 0
        %1788 = vmatpush1.bf16.msra.mxu0 0
        %1789 = vmatprep.subr.bf16.mxu0 0
        %1790 = vmatpush1.bf16.msra.mxu0 0
        %1791 = vmatprep.subr.bf16.mxu0 0
        %1792 = vmatpush1.bf16.msra.mxu0 0
        %1793 = vmatprep.subr.bf16.mxu0 0
        %1794 = vmatpush1.bf16.msra.mxu0 0
        %1795 = vmatprep.mubr.bf16.mxu0 0
        %1796 = vmatmul.mubr.bf16.gmra.mrb[0].mxu0 %v1622
        %v1797 = vpop.f32.mrb[0].mxu0
        %v1798 = vadd.f32 %v1733, %v1797
        %v1799 = vpop.f32.mrb[0].mxu0
        %v1800 = vpop.f32.mrb[0].mxu0
        %v1801 = vadd.f32 %v1736, %v1800
        %v1802 = vpop.f32.mrb[0].mxu0
        %1803 = vmatprep.mubr.bf16.mxu0 0
        %1804 = vmatmul.mubr.bf16.gmra.mrb[0].mxu0 %v1624
        %v1805 = vpop.f32.mrb[0].mxu0
        %v1806 = vadd.f32 %v1741, %v1805
        %v1807 = vpop.f32.mrb[0].mxu0
        %v1808 = vpop.f32.mrb[0].mxu0
        %v1809 = vadd.f32 %v1744, %v1808
        %v1810 = vpop.f32.mrb[0].mxu0
        %1811 = vmatprep.mubr.bf16.mxu0 0
        %1812 = vmatmul.mubr.bf16.gmra.mrb[0].mxu0 %v1626
        %v1813 = vpop.f32.mrb[0].mxu0
        %v1814 = vadd.f32 %v1749, %v1813
        %v1815 = vpop.f32.mrb[0].mxu0
        %v1816 = vpop.f32.mrb[0].mxu0
        %v1817 = vadd.f32 %v1752, %v1816
        %v1818 = vpop.f32.mrb[0].mxu0
        %1819 = vmatprep.mubr.bf16.mxu0 0
        %1820 = vmatmul.mubr.bf16.gmra.mrb[0].mxu0 %v1628
        %v1821 = vpop.f32.mrb[0].mxu0
        %v1822 = vadd.f32 %v1757, %v1821
        %v1823 = vpop.f32.mrb[0].mxu0
        %v1824 = vpop.f32.mrb[0].mxu0
        %v1825 = vadd.f32 %v1760, %v1824
        %v1826 = vpop.f32.mrb[0].mxu0
        %1827 = vdwg.mxu0
        %v1828 = vmax.f32 %v1798, %v1806
        %v1829 = vmax.f32 %v1801, %v1809
        %v1830 = vmax.f32 %v1814, %v1822
        %v1831 = vmax.f32 %v1817, %v1825
        %v1832 = vmax.f32 %v1828, %v1830
        %v1833 = vmax.f32 %v1829, %v1831
        %v1834 = vld [vmem:[%s3] sm:$0x1]
        %v1836 = vlaneseq
        %v1837 = vshrl.u32 %v1836, 7
        %v1838 = vsub.s32 0, %v1837
        %v1839 = vrot.slane %v1834, %v1838
        %v1841 = vadd.f32 %v1832, %v1839
        %v1842 = vadd.f32 %v1833, %v1839
        %v1843 = vmax.f32 %v1841, 0.0
        %v1844 = vmax.f32 %v1842, 0.0
        %v1845 = vld [vmem:[%s4] sm:$0xf]
        %v1846 = vld [vmem:[%s4 + $0x4] sm:$0xf]
        %v1847 = vld [vmem:[%s4 + $0x8] sm:$0xf]
        %v1848 = vld [vmem:[%s4 + $0xc] sm:$0xf]
        %v1849 = vld [vmem:[%s4 + $0x10] sm:$0xf]
        %v1850 = vld [vmem:[%s4 + $0x14] sm:$0xf]
        %v1851 = vld [vmem:[%s4 + $0x18] sm:$0xf]
        %v1852 = vld [vmem:[%s4 + $0x1c] sm:$0xf]
        %v1853 = vld [vmem:[%s4 + $0x20] sm:$0xf]
        %v1854 = vld [vmem:[%s4 + $0x24] sm:$0xf]
        %v1855 = vld [vmem:[%s4 + $0x28] sm:$0xf]
        %v1856 = vld [vmem:[%s4 + $0x2c] sm:$0xf]
        %v1857 = vld [vmem:[%s4 + $0x30] sm:$0xf]
        %v1858 = vld [vmem:[%s4 + $0x34] sm:$0xf]
        %v1859 = vld [vmem:[%s4 + $0x38] sm:$0xf]
        %v1860 = vld [vmem:[%s4 + $0x3c] sm:$0xf]
        %v1861 = vld [vmem:[%s4 + $0x40] sm:$0xf]
        %v1862 = vld [vmem:[%s4 + $0x44] sm:$0xf]
        %v1863 = vld [vmem:[%s4 + $0x48] sm:$0xf]
        %v1864 = vld [vmem:[%s4 + $0x4c] sm:$0xf]
        %v1865 = vld [vmem:[%s4 + $0x50] sm:$0xf]
        %v1866 = vld [vmem:[%s4 + $0x54] sm:$0xf]
        %v1867 = vld [vmem:[%s4 + $0x58] sm:$0xf]
        %v1868 = vld [vmem:[%s4 + $0x5c] sm:$0xf]
        %v1869 = vld [vmem:[%s4 + $0x60] sm:$0xf]
        %v1870 = vld [vmem:[%s4 + $0x64] sm:$0xf]
        %v1871 = vld [vmem:[%s4 + $0x68] sm:$0xf]
        %v1872 = vld [vmem:[%s4 + $0x6c] sm:$0xf]
        %v1873 = vld [vmem:[%s4 + $0x70] sm:$0xf]
        %v1874 = vld [vmem:[%s4 + $0x74] sm:$0xf]
        %v1875 = vld [vmem:[%s4 + $0x78] sm:$0xf]
        %v1876 = vld [vmem:[%s4 + $0x7c] sm:$0xf]
        %v1877 = vld [vmem:[%s4 + $0x80] sm:$0xf]
        %v1878 = vld [vmem:[%s4 + $0x84] sm:$0xf]
        %v1879 = vld [vmem:[%s4 + $0x88] sm:$0xf]
        %v1880 = vld [vmem:[%s4 + $0x8c] sm:$0xf]
        %v1881 = vld [vmem:[%s4 + $0x90] sm:$0xf]
        %v1882 = vld [vmem:[%s4 + $0x94] sm:$0xf]
        %v1883 = vld [vmem:[%s4 + $0x98] sm:$0xf]
        %v1884 = vld [vmem:[%s4 + $0x9c] sm:$0xf]
        %v1885 = vld [vmem:[%s4 + $0xa0] sm:$0xf]
        %v1886 = vld [vmem:[%s4 + $0xa4] sm:$0xf]
        %v1887 = vld [vmem:[%s4 + $0xa8] sm:$0xf]
        %v1888 = vld [vmem:[%s4 + $0xac] sm:$0xf]
        %v1889 = vld [vmem:[%s4 + $0xb0] sm:$0xf]
        %v1890 = vld [vmem:[%s4 + $0xb4] sm:$0xf]
        %v1891 = vld [vmem:[%s4 + $0xb8] sm:$0xf]
        %v1892 = vld [vmem:[%s4 + $0xbc] sm:$0xf]
        %v1893 = vld [vmem:[%s4 + $0xc0] sm:$0xf]
        %v1894 = vld [vmem:[%s4 + $0xc4] sm:$0xf]
        %v1895 = vld [vmem:[%s4 + $0xc8] sm:$0xf]
        %v1896 = vld [vmem:[%s4 + $0xcc] sm:$0xf]
        %v1897 = vld [vmem:[%s4 + $0xd0] sm:$0xf]
        %v1898 = vld [vmem:[%s4 + $0xd4] sm:$0xf]
        %v1899 = vld [vmem:[%s4 + $0xd8] sm:$0xf]
        %v1900 = vld [vmem:[%s4 + $0xdc] sm:$0xf]
        %v1901 = vld [vmem:[%s4 + $0xe0] sm:$0xf]
        %v1902 = vld [vmem:[%s4 + $0xe4] sm:$0xf]
        %v1903 = vld [vmem:[%s4 + $0xe8] sm:$0xf]
        %v1904 = vld [vmem:[%s4 + $0xec] sm:$0xf]
        %v1905 = vld [vmem:[%s4 + $0xf0] sm:$0xf]
        %v1906 = vld [vmem:[%s4 + $0xf4] sm:$0xf]
        %v1907 = vld [vmem:[%s4 + $0xf8] sm:$0xf]
        %v1908 = vld [vmem:[%s4 + $0xfc] sm:$0xf]
        %v1909 = vld [vmem:[%s4 + $0x100] sm:$0xf]
        %v1910 = vld [vmem:[%s4 + $0x104] sm:$0xf]
        %v1911 = vld [vmem:[%s4 + $0x108] sm:$0xf]
        %v1912 = vld [vmem:[%s4 + $0x10c] sm:$0xf]
        %v1913 = vld [vmem:[%s4 + $0x110] sm:$0xf]
        %v1914 = vld [vmem:[%s4 + $0x114] sm:$0xf]
        %v1915 = vld [vmem:[%s4 + $0x118] sm:$0xf]
        %v1916 = vld [vmem:[%s4 + $0x11c] sm:$0xf]
        %v1917 = vld [vmem:[%s4 + $0x120] sm:$0xf]
        %v1918 = vld [vmem:[%s4 + $0x124] sm:$0x3]
        %v1919 = vld [vmem:[%s278] sm:$0x3]
        %v1920 = vld [vmem:[%s278 + $0x8] sm:$0xc]
        %v1921 = vld [vmem:[%s278] sm:$0x6]
        %v1922 = vld [vmem:[%s278 + $0x8] sm:$0x8]
        %v1923 = vld [vmem:[%s278 + $0xc] sm:$0x1]
        %v1924 = vld [vmem:[%s278] sm:$0xc]
        %v1925 = vld [vmem:[%s278 + $0xc] sm:$0x3]
        %v1926 = vld [vmem:[%s278] sm:$0x8]
        %v1927 = vld [vmem:[%s278 + $0x4] sm:$0x1]
        %v1929 = vunpack.c.l.b16 %v1920
        %v1930 = vpack.c.b16 %v1929, %v1929
        %v1931 = vrot.slane %v1930, 2
        %1932 = vrot.lane.b32.xlu0 %v1931, 84
        %v1933 = vpop.permute.xlu0 %1932
        %v1935 = vunpack.c.l.b16 %v1921
        %v1936 = vpack.c.b16 %v1935, %v1935
        %v1937 = vrot.slane %v1936, 1
        %1938 = vrot.lane.b32.xlu0 %v1937, 40
        %v1939 = vpop.permute.xlu0 %1938
        %v1942 = vunpack.c.l.b16 %v1922
        %v1943 = vunpack.c.l.b16 %v1923
        %v1944 = vpack.c.b16 %v1943, %v1942
        %v1945 = vrot.slane %v1944, 3
        %1946 = vrot.lane.b32.xlu0 %v1945, 124
        %v1947 = vpop.permute.xlu0 %1946
        %v1949 = vunpack.c.l.b16 %v1924
        %v1950 = vpack.c.b16 %v1949, %v1949
        %v1951 = vrot.slane %v1950, 2
        %1952 = vrot.lane.b32.xlu0 %v1951, 80
        %v1953 = vpop.permute.xlu0 %1952
        %v1955 = vunpack.c.l.b16 %v1925
        %v1956 = vpack.c.b16 %v1955, %v1955
        %1957 = vrot.lane.b32.xlu0 %v1956, 36
        %v1958 = vpop.permute.xlu0 %1957
        %v1961 = vunpack.c.l.b16 %v1926
        %v1962 = vunpack.c.l.b16 %v1927
        %v1963 = vpack.c.b16 %v1962, %v1961
        %v1964 = vrot.slane %v1963, 3
        %1965 = vrot.lane.b32.xlu0 %v1964, 120
        %v1966 = vpop.permute.xlu0 %1965
        %v1969 = vsel %vm404, %v1919, %v1933
        %v1971 = vsel %vm408, %v1933, %v1939
        %v1973 = vsel %vm411, %v1971, %v1947
        %v1975 = vsel %vm414, %v1947, %v1953
        %v1977 = vsel %vm417, %v1953, %v1958
        %v1979 = vsel %vm420, %v1977, %v1966
        %s1980 = scalar_lea.vmem %s278, 20
        %v1981 = vld [vmem:[%s1980] sm:$0x3]
        %v1982 = vld [vmem:[%s1980 + $0x8] sm:$0xc]
        %v1983 = vld [vmem:[%s1980] sm:$0x6]
        %v1984 = vld [vmem:[%s1980 + $0x8] sm:$0x8]
        %v1985 = vld [vmem:[%s1980 + $0xc] sm:$0x1]
        %v1986 = vld [vmem:[%s1980] sm:$0xc]
        %v1987 = vld [vmem:[%s1980 + $0xc] sm:$0x3]
        %v1988 = vld [vmem:[%s1980] sm:$0x8]
        %v1989 = vld [vmem:[%s1980 + $0x4] sm:$0x1]
        %v1991 = vunpack.c.l.b16 %v1982
        %v1992 = vpack.c.b16 %v1991, %v1991
        %v1993 = vrot.slane %v1992, 2
        %1994 = vrot.lane.b32.xlu0 %v1993, 84
        %v1995 = vpop.permute.xlu0 %1994
        %v1997 = vunpack.c.l.b16 %v1983
        %v1998 = vpack.c.b16 %v1997, %v1997
        %v1999 = vrot.slane %v1998, 1
        %2000 = vrot.lane.b32.xlu0 %v1999, 40
        %v2001 = vpop.permute.xlu0 %2000
        %v2004 = vunpack.c.l.b16 %v1984
        %v2005 = vunpack.c.l.b16 %v1985
        %v2006 = vpack.c.b16 %v2005, %v2004
        %v2007 = vrot.slane %v2006, 3
        %2008 = vrot.lane.b32.xlu0 %v2007, 124
        %v2009 = vpop.permute.xlu0 %2008
        %v2011 = vunpack.c.l.b16 %v1986
        %v2012 = vpack.c.b16 %v2011, %v2011
        %v2013 = vrot.slane %v2012, 2
        %2014 = vrot.lane.b32.xlu0 %v2013, 80
        %v2015 = vpop.permute.xlu0 %2014
        %v2017 = vunpack.c.l.b16 %v1987
        %v2018 = vpack.c.b16 %v2017, %v2017
        %2019 = vrot.lane.b32.xlu0 %v2018, 36
        %v2020 = vpop.permute.xlu0 %2019
        %v2023 = vunpack.c.l.b16 %v1988
        %v2024 = vunpack.c.l.b16 %v1989
        %v2025 = vpack.c.b16 %v2024, %v2023
        %v2026 = vrot.slane %v2025, 3
        %2027 = vrot.lane.b32.xlu0 %v2026, 120
        %v2028 = vpop.permute.xlu0 %2027
        %v2031 = vsel %vm404, %v1981, %v1995
        %v2033 = vsel %vm408, %v1995, %v2001
        %v2035 = vsel %vm411, %v2033, %v2009
        %v2037 = vsel %vm414, %v2009, %v2015
        %v2039 = vsel %vm417, %v2015, %v2020
        %v2041 = vsel %vm420, %v2039, %v2028
        %s2042 = scalar_lea.vmem %s278, 40
        %v2043 = vld [vmem:[%s2042] sm:$0x3]
        %v2044 = vld [vmem:[%s2042 + $0x8] sm:$0xc]
        %v2045 = vld [vmem:[%s2042] sm:$0x6]
        %v2046 = vld [vmem:[%s2042 + $0x8] sm:$0x8]
        %v2047 = vld [vmem:[%s2042 + $0xc] sm:$0x1]
        %v2048 = vld [vmem:[%s2042] sm:$0xc]
        %v2049 = vld [vmem:[%s2042 + $0xc] sm:$0x3]
        %v2050 = vld [vmem:[%s2042] sm:$0x8]
        %v2051 = vld [vmem:[%s2042 + $0x4] sm:$0x1]
        %v2053 = vunpack.c.l.b16 %v2044
        %v2054 = vpack.c.b16 %v2053, %v2053
        %v2055 = vrot.slane %v2054, 2
        %2056 = vrot.lane.b32.xlu0 %v2055, 84
        %v2057 = vpop.permute.xlu0 %2056
        %v2059 = vunpack.c.l.b16 %v2045
        %v2060 = vpack.c.b16 %v2059, %v2059
        %v2061 = vrot.slane %v2060, 1
        %2062 = vrot.lane.b32.xlu0 %v2061, 40
        %v2063 = vpop.permute.xlu0 %2062
        %v2066 = vunpack.c.l.b16 %v2046
        %v2067 = vunpack.c.l.b16 %v2047
        %v2068 = vpack.c.b16 %v2067, %v2066
        %v2069 = vrot.slane %v2068, 3
        %2070 = vrot.lane.b32.xlu0 %v2069, 124
        %v2071 = vpop.permute.xlu0 %2070
        %v2073 = vunpack.c.l.b16 %v2048
        %v2074 = vpack.c.b16 %v2073, %v2073
        %v2075 = vrot.slane %v2074, 2
        %2076 = vrot.lane.b32.xlu0 %v2075, 80
        %v2077 = vpop.permute.xlu0 %2076
        %v2079 = vunpack.c.l.b16 %v2049
        %v2080 = vpack.c.b16 %v2079, %v2079
        %2081 = vrot.lane.b32.xlu0 %v2080, 36
        %v2082 = vpop.permute.xlu0 %2081
        %v2085 = vunpack.c.l.b16 %v2050
        %v2086 = vunpack.c.l.b16 %v2051
        %v2087 = vpack.c.b16 %v2086, %v2085
        %v2088 = vrot.slane %v2087, 3
        %2089 = vrot.lane.b32.xlu0 %v2088, 120
        %v2090 = vpop.permute.xlu0 %2089
        %v2093 = vsel %vm404, %v2043, %v2057
        %v2095 = vsel %vm408, %v2057, %v2063
        %v2097 = vsel %vm411, %v2095, %v2071
        %v2099 = vsel %vm414, %v2071, %v2077
        %v2101 = vsel %vm417, %v2077, %v2082
        %v2103 = vsel %vm420, %v2101, %v2090
        %s2104 = scalar_lea.vmem %s278, 60
        %v2105 = vld [vmem:[%s2104] sm:$0x3]
        %v2106 = vld [vmem:[%s2104 + $0x8] sm:$0xc]
        %v2107 = vld [vmem:[%s2104] sm:$0x6]
        %v2108 = vld [vmem:[%s2104 + $0x8] sm:$0x8]
        %v2109 = vld [vmem:[%s2104 + $0xc] sm:$0x1]
        %v2110 = vld [vmem:[%s2104] sm:$0xc]
        %v2111 = vld [vmem:[%s2104 + $0xc] sm:$0x3]
        %v2112 = vld [vmem:[%s2104] sm:$0x8]
        %v2113 = vld [vmem:[%s2104 + $0x4] sm:$0x1]
        %v2115 = vunpack.c.l.b16 %v2106
        %v2116 = vpack.c.b16 %v2115, %v2115
        %v2117 = vrot.slane %v2116, 2
        %2118 = vrot.lane.b32.xlu0 %v2117, 84
        %v2119 = vpop.permute.xlu0 %2118
        %v2121 = vunpack.c.l.b16 %v2107
        %v2122 = vpack.c.b16 %v2121, %v2121
        %v2123 = vrot.slane %v2122, 1
        %2124 = vrot.lane.b32.xlu0 %v2123, 40
        %v2125 = vpop.permute.xlu0 %2124
        %v2128 = vunpack.c.l.b16 %v2108
        %v2129 = vunpack.c.l.b16 %v2109
        %v2130 = vpack.c.b16 %v2129, %v2128
        %v2131 = vrot.slane %v2130, 3
        %2132 = vrot.lane.b32.xlu0 %v2131, 124
        %v2133 = vpop.permute.xlu0 %2132
        %v2135 = vunpack.c.l.b16 %v2110
        %v2136 = vpack.c.b16 %v2135, %v2135
        %v2137 = vrot.slane %v2136, 2
        %2138 = vrot.lane.b32.xlu0 %v2137, 80
        %v2139 = vpop.permute.xlu0 %2138
        %v2141 = vunpack.c.l.b16 %v2111
        %v2142 = vpack.c.b16 %v2141, %v2141
        %2143 = vrot.lane.b32.xlu0 %v2142, 36
        %v2144 = vpop.permute.xlu0 %2143
        %v2147 = vunpack.c.l.b16 %v2112
        %v2148 = vunpack.c.l.b16 %v2113
        %v2149 = vpack.c.b16 %v2148, %v2147
        %v2150 = vrot.slane %v2149, 3
        %2151 = vrot.lane.b32.xlu0 %v2150, 120
        %v2152 = vpop.permute.xlu0 %2151
        %v2155 = vsel %vm404, %v2105, %v2119
        %v2157 = vsel %vm408, %v2119, %v2125
        %v2159 = vsel %vm411, %v2157, %v2133
        %v2161 = vsel %vm414, %v2133, %v2139
        %v2163 = vsel %vm417, %v2139, %v2144
        %v2165 = vsel %vm420, %v2163, %v2152
        %v2166 = vld [vmem:[%s278 + $0x4] sm:$0x6]
        %v2167 = vld [vmem:[%s278 + $0xc] sm:$0x8]
        %v2168 = vld [vmem:[%s278 + $0x10] sm:$0x1]
        %v2169 = vld [vmem:[%s278 + $0x4] sm:$0xc]
        %v2170 = vld [vmem:[%s278 + $0x10] sm:$0x3]
        %v2171 = vld [vmem:[%s278 + $0x4] sm:$0x8]
        %v2172 = vld [vmem:[%s278 + $0x8] sm:$0x1]
        %v2173 = vld [vmem:[%s278 + $0x10] sm:$0x6]
        %v2174 = vld [vmem:[%s278 + $0x8] sm:$0x3]
        %v2177 = vunpack.c.l.b16 %v2167
        %v2178 = vunpack.c.l.b16 %v2168
        %v2179 = vpack.c.b16 %v2178, %v2177
        %v2180 = vrot.slane %v2179, 2
        %2181 = vrot.lane.b32.xlu0 %v2180, 84
        %v2182 = vpop.permute.xlu0 %2181
        %v2184 = vunpack.c.l.b16 %v2169
        %v2185 = vpack.c.b16 %v2184, %v2184
        %v2186 = vrot.slane %v2185, 1
        %2187 = vrot.lane.b32.xlu0 %v2186, 40
        %v2188 = vpop.permute.xlu0 %2187
        %v2190 = vunpack.c.l.b16 %v2170
        %v2191 = vpack.c.b16 %v2190, %v2190
        %v2192 = vrot.slane %v2191, 7
        %2193 = vrot.lane.b32.xlu0 %v2192, 124
        %v2194 = vpop.permute.xlu0 %2193
        %v2197 = vunpack.c.l.b16 %v2171
        %v2198 = vunpack.c.l.b16 %v2172
        %v2199 = vpack.c.b16 %v2198, %v2197
        %v2200 = vrot.slane %v2199, 2
        %2201 = vrot.lane.b32.xlu0 %v2200, 80
        %v2202 = vpop.permute.xlu0 %2201
        %v2204 = vunpack.c.l.b16 %v2173
        %v2205 = vpack.c.b16 %v2204, %v2204
        %2206 = vrot.lane.b32.xlu0 %v2205, 36
        %v2207 = vpop.permute.xlu0 %2206
        %v2209 = vunpack.c.l.b16 %v2174
        %v2210 = vpack.c.b16 %v2209, %v2209
        %v2211 = vrot.slane %v2210, 7
        %2212 = vrot.lane.b32.xlu0 %v2211, 120
        %v2213 = vpop.permute.xlu0 %2212
        %v2216 = vsel %vm404, %v2166, %v2182
        %v2218 = vsel %vm408, %v2182, %v2188
        %v2220 = vsel %vm411, %v2218, %v2194
        %v2222 = vsel %vm414, %v2194, %v2202
        %v2224 = vsel %vm417, %v2202, %v2207
        %v2226 = vsel %vm420, %v2224, %v2213
        %v2227 = vld [vmem:[%s1980 + $0x4] sm:$0x6]
        %v2228 = vld [vmem:[%s1980 + $0xc] sm:$0x8]
        %v2229 = vld [vmem:[%s1980 + $0x10] sm:$0x1]
        %v2230 = vld [vmem:[%s1980 + $0x4] sm:$0xc]
        %v2231 = vld [vmem:[%s1980 + $0x10] sm:$0x3]
        %v2232 = vld [vmem:[%s1980 + $0x4] sm:$0x8]
        %v2233 = vld [vmem:[%s1980 + $0x8] sm:$0x1]
        %v2234 = vld [vmem:[%s1980 + $0x10] sm:$0x6]
        %v2235 = vld [vmem:[%s1980 + $0x8] sm:$0x3]
        %v2238 = vunpack.c.l.b16 %v2228
        %v2239 = vunpack.c.l.b16 %v2229
        %v2240 = vpack.c.b16 %v2239, %v2238
        %v2241 = vrot.slane %v2240, 2
        %2242 = vrot.lane.b32.xlu0 %v2241, 84
        %v2243 = vpop.permute.xlu0 %2242
        %v2245 = vunpack.c.l.b16 %v2230
        %v2246 = vpack.c.b16 %v2245, %v2245
        %v2247 = vrot.slane %v2246, 1
        %2248 = vrot.lane.b32.xlu0 %v2247, 40
        %v2249 = vpop.permute.xlu0 %2248
        %v2251 = vunpack.c.l.b16 %v2231
        %v2252 = vpack.c.b16 %v2251, %v2251
        %v2253 = vrot.slane %v2252, 7
        %2254 = vrot.lane.b32.xlu0 %v2253, 124
        %v2255 = vpop.permute.xlu0 %2254
        %v2258 = vunpack.c.l.b16 %v2232
        %v2259 = vunpack.c.l.b16 %v2233
        %v2260 = vpack.c.b16 %v2259, %v2258
        %v2261 = vrot.slane %v2260, 2
        %2262 = vrot.lane.b32.xlu0 %v2261, 80
        %v2263 = vpop.permute.xlu0 %2262
        %v2265 = vunpack.c.l.b16 %v2234
        %v2266 = vpack.c.b16 %v2265, %v2265
        %2267 = vrot.lane.b32.xlu0 %v2266, 36
        %v2268 = vpop.permute.xlu0 %2267
        %v2270 = vunpack.c.l.b16 %v2235
        %v2271 = vpack.c.b16 %v2270, %v2270
        %v2272 = vrot.slane %v2271, 7
        %2273 = vrot.lane.b32.xlu0 %v2272, 120
        %v2274 = vpop.permute.xlu0 %2273
        %v2277 = vsel %vm404, %v2227, %v2243
        %v2279 = vsel %vm408, %v2243, %v2249
        %v2281 = vsel %vm411, %v2279, %v2255
        %v2283 = vsel %vm414, %v2255, %v2263
        %v2285 = vsel %vm417, %v2263, %v2268
        %v2287 = vsel %vm420, %v2285, %v2274
        %v2288 = vld [vmem:[%s2042 + $0x4] sm:$0x6]
        %v2289 = vld [vmem:[%s2042 + $0xc] sm:$0x8]
        %v2290 = vld [vmem:[%s2042 + $0x10] sm:$0x1]
        %v2291 = vld [vmem:[%s2042 + $0x4] sm:$0xc]
        %v2292 = vld [vmem:[%s2042 + $0x10] sm:$0x3]
        %v2293 = vld [vmem:[%s2042 + $0x4] sm:$0x8]
        %v2294 = vld [vmem:[%s2042 + $0x8] sm:$0x1]
        %v2295 = vld [vmem:[%s2042 + $0x10] sm:$0x6]
        %v2296 = vld [vmem:[%s2042 + $0x8] sm:$0x3]
        %v2299 = vunpack.c.l.b16 %v2289
        %v2300 = vunpack.c.l.b16 %v2290
        %v2301 = vpack.c.b16 %v2300, %v2299
        %v2302 = vrot.slane %v2301, 2
        %2303 = vrot.lane.b32.xlu0 %v2302, 84
        %v2304 = vpop.permute.xlu0 %2303
        %v2306 = vunpack.c.l.b16 %v2291
        %v2307 = vpack.c.b16 %v2306, %v2306
        %v2308 = vrot.slane %v2307, 1
        %2309 = vrot.lane.b32.xlu0 %v2308, 40
        %v2310 = vpop.permute.xlu0 %2309
        %v2312 = vunpack.c.l.b16 %v2292
        %v2313 = vpack.c.b16 %v2312, %v2312
        %v2314 = vrot.slane %v2313, 7
        %2315 = vrot.lane.b32.xlu0 %v2314, 124
        %v2316 = vpop.permute.xlu0 %2315
        %v2319 = vunpack.c.l.b16 %v2293
        %v2320 = vunpack.c.l.b16 %v2294
        %v2321 = vpack.c.b16 %v2320, %v2319
        %v2322 = vrot.slane %v2321, 2
        %2323 = vrot.lane.b32.xlu0 %v2322, 80
        %v2324 = vpop.permute.xlu0 %2323
        %v2326 = vunpack.c.l.b16 %v2295
        %v2327 = vpack.c.b16 %v2326, %v2326
        %2328 = vrot.lane.b32.xlu0 %v2327, 36
        %v2329 = vpop.permute.xlu0 %2328
        %v2331 = vunpack.c.l.b16 %v2296
        %v2332 = vpack.c.b16 %v2331, %v2331
        %v2333 = vrot.slane %v2332, 7
        %2334 = vrot.lane.b32.xlu0 %v2333, 120
        %v2335 = vpop.permute.xlu0 %2334
        %v2338 = vsel %vm404, %v2288, %v2304
        %v2340 = vsel %vm408, %v2304, %v2310
        %v2342 = vsel %vm411, %v2340, %v2316
        %v2344 = vsel %vm414, %v2316, %v2324
        %v2346 = vsel %vm417, %v2324, %v2329
        %v2348 = vsel %vm420, %v2346, %v2335
        %v2349 = vld [vmem:[%s2104 + $0x4] sm:$0x6]
        %v2350 = vld [vmem:[%s2104 + $0xc] sm:$0x8]
        %v2351 = vld [vmem:[%s2104 + $0x10] sm:$0x1]
        %v2352 = vld [vmem:[%s2104 + $0x4] sm:$0xc]
        %v2353 = vld [vmem:[%s2104 + $0x10] sm:$0x3]
        %v2354 = vld [vmem:[%s2104 + $0x4] sm:$0x8]
        %v2355 = vld [vmem:[%s2104 + $0x8] sm:$0x1]
        %v2356 = vld [vmem:[%s2104 + $0x10] sm:$0x6]
        %v2357 = vld [vmem:[%s2104 + $0x8] sm:$0x3]
        %v2360 = vunpack.c.l.b16 %v2350
        %v2361 = vunpack.c.l.b16 %v2351
        %v2362 = vpack.c.b16 %v2361, %v2360
        %v2363 = vrot.slane %v2362, 2
        %2364 = vrot.lane.b32.xlu0 %v2363, 84
        %v2365 = vpop.permute.xlu0 %2364
        %v2367 = vunpack.c.l.b16 %v2352
        %v2368 = vpack.c.b16 %v2367, %v2367
        %v2369 = vrot.slane %v2368, 1
        %2370 = vrot.lane.b32.xlu0 %v2369, 40
        %v2371 = vpop.permute.xlu0 %2370
        %v2373 = vunpack.c.l.b16 %v2353
        %v2374 = vpack.c.b16 %v2373, %v2373
        %v2375 = vrot.slane %v2374, 7
        %2376 = vrot.lane.b32.xlu0 %v2375, 124
        %v2377 = vpop.permute.xlu0 %2376
        %v2380 = vunpack.c.l.b16 %v2354
        %v2381 = vunpack.c.l.b16 %v2355
        %v2382 = vpack.c.b16 %v2381, %v2380
        %v2383 = vrot.slane %v2382, 2
        %2384 = vrot.lane.b32.xlu0 %v2383, 80
        %v2385 = vpop.permute.xlu0 %2384
        %v2387 = vunpack.c.l.b16 %v2356
        %v2388 = vpack.c.b16 %v2387, %v2387
        %2389 = vrot.lane.b32.xlu0 %v2388, 36
        %v2390 = vpop.permute.xlu0 %2389
        %v2392 = vunpack.c.l.b16 %v2357
        %v2393 = vpack.c.b16 %v2392, %v2392
        %v2394 = vrot.slane %v2393, 7
        %2395 = vrot.lane.b32.xlu0 %v2394, 120
        %v2396 = vpop.permute.xlu0 %2395
        %v2399 = vsel %vm404, %v2349, %v2365
        %v2401 = vsel %vm408, %v2365, %v2371
        %v2403 = vsel %vm411, %v2401, %v2377
        %v2405 = vsel %vm414, %v2377, %v2385
        %v2407 = vsel %vm417, %v2385, %v2390
        %v2409 = vsel %vm420, %v2407, %v2396
        %v2410 = vld [vmem:[%s278 + $0xc] sm:$0x6]
        %v2411 = vrot.slane %v1936, 7
        %2412 = vrot.lane.b32.xlu0 %v2411, 84
        %v2413 = vpop.permute.xlu0 %2412
        %v2414 = vrot.slane %v1944, 1
        %2415 = vrot.lane.b32.xlu0 %v2414, 40
        %v2416 = vpop.permute.xlu0 %2415
        %2417 = vrot.lane.b32.xlu0 %v1950, 124
        %v2418 = vpop.permute.xlu0 %2417
        %v2419 = vrot.slane %v1956, 6
        %2420 = vrot.lane.b32.xlu0 %v2419, 80
        %v2421 = vpop.permute.xlu0 %2420
        %v2422 = vrot.slane %v1963, 1
        %2423 = vrot.lane.b32.xlu0 %v2422, 36
        %v2424 = vpop.permute.xlu0 %2423
        %v2426 = vunpack.c.l.b16 %v2410
        %v2427 = vpack.c.b16 %v2426, %v2426
        %v2428 = vrot.slane %v2427, 7
        %2429 = vrot.lane.b32.xlu0 %v2428, 120
        %v2430 = vpop.permute.xlu0 %2429
        %v2433 = vsel %vm404, %v1920, %v2413
        %v2435 = vsel %vm408, %v2413, %v2416
        %v2437 = vsel %vm411, %v2435, %v2418
        %v2439 = vsel %vm414, %v2418, %v2421
        %v2441 = vsel %vm417, %v2421, %v2424
        %v2443 = vsel %vm420, %v2441, %v2430
        %v2444 = vld [vmem:[%s1980 + $0xc] sm:$0x6]
        %v2445 = vrot.slane %v1998, 7
        %2446 = vrot.lane.b32.xlu0 %v2445, 84
        %v2447 = vpop.permute.xlu0 %2446
        %v2448 = vrot.slane %v2006, 1
        %2449 = vrot.lane.b32.xlu0 %v2448, 40
        %v2450 = vpop.permute.xlu0 %2449
        %2451 = vrot.lane.b32.xlu0 %v2012, 124
        %v2452 = vpop.permute.xlu0 %2451
        %v2453 = vrot.slane %v2018, 6
        %2454 = vrot.lane.b32.xlu0 %v2453, 80
        %v2455 = vpop.permute.xlu0 %2454
        %v2456 = vrot.slane %v2025, 1
        %2457 = vrot.lane.b32.xlu0 %v2456, 36
        %v2458 = vpop.permute.xlu0 %2457
        %v2460 = vunpack.c.l.b16 %v2444
        %v2461 = vpack.c.b16 %v2460, %v2460
        %v2462 = vrot.slane %v2461, 7
        %2463 = vrot.lane.b32.xlu0 %v2462, 120
        %v2464 = vpop.permute.xlu0 %2463
        %v2467 = vsel %vm404, %v1982, %v2447
        %v2469 = vsel %vm408, %v2447, %v2450
        %v2471 = vsel %vm411, %v2469, %v2452
        %v2473 = vsel %vm414, %v2452, %v2455
        %v2475 = vsel %vm417, %v2455, %v2458
        %v2477 = vsel %vm420, %v2475, %v2464
        %v2478 = vld [vmem:[%s2042 + $0xc] sm:$0x6]
        %v2479 = vrot.slane %v2060, 7
        %2480 = vrot.lane.b32.xlu0 %v2479, 84
        %v2481 = vpop.permute.xlu0 %2480
        %v2482 = vrot.slane %v2068, 1
        %2483 = vrot.lane.b32.xlu0 %v2482, 40
        %v2484 = vpop.permute.xlu0 %2483
        %2485 = vrot.lane.b32.xlu0 %v2074, 124
        %v2486 = vpop.permute.xlu0 %2485
        %v2487 = vrot.slane %v2080, 6
        %2488 = vrot.lane.b32.xlu0 %v2487, 80
        %v2489 = vpop.permute.xlu0 %2488
        %v2490 = vrot.slane %v2087, 1
        %2491 = vrot.lane.b32.xlu0 %v2490, 36
        %v2492 = vpop.permute.xlu0 %2491
        %v2494 = vunpack.c.l.b16 %v2478
        %v2495 = vpack.c.b16 %v2494, %v2494
        %v2496 = vrot.slane %v2495, 7
        %2497 = vrot.lane.b32.xlu0 %v2496, 120
        %v2498 = vpop.permute.xlu0 %2497
        %v2501 = vsel %vm404, %v2044, %v2481
        %v2503 = vsel %vm408, %v2481, %v2484
        %v2505 = vsel %vm411, %v2503, %v2486
        %v2507 = vsel %vm414, %v2486, %v2489
        %v2509 = vsel %vm417, %v2489, %v2492
        %v2511 = vsel %vm420, %v2509, %v2498
        %v2512 = vld [vmem:[%s2104 + $0xc] sm:$0x6]
        %v2513 = vrot.slane %v2122, 7
        %2514 = vrot.lane.b32.xlu0 %v2513, 84
        %v2515 = vpop.permute.xlu0 %2514
        %v2516 = vrot.slane %v2130, 1
        %2517 = vrot.lane.b32.xlu0 %v2516, 40
        %v2518 = vpop.permute.xlu0 %2517
        %2519 = vrot.lane.b32.xlu0 %v2136, 124
        %v2520 = vpop.permute.xlu0 %2519
        %v2521 = vrot.slane %v2142, 6
        %2522 = vrot.lane.b32.xlu0 %v2521, 80
        %v2523 = vpop.permute.xlu0 %2522
        %v2524 = vrot.slane %v2149, 1
        %2525 = vrot.lane.b32.xlu0 %v2524, 36
        %v2526 = vpop.permute.xlu0 %2525
        %v2528 = vunpack.c.l.b16 %v2512
        %v2529 = vpack.c.b16 %v2528, %v2528
        %v2530 = vrot.slane %v2529, 7
        %2531 = vrot.lane.b32.xlu0 %v2530, 120
        %v2532 = vpop.permute.xlu0 %2531
        %v2535 = vsel %vm404, %v2106, %v2515
        %v2537 = vsel %vm408, %v2515, %v2518
        %v2539 = vsel %vm411, %v2537, %v2520
        %v2541 = vsel %vm414, %v2520, %v2523
        %v2543 = vsel %vm417, %v2523, %v2526
        %v2545 = vsel %vm420, %v2543, %v2532
        %v2546 = vld [vmem:[%s278 + $0x10] sm:$0xc]
        %v2547 = vrot.slane %v2185, 7
        %2548 = vrot.lane.b32.xlu0 %v2547, 84
        %v2549 = vpop.permute.xlu0 %2548
        %v2550 = vrot.slane %v2191, 5
        %2551 = vrot.lane.b32.xlu0 %v2550, 40
        %v2552 = vpop.permute.xlu0 %2551
        %2553 = vrot.lane.b32.xlu0 %v2199, 124
        %v2554 = vpop.permute.xlu0 %2553
        %v2555 = vrot.slane %v2205, 6
        %2556 = vrot.lane.b32.xlu0 %v2555, 80
        %v2557 = vpop.permute.xlu0 %2556
        %v2558 = vrot.slane %v2210, 5
        %2559 = vrot.lane.b32.xlu0 %v2558, 36
        %v2560 = vpop.permute.xlu0 %2559
        %v2562 = vunpack.c.l.b16 %v2546
        %v2563 = vpack.c.b16 %v2562, %v2562
        %v2564 = vrot.slane %v2563, 7
        %2565 = vrot.lane.b32.xlu0 %v2564, 120
        %v2566 = vpop.permute.xlu0 %2565
        %v2569 = vsel %vm404, %v2179, %v2549
        %v2571 = vsel %vm408, %v2549, %v2552
        %v2573 = vsel %vm411, %v2571, %v2554
        %v2575 = vsel %vm414, %v2554, %v2557
        %v2577 = vsel %vm417, %v2557, %v2560
        %v2579 = vsel %vm420, %v2577, %v2566
        %v2580 = vld [vmem:[%s1980 + $0x10] sm:$0xc]
        %v2581 = vrot.slane %v2246, 7
        %2582 = vrot.lane.b32.xlu0 %v2581, 84
        %v2583 = vpop.permute.xlu0 %2582
        %v2584 = vrot.slane %v2252, 5
        %2585 = vrot.lane.b32.xlu0 %v2584, 40
        %v2586 = vpop.permute.xlu0 %2585
        %2587 = vrot.lane.b32.xlu0 %v2260, 124
        %v2588 = vpop.permute.xlu0 %2587
        %v2589 = vrot.slane %v2266, 6
        %2590 = vrot.lane.b32.xlu0 %v2589, 80
        %v2591 = vpop.permute.xlu0 %2590
        %v2592 = vrot.slane %v2271, 5
        %2593 = vrot.lane.b32.xlu0 %v2592, 36
        %v2594 = vpop.permute.xlu0 %2593
        %v2596 = vunpack.c.l.b16 %v2580
        %v2597 = vpack.c.b16 %v2596, %v2596
        %v2598 = vrot.slane %v2597, 7
        %2599 = vrot.lane.b32.xlu0 %v2598, 120
        %v2600 = vpop.permute.xlu0 %2599
        %v2603 = vsel %vm404, %v2240, %v2583
        %v2605 = vsel %vm408, %v2583, %v2586
        %v2607 = vsel %vm411, %v2605, %v2588
        %v2609 = vsel %vm414, %v2588, %v2591
        %v2611 = vsel %vm417, %v2591, %v2594
        %v2613 = vsel %vm420, %v2611, %v2600
        %v2614 = vld [vmem:[%s2042 + $0x10] sm:$0xc]
        %v2615 = vrot.slane %v2307, 7
        %2616 = vrot.lane.b32.xlu0 %v2615, 84
        %v2617 = vpop.permute.xlu0 %2616
        %v2618 = vrot.slane %v2313, 5
        %2619 = vrot.lane.b32.xlu0 %v2618, 40
        %v2620 = vpop.permute.xlu0 %2619
        %2621 = vrot.lane.b32.xlu0 %v2321, 124
        %v2622 = vpop.permute.xlu0 %2621
        %v2623 = vrot.slane %v2327, 6
        %2624 = vrot.lane.b32.xlu0 %v2623, 80
        %v2625 = vpop.permute.xlu0 %2624
        %v2626 = vrot.slane %v2332, 5
        %2627 = vrot.lane.b32.xlu0 %v2626, 36
        %v2628 = vpop.permute.xlu0 %2627
        %v2630 = vunpack.c.l.b16 %v2614
        %v2631 = vpack.c.b16 %v2630, %v2630
        %v2632 = vrot.slane %v2631, 7
        %2633 = vrot.lane.b32.xlu0 %v2632, 120
        %v2634 = vpop.permute.xlu0 %2633
        %v2637 = vsel %vm404, %v2301, %v2617
        %v2639 = vsel %vm408, %v2617, %v2620
        %v2641 = vsel %vm411, %v2639, %v2622
        %v2643 = vsel %vm414, %v2622, %v2625
        %v2645 = vsel %vm417, %v2625, %v2628
        %v2647 = vsel %vm420, %v2645, %v2634
        %v2648 = vld [vmem:[%s2104 + $0x10] sm:$0xc]
        %v2649 = vrot.slane %v2368, 7
        %2650 = vrot.lane.b32.xlu0 %v2649, 84
        %v2651 = vpop.permute.xlu0 %2650
        %v2652 = vrot.slane %v2374, 5
        %2653 = vrot.lane.b32.xlu0 %v2652, 40
        %v2654 = vpop.permute.xlu0 %2653
        %2655 = vrot.lane.b32.xlu0 %v2382, 124
        %v2656 = vpop.permute.xlu0 %2655
        %v2657 = vrot.slane %v2388, 6
        %2658 = vrot.lane.b32.xlu0 %v2657, 80
        %v2659 = vpop.permute.xlu0 %2658
        %v2660 = vrot.slane %v2393, 5
        %2661 = vrot.lane.b32.xlu0 %v2660, 36
        %v2662 = vpop.permute.xlu0 %2661
        %v2664 = vunpack.c.l.b16 %v2648
        %v2665 = vpack.c.b16 %v2664, %v2664
        %v2666 = vrot.slane %v2665, 7
        %2667 = vrot.lane.b32.xlu0 %v2666, 120
        %v2668 = vpop.permute.xlu0 %2667
        %v2671 = vsel %vm404, %v2362, %v2651
        %v2673 = vsel %vm408, %v2651, %v2654
        %v2675 = vsel %vm411, %v2673, %v2656
        %v2677 = vsel %vm414, %v2656, %v2659
        %v2679 = vsel %vm417, %v2659, %v2662
        %v2681 = vsel %vm420, %v2679, %v2668
        %v2686 = vrot.slane %v2031, 6
        %v2687 = vrot.slane %v2035, 6
        %v2688 = vrot.slane %v2037, 6
        %v2689 = vrot.slane %v2041, 6
        %v2690 = vrot.slane %v2028, 6
        %v2695 = vrot.slane %v2093, 4
        %v2696 = vrot.slane %v2097, 4
        %v2697 = vrot.slane %v2099, 4
        %v2698 = vrot.slane %v2103, 4
        %v2699 = vrot.slane %v2090, 4
        %v2704 = vrot.slane %v2155, 2
        %v2705 = vrot.slane %v2159, 2
        %v2706 = vrot.slane %v2161, 2
        %v2707 = vrot.slane %v2165, 2
        %v2708 = vrot.slane %v2152, 2
        %v2713 = vrot.slane %v2216, 1
        %v2714 = vrot.slane %v2220, 1
        %v2715 = vrot.slane %v2222, 1
        %v2716 = vrot.slane %v2226, 1
        %v2717 = vrot.slane %v2213, 1
        %v2722 = vrot.slane %v2277, 7
        %v2723 = vrot.slane %v2281, 7
        %v2724 = vrot.slane %v2283, 7
        %v2725 = vrot.slane %v2287, 7
        %v2726 = vrot.slane %v2274, 7
        %v2731 = vrot.slane %v2338, 5
        %v2732 = vrot.slane %v2342, 5
        %v2733 = vrot.slane %v2344, 5
        %v2734 = vrot.slane %v2348, 5
        %v2735 = vrot.slane %v2335, 5
        %v2740 = vrot.slane %v2399, 3
        %v2741 = vrot.slane %v2403, 3
        %v2742 = vrot.slane %v2405, 3
        %v2743 = vrot.slane %v2409, 3
        %v2744 = vrot.slane %v2396, 3
        %v2749 = vrot.slane %v2433, 2
        %v2750 = vrot.slane %v2437, 2
        %v2751 = vrot.slane %v2439, 2
        %v2752 = vrot.slane %v2443, 2
        %v2753 = vrot.slane %v2430, 2
        %v2758 = vrot.slane %v2501, 6
        %v2759 = vrot.slane %v2505, 6
        %v2760 = vrot.slane %v2507, 6
        %v2761 = vrot.slane %v2511, 6
        %v2762 = vrot.slane %v2498, 6
        %v2767 = vrot.slane %v2535, 4
        %v2768 = vrot.slane %v2539, 4
        %v2769 = vrot.slane %v2541, 4
        %v2770 = vrot.slane %v2545, 4
        %v2771 = vrot.slane %v2532, 4
        %v2776 = vrot.slane %v2569, 3
        %v2777 = vrot.slane %v2573, 3
        %v2778 = vrot.slane %v2575, 3
        %v2779 = vrot.slane %v2579, 3
        %v2780 = vrot.slane %v2566, 3
        %v2785 = vrot.slane %v2603, 1
        %v2786 = vrot.slane %v2607, 1
        %v2787 = vrot.slane %v2609, 1
        %v2788 = vrot.slane %v2613, 1
        %v2789 = vrot.slane %v2600, 1
        %v2794 = vrot.slane %v2637, 7
        %v2795 = vrot.slane %v2641, 7
        %v2796 = vrot.slane %v2643, 7
        %v2797 = vrot.slane %v2647, 7
        %v2798 = vrot.slane %v2634, 7
        %v2803 = vrot.slane %v2671, 5
        %v2804 = vrot.slane %v2675, 5
        %v2805 = vrot.slane %v2677, 5
        %v2806 = vrot.slane %v2681, 5
        %v2807 = vrot.slane %v2668, 5
        %v2809 = vsel %vm1251, %v1969, %v2686
        %v2811 = vsel %vm1251, %v1973, %v2687
        %v2813 = vsel %vm1251, %v1975, %v2688
        %v2815 = vsel %vm1251, %v1979, %v2689
        %v2817 = vsel %vm1251, %v1966, %v2690
        %v2819 = vsel %vm1262, %v2809, %v2695
        %v2821 = vsel %vm1262, %v2811, %v2696
        %v2823 = vsel %vm1262, %v2813, %v2697
        %v2825 = vsel %vm1262, %v2815, %v2698
        %v2827 = vsel %vm1262, %v2817, %v2699
        %v2829 = vsel %vm1273, %v2819, %v2704
        %v2832 = vsel %vm1273, %v2821, %v2705
        %v2835 = vsel %vm1273, %v2823, %v2706
        %v2838 = vsel %vm1273, %v2825, %v2707
        %v2841 = vsel %vm1273, %v2827, %v2708
        %v2844 = vsel %vm1251, %v2713, %v2722
        %v2847 = vsel %vm1251, %v2714, %v2723
        %v2850 = vsel %vm1251, %v2715, %v2724
        %v2853 = vsel %vm1251, %v2716, %v2725
        %v2856 = vsel %vm1251, %v2717, %v2726
        %v2858 = vsel %vm1262, %v2844, %v2731
        %v2860 = vsel %vm1262, %v2847, %v2732
        %v2862 = vsel %vm1262, %v2850, %v2733
        %v2864 = vsel %vm1262, %v2853, %v2734
        %v2866 = vsel %vm1262, %v2856, %v2735
        %v2868 = vsel %vm1273, %v2858, %v2740
        %v2871 = vsel %vm1273, %v2860, %v2741
        %v2874 = vsel %vm1273, %v2862, %v2742
        %v2877 = vsel %vm1273, %v2864, %v2743
        %v2880 = vsel %vm1273, %v2866, %v2744
        %v2882 = vsel %vm1251, %v2749, %v2467
        %v2884 = vsel %vm1251, %v2750, %v2471
        %v2886 = vsel %vm1251, %v2751, %v2473
        %v2888 = vsel %vm1251, %v2752, %v2477
        %v2890 = vsel %vm1251, %v2753, %v2464
        %v2892 = vsel %vm1262, %v2882, %v2758
        %v2894 = vsel %vm1262, %v2884, %v2759
        %v2896 = vsel %vm1262, %v2886, %v2760
        %v2898 = vsel %vm1262, %v2888, %v2761
        %v2900 = vsel %vm1262, %v2890, %v2762
        %v2902 = vsel %vm1273, %v2892, %v2767
        %v2905 = vsel %vm1273, %v2894, %v2768
        %v2908 = vsel %vm1273, %v2896, %v2769
        %v2911 = vsel %vm1273, %v2898, %v2770
        %v2914 = vsel %vm1273, %v2900, %v2771
        %v2917 = vsel %vm1251, %v2776, %v2785
        %v2920 = vsel %vm1251, %v2777, %v2786
        %v2923 = vsel %vm1251, %v2778, %v2787
        %v2926 = vsel %vm1251, %v2779, %v2788
        %v2929 = vsel %vm1251, %v2780, %v2789
        %v2931 = vsel %vm1262, %v2917, %v2794
        %v2933 = vsel %vm1262, %v2920, %v2795
        %v2935 = vsel %vm1262, %v2923, %v2796
        %v2937 = vsel %vm1262, %v2926, %v2797
        %v2939 = vsel %vm1262, %v2929, %v2798
        %v2941 = vsel %vm1273, %v2931, %v2803
        %v2944 = vsel %vm1273, %v2933, %v2804
        %v2947 = vsel %vm1273, %v2935, %v2805
        %v2950 = vsel %vm1273, %v2937, %v2806
        %v2953 = vsel %vm1273, %v2939, %v2807
        %v3028 = vunpack.c.l.b16 %v1845
        %v3029 = vunpack.c.l.b16 %v1846
        %v3030 = vunpack.c.l.b16 %v1847
        %v3031 = vunpack.c.l.b16 %v1848
        %v3032 = vunpack.c.l.b16 %v1849
        %v3033 = vunpack.c.l.b16 %v1850
        %v3034 = vunpack.c.l.b16 %v1851
        %v3035 = vunpack.c.l.b16 %v1852
        %v3036 = vunpack.c.l.b16 %v1853
        %v3037 = vunpack.c.l.b16 %v1854
        %v3038 = vunpack.c.l.b16 %v1855
        %v3039 = vunpack.c.l.b16 %v1856
        %v3040 = vunpack.c.l.b16 %v1857
        %v3041 = vunpack.c.l.b16 %v1858
        %v3042 = vunpack.c.l.b16 %v1859
        %v3043 = vunpack.c.l.b16 %v1860
        %v3044 = vunpack.c.l.b16 %v1861
        %v3045 = vunpack.c.l.b16 %v1862
        %v3046 = vunpack.c.l.b16 %v1863
        %v3047 = vunpack.c.l.b16 %v1864
        %v3048 = vunpack.c.l.b16 %v1865
        %v3049 = vunpack.c.l.b16 %v1866
        %v3050 = vunpack.c.l.b16 %v1867
        %v3051 = vunpack.c.l.b16 %v1868
        %v3052 = vunpack.c.l.b16 %v1869
        %v3053 = vunpack.c.l.b16 %v1870
        %v3054 = vunpack.c.l.b16 %v1871
        %v3055 = vunpack.c.l.b16 %v1872
        %v3056 = vunpack.c.l.b16 %v1873
        %v3057 = vunpack.c.l.b16 %v1874
        %v3058 = vunpack.c.l.b16 %v1875
        %v3059 = vunpack.c.l.b16 %v1876
        %v3060 = vunpack.c.l.b16 %v1877
        %v3061 = vunpack.c.l.b16 %v1878
        %v3062 = vunpack.c.l.b16 %v1879
        %v3063 = vunpack.c.l.b16 %v1880
        %v3064 = vunpack.c.l.b16 %v1881
        %v3065 = vunpack.c.l.b16 %v1882
        %v3066 = vunpack.c.l.b16 %v1883
        %v3067 = vunpack.c.l.b16 %v1884
        %v3068 = vunpack.c.l.b16 %v1885
        %v3069 = vunpack.c.l.b16 %v1886
        %v3070 = vunpack.c.l.b16 %v1887
        %v3071 = vunpack.c.l.b16 %v1888
        %v3072 = vunpack.c.l.b16 %v1889
        %v3073 = vunpack.c.l.b16 %v1890
        %v3074 = vunpack.c.l.b16 %v1891
        %v3075 = vunpack.c.l.b16 %v1892
        %v3076 = vunpack.c.l.b16 %v1893
        %v3077 = vunpack.c.l.b16 %v1894
        %v3078 = vunpack.c.l.b16 %v1895
        %v3079 = vunpack.c.l.b16 %v1896
        %v3080 = vunpack.c.l.b16 %v1897
        %v3081 = vunpack.c.l.b16 %v1898
        %v3082 = vunpack.c.l.b16 %v1899
        %v3083 = vunpack.c.l.b16 %v1900
        %v3084 = vunpack.c.l.b16 %v1901
        %v3085 = vunpack.c.l.b16 %v1902
        %v3086 = vunpack.c.l.b16 %v1903
        %v3087 = vunpack.c.l.b16 %v1904
        %v3088 = vunpack.c.l.b16 %v1905
        %v3089 = vunpack.c.l.b16 %v1906
        %v3090 = vunpack.c.l.b16 %v1907
        %v3091 = vunpack.c.l.b16 %v1908
        %v3092 = vunpack.c.l.b16 %v1909
        %v3093 = vunpack.c.l.b16 %v1910
        %v3094 = vunpack.c.l.b16 %v1911
        %v3095 = vunpack.c.l.b16 %v1912
        %v3096 = vunpack.c.l.b16 %v1913
        %v3097 = vunpack.c.l.b16 %v1914
        %v3098 = vunpack.c.l.b16 %v1915
        %v3099 = vunpack.c.l.b16 %v1916
        %v3100 = vunpack.c.l.b16 %v1917
        %v3101 = vunpack.c.l.b16 %v1918
        %v3102 = vpack.c.b16 %v3029, %v3028
        %v3103 = vpack.c.b16 %v3031, %v3030
        %v3104 = vpack.c.b16 %v3033, %v3032
        %v3105 = vpack.c.b16 %v3035, %v3034
        %v3106 = vpack.c.b16 %v3037, %v3036
        %v3107 = vpack.c.b16 %v3039, %v3038
        %v3108 = vpack.c.b16 %v3041, %v3040
        %v3109 = vpack.c.b16 %v3043, %v3042
        %v3110 = vpack.c.b16 %v3045, %v3044
        %v3111 = vpack.c.b16 %v3047, %v3046
        %v3112 = vpack.c.b16 %v3049, %v3048
        %v3113 = vpack.c.b16 %v3051, %v3050
        %v3114 = vpack.c.b16 %v3053, %v3052
        %v3115 = vpack.c.b16 %v3055, %v3054
        %v3116 = vpack.c.b16 %v3057, %v3056
        %v3117 = vpack.c.b16 %v3059, %v3058
        %v3118 = vpack.c.b16 %v3061, %v3060
        %v3119 = vpack.c.b16 %v3063, %v3062
        %v3120 = vpack.c.b16 %v3065, %v3064
        %v3121 = vpack.c.b16 %v3067, %v3066
        %v3122 = vpack.c.b16 %v3069, %v3068
        %v3123 = vpack.c.b16 %v3071, %v3070
        %v3124 = vpack.c.b16 %v3073, %v3072
        %v3125 = vpack.c.b16 %v3075, %v3074
        %v3126 = vpack.c.b16 %v3077, %v3076
        %v3127 = vpack.c.b16 %v3079, %v3078
        %v3128 = vpack.c.b16 %v3081, %v3080
        %v3129 = vpack.c.b16 %v3083, %v3082
        %v3130 = vpack.c.b16 %v3085, %v3084
        %v3131 = vpack.c.b16 %v3087, %v3086
        %v3132 = vpack.c.b16 %v3089, %v3088
        %v3133 = vpack.c.b16 %v3091, %v3090
        %v3134 = vpack.c.b16 %v3093, %v3092
        %v3135 = vpack.c.b16 %v3095, %v3094
        %v3136 = vpack.c.b16 %v3097, %v3096
        %v3137 = vpack.c.b16 %v3099, %v3098
        %v3138 = vpack.c.b16 %v3101, %v3100
        %v3175 = vsel %vm1621, %v2841, 0
        %v3177 = vsel %vm1621, %v2880, 0
        %v3179 = vsel %vm1621, %v2914, 0
        %v3181 = vsel %vm1621, %v2953, 0
        %v3184 = vsel %vm1273, %v3138, 0
        %3186 = vmatprep.subr.bf16.mxu0 0
        %3187 = vmatpush1.bf16.msra.mxu0 %v3102
        %3188 = vmatprep.subr.bf16.mxu0 0
        %3189 = vmatpush1.bf16.msra.mxu0 %v3103
        %3190 = vmatprep.subr.bf16.mxu0 0
        %3191 = vmatpush1.bf16.msra.mxu0 %v3104
        %3192 = vmatprep.subr.bf16.mxu0 0
        %3193 = vmatpush1.bf16.msra.mxu0 %v3105
        %3194 = vmatprep.subr.bf16.mxu0 0
        %3195 = vmatpush1.bf16.msra.mxu0 %v3106
        %3196 = vmatprep.subr.bf16.mxu0 0
        %3197 = vmatpush1.bf16.msra.mxu0 %v3107
        %3198 = vmatprep.subr.bf16.mxu0 0
        %3199 = vmatpush1.bf16.msra.mxu0 %v3108
        %3200 = vmatprep.subr.bf16.mxu0 0
        %3201 = vmatpush1.bf16.msra.mxu0 %v3109
        %3202 = vmatprep.subr.bf16.mxu0 0
        %3203 = vmatpush1.bf16.msra.mxu0 %v3110
        %3204 = vmatprep.subr.bf16.mxu0 0
        %3205 = vmatpush1.bf16.msra.mxu0 %v3111
        %3206 = vmatprep.subr.bf16.mxu0 0
        %3207 = vmatpush1.bf16.msra.mxu0 %v3112
        %3208 = vmatprep.subr.bf16.mxu0 0
        %3209 = vmatpush1.bf16.msra.mxu0 %v3113
        %3210 = vmatprep.subr.bf16.mxu0 0
        %3211 = vmatpush1.bf16.msra.mxu0 %v3114
        %3212 = vmatprep.subr.bf16.mxu0 0
        %3213 = vmatpush1.bf16.msra.mxu0 %v3115
        %3214 = vmatprep.subr.bf16.mxu0 0
        %3215 = vmatpush1.bf16.msra.mxu0 %v3116
        %3216 = vmatprep.subr.bf16.mxu0 0
        %3217 = vmatpush1.bf16.msra.mxu0 %v3117
        %3218 = vmatprep.mubr.bf16.mxu0 %v2832
        %3219 = vmatmul.mubr.bf16.gmra.mrb[0].mxu0 %v2829
        %v3220 = vpop.f32.mrb[0].mxu0
        %v3221 = vadd.f32 0.0, %v3220
        %v3222 = vpop.f32.mrb[0].mxu0
        %v3223 = vpop.f32.mrb[0].mxu0
        %v3224 = vadd.f32 0.0, %v3223
        %v3225 = vpop.f32.mrb[0].mxu0
        %3226 = vmatprep.mubr.bf16.mxu0 %v2871
        %3227 = vmatmul.mubr.bf16.gmra.mrb[0].mxu0 %v2868
        %v3228 = vpop.f32.mrb[0].mxu0
        %v3229 = vadd.f32 0.0, %v3228
        %v3230 = vpop.f32.mrb[0].mxu0
        %v3231 = vpop.f32.mrb[0].mxu0
        %v3232 = vadd.f32 0.0, %v3231
        %v3233 = vpop.f32.mrb[0].mxu0
        %3234 = vmatprep.mubr.bf16.mxu0 %v2905
        %3235 = vmatmul.mubr.bf16.gmra.mrb[0].mxu0 %v2902
        %v3236 = vpop.f32.mrb[0].mxu0
        %v3237 = vadd.f32 0.0, %v3236
        %v3238 = vpop.f32.mrb[0].mxu0
        %v3239 = vpop.f32.mrb[0].mxu0
        %v3240 = vadd.f32 0.0, %v3239
        %v3241 = vpop.f32.mrb[0].mxu0
        %3242 = vmatprep.mubr.bf16.mxu0 %v2944
        %3243 = vmatmul.mubr.bf16.gmra.mrb[0].mxu0 %v2941
        %v3244 = vpop.f32.mrb[0].mxu0
        %v3245 = vadd.f32 0.0, %v3244
        %v3246 = vpop.f32.mrb[0].mxu0
        %v3247 = vpop.f32.mrb[0].mxu0
        %v3248 = vadd.f32 0.0, %v3247
        %v3249 = vpop.f32.mrb[0].mxu0
        %3250 = vdwg.mxu0
        %3251 = vmatprep.subr.bf16.mxu0 0
        %3252 = vmatpush1.bf16.msra.mxu0 %v3118
        %3253 = vmatprep.subr.bf16.mxu0 0
        %3254 = vmatpush1.bf16.msra.mxu0 %v3119
        %3255 = vmatprep.subr.bf16.mxu0 0
        %3256 = vmatpush1.bf16.msra.mxu0 %v3120
        %3257 = vmatprep.subr.bf16.mxu0 0
        %3258 = vmatpush1.bf16.msra.mxu0 %v3121
        %3259 = vmatprep.subr.bf16.mxu0 0
        %3260 = vmatpush1.bf16.msra.mxu0 %v3122
        %3261 = vmatprep.subr.bf16.mxu0 0
        %3262 = vmatpush1.bf16.msra.mxu0 %v3123
        %3263 = vmatprep.subr.bf16.mxu0 0
        %3264 = vmatpush1.bf16.msra.mxu0 %v3124
        %3265 = vmatprep.subr.bf16.mxu0 0
        %3266 = vmatpush1.bf16.msra.mxu0 %v3125
        %3267 = vmatprep.subr.bf16.mxu0 0
        %3268 = vmatpush1.bf16.msra.mxu0 %v3126
        %3269 = vmatprep.subr.bf16.mxu0 0
        %3270 = vmatpush1.bf16.msra.mxu0 %v3127
        %3271 = vmatprep.subr.bf16.mxu0 0
        %3272 = vmatpush1.bf16.msra.mxu0 %v3128
        %3273 = vmatprep.subr.bf16.mxu0 0
        %3274 = vmatpush1.bf16.msra.mxu0 %v3129
        %3275 = vmatprep.subr.bf16.mxu0 0
        %3276 = vmatpush1.bf16.msra.mxu0 %v3130
        %3277 = vmatprep.subr.bf16.mxu0 0
        %3278 = vmatpush1.bf16.msra.mxu0 %v3131
        %3279 = vmatprep.subr.bf16.mxu0 0
        %3280 = vmatpush1.bf16.msra.mxu0 %v3132
        %3281 = vmatprep.subr.bf16.mxu0 0
        %3282 = vmatpush1.bf16.msra.mxu0 %v3133
        %3283 = vmatprep.mubr.bf16.mxu0 %v2838
        %3284 = vmatmul.mubr.bf16.gmra.mrb[0].mxu0 %v2835
        %v3285 = vpop.f32.mrb[0].mxu0
        %v3286 = vadd.f32 %v3221, %v3285
        %v3287 = vpop.f32.mrb[0].mxu0
        %v3288 = vpop.f32.mrb[0].mxu0
        %v3289 = vadd.f32 %v3224, %v3288
        %v3290 = vpop.f32.mrb[0].mxu0
        %3291 = vmatprep.mubr.bf16.mxu0 %v2877
        %3292 = vmatmul.mubr.bf16.gmra.mrb[0].mxu0 %v2874
        %v3293 = vpop.f32.mrb[0].mxu0
        %v3294 = vadd.f32 %v3229, %v3293
        %v3295 = vpop.f32.mrb[0].mxu0
        %v3296 = vpop.f32.mrb[0].mxu0
        %v3297 = vadd.f32 %v3232, %v3296
        %v3298 = vpop.f32.mrb[0].mxu0
        %3299 = vmatprep.mubr.bf16.mxu0 %v2911
        %3300 = vmatmul.mubr.bf16.gmra.mrb[0].mxu0 %v2908
        %v3301 = vpop.f32.mrb[0].mxu0
        %v3302 = vadd.f32 %v3237, %v3301
        %v3303 = vpop.f32.mrb[0].mxu0
        %v3304 = vpop.f32.mrb[0].mxu0
        %v3305 = vadd.f32 %v3240, %v3304
        %v3306 = vpop.f32.mrb[0].mxu0
        %3307 = vmatprep.mubr.bf16.mxu0 %v2950
        %3308 = vmatmul.mubr.bf16.gmra.mrb[0].mxu0 %v2947
        %v3309 = vpop.f32.mrb[0].mxu0
        %v3310 = vadd.f32 %v3245, %v3309
        %v3311 = vpop.f32.mrb[0].mxu0
        %v3312 = vpop.f32.mrb[0].mxu0
        %v3313 = vadd.f32 %v3248, %v3312
        %v3314 = vpop.f32.mrb[0].mxu0
        %3315 = vdwg.mxu0
        %3316 = vmatprep.subr.bf16.mxu0 0
        %3317 = vmatpush1.bf16.msra.mxu0 %v3134
        %3318 = vmatprep.subr.bf16.mxu0 0
        %3319 = vmatpush1.bf16.msra.mxu0 %v3135
        %3320 = vmatprep.subr.bf16.mxu0 0
        %3321 = vmatpush1.bf16.msra.mxu0 %v3136
        %3322 = vmatprep.subr.bf16.mxu0 0
        %3323 = vmatpush1.bf16.msra.mxu0 %v3137
        %3324 = vmatprep.subr.bf16.mxu0 0
        %3325 = vmatpush1.bf16.msra.mxu0 %v3184
        %3326 = vmatprep.subr.bf16.mxu0 0
        %3327 = vmatpush1.bf16.msra.mxu0 0
        %3328 = vmatprep.subr.bf16.mxu0 0
        %3329 = vmatpush1.bf16.msra.mxu0 0
        %3330 = vmatprep.subr.bf16.mxu0 0
        %3331 = vmatpush1.bf16.msra.mxu0 0
        %3332 = vmatprep.subr.bf16.mxu0 0
        %3333 = vmatpush1.bf16.msra.mxu0 0
        %3334 = vmatprep.subr.bf16.mxu0 0
        %3335 = vmatpush1.bf16.msra.mxu0 0
        %3336 = vmatprep.subr.bf16.mxu0 0
        %3337 = vmatpush1.bf16.msra.mxu0 0
        %3338 = vmatprep.subr.bf16.mxu0 0
        %3339 = vmatpush1.bf16.msra.mxu0 0
        %3340 = vmatprep.subr.bf16.mxu0 0
        %3341 = vmatpush1.bf16.msra.mxu0 0
        %3342 = vmatprep.subr.bf16.mxu0 0
        %3343 = vmatpush1.bf16.msra.mxu0 0
        %3344 = vmatprep.subr.bf16.mxu0 0
        %3345 = vmatpush1.bf16.msra.mxu0 0
        %3346 = vmatprep.subr.bf16.mxu0 0
        %3347 = vmatpush1.bf16.msra.mxu0 0
        %3348 = vmatprep.mubr.bf16.mxu0 0
        %3349 = vmatmul.mubr.bf16.gmra.mrb[0].mxu0 %v3175
        %v3350 = vpop.f32.mrb[0].mxu0
        %v3351 = vadd.f32 %v3286, %v3350
        %v3352 = vpop.f32.mrb[0].mxu0
        %v3353 = vpop.f32.mrb[0].mxu0
        %v3354 = vadd.f32 %v3289, %v3353
        %v3355 = vpop.f32.mrb[0].mxu0
        %3356 = vmatprep.mubr.bf16.mxu0 0
        %3357 = vmatmul.mubr.bf16.gmra.mrb[0].mxu0 %v3177
        %v3358 = vpop.f32.mrb[0].mxu0
        %v3359 = vadd.f32 %v3294, %v3358
        %v3360 = vpop.f32.mrb[0].mxu0
        %v3361 = vpop.f32.mrb[0].mxu0
        %v3362 = vadd.f32 %v3297, %v3361
        %v3363 = vpop.f32.mrb[0].mxu0
        %3364 = vmatprep.mubr.bf16.mxu0 0
        %3365 = vmatmul.mubr.bf16.gmra.mrb[0].mxu0 %v3179
        %v3366 = vpop.f32.mrb[0].mxu0
        %v3367 = vadd.f32 %v3302, %v3366
        %v3368 = vpop.f32.mrb[0].mxu0
        %v3369 = vpop.f32.mrb[0].mxu0
        %v3370 = vadd.f32 %v3305, %v3369
        %v3371 = vpop.f32.mrb[0].mxu0
        %3372 = vmatprep.mubr.bf16.mxu0 0
        %3373 = vmatmul.mubr.bf16.gmra.mrb[0].mxu0 %v3181
        %v3374 = vpop.f32.mrb[0].mxu0
        %v3375 = vadd.f32 %v3310, %v3374
        %v3376 = vpop.f32.mrb[0].mxu0
        %v3377 = vpop.f32.mrb[0].mxu0
        %v3378 = vadd.f32 %v3313, %v3377
        %v3379 = vpop.f32.mrb[0].mxu0
        %3380 = vdwg.mxu0
        %v3381 = vmax.f32 %v3351, %v3359
        %v3382 = vmax.f32 %v3354, %v3362
        %v3383 = vmax.f32 %v3367, %v3375
        %v3384 = vmax.f32 %v3370, %v3378
        %v3385 = vmax.f32 %v3381, %v3383
        %v3386 = vmax.f32 %v3382, %v3384
        %v3387 = vld [vmem:[%s5] sm:$0x1]
        %v3389 = vlaneseq
        %v3390 = vshrl.u32 %v3389, 7
        %v3391 = vsub.s32 0, %v3390
        %v3392 = vrot.slane %v3387, %v3391
        %v3394 = vadd.f32 %v3385, %v3392
        %v3395 = vadd.f32 %v3386, %v3392
        %v3396 = vmax.f32 %v3394, 0.0
        %v3397 = vmax.f32 %v3395, 0.0
        %v3398 = vadd.f32 %v1843, %v3396
        %v3399 = vadd.f32 %v1844, %v3397
        %vm3400 = vcmask 191488
        %3401 = vst.msk [vmem:[%s265] sm:$0xf] %vm3400, %v3398
        %s3402 = scalar_lea.vmem %s265, 4 [#allocation2]
        %vm3403 = vcmask 195588
        %3404 = vst.msk [vmem:[%s3402 - $0x4] sm:$0xf0] %vm3403, %v3398
        %s3405 = scalar_lea.vmem %s265, 8 [#allocation2]
        %3406 = vst.msk [vmem:[%s3405] sm:$0xf] %vm3400, %v3399
        %s3407 = scalar_lea.vmem %s265, 12 [#allocation2]
        %3408 = vst.msk [vmem:[%s3407 - $0x4] sm:$0xf0] %vm3403, %v3399
        %s3409 = sand.u32 %s164, 1
        %s3410 = scalar_lea.sflag [#allocation3], %s3409
        %s3411 = sand.u32 %s164, 1
        %s3412 = smul.addr %s3411, 16
        %s3413 = scalar_lea.vmem [#allocation2], %s3412
        // Predicated region
        $region45: #{cafusion_stem_forward.3} parent=43 // pred_check
          %p3414 = pneg %p174
        $region46: #{cafusion_stem_forward.3} parent=43 // pred_check_branch
          %3416 = sbr.rel (%p3414) target = $region48
        $region47: #{cafusion_stem_forward.3} parent=43 // pred_region
          %s3417 = smul.u32 4, %s20
          %s3419 = ssub.s32 256, 256
          %3420 = vsyncadd %s3410, %s3419
          %s3421 = smul.addr %s3417, 64
          %s3422 = scalar_lea.hbm %s6, %s3421
          %s3423 = sshll.u32 %s3413, 4
          %s3424 = int_to_ptr.vmem [resolvable:$true] %s3423
          %3429 = dma.vmem_to_hbm [thread:$0]  %s3424, 256, %s3422, %s3410, 64, 64, 4
        $region48: #{cafusion_stem_forward.3} parent=43 // pred_fallthru
          _
      $region44: #{cafusion_stem_forward.3} parent=5 // pred_fallthru
        _
      %p3430 = scmp.le.s32.totalorder 2, %s15
      // Predicated region
      $region49: #{cafusion_stem_forward.3} parent=5 // pred_check
        %p3431 = pneg %p3430
      $region50: #{cafusion_stem_forward.3} parent=5 // pred_check_branch
        %3433 = sbr.rel (%p3431) target = $region52
      $region51: #{cafusion_stem_forward.3} parent=5 // pred_region
        %s3434 = ssub.s32 %s15, 2
        // Predicated region
        $region53: #{cafusion_stem_forward.3} parent=51 // pred_check
          %p3435 = pneg %p180
        $region54: #{cafusion_stem_forward.3} parent=51 // pred_check_branch
          %3437 = sbr.rel (%p3435) target = $region56
        $region55: #{cafusion_stem_forward.3} parent=51 // pred_region
          %s3438 = sand.u32 %s165, 1
          %s3439 = scalar_lea.sflag [#allocation3], %s3438
          %s3440 = sand.u32 %s165, 1
          %s3441 = smul.addr %s3440, 16
          %s3442 = scalar_lea.vmem [#allocation2], %s3441
          %3443 = dma.done %s3439, 256
        $region56: #{cafusion_stem_forward.3} parent=51 // pred_fallthru
          _
      $region52: #{cafusion_stem_forward.3} parent=5 // pred_fallthru
        _
    $region6: #{cafusion_stem_forward.3} parent=1 // loop_footer
      %s19 = sadd.s32 1, %s15
    $region7: #{cafusion_stem_forward.3} parent=1 // loop_footer_branch
      %14 = sbr.rel target = $region3
    $region8: #{cafusion_stem_forward.3} parent=1 // loop_exit
      _
    %3444 = vsyncpa [#allocation3], 1
    %s3445 = scalar_lea.sflag [#allocation3], 1
    %3446 = vsyncpa %s3445, 1

</llo_original>
